<compile_context>
chip_gen: v7x
topology: tpu7x:2x2x1
jax: 0.10.0
libtpu: 0.0.40
codegen_flags: <defaults>
</compile_context>

<pallas_src>
import functools

import jax
import jax.numpy as jnp
from jax.experimental import pallas as pl
from jax.experimental.pallas import tpu as pltpu


def _round_up(x, m):
    return (x + m - 1) // m * m


# ----------------------------------------------------------------------------
# Per-generation tile / VMEM selection for the linear1 weight stream.
# ----------------------------------------------------------------------------
def _select_linear1_tiles(n_out):
    """Returns (tk_pref, tn, vmem_limit_bytes)."""
    vmem_phys = 64 * 1024 * 1024  # conservative: v7x per-TensorCore VMEM
    try:
        info = pltpu.get_tpu_info()
        vmem_phys = int(getattr(info, "vmem_capacity_bytes", vmem_phys))
    except Exception:
        # Detection is best-effort; the conservative config is valid everywhere.
        pass

    if vmem_phys >= 100 * 1024 * 1024:
        # v5e / v6e: 128 MiB VMEM, single TensorCore -> one wide N tile plus a
        # big K tile (32 MiB bf16 W tile, double-buffered) and a high scoped
        # VMEM limit (v5e's default scoped limit is only 16 MiB).
        # TODO(synk): sweep tk in {4096, 8192} on v6e (K padding vs. per-step overhead).
        tn = min(2048, _round_up(n_out, 256))
        return 8192, tn, 96 * 1024 * 1024

    # v7x (or unknown): keep >= 2 N blocks so the "parallel" j axis shards the
    # weight stream across both TensorCores, and stay well under 64 MiB/core.
    tn = min(1024, _round_up(n_out, 256))
    if _round_up(n_out, tn) == tn and tn >= 512:
        tn //= 2  # guarantee nj >= 2 for two-TensorCore sharding
    return 4096, tn, 40 * 1024 * 1024


# ----------------------------------------------------------------------------
# Streaming linear layer:  y = act(x @ W + b), W pre-padded/cast at init.
# Grid = (N_pad//tn, K_pad//tk), K innermost.  x streams as small (M, tk)
# blocks, W streams as (tk, tn) bf16 tiles, accumulation in an f32 scratch,
# epilogue adds bias + relu and writes the output block in out_dtype.
# ----------------------------------------------------------------------------
def _linear_stream_kernel(x_ref, w_ref, b_ref, o_ref, acc_ref, *, activation):
    k = pl.program_id(1)

    @pl.when(k == 0)
    def _():
        acc_ref[...] = jnp.zeros_like(acc_ref)

    acc_ref[...] += jnp.dot(x_ref[...], w_ref[...],
                            preferred_element_type=jnp.float32)

    @pl.when(k == pl.num_programs(1) - 1)
    def _():
        out = acc_ref[...] + b_ref[...]          # (M, tn) + (1, tn) broadcast
        if activation == "relu":
            out = jnp.maximum(out, 0.0)
        o_ref[...] = out.astype(o_ref.dtype)


def linear_stream(x, w_pad, b_pad, *, n_out, tk, tn, vmem_limit,
                  activation="relu", out_dtype=jnp.bfloat16):
    """x: [M, K] (M % 8 == 0); w_pad: bf16 [K_pad, N_pad] (padded at init);
    b_pad: f32 [1, N_pad].  Returns out_dtype [M, n_out]."""
    M, K = x.shape
    K_pad, N_pad = w_pad.shape
    assert M % 8 == 0, "pad the batch to a multiple of 8 before calling"
    assert K_pad % tk == 0 and N_pad % tn == 0
    nk = K_pad // tk
    nj = N_pad // tn

    xb = x.astype(jnp.bfloat16)
    if K_pad != K:
        xb = jnp.pad(xb, ((0, 0), (0, K_pad - K)))  # activations only (tiny)

    kern = functools.partial(_linear_stream_kernel, activation=activation)
    out = pl.pallas_call(
        kern,
        out_shape=jax.ShapeDtypeStruct((M, N_pad), out_dtype),
        grid_spec=pltpu.PrefetchScalarGridSpec(
            num_scalar_prefetch=0,
            grid=(nj, nk),
            in_specs=[
                pl.BlockSpec((M, tk), lambda j, k: (0, k)),   # x: streamed, tiny
                # TODO(synk): sweep pipeline_mode=pl.Buffered(3) on this spec for v7x.
                pl.BlockSpec((tk, tn), lambda j, k: (k, j)),  # W: the ~1.15 GB stream
                pl.BlockSpec((1, tn), lambda j, k: (0, j)),   # bias
            ],
            out_specs=pl.BlockSpec((M, tn), lambda j, k: (0, j)),
            scratch_shapes=[pltpu.VMEM((M, tn), jnp.float32)],
        ),
        compiler_params=pltpu.CompilerParams(
            dimension_semantics=("parallel", "arbitrary"),
            vmem_limit_bytes=vmem_limit,
        ),
    )(xb, w_pad, b_pad)

    return out[:, :n_out] if N_pad != n_out else out


# ----------------------------------------------------------------------------
# Fused tail: linear2 -> relu -> linear3 -> relu -> [linear4|linear5] (one
# concatenated matmul) -> reparameterization + masked KL.  Single grid-less
# pallas_call; all tail weights (~5.5 MiB bf16, prepared at init) live in VMEM.
# ----------------------------------------------------------------------------
def _tail_kernel(h_ref, w2_ref, b2_ref, w3_ref, b3_ref, w45_ref, b45_ref,
                 eps_ref, z_ref, kl_ref, *, valid_rows, latent):
    h1 = h_ref[...]                                    # already bf16

    h2 = jnp.dot(h1, w2_ref[...], preferred_element_type=jnp.float32) + b2_ref[...]
    h2 = jnp.maximum(h2, 0.0).astype(jnp.bfloat16)

    h3 = jnp.dot(h2, w3_ref[...], preferred_element_type=jnp.float32) + b3_ref[...]
    h3 = jnp.maximum(h3, 0.0).astype(jnp.bfloat16)

    ml = jnp.dot(h3, w45_ref[...], preferred_element_type=jnp.float32) + b45_ref[...]
    mu = ml[:, :latent]
    logs = ml[:, latent:]
    sigma = jnp.exp(logs)

    z_ref[...] = mu + sigma * eps_ref[...]

    # KL only over the real (non-padded) batch rows.
    row = jax.lax.broadcasted_iota(jnp.int32, mu.shape, 0)
    kl_terms = jnp.where(row < valid_rows,
                         sigma * sigma + mu * mu - logs - 0.5, 0.0)
    kl_ref[...] = jnp.sum(kl_terms, keepdims=True)


def fused_tail(h1, params, eps, *, valid_rows, latent):
    m_pad = h1.shape[0]
    kern = functools.partial(_tail_kernel, valid_rows=valid_rows, latent=latent)
    z_pad, kl = pl.pallas_call(
        kern,
        out_shape=(
            jax.ShapeDtypeStruct((m_pad, latent), jnp.float32),
            jax.ShapeDtypeStruct((1, 1), jnp.float32),
        ),
    )(h1, params["w2"], params["b2"], params["w3"], params["b3"],
      params["w45"], params["b45"], eps.astype(jnp.float32))
    return z_pad, kl[0, 0]


# ----------------------------------------------------------------------------
# Parameter init (PyTorch nn.Linear default: U(-1/sqrt(fan_in), 1/sqrt(fan_in)))
# and ONE-TIME preparation (pad / cast / concat) of kernel-ready parameters.
# ----------------------------------------------------------------------------
def init_linear_params(key, fan_in, fan_out):
    kw, kb = jax.random.split(key)
    bound = 1.0 / jnp.sqrt(jnp.float32(fan_in))
    w = jax.random.uniform(kw, (fan_in, fan_out), jnp.float32, -bound, bound)
    b = jax.random.uniform(kb, (fan_out,), jnp.float32, -bound, bound)
    return w.astype(jnp.bfloat16), b


def init_raw_params(key, input_size, latent_dims):
    k1, k2, k3, k4, k5 = jax.random.split(key, 5)
    return {
        "linear1": init_linear_params(k1, input_size, 2048),
        "linear2": init_linear_params(k2, 2048, 1024),
        "linear3": init_linear_params(k3, 1024, 512),
        "linear4": init_linear_params(k4, 512, latent_dims),
        "linear5": init_linear_params(k5, 512, latent_dims),
    }


def prepare_encoder_params(raw):
    """Init-time prep (runs once, never per forward): pads/casts the streamed
    linear1 weight to its tile grid, casts tail weights to bf16, reshapes
    biases to (1, N) rows, and concatenates linear4|linear5."""
    w1, b1 = raw["linear1"]
    K, N = w1.shape
    tk_pref, tn, vmem_limit = _select_linear1_tiles(N)
    tk = min(tk_pref, _round_up(K, 512))
    K_pad = _round_up(K, tk)
    N_pad = _round_up(N, tn)

    w1p = w1.astype(jnp.bfloat16)
    if (K_pad, N_pad) != (K, N):
        w1p = jnp.pad(w1p, ((0, K_pad - K), (0, N_pad - N)))
    b1p = b1.astype(jnp.float32)
    if N_pad != N:
        b1p = jnp.pad(b1p, (0, N_pad - N))

    latent = raw["linear4"][0].shape[1]
    params = {
        "w1": w1p, "b1": b1p.reshape(1, N_pad),
        "w2": raw["linear2"][0].astype(jnp.bfloat16),
        "b2": raw["linear2"][1].astype(jnp.float32).reshape(1, -1),
        "w3": raw["linear3"][0].astype(jnp.bfloat16),
        "b3": raw["linear3"][1].astype(jnp.float32).reshape(1, -1),
        "w45": jnp.concatenate([raw["linear4"][0], raw["linear5"][0]],
                               axis=1).astype(jnp.bfloat16),
        "b45": jnp.concatenate([raw["linear4"][1], raw["linear5"][1]],
                               axis=0).astype(jnp.float32).reshape(1, -1),
    }
    cfg = {"n1": N, "tk": tk, "tn": tn, "vmem_limit": vmem_limit,
           "latent": latent}
    return params, cfg


def variational_encoder_forward(params, x, eps, *, cfg):
    batch = x.shape[0]
    m_pad = _round_up(batch, 8)
    if m_pad != batch:
        x = jnp.pad(x, ((0, m_pad - batch), (0, 0)))
        eps = jnp.pad(eps, ((0, m_pad - batch), (0, 0)))

    h1 = linear_stream(x, params["w1"], params["b1"], n_out=cfg["n1"],
                       tk=cfg["tk"], tn=cfg["tn"],
                       vmem_limit=cfg["vmem_limit"],
                       activation="relu", out_dtype=jnp.bfloat16)
    z_pad, kl = fused_tail(h1, params, eps, valid_rows=batch,
                           latent=cfg["latent"])
    return z_pad[:batch], kl


# ----------------------------------------------------------------------------
# Pure-JAX reference (mirrors the bf16 weight / bf16 activation-cast numerics).
# ----------------------------------------------------------------------------
def ref_fwd(raw, x, eps):
    def lin(h, w, b):
        hb = h.astype(jnp.bfloat16).astype(jnp.float32)
        return jnp.dot(hb, w.astype(jnp.float32),
                       precision=jax.lax.Precision.HIGHEST) + b

    h = jax.nn.relu(lin(x, *raw["linear1"]))
    h = jax.nn.relu(lin(h, *raw["linear2"]))
    h = jax.nn.relu(lin(h, *raw["linear3"]))
    mu = lin(h, *raw["linear4"])
    logs = lin(h, *raw["linear5"])
    sigma = jnp.exp(logs)
    z = mu + sigma * eps
    kl = jnp.sum(sigma ** 2 + mu ** 2 - logs - 0.5)
    return z, kl


if __name__ == "__main__":
    # Small, module-consistent shapes.  The real model uses input_size=280257;
    # here we shrink it (non-tile-aligned to exercise the padding path) while
    # keeping the internal architecture (-> 2048 -> 1024 -> 512 -> 256).
    batch = 2
    input_size = 1000       # real module: 280257
    latent_dims = 256

    key = jax.random.PRNGKey(0)
    kp, kx, ke = jax.random.split(key, 3)

    raw = init_raw_params(kp, input_size, latent_dims)
    params, cfg = prepare_encoder_params(raw)   # one-time pad/cast/concat

    x = jax.random.normal(kx, (batch, input_size), jnp.float32)
    eps = jax.random.normal(ke, (batch, latent_dims), jnp.float32)  # N.sample(mu.shape)

    fwd = jax.jit(functools.partial(variational_encoder_forward, cfg=cfg))
    z, kl = fwd(params, x, eps)
    jax.block_until_ready((z, kl))

    z_ref, kl_ref = ref_fwd(raw, x, eps)
    assert z.shape == (batch, latent_dims)
    max_err = jnp.max(jnp.abs(z - z_ref))
    assert jnp.allclose(z, z_ref, atol=3e-2, rtol=3e-2), f"z mismatch (max abs err {max_err})"
    assert jnp.allclose(kl, kl_ref, atol=1.0, rtol=2e-2), f"kl mismatch ({kl} vs {kl_ref})"

    print("KERNEL_OK")
</pallas_src>

<mosaic_0001>
module attributes {stable_mosaic.version = 11 : i64} {
  func.func @_linear_stream_kernel(%arg0: i32, %arg1: i32, %arg2: memref<8x1024xbf16, #tpu.memory_space<vmem>>, %arg3: memref<1024x1024xbf16, #tpu.memory_space<vmem>>, %arg4: memref<1x1024xf32, #tpu.memory_space<vmem>>, %arg5: memref<8x1024xbf16, #tpu.memory_space<vmem>>, %arg6: memref<8x1024xf32, #tpu.memory_space<vmem>>) attributes {dimension_semantics = [#tpu.dimension_semantics<parallel>, #tpu.dimension_semantics<arbitrary>], iteration_bounds = array<i64: 2, 1>, scalar_prefetch = 0 : i64, scratch_operands = 1 : i64, tpu.core_type = #tpu.core_type<tc>, window_params = [{transform_indices = @transform_0, window_bounds = array<i64: 8, 1024>}, {transform_indices = @transform_1, window_bounds = array<i64: 1024, 1024>}, {transform_indices = @transform_2, window_bounds = array<i64: 1, 1024>}, {transform_indices = @transform_3, window_bounds = array<i64: 8, 1024>}]} {
    %c0_i32 = arith.constant 0 : i32
    %0 = arith.cmpi eq, %arg1, %c0_i32 : i32
    %1 = arith.extui %0 : i1 to i32
    %c0_i32_0 = arith.constant 0 : i32
    %2 = arith.cmpi ne, %1, %c0_i32_0 : i32
    scf.if %2 {
      %cst_10 = arith.constant 0.000000e+00 : f32
      %12 = vector.broadcast %cst_10 : f32 to vector<8x1024xf32>
      %c0_11 = arith.constant 0 : index
      %c0_12 = arith.constant 0 : index
      %13 = vector.load %arg6[%c0_11, %c0_12] : memref<8x1024xf32, #tpu.memory_space<vmem>>, vector<8x1024xf32>
      tpu.vector_store %arg6[%c0_11, %c0_12], %12 {strides = array<i32>} : memref<8x1024xf32, #tpu.memory_space<vmem>>, vector<8x1024xf32>,
    } else {
    }
    %c0 = arith.constant 0 : index
    %c0_1 = arith.constant 0 : index
    %3 = vector.load %arg6[%c0, %c0_1] : memref<8x1024xf32, #tpu.memory_space<vmem>>, vector<8x1024xf32>
    %c0_2 = arith.constant 0 : index
    %c0_3 = arith.constant 0 : index
    %4 = vector.load %arg2[%c0_2, %c0_3] : memref<8x1024xbf16, #tpu.memory_space<vmem>>, vector<8x1024xbf16>
    %c0_4 = arith.constant 0 : index
    %c0_5 = arith.constant 0 : index
    %5 = vector.load %arg3[%c0_4, %c0_5] : memref<1024x1024xbf16, #tpu.memory_space<vmem>>, vector<1024x1024xbf16>
    %cst = arith.constant dense<0.000000e+00> : vector<8x1024xf32>
    %6 = tpu.matmul %4, %5, %cst {dimension_numbers = #tpu.dot_dimension_numbers<[1], [0], [0], [1], [0, 0, 1, 1], [], []>} : vector<8x1024xbf16>, vector<1024x1024xbf16>, vector<8x1024xf32> -> vector<8x1024xf32>
    %7 = arith.addf %3, %6 : vector<8x1024xf32>
    %c0_6 = arith.constant 0 : index
    %c0_7 = arith.constant 0 : index
    %8 = vector.load %arg6[%c0_6, %c0_7] : memref<8x1024xf32, #tpu.memory_space<vmem>>, vector<8x1024xf32>
    tpu.vector_store %arg6[%c0_6, %c0_7], %7 {strides = array<i32>} : memref<8x1024xf32, #tpu.memory_space<vmem>>, vector<8x1024xf32>,
    %c0_i32_8 = arith.constant 0 : i32
    %9 = arith.cmpi eq, %arg1, %c0_i32_8 : i32
    %10 = arith.extui %9 : i1 to i32
    %c0_i32_9 = arith.constant 0 : i32
    %11 = arith.cmpi ne, %10, %c0_i32_9 : i32
    scf.if %11 {
      %c0_10 = arith.constant 0 : index
      %c0_11 = arith.constant 0 : index
      %12 = vector.load %arg6[%c0_10, %c0_11] : memref<8x1024xf32, #tpu.memory_space<vmem>>, vector<8x1024xf32>
      %c0_12 = arith.constant 0 : index
      %c0_13 = arith.constant 0 : index
      %13 = vector.load %arg4[%c0_12, %c0_13] : memref<1x1024xf32, #tpu.memory_space<vmem>>, vector<1x1024xf32>
      %14 = vector.broadcast %13 : vector<1x1024xf32> to vector<8x1024xf32>
      %15 = arith.addf %12, %14 : vector<8x1024xf32>
      %cst_14 = arith.constant 0.000000e+00 : f32
      %16 = vector.broadcast %cst_14 : f32 to vector<8x1024xf32>
      %17 = arith.maximumf %15, %16 : vector<8x1024xf32>
      %18 = arith.truncf %17 : vector<8x1024xf32> to vector<8x1024xbf16>
      %c0_15 = arith.constant 0 : index
      %c0_16 = arith.constant 0 : index
      %19 = vector.load %arg5[%c0_15, %c0_16] : memref<8x1024xbf16, #tpu.memory_space<vmem>>, vector<8x1024xbf16>
      tpu.vector_store %arg5[%c0_15, %c0_16], %18 {strides = array<i32>} : memref<8x1024xbf16, #tpu.memory_space<vmem>>, vector<8x1024xbf16>,
    } else {
    }
    return
  }
  func.func @transform_0(%arg0: i32, %arg1: i32) -> (i32, i32) {
    %c0_i32 = arith.constant 0 : i32
    %c0_i32_0 = arith.constant 0 : i32
    return %c0_i32, %arg1 : i32, i32
  }
  func.func @transform_1(%arg0: i32, %arg1: i32) -> (i32, i32) {
    %c0_i32 = arith.constant 0 : i32
    return %arg1, %arg0 : i32, i32
  }
  func.func @transform_2(%arg0: i32, %arg1: i32) -> (i32, i32) {
    %c0_i32 = arith.constant 0 : i32
    %c0_i32_0 = arith.constant 0 : i32
    return %c0_i32, %arg0 : i32, i32
  }
  func.func @transform_3(%arg0: i32, %arg1: i32) -> (i32, i32) {
    %c0_i32 = arith.constant 0 : i32
    %c0_i32_0 = arith.constant 0 : i32
    return %c0_i32, %arg0 : i32, i32
  }
}

module attributes {stable_mosaic.version = 11 : i64} {
  func.func @_tail_kernel(%arg0: memref<8x2048xbf16, #tpu.memory_space<vmem>>, %arg1: memref<2048x1024xbf16, #tpu.memory_space<vmem>>, %arg2: memref<1x1024xf32, #tpu.memory_space<vmem>>, %arg3: memref<1024x512xbf16, #tpu.memory_space<vmem>>, %arg4: memref<1x512xf32, #tpu.memory_space<vmem>>, %arg5: memref<512x512xbf16, #tpu.memory_space<vmem>>, %arg6: memref<1x512xf32, #tpu.memory_space<vmem>>, %arg7: memref<8x256xf32, #tpu.memory_space<vmem>>, %arg8: memref<8x256xf32, #tpu.memory_space<vmem>>, %arg9: memref<1x1xf32, #tpu.memory_space<vmem>>) attributes {dimension_semantics = [], scalar_prefetch = 0 : i64, scratch_operands = 0 : i64, tpu.core_type = #tpu.core_type<tc>} {
    %c0 = arith.constant 0 : index
    %c0_0 = arith.constant 0 : index
    %0 = vector.load %arg0[%c0, %c0_0] : memref<8x2048xbf16, #tpu.memory_space<vmem>>, vector<8x2048xbf16>
    %c0_1 = arith.constant 0 : index
    %c0_2 = arith.constant 0 : index
    %1 = vector.load %arg1[%c0_1, %c0_2] : memref<2048x1024xbf16, #tpu.memory_space<vmem>>, vector<2048x1024xbf16>
    %cst = arith.constant dense<0.000000e+00> : vector<8x1024xf32>
    %2 = tpu.matmul %0, %1, %cst {dimension_numbers = #tpu.dot_dimension_numbers<[1], [0], [0], [1], [0, 0, 1, 1], [], []>} : vector<8x2048xbf16>, vector<2048x1024xbf16>, vector<8x1024xf32> -> vector<8x1024xf32>
    %c0_3 = arith.constant 0 : index
    %c0_4 = arith.constant 0 : index
    %3 = vector.load %arg2[%c0_3, %c0_4] : memref<1x1024xf32, #tpu.memory_space<vmem>>, vector<1x1024xf32>
    %4 = vector.broadcast %3 : vector<1x1024xf32> to vector<8x1024xf32>
    %5 = arith.addf %2, %4 : vector<8x1024xf32>
    %cst_5 = arith.constant 0.000000e+00 : f32
    %6 = vector.broadcast %cst_5 : f32 to vector<8x1024xf32>
    %7 = arith.maximumf %5, %6 : vector<8x1024xf32>
    %8 = arith.truncf %7 : vector<8x1024xf32> to vector<8x1024xbf16>
    %c0_6 = arith.constant 0 : index
    %c0_7 = arith.constant 0 : index
    %9 = vector.load %arg3[%c0_6, %c0_7] : memref<1024x512xbf16, #tpu.memory_space<vmem>>, vector<1024x512xbf16>
    %cst_8 = arith.constant dense<0.000000e+00> : vector<8x512xf32>
    %10 = tpu.matmul %8, %9, %cst_8 {dimension_numbers = #tpu.dot_dimension_numbers<[1], [0], [0], [1], [0, 0, 1, 1], [], []>} : vector<8x1024xbf16>, vector<1024x512xbf16>, vector<8x512xf32> -> vector<8x512xf32>
    %c0_9 = arith.constant 0 : index
    %c0_10 = arith.constant 0 : index
    %11 = vector.load %arg4[%c0_9, %c0_10] : memref<1x512xf32, #tpu.memory_space<vmem>>, vector<1x512xf32>
    %12 = vector.broadcast %11 : vector<1x512xf32> to vector<8x512xf32>
    %13 = arith.addf %10, %12 : vector<8x512xf32>
    %cst_11 = arith.constant 0.000000e+00 : f32
    %14 = vector.broadcast %cst_11 : f32 to vector<8x512xf32>
    %15 = arith.maximumf %13, %14 : vector<8x512xf32>
    %16 = arith.truncf %15 : vector<8x512xf32> to vector<8x512xbf16>
    %c0_12 = arith.constant 0 : index
    %c0_13 = arith.constant 0 : index
    %17 = vector.load %arg5[%c0_12, %c0_13] : memref<512x512xbf16, #tpu.memory_space<vmem>>, vector<512x512xbf16>
    %cst_14 = arith.constant dense<0.000000e+00> : vector<8x512xf32>
    %18 = tpu.matmul %16, %17, %cst_14 {dimension_numbers = #tpu.dot_dimension_numbers<[1], [0], [0], [1], [0, 0, 1, 1], [], []>} : vector<8x512xbf16>, vector<512x512xbf16>, vector<8x512xf32> -> vector<8x512xf32>
    %c0_15 = arith.constant 0 : index
    %c0_16 = arith.constant 0 : index
    %19 = vector.load %arg6[%c0_15, %c0_16] : memref<1x512xf32, #tpu.memory_space<vmem>>, vector<1x512xf32>
    %20 = vector.broadcast %19 : vector<1x512xf32> to vector<8x512xf32>
    %21 = arith.addf %18, %20 : vector<8x512xf32>
    %22 = vector.extract_strided_slice %21 {offsets = [0, 0], sizes = [8, 256], strides = [1, 1]} : vector<8x512xf32> to vector<8x256xf32>
    %23 = vector.extract_strided_slice %21 {offsets = [0, 256], sizes = [8, 256], strides = [1, 1]} : vector<8x512xf32> to vector<8x256xf32>
    %24 = math.exp %23 : vector<8x256xf32>
    %c0_17 = arith.constant 0 : index
    %c0_18 = arith.constant 0 : index
    %25 = vector.load %arg7[%c0_17, %c0_18] : memref<8x256xf32, #tpu.memory_space<vmem>>, vector<8x256xf32>
    %26 = arith.mulf %24, %25 : vector<8x256xf32>
    %27 = arith.addf %22, %26 : vector<8x256xf32>
    %c0_19 = arith.constant 0 : index
    %c0_20 = arith.constant 0 : index
    %28 = vector.load %arg8[%c0_19, %c0_20] : memref<8x256xf32, #tpu.memory_space<vmem>>, vector<8x256xf32>
    tpu.vector_store %arg8[%c0_19, %c0_20], %27 {strides = array<i32>} : memref<8x256xf32, #tpu.memory_space<vmem>>, vector<8x256xf32>,
    %29 = tpu.iota {dimensions = array<i32: 0>} : vector<8x256xi32>
    %c2_i32 = arith.constant 2 : i32
    %30 = vector.broadcast %c2_i32 : i32 to vector<8x256xi32>
    %31 = arith.cmpi slt, %29, %30 : vector<8x256xi32>
    %32 = arith.mulf %24, %24 : vector<8x256xf32>
    %33 = arith.mulf %22, %22 : vector<8x256xf32>
    %34 = arith.addf %32, %33 : vector<8x256xf32>
    %35 = arith.subf %34, %23 : vector<8x256xf32>
    %cst_21 = arith.constant 5.000000e-01 : f32
    %36 = vector.broadcast %cst_21 : f32 to vector<8x256xf32>
    %37 = arith.subf %35, %36 : vector<8x256xf32>
    %cst_22 = arith.constant 0.000000e+00 : f32
    %38 = vector.broadcast %cst_22 : f32 to vector<8x256xf32>
    %39 = arith.select %31, %37, %38 : vector<8x256xi1>, vector<8x256xf32>
    %40 = vector.shape_cast %39 : vector<8x256xf32> to vector<1x8x256xf32>
    %cst_23 = arith.constant dense<0.000000e+00> : vector<1xf32>
    %41 = vector.multi_reduction <add>, %40, %cst_23 [1, 2] : vector<1x8x256xf32> to vector<1xf32>
    %42 = vector.shape_cast %41 : vector<1xf32> to vector<1x1x1xf32>
    %43 = vector.extract %42[0, 0, 0] : f32 from vector<1x1x1xf32>
    %44 = vector.broadcast %43 : f32 to vector<1x1xf32>
    %c0_24 = arith.constant 0 : index
    %c0_25 = arith.constant 0 : index
    %45 = vector.load %arg9[%c0_24, %c0_25] : memref<1x1xf32, #tpu.memory_space<vmem>>, vector<1x1xf32>
    tpu.vector_store %arg9[%c0_24, %c0_25], %44 {strides = array<i32>} : memref<1x1xf32, #tpu.memory_space<vmem>>, vector<1x1xf32>,
    return
  }
}

</mosaic_0001>

<llo_original>
// kernel: variational_encoder_forward.2
$region0: #{variational_encoder_forward.2}
  #allocation0 [shape = 'u32[]', space=smem, size = 0x4, offset = 0x4, fixed_abs, tag = 'smem constant byte address 0x4 - core index']
  #allocation1 [shape = 'u32[144,128]{1,0:T(1,128)}', space=vmem, size = 0x12000, scoped, tag = 'internal scratch']
  #allocation2 [shape = 'f32[8,1024]{1,0:T(8,128)}', space=vmem, size = 0x8000, scoped, tag = 'scratch operand']
  %s0 = inlined_call_operand.vmem [shape: bf16[8,1024], index: 0, kind: input, shape index: {}]
  %s1 = inlined_call_operand.hbm [shape: bf16[1024,2048], index: 1, kind: input, shape index: {}]
  %s2 = inlined_call_operand.hbm [shape: f32[1,2048], index: 2, kind: input, shape index: {}]
  %s3 = inlined_call_operand.vmem [shape: bf16[8,2048], index: 3, kind: output, shape index: {}]
  %s4 = sld [smem:[#allocation0]]
  $region61: #{variational_encoder_forward.2} parent=0
    _
  %s6 = ssub.s32 1, %s4
  %s7 = scalar_select 0, %s6, %s4
  $region1: #{variational_encoder_forward.2} parent=0
    #allocation3 [shape = 'u8[4194304]{0}', space=vmem, size = 0x400000, scoped, tag = 'input window, operand 1']
    #allocation4 [shape = 's32[2]{0}', space=sflag, size = 0x8, scoped, tag = 'scoped memory for variational_encoder_forward.2']
    #allocation5 [shape = 'u8[8192]{0}', space=vmem, size = 0x2000, scoped, tag = 'input window, operand 2']
    #allocation6 [shape = 's32[2]{0}', space=sflag, size = 0x8, scoped, tag = 'scoped memory for variational_encoder_forward.2']
    %8 = vsyncpa [#allocation4], 0
    %s9 = scalar_lea.sflag [#allocation4], 1
    %10 = vsyncpa %s9, 0
    %11 = vsyncpa [#allocation6], 0
    %s12 = scalar_lea.sflag [#allocation6], 1
    %13 = vsyncpa %s12, 0
    loop: start=0, step=1, limit=4
    $region2: #{variational_encoder_forward.2} parent=1 // loop_pre_header
      _
    $region3: #{variational_encoder_forward.2} parent=1 // loop_header
      %s15 = sphi 0, %s19
      %p16 = scmp.ge.s32.totalorder %s15, 4
      %s22 = sphi 0, %s34
      %s23 = sphi 0, %s30
      %s24 = sphi 0, %s22
      %s25 = sphi 0, %s23
      %s26 = sphi 0, %s24
      %s27 = sphi 0, %s25
      %s37 = sphi 0, %s39
      %s40 = sphi 0, %s37
      %s41 = sphi 0, %s40
      %s57 = sphi 0, %s41
      %s65 = sphi 0, %s67
      %s68 = sphi 0, %s65
      %s69 = sphi 0, %s68
      %s85 = sphi 0, %s69
      %s91 = sphi 0, %s93
      %s94 = sphi 0, %s91
      %s95 = sphi 0, %s94
      %s111 = sphi 0, %s95
      %s117 = sphi 0, %s119
      %s120 = sphi 0, %s117
      %s121 = sphi 0, %s120
      %s137 = sphi 0, %s121
    $region4: #{variational_encoder_forward.2} parent=1 // loop_header_branch
      %18 = sbr.rel (%p16) target = $region8
    $region5: #{variational_encoder_forward.2} parent=1 // loop_body
      %s20 = ssub.s32 %s15, 1
      %s21 = ssub.s32 %s15, 2
      %s28 = sadd.s32 1, %s23
      %p29 = scmp.ge.s32.totalorder %s28, 1
      %s30 = scalar_select %p29, 0, %s28
      %s31 = sadd.s32 1, %s22
      %s32 = scalar_select %p29, %s31, %s22
      %p33 = scmp.ge.s32.totalorder %s32, 2
      %s34 = scalar_select %p33, 0, %s32
      %s35 = ssub.s32 %s23, %s30
      %p36 = scmp.eq.s32.totalorder %s35, 0
      %s38 = sadd.s32 %s37, 1
      %s39 = scalar_select %p36, %s37, %s38
      %p42 = pneg %p36
      %p43 = scmp.eq.s32.totalorder %s15, 1
      %p44 = por %p42, %p43
      %p45 = scmp.ne.s32.totalorder %s37, %s40
      %p46 = scmp.eq.s32.totalorder %s15, 0
      %p47 = por %p45, %p46
      %p48 = scmp.ne.s32.totalorder %s37, %s40
      %p49 = scmp.eq.s32.totalorder %s20, 1
      %p50 = por %p48, %p49
      %p51 = scmp.ne.s32.totalorder %s40, %s41
      %p52 = scmp.eq.s32.totalorder %s20, 0
      %p53 = por %p51, %p52
      %p54 = scmp.ne.s32.totalorder %s40, %s41
      %p55 = scmp.eq.s32.totalorder %s21, 1
      %p56 = por %p54, %p55
      %p58 = scmp.ne.s32.totalorder %s41, %s57
      %p59 = scmp.eq.s32.totalorder %s21, 0
      %p60 = por %p58, %p59
      %s61 = ssub.s32 %s23, %s30
      %s62 = ssub.s32 %s22, %s34
      %s63 = sor.u32 %s61, %s62
      %p64 = scmp.eq.s32.totalorder %s63, 0
      %s66 = sadd.s32 %s65, 1
      %s67 = scalar_select %p64, %s65, %s66
      %p70 = pneg %p64
      %p71 = scmp.eq.s32.totalorder %s15, 1
      %p72 = por %p70, %p71
      %p73 = scmp.ne.s32.totalorder %s65, %s68
      %p74 = scmp.eq.s32.totalorder %s15, 0
      %p75 = por %p73, %p74
      %p76 = scmp.ne.s32.totalorder %s65, %s68
      %p77 = scmp.eq.s32.totalorder %s20, 1
      %p78 = por %p76, %p77
      %p79 = scmp.ne.s32.totalorder %s68, %s69
      %p80 = scmp.eq.s32.totalorder %s20, 0
      %p81 = por %p79, %p80
      %p82 = scmp.ne.s32.totalorder %s68, %s69
      %p83 = scmp.eq.s32.totalorder %s21, 1
      %p84 = por %p82, %p83
      %p86 = scmp.ne.s32.totalorder %s69, %s85
      %p87 = scmp.eq.s32.totalorder %s21, 0
      %p88 = por %p86, %p87
      %s89 = ssub.s32 %s22, %s34
      %p90 = scmp.eq.s32.totalorder %s89, 0
      %s92 = sadd.s32 %s91, 1
      %s93 = scalar_select %p90, %s91, %s92
      %p96 = pneg %p90
      %p97 = scmp.eq.s32.totalorder %s15, 1
      %p98 = por %p96, %p97
      %p99 = scmp.ne.s32.totalorder %s91, %s94
      %p100 = scmp.eq.s32.totalorder %s15, 0
      %p101 = por %p99, %p100
      %p102 = scmp.ne.s32.totalorder %s91, %s94
      %p103 = scmp.eq.s32.totalorder %s20, 1
      %p104 = por %p102, %p103
      %p105 = scmp.ne.s32.totalorder %s94, %s95
      %p106 = scmp.eq.s32.totalorder %s20, 0
      %p107 = por %p105, %p106
      %p108 = scmp.ne.s32.totalorder %s94, %s95
      %p109 = scmp.eq.s32.totalorder %s21, 1
      %p110 = por %p108, %p109
      %p112 = scmp.ne.s32.totalorder %s95, %s111
      %p113 = scmp.eq.s32.totalorder %s21, 0
      %p114 = por %p112, %p113
      %s115 = ssub.s32 %s22, %s34
      %p116 = scmp.eq.s32.totalorder %s115, 0
      %s118 = sadd.s32 %s117, 1
      %s119 = scalar_select %p116, %s117, %s118
      %p122 = pneg %p116
      %p123 = scmp.eq.s32.totalorder %s15, 1
      %p124 = por %p122, %p123
      %p125 = scmp.ne.s32.totalorder %s117, %s120
      %p126 = scmp.eq.s32.totalorder %s15, 0
      %p127 = por %p125, %p126
      %p128 = scmp.ne.s32.totalorder %s117, %s120
      %p129 = scmp.eq.s32.totalorder %s20, 1
      %p130 = por %p128, %p129
      %p131 = scmp.ne.s32.totalorder %s120, %s121
      %p132 = scmp.eq.s32.totalorder %s20, 0
      %p133 = por %p131, %p132
      %p134 = scmp.ne.s32.totalorder %s120, %s121
      %p135 = scmp.eq.s32.totalorder %s21, 1
      %p136 = por %p134, %p135
      %p138 = scmp.ne.s32.totalorder %s121, %s137
      %p139 = scmp.eq.s32.totalorder %s21, 0
      %p140 = por %p138, %p139
      %p141 = scmp.le.s32.totalorder 1, %s15
      %p142 = scmp.lt.s32.totalorder %s15, 3
      %p143 = pnand %p141, %p142
      %p144 = pneg %p143
      // Predicated region
      $region9: #{variational_encoder_forward.2} parent=5 // pred_check
        _
      $region10: #{variational_encoder_forward.2} parent=5 // pred_check_branch
        %146 = sbr.rel (%p143) target = $region12
      $region11: #{variational_encoder_forward.2} parent=5 // pred_region
        %s147 = ssub.s32 %s15, 1
        // Predicated region
        $region13: #{variational_encoder_forward.2} parent=11 // pred_check
          %p148 = pneg %p53
        $region14: #{variational_encoder_forward.2} parent=11 // pred_check_branch
          %150 = sbr.rel (%p148) target = $region16
        $region15: #{variational_encoder_forward.2} parent=11 // pred_region
          %s151 = smul.u32 8, %s25
          %p152 = scmp.lt.s32.totalorder %s151, 7
          %s153 = scalar_select %p152, %s151, 7
          %s154 = smul.addr %s153, 4
          %s155 = scalar_lea.vmem %s0, %s154
          %s156 = smul.u32 8, %s25
        $region16: #{variational_encoder_forward.2} parent=11 // pred_fallthru
          _
      $region12: #{variational_encoder_forward.2} parent=5 // pred_fallthru
        _
      %p157 = scmp.lt.s32.totalorder %s15, 2
      // Predicated region
      $region17: #{variational_encoder_forward.2} parent=5 // pred_check
        %p158 = pneg %p157
      $region18: #{variational_encoder_forward.2} parent=5 // pred_check_branch
        %160 = sbr.rel (%p158) target = $region20
      $region19: #{variational_encoder_forward.2} parent=5 // pred_region
        // Predicated region
        $region21: #{variational_encoder_forward.2} parent=19 // pred_check
          %p161 = pneg %p75
        $region22: #{variational_encoder_forward.2} parent=19 // pred_check_branch
          %163 = sbr.rel (%p161) target = $region24
        $region23: #{variational_encoder_forward.2} parent=19 // pred_region
          %s164 = sand.u32 %s65, 1
          %s165 = scalar_lea.sflag [#allocation4], %s164
          %s166 = sand.u32 %s65, 1
          %s167 = smul.addr %s166, 4096
          %s168 = scalar_lea.vmem [#allocation3], %s167
          %s169 = smul.u32 128, %s23
          %s170 = smul.u32 8, %s22
          %s172 = ssub.s32 65536, 65536
          %173 = vsyncadd %s165, %s172
          %s174 = smul.addr %s169, 16
          %s175 = sadd.s32 %s170, %s174
          %s176 = smul.addr %s175, 64
          %s177 = scalar_lea.hbm %s1, %s176
          %s178 = sshll.u32 %s168, 4
          %s179 = int_to_ptr.vmem [resolvable:$true] %s178
          %184 = dma.hbm_to_vmem [thread:$0]  %s177, 65536, %s179, %s165, 1024, 512, 32
        $region24: #{variational_encoder_forward.2} parent=19 // pred_fallthru
          _
        // Predicated region
        $region25: #{variational_encoder_forward.2} parent=19 // pred_check
          %p185 = pneg %p101
        $region26: #{variational_encoder_forward.2} parent=19 // pred_check_branch
          %187 = sbr.rel (%p185) target = $region28
        $region27: #{variational_encoder_forward.2} parent=19 // pred_region
          %s188 = sand.u32 %s91, 1
          %s189 = scalar_lea.sflag [#allocation6], %s188
          %s190 = sand.u32 %s91, 1
          %s191 = smul.addr %s190, 8
          %s192 = scalar_lea.vmem [#allocation5], %s191
          %s193 = smul.u32 8, %s22
          %s195 = ssub.s32 128, 128
          %196 = vsyncadd %s189, %s195
          %s197 = smul.addr %s193, 16
          %s198 = scalar_lea.hbm %s2, %s197
          %s200 = sshll.u32 %s192, 4
          %s201 = int_to_ptr.vmem [resolvable:$true] %s200
          %203 = dma.hbm_to_vmem [thread:$0]  %s198, 128, %s201, %s189
        $region28: #{variational_encoder_forward.2} parent=19 // pred_fallthru
          _
      $region20: #{variational_encoder_forward.2} parent=5 // pred_fallthru
        _
      %p204 = scmp.le.s32.totalorder 1, %s15
      %p205 = scmp.lt.s32.totalorder %s15, 3
      %p206 = pnand %p204, %p205
      %p207 = pneg %p206
      // Predicated region
      $region29: #{variational_encoder_forward.2} parent=5 // pred_check
        _
      $region30: #{variational_encoder_forward.2} parent=5 // pred_check_branch
        %209 = sbr.rel (%p206) target = $region32
      $region31: #{variational_encoder_forward.2} parent=5 // pred_region
        %s210 = ssub.s32 %s15, 1
        %s211 = sand.u32 %s68, 1
        %s212 = scalar_lea.sflag [#allocation4], %s211
        %s213 = sand.u32 %s68, 1
        %s214 = smul.addr %s213, 4096
        %s215 = scalar_lea.vmem [#allocation3], %s214
        // Predicated region
        $region33: #{variational_encoder_forward.2} parent=31 // pred_check
          %p216 = pneg %p81
        $region34: #{variational_encoder_forward.2} parent=31 // pred_check_branch
          %218 = sbr.rel (%p216) target = $region36
        $region35: #{variational_encoder_forward.2} parent=31 // pred_region
          %219 = dma.done %s212, 65536
        $region36: #{variational_encoder_forward.2} parent=31 // pred_fallthru
          _
        %s220 = sand.u32 %s94, 1
        %s221 = scalar_lea.sflag [#allocation6], %s220
        %s222 = sand.u32 %s94, 1
        %s223 = smul.addr %s222, 8
        %s224 = scalar_lea.vmem [#allocation5], %s223
        // Predicated region
        $region37: #{variational_encoder_forward.2} parent=31 // pred_check
          %p225 = pneg %p107
        $region38: #{variational_encoder_forward.2} parent=31 // pred_check_branch
          %227 = sbr.rel (%p225) target = $region40
        $region39: #{variational_encoder_forward.2} parent=31 // pred_region
          %228 = dma.done %s221, 128
        $region40: #{variational_encoder_forward.2} parent=31 // pred_fallthru
          _
        %s229 = smul.u32 8, %s25
        %p230 = scmp.lt.s32.totalorder %s229, 7
        %s231 = scalar_select %p230, %s229, 7
        %s232 = smul.addr %s231, 4
        %s233 = scalar_lea.vmem %s0, %s232
        %p234 = pneg %p53
        %p235 = pneg %p50
        %s236 = sand.u32 %s68, 1
        %s237 = scalar_lea.sflag [#allocation4], %s236
        %s238 = sand.u32 %s68, 1
        %s239 = smul.addr %s238, 4096
        %s240 = scalar_lea.vmem [#allocation3], %s239
        %p241 = pneg %p81
        %p242 = pneg %p78
        %s243 = sand.u32 %s94, 1
        %s244 = scalar_lea.sflag [#allocation6], %s243
        %s245 = sand.u32 %s94, 1
        %s246 = smul.addr %s245, 8
        %s247 = scalar_lea.vmem [#allocation5], %s246
        %p248 = pneg %p107
        %p249 = pneg %p104
        %p250 = pneg %p133
        %p251 = pneg %p130
        %s252 = smul.u32 8, %s24
        %p253 = scmp.lt.s32.totalorder %s252, 15
        %s254 = scalar_select %p253, %s252, 15
        %s255 = smul.addr %s254, 4
        %s256 = scalar_lea.vmem %s3, %s255
        %s257 = smul.u32 8, %s25
        %p258 = scmp.lt.s32.totalorder %s257, 7
        %s259 = scalar_select %p258, %s257, 7
        %s260 = smul.addr %s259, 4
        %s261 = scalar_lea.vmem %s0, %s260
        %s262 = smul.u32 8, %s25
        %s263 = smul.u32 128, %s25
        %s264 = smul.u32 8, %s24
        %s265 = smul.u32 8, %s24
        %s266 = smul.u32 8, %s24
        %p267 = scmp.lt.s32.totalorder %s266, 15
        %s268 = scalar_select %p267, %s266, 15
        %s269 = smul.addr %s268, 4
        %s270 = scalar_lea.vmem %s3, %s269
        %s271 = smul.u32 8, %s24
        %p272 = scmp.eq.s32.totalorder %s25, 0
        // Predicated region
        $region41: #{variational_encoder_forward.2} parent=31 // pred_check
          %p273 = pneg %p272
        $region42: #{variational_encoder_forward.2} parent=31 // pred_check_branch
          %275 = sbr.rel (%p273) target = $region44
        $region43: #{variational_encoder_forward.2} parent=31 // pred_region
          %276 = vst [vmem:[#allocation2] sm:$0xff] 0.0
          %277 = vst [vmem:[#allocation2 + $0x8] sm:$0xff] 0.0
          %278 = vst [vmem:[#allocation2 + $0x10] sm:$0xff] 0.0
          %279 = vst [vmem:[#allocation2 + $0x18] sm:$0xff] 0.0
          %280 = vst [vmem:[#allocation2 + $0x20] sm:$0xff] 0.0
          %281 = vst [vmem:[#allocation2 + $0x28] sm:$0xff] 0.0
          %282 = vst [vmem:[#allocation2 + $0x30] sm:$0xff] 0.0
          %283 = vst [vmem:[#allocation2 + $0x38] sm:$0xff] 0.0
        $region44: #{variational_encoder_forward.2} parent=31 // pred_fallthru
          _
        %v284 = vld [vmem:[#allocation2] sm:$0xff]
        %v285 = vld [vmem:[#allocation2 + $0x8] sm:$0xff]
        %v286 = vld [vmem:[#allocation2 + $0x10] sm:$0xff]
        %v287 = vld [vmem:[#allocation2 + $0x18] sm:$0xff]
        %v288 = vld [vmem:[#allocation2 + $0x20] sm:$0xff]
        %v289 = vld [vmem:[#allocation2 + $0x28] sm:$0xff]
        %v290 = vld [vmem:[#allocation2 + $0x30] sm:$0xff]
        %v291 = vld [vmem:[#allocation2 + $0x38] sm:$0xff]
        %v292 = vld [vmem:[%s261] sm:$0xff]
        %v293 = vld [vmem:[%s261 + $0x8] sm:$0xff]
        %v294 = vld [vmem:[%s261 + $0x10] sm:$0xff]
        %v295 = vld [vmem:[%s261 + $0x18] sm:$0xff]
        %v296 = vld [vmem:[%s215] sm:$0xff]
        %v297 = vld [vmem:[%s215 + $0x8] sm:$0xff]
        %v298 = vld [vmem:[%s215 + $0x10] sm:$0xff]
        %v299 = vld [vmem:[%s215 + $0x18] sm:$0xff]
        %v300 = vld [vmem:[%s215 + $0x20] sm:$0xff]
        %v301 = vld [vmem:[%s215 + $0x28] sm:$0xff]
        %v302 = vld [vmem:[%s215 + $0x30] sm:$0xff]
        %v303 = vld [vmem:[%s215 + $0x38] sm:$0xff]
        %v304 = vld [vmem:[%s215 + $0x40] sm:$0xff]
        %v305 = vld [vmem:[%s215 + $0x48] sm:$0xff]
        %v306 = vld [vmem:[%s215 + $0x50] sm:$0xff]
        %v307 = vld [vmem:[%s215 + $0x58] sm:$0xff]
        %v308 = vld [vmem:[%s215 + $0x60] sm:$0xff]
        %v309 = vld [vmem:[%s215 + $0x68] sm:$0xff]
        %v310 = vld [vmem:[%s215 + $0x70] sm:$0xff]
        %v311 = vld [vmem:[%s215 + $0x78] sm:$0xff]
        %v312 = vld [vmem:[%s215 + $0x80] sm:$0xff]
        %v313 = vld [vmem:[%s215 + $0x88] sm:$0xff]
        %v314 = vld [vmem:[%s215 + $0x90] sm:$0xff]
        %v315 = vld [vmem:[%s215 + $0x98] sm:$0xff]
        %v316 = vld [vmem:[%s215 + $0xa0] sm:$0xff]
        %v317 = vld [vmem:[%s215 + $0xa8] sm:$0xff]
        %v318 = vld [vmem:[%s215 + $0xb0] sm:$0xff]
        %v319 = vld [vmem:[%s215 + $0xb8] sm:$0xff]
        %v320 = vld [vmem:[%s215 + $0xc0] sm:$0xff]
        %v321 = vld [vmem:[%s215 + $0xc8] sm:$0xff]
        %v322 = vld [vmem:[%s215 + $0xd0] sm:$0xff]
        %v323 = vld [vmem:[%s215 + $0xd8] sm:$0xff]
        %v324 = vld [vmem:[%s215 + $0xe0] sm:$0xff]
        %v325 = vld [vmem:[%s215 + $0xe8] sm:$0xff]
        %v326 = vld [vmem:[%s215 + $0xf0] sm:$0xff]
        %v327 = vld [vmem:[%s215 + $0xf8] sm:$0xff]
        %v328 = vld [vmem:[%s215 + $0x100] sm:$0xff]
        %v329 = vld [vmem:[%s215 + $0x108] sm:$0xff]
        %v330 = vld [vmem:[%s215 + $0x110] sm:$0xff]
        %v331 = vld [vmem:[%s215 + $0x118] sm:$0xff]
        %v332 = vld [vmem:[%s215 + $0x120] sm:$0xff]
        %v333 = vld [vmem:[%s215 + $0x128] sm:$0xff]
        %v334 = vld [vmem:[%s215 + $0x130] sm:$0xff]
        %v335 = vld [vmem:[%s215 + $0x138] sm:$0xff]
        %v336 = vld [vmem:[%s215 + $0x140] sm:$0xff]
        %v337 = vld [vmem:[%s215 + $0x148] sm:$0xff]
        %v338 = vld [vmem:[%s215 + $0x150] sm:$0xff]
        %v339 = vld [vmem:[%s215 + $0x158] sm:$0xff]
        %v340 = vld [vmem:[%s215 + $0x160] sm:$0xff]
        %v341 = vld [vmem:[%s215 + $0x168] sm:$0xff]
        %v342 = vld [vmem:[%s215 + $0x170] sm:$0xff]
        %v343 = vld [vmem:[%s215 + $0x178] sm:$0xff]
        %v344 = vld [vmem:[%s215 + $0x180] sm:$0xff]
        %v345 = vld [vmem:[%s215 + $0x188] sm:$0xff]
        %v346 = vld [vmem:[%s215 + $0x190] sm:$0xff]
        %v347 = vld [vmem:[%s215 + $0x198] sm:$0xff]
        %v348 = vld [vmem:[%s215 + $0x1a0] sm:$0xff]
        %v349 = vld [vmem:[%s215 + $0x1a8] sm:$0xff]
        %v350 = vld [vmem:[%s215 + $0x1b0] sm:$0xff]
        %v351 = vld [vmem:[%s215 + $0x1b8] sm:$0xff]
        %v352 = vld [vmem:[%s215 + $0x1c0] sm:$0xff]
        %v353 = vld [vmem:[%s215 + $0x1c8] sm:$0xff]
        %v354 = vld [vmem:[%s215 + $0x1d0] sm:$0xff]
        %v355 = vld [vmem:[%s215 + $0x1d8] sm:$0xff]
        %v356 = vld [vmem:[%s215 + $0x1e0] sm:$0xff]
        %v357 = vld [vmem:[%s215 + $0x1e8] sm:$0xff]
        %v358 = vld [vmem:[%s215 + $0x1f0] sm:$0xff]
        %v359 = vld [vmem:[%s215 + $0x1f8] sm:$0xff]
        %v360 = vld [vmem:[%s215 + $0x200] sm:$0xff]
        %v361 = vld [vmem:[%s215 + $0x208] sm:$0xff]
        %v362 = vld [vmem:[%s215 + $0x210] sm:$0xff]
        %v363 = vld [vmem:[%s215 + $0x218] sm:$0xff]
        %v364 = vld [vmem:[%s215 + $0x220] sm:$0xff]
        %v365 = vld [vmem:[%s215 + $0x228] sm:$0xff]
        %v366 = vld [vmem:[%s215 + $0x230] sm:$0xff]
        %v367 = vld [vmem:[%s215 + $0x238] sm:$0xff]
        %v368 = vld [vmem:[%s215 + $0x240] sm:$0xff]
        %v369 = vld [vmem:[%s215 + $0x248] sm:$0xff]
        %v370 = vld [vmem:[%s215 + $0x250] sm:$0xff]
        %v371 = vld [vmem:[%s215 + $0x258] sm:$0xff]
        %v372 = vld [vmem:[%s215 + $0x260] sm:$0xff]
        %v373 = vld [vmem:[%s215 + $0x268] sm:$0xff]
        %v374 = vld [vmem:[%s215 + $0x270] sm:$0xff]
        %v375 = vld [vmem:[%s215 + $0x278] sm:$0xff]
        %v376 = vld [vmem:[%s215 + $0x280] sm:$0xff]
        %v377 = vld [vmem:[%s215 + $0x288] sm:$0xff]
        %v378 = vld [vmem:[%s215 + $0x290] sm:$0xff]
        %v379 = vld [vmem:[%s215 + $0x298] sm:$0xff]
        %v380 = vld [vmem:[%s215 + $0x2a0] sm:$0xff]
        %v381 = vld [vmem:[%s215 + $0x2a8] sm:$0xff]
        %v382 = vld [vmem:[%s215 + $0x2b0] sm:$0xff]
        %v383 = vld [vmem:[%s215 + $0x2b8] sm:$0xff]
        %v384 = vld [vmem:[%s215 + $0x2c0] sm:$0xff]
        %v385 = vld [vmem:[%s215 + $0x2c8] sm:$0xff]
        %v386 = vld [vmem:[%s215 + $0x2d0] sm:$0xff]
        %v387 = vld [vmem:[%s215 + $0x2d8] sm:$0xff]
        %v388 = vld [vmem:[%s215 + $0x2e0] sm:$0xff]
        %v389 = vld [vmem:[%s215 + $0x2e8] sm:$0xff]
        %v390 = vld [vmem:[%s215 + $0x2f0] sm:$0xff]
        %v391 = vld [vmem:[%s215 + $0x2f8] sm:$0xff]
        %v392 = vld [vmem:[%s215 + $0x300] sm:$0xff]
        %v393 = vld [vmem:[%s215 + $0x308] sm:$0xff]
        %v394 = vld [vmem:[%s215 + $0x310] sm:$0xff]
        %v395 = vld [vmem:[%s215 + $0x318] sm:$0xff]
        %v396 = vld [vmem:[%s215 + $0x320] sm:$0xff]
        %v397 = vld [vmem:[%s215 + $0x328] sm:$0xff]
        %v398 = vld [vmem:[%s215 + $0x330] sm:$0xff]
        %v399 = vld [vmem:[%s215 + $0x338] sm:$0xff]
        %v400 = vld [vmem:[%s215 + $0x340] sm:$0xff]
        %v401 = vld [vmem:[%s215 + $0x348] sm:$0xff]
        %v402 = vld [vmem:[%s215 + $0x350] sm:$0xff]
        %v403 = vld [vmem:[%s215 + $0x358] sm:$0xff]
        %v404 = vld [vmem:[%s215 + $0x360] sm:$0xff]
        %v405 = vld [vmem:[%s215 + $0x368] sm:$0xff]
        %v406 = vld [vmem:[%s215 + $0x370] sm:$0xff]
        %v407 = vld [vmem:[%s215 + $0x378] sm:$0xff]
        %v408 = vld [vmem:[%s215 + $0x380] sm:$0xff]
        %v409 = vld [vmem:[%s215 + $0x388] sm:$0xff]
        %v410 = vld [vmem:[%s215 + $0x390] sm:$0xff]
        %v411 = vld [vmem:[%s215 + $0x398] sm:$0xff]
        %v412 = vld [vmem:[%s215 + $0x3a0] sm:$0xff]
        %v413 = vld [vmem:[%s215 + $0x3a8] sm:$0xff]
        %v414 = vld [vmem:[%s215 + $0x3b0] sm:$0xff]
        %v415 = vld [vmem:[%s215 + $0x3b8] sm:$0xff]
        %v416 = vld [vmem:[%s215 + $0x3c0] sm:$0xff]
        %v417 = vld [vmem:[%s215 + $0x3c8] sm:$0xff]
        %v418 = vld [vmem:[%s215 + $0x3d0] sm:$0xff]
        %v419 = vld [vmem:[%s215 + $0x3d8] sm:$0xff]
        %v420 = vld [vmem:[%s215 + $0x3e0] sm:$0xff]
        %v421 = vld [vmem:[%s215 + $0x3e8] sm:$0xff]
        %v422 = vld [vmem:[%s215 + $0x3f0] sm:$0xff]
        %v423 = vld [vmem:[%s215 + $0x3f8] sm:$0xff]
        %v424 = vld [vmem:[%s215 + $0x400] sm:$0xff]
        %v425 = vld [vmem:[%s215 + $0x408] sm:$0xff]
        %v426 = vld [vmem:[%s215 + $0x410] sm:$0xff]
        %v427 = vld [vmem:[%s215 + $0x418] sm:$0xff]
        %v428 = vld [vmem:[%s215 + $0x420] sm:$0xff]
        %v429 = vld [vmem:[%s215 + $0x428] sm:$0xff]
        %v430 = vld [vmem:[%s215 + $0x430] sm:$0xff]
        %v431 = vld [vmem:[%s215 + $0x438] sm:$0xff]
        %v432 = vld [vmem:[%s215 + $0x440] sm:$0xff]
        %v433 = vld [vmem:[%s215 + $0x448] sm:$0xff]
        %v434 = vld [vmem:[%s215 + $0x450] sm:$0xff]
        %v435 = vld [vmem:[%s215 + $0x458] sm:$0xff]
        %v436 = vld [vmem:[%s215 + $0x460] sm:$0xff]
        %v437 = vld [vmem:[%s215 + $0x468] sm:$0xff]
        %v438 = vld [vmem:[%s215 + $0x470] sm:$0xff]
        %v439 = vld [vmem:[%s215 + $0x478] sm:$0xff]
        %v440 = vld [vmem:[%s215 + $0x480] sm:$0xff]
        %v441 = vld [vmem:[%s215 + $0x488] sm:$0xff]
        %v442 = vld [vmem:[%s215 + $0x490] sm:$0xff]
        %v443 = vld [vmem:[%s215 + $0x498] sm:$0xff]
        %v444 = vld [vmem:[%s215 + $0x4a0] sm:$0xff]
        %v445 = vld [vmem:[%s215 + $0x4a8] sm:$0xff]
        %v446 = vld [vmem:[%s215 + $0x4b0] sm:$0xff]
        %v447 = vld [vmem:[%s215 + $0x4b8] sm:$0xff]
        %v448 = vld [vmem:[%s215 + $0x4c0] sm:$0xff]
        %v449 = vld [vmem:[%s215 + $0x4c8] sm:$0xff]
        %v450 = vld [vmem:[%s215 + $0x4d0] sm:$0xff]
        %v451 = vld [vmem:[%s215 + $0x4d8] sm:$0xff]
        %v452 = vld [vmem:[%s215 + $0x4e0] sm:$0xff]
        %v453 = vld [vmem:[%s215 + $0x4e8] sm:$0xff]
        %v454 = vld [vmem:[%s215 + $0x4f0] sm:$0xff]
        %v455 = vld [vmem:[%s215 + $0x4f8] sm:$0xff]
        %v456 = vld [vmem:[%s215 + $0x500] sm:$0xff]
        %v457 = vld [vmem:[%s215 + $0x508] sm:$0xff]
        %v458 = vld [vmem:[%s215 + $0x510] sm:$0xff]
        %v459 = vld [vmem:[%s215 + $0x518] sm:$0xff]
        %v460 = vld [vmem:[%s215 + $0x520] sm:$0xff]
        %v461 = vld [vmem:[%s215 + $0x528] sm:$0xff]
        %v462 = vld [vmem:[%s215 + $0x530] sm:$0xff]
        %v463 = vld [vmem:[%s215 + $0x538] sm:$0xff]
        %v464 = vld [vmem:[%s215 + $0x540] sm:$0xff]
        %v465 = vld [vmem:[%s215 + $0x548] sm:$0xff]
        %v466 = vld [vmem:[%s215 + $0x550] sm:$0xff]
        %v467 = vld [vmem:[%s215 + $0x558] sm:$0xff]
        %v468 = vld [vmem:[%s215 + $0x560] sm:$0xff]
        %v469 = vld [vmem:[%s215 + $0x568] sm:$0xff]
        %v470 = vld [vmem:[%s215 + $0x570] sm:$0xff]
        %v471 = vld [vmem:[%s215 + $0x578] sm:$0xff]
        %v472 = vld [vmem:[%s215 + $0x580] sm:$0xff]
        %v473 = vld [vmem:[%s215 + $0x588] sm:$0xff]
        %v474 = vld [vmem:[%s215 + $0x590] sm:$0xff]
        %v475 = vld [vmem:[%s215 + $0x598] sm:$0xff]
        %v476 = vld [vmem:[%s215 + $0x5a0] sm:$0xff]
        %v477 = vld [vmem:[%s215 + $0x5a8] sm:$0xff]
        %v478 = vld [vmem:[%s215 + $0x5b0] sm:$0xff]
        %v479 = vld [vmem:[%s215 + $0x5b8] sm:$0xff]
        %v480 = vld [vmem:[%s215 + $0x5c0] sm:$0xff]
        %v481 = vld [vmem:[%s215 + $0x5c8] sm:$0xff]
        %v482 = vld [vmem:[%s215 + $0x5d0] sm:$0xff]
        %v483 = vld [vmem:[%s215 + $0x5d8] sm:$0xff]
        %v484 = vld [vmem:[%s215 + $0x5e0] sm:$0xff]
        %v485 = vld [vmem:[%s215 + $0x5e8] sm:$0xff]
        %v486 = vld [vmem:[%s215 + $0x5f0] sm:$0xff]
        %v487 = vld [vmem:[%s215 + $0x5f8] sm:$0xff]
        %v488 = vld [vmem:[%s215 + $0x600] sm:$0xff]
        %v489 = vld [vmem:[%s215 + $0x608] sm:$0xff]
        %v490 = vld [vmem:[%s215 + $0x610] sm:$0xff]
        %v491 = vld [vmem:[%s215 + $0x618] sm:$0xff]
        %v492 = vld [vmem:[%s215 + $0x620] sm:$0xff]
        %v493 = vld [vmem:[%s215 + $0x628] sm:$0xff]
        %v494 = vld [vmem:[%s215 + $0x630] sm:$0xff]
        %v495 = vld [vmem:[%s215 + $0x638] sm:$0xff]
        %v496 = vld [vmem:[%s215 + $0x640] sm:$0xff]
        %v497 = vld [vmem:[%s215 + $0x648] sm:$0xff]
        %v498 = vld [vmem:[%s215 + $0x650] sm:$0xff]
        %v499 = vld [vmem:[%s215 + $0x658] sm:$0xff]
        %v500 = vld [vmem:[%s215 + $0x660] sm:$0xff]
        %v501 = vld [vmem:[%s215 + $0x668] sm:$0xff]
        %v502 = vld [vmem:[%s215 + $0x670] sm:$0xff]
        %v503 = vld [vmem:[%s215 + $0x678] sm:$0xff]
        %v504 = vld [vmem:[%s215 + $0x680] sm:$0xff]
        %v505 = vld [vmem:[%s215 + $0x688] sm:$0xff]
        %v506 = vld [vmem:[%s215 + $0x690] sm:$0xff]
        %v507 = vld [vmem:[%s215 + $0x698] sm:$0xff]
        %v508 = vld [vmem:[%s215 + $0x6a0] sm:$0xff]
        %v509 = vld [vmem:[%s215 + $0x6a8] sm:$0xff]
        %v510 = vld [vmem:[%s215 + $0x6b0] sm:$0xff]
        %v511 = vld [vmem:[%s215 + $0x6b8] sm:$0xff]
        %v512 = vld [vmem:[%s215 + $0x6c0] sm:$0xff]
        %v513 = vld [vmem:[%s215 + $0x6c8] sm:$0xff]
        %v514 = vld [vmem:[%s215 + $0x6d0] sm:$0xff]
        %v515 = vld [vmem:[%s215 + $0x6d8] sm:$0xff]
        %v516 = vld [vmem:[%s215 + $0x6e0] sm:$0xff]
        %v517 = vld [vmem:[%s215 + $0x6e8] sm:$0xff]
        %v518 = vld [vmem:[%s215 + $0x6f0] sm:$0xff]
        %v519 = vld [vmem:[%s215 + $0x6f8] sm:$0xff]
        %v520 = vld [vmem:[%s215 + $0x700] sm:$0xff]
        %v521 = vld [vmem:[%s215 + $0x708] sm:$0xff]
        %v522 = vld [vmem:[%s215 + $0x710] sm:$0xff]
        %v523 = vld [vmem:[%s215 + $0x718] sm:$0xff]
        %v524 = vld [vmem:[%s215 + $0x720] sm:$0xff]
        %v525 = vld [vmem:[%s215 + $0x728] sm:$0xff]
        %v526 = vld [vmem:[%s215 + $0x730] sm:$0xff]
        %v527 = vld [vmem:[%s215 + $0x738] sm:$0xff]
        %v528 = vld [vmem:[%s215 + $0x740] sm:$0xff]
        %v529 = vld [vmem:[%s215 + $0x748] sm:$0xff]
        %v530 = vld [vmem:[%s215 + $0x750] sm:$0xff]
        %v531 = vld [vmem:[%s215 + $0x758] sm:$0xff]
        %v532 = vld [vmem:[%s215 + $0x760] sm:$0xff]
        %v533 = vld [vmem:[%s215 + $0x768] sm:$0xff]
        %v534 = vld [vmem:[%s215 + $0x770] sm:$0xff]
        %v535 = vld [vmem:[%s215 + $0x778] sm:$0xff]
        %v536 = vld [vmem:[%s215 + $0x780] sm:$0xff]
        %v537 = vld [vmem:[%s215 + $0x788] sm:$0xff]
        %v538 = vld [vmem:[%s215 + $0x790] sm:$0xff]
        %v539 = vld [vmem:[%s215 + $0x798] sm:$0xff]
        %v540 = vld [vmem:[%s215 + $0x7a0] sm:$0xff]
        %v541 = vld [vmem:[%s215 + $0x7a8] sm:$0xff]
        %v542 = vld [vmem:[%s215 + $0x7b0] sm:$0xff]
        %v543 = vld [vmem:[%s215 + $0x7b8] sm:$0xff]
        %v544 = vld [vmem:[%s215 + $0x7c0] sm:$0xff]
        %v545 = vld [vmem:[%s215 + $0x7c8] sm:$0xff]
        %v546 = vld [vmem:[%s215 + $0x7d0] sm:$0xff]
        %v547 = vld [vmem:[%s215 + $0x7d8] sm:$0xff]
        %v548 = vld [vmem:[%s215 + $0x7e0] sm:$0xff]
        %v549 = vld [vmem:[%s215 + $0x7e8] sm:$0xff]
        %v550 = vld [vmem:[%s215 + $0x7f0] sm:$0xff]
        %v551 = vld [vmem:[%s215 + $0x7f8] sm:$0xff]
        %v552 = vld [vmem:[%s215 + $0x800] sm:$0xff]
        %v553 = vld [vmem:[%s215 + $0x808] sm:$0xff]
        %v554 = vld [vmem:[%s215 + $0x810] sm:$0xff]
        %v555 = vld [vmem:[%s215 + $0x818] sm:$0xff]
        %v556 = vld [vmem:[%s215 + $0x820] sm:$0xff]
        %v557 = vld [vmem:[%s215 + $0x828] sm:$0xff]
        %v558 = vld [vmem:[%s215 + $0x830] sm:$0xff]
        %v559 = vld [vmem:[%s215 + $0x838] sm:$0xff]
        %v560 = vld [vmem:[%s215 + $0x840] sm:$0xff]
        %v561 = vld [vmem:[%s215 + $0x848] sm:$0xff]
        %v562 = vld [vmem:[%s215 + $0x850] sm:$0xff]
        %v563 = vld [vmem:[%s215 + $0x858] sm:$0xff]
        %v564 = vld [vmem:[%s215 + $0x860] sm:$0xff]
        %v565 = vld [vmem:[%s215 + $0x868] sm:$0xff]
        %v566 = vld [vmem:[%s215 + $0x870] sm:$0xff]
        %v567 = vld [vmem:[%s215 + $0x878] sm:$0xff]
        %v568 = vld [vmem:[%s215 + $0x880] sm:$0xff]
        %v569 = vld [vmem:[%s215 + $0x888] sm:$0xff]
        %v570 = vld [vmem:[%s215 + $0x890] sm:$0xff]
        %v571 = vld [vmem:[%s215 + $0x898] sm:$0xff]
        %v572 = vld [vmem:[%s215 + $0x8a0] sm:$0xff]
        %v573 = vld [vmem:[%s215 + $0x8a8] sm:$0xff]
        %v574 = vld [vmem:[%s215 + $0x8b0] sm:$0xff]
        %v575 = vld [vmem:[%s215 + $0x8b8] sm:$0xff]
        %v576 = vld [vmem:[%s215 + $0x8c0] sm:$0xff]
        %v577 = vld [vmem:[%s215 + $0x8c8] sm:$0xff]
        %v578 = vld [vmem:[%s215 + $0x8d0] sm:$0xff]
        %v579 = vld [vmem:[%s215 + $0x8d8] sm:$0xff]
        %v580 = vld [vmem:[%s215 + $0x8e0] sm:$0xff]
        %v581 = vld [vmem:[%s215 + $0x8e8] sm:$0xff]
        %v582 = vld [vmem:[%s215 + $0x8f0] sm:$0xff]
        %v583 = vld [vmem:[%s215 + $0x8f8] sm:$0xff]
        %v584 = vld [vmem:[%s215 + $0x900] sm:$0xff]
        %v585 = vld [vmem:[%s215 + $0x908] sm:$0xff]
        %v586 = vld [vmem:[%s215 + $0x910] sm:$0xff]
        %v587 = vld [vmem:[%s215 + $0x918] sm:$0xff]
        %v588 = vld [vmem:[%s215 + $0x920] sm:$0xff]
        %v589 = vld [vmem:[%s215 + $0x928] sm:$0xff]
        %v590 = vld [vmem:[%s215 + $0x930] sm:$0xff]
        %v591 = vld [vmem:[%s215 + $0x938] sm:$0xff]
        %v592 = vld [vmem:[%s215 + $0x940] sm:$0xff]
        %v593 = vld [vmem:[%s215 + $0x948] sm:$0xff]
        %v594 = vld [vmem:[%s215 + $0x950] sm:$0xff]
        %v595 = vld [vmem:[%s215 + $0x958] sm:$0xff]
        %v596 = vld [vmem:[%s215 + $0x960] sm:$0xff]
        %v597 = vld [vmem:[%s215 + $0x968] sm:$0xff]
        %v598 = vld [vmem:[%s215 + $0x970] sm:$0xff]
        %v599 = vld [vmem:[%s215 + $0x978] sm:$0xff]
        %v600 = vld [vmem:[%s215 + $0x980] sm:$0xff]
        %v601 = vld [vmem:[%s215 + $0x988] sm:$0xff]
        %v602 = vld [vmem:[%s215 + $0x990] sm:$0xff]
        %v603 = vld [vmem:[%s215 + $0x998] sm:$0xff]
        %v604 = vld [vmem:[%s215 + $0x9a0] sm:$0xff]
        %v605 = vld [vmem:[%s215 + $0x9a8] sm:$0xff]
        %v606 = vld [vmem:[%s215 + $0x9b0] sm:$0xff]
        %v607 = vld [vmem:[%s215 + $0x9b8] sm:$0xff]
        %v608 = vld [vmem:[%s215 + $0x9c0] sm:$0xff]
        %v609 = vld [vmem:[%s215 + $0x9c8] sm:$0xff]
        %v610 = vld [vmem:[%s215 + $0x9d0] sm:$0xff]
        %v611 = vld [vmem:[%s215 + $0x9d8] sm:$0xff]
        %v612 = vld [vmem:[%s215 + $0x9e0] sm:$0xff]
        %v613 = vld [vmem:[%s215 + $0x9e8] sm:$0xff]
        %v614 = vld [vmem:[%s215 + $0x9f0] sm:$0xff]
        %v615 = vld [vmem:[%s215 + $0x9f8] sm:$0xff]
        %v616 = vld [vmem:[%s215 + $0xa00] sm:$0xff]
        %v617 = vld [vmem:[%s215 + $0xa08] sm:$0xff]
        %v618 = vld [vmem:[%s215 + $0xa10] sm:$0xff]
        %v619 = vld [vmem:[%s215 + $0xa18] sm:$0xff]
        %v620 = vld [vmem:[%s215 + $0xa20] sm:$0xff]
        %v621 = vld [vmem:[%s215 + $0xa28] sm:$0xff]
        %v622 = vld [vmem:[%s215 + $0xa30] sm:$0xff]
        %v623 = vld [vmem:[%s215 + $0xa38] sm:$0xff]
        %v624 = vld [vmem:[%s215 + $0xa40] sm:$0xff]
        %v625 = vld [vmem:[%s215 + $0xa48] sm:$0xff]
        %v626 = vld [vmem:[%s215 + $0xa50] sm:$0xff]
        %v627 = vld [vmem:[%s215 + $0xa58] sm:$0xff]
        %v628 = vld [vmem:[%s215 + $0xa60] sm:$0xff]
        %v629 = vld [vmem:[%s215 + $0xa68] sm:$0xff]
        %v630 = vld [vmem:[%s215 + $0xa70] sm:$0xff]
        %v631 = vld [vmem:[%s215 + $0xa78] sm:$0xff]
        %v632 = vld [vmem:[%s215 + $0xa80] sm:$0xff]
        %v633 = vld [vmem:[%s215 + $0xa88] sm:$0xff]
        %v634 = vld [vmem:[%s215 + $0xa90] sm:$0xff]
        %v635 = vld [vmem:[%s215 + $0xa98] sm:$0xff]
        %v636 = vld [vmem:[%s215 + $0xaa0] sm:$0xff]
        %v637 = vld [vmem:[%s215 + $0xaa8] sm:$0xff]
        %v638 = vld [vmem:[%s215 + $0xab0] sm:$0xff]
        %v639 = vld [vmem:[%s215 + $0xab8] sm:$0xff]
        %v640 = vld [vmem:[%s215 + $0xac0] sm:$0xff]
        %v641 = vld [vmem:[%s215 + $0xac8] sm:$0xff]
        %v642 = vld [vmem:[%s215 + $0xad0] sm:$0xff]
        %v643 = vld [vmem:[%s215 + $0xad8] sm:$0xff]
        %v644 = vld [vmem:[%s215 + $0xae0] sm:$0xff]
        %v645 = vld [vmem:[%s215 + $0xae8] sm:$0xff]
        %v646 = vld [vmem:[%s215 + $0xaf0] sm:$0xff]
        %v647 = vld [vmem:[%s215 + $0xaf8] sm:$0xff]
        %v648 = vld [vmem:[%s215 + $0xb00] sm:$0xff]
        %v649 = vld [vmem:[%s215 + $0xb08] sm:$0xff]
        %v650 = vld [vmem:[%s215 + $0xb10] sm:$0xff]
        %v651 = vld [vmem:[%s215 + $0xb18] sm:$0xff]
        %v652 = vld [vmem:[%s215 + $0xb20] sm:$0xff]
        %v653 = vld [vmem:[%s215 + $0xb28] sm:$0xff]
        %v654 = vld [vmem:[%s215 + $0xb30] sm:$0xff]
        %v655 = vld [vmem:[%s215 + $0xb38] sm:$0xff]
        %v656 = vld [vmem:[%s215 + $0xb40] sm:$0xff]
        %v657 = vld [vmem:[%s215 + $0xb48] sm:$0xff]
        %v658 = vld [vmem:[%s215 + $0xb50] sm:$0xff]
        %v659 = vld [vmem:[%s215 + $0xb58] sm:$0xff]
        %v660 = vld [vmem:[%s215 + $0xb60] sm:$0xff]
        %v661 = vld [vmem:[%s215 + $0xb68] sm:$0xff]
        %v662 = vld [vmem:[%s215 + $0xb70] sm:$0xff]
        %v663 = vld [vmem:[%s215 + $0xb78] sm:$0xff]
        %v664 = vld [vmem:[%s215 + $0xb80] sm:$0xff]
        %v665 = vld [vmem:[%s215 + $0xb88] sm:$0xff]
        %v666 = vld [vmem:[%s215 + $0xb90] sm:$0xff]
        %v667 = vld [vmem:[%s215 + $0xb98] sm:$0xff]
        %v668 = vld [vmem:[%s215 + $0xba0] sm:$0xff]
        %v669 = vld [vmem:[%s215 + $0xba8] sm:$0xff]
        %v670 = vld [vmem:[%s215 + $0xbb0] sm:$0xff]
        %v671 = vld [vmem:[%s215 + $0xbb8] sm:$0xff]
        %v672 = vld [vmem:[%s215 + $0xbc0] sm:$0xff]
        %v673 = vld [vmem:[%s215 + $0xbc8] sm:$0xff]
        %v674 = vld [vmem:[%s215 + $0xbd0] sm:$0xff]
        %v675 = vld [vmem:[%s215 + $0xbd8] sm:$0xff]
        %v676 = vld [vmem:[%s215 + $0xbe0] sm:$0xff]
        %v677 = vld [vmem:[%s215 + $0xbe8] sm:$0xff]
        %v678 = vld [vmem:[%s215 + $0xbf0] sm:$0xff]
        %v679 = vld [vmem:[%s215 + $0xbf8] sm:$0xff]
        %v680 = vld [vmem:[%s215 + $0xc00] sm:$0xff]
        %v681 = vld [vmem:[%s215 + $0xc08] sm:$0xff]
        %v682 = vld [vmem:[%s215 + $0xc10] sm:$0xff]
        %v683 = vld [vmem:[%s215 + $0xc18] sm:$0xff]
        %v684 = vld [vmem:[%s215 + $0xc20] sm:$0xff]
        %v685 = vld [vmem:[%s215 + $0xc28] sm:$0xff]
        %v686 = vld [vmem:[%s215 + $0xc30] sm:$0xff]
        %v687 = vld [vmem:[%s215 + $0xc38] sm:$0xff]
        %v688 = vld [vmem:[%s215 + $0xc40] sm:$0xff]
        %v689 = vld [vmem:[%s215 + $0xc48] sm:$0xff]
        %v690 = vld [vmem:[%s215 + $0xc50] sm:$0xff]
        %v691 = vld [vmem:[%s215 + $0xc58] sm:$0xff]
        %v692 = vld [vmem:[%s215 + $0xc60] sm:$0xff]
        %v693 = vld [vmem:[%s215 + $0xc68] sm:$0xff]
        %v694 = vld [vmem:[%s215 + $0xc70] sm:$0xff]
        %v695 = vld [vmem:[%s215 + $0xc78] sm:$0xff]
        %v696 = vld [vmem:[%s215 + $0xc80] sm:$0xff]
        %v697 = vld [vmem:[%s215 + $0xc88] sm:$0xff]
        %v698 = vld [vmem:[%s215 + $0xc90] sm:$0xff]
        %v699 = vld [vmem:[%s215 + $0xc98] sm:$0xff]
        %v700 = vld [vmem:[%s215 + $0xca0] sm:$0xff]
        %v701 = vld [vmem:[%s215 + $0xca8] sm:$0xff]
        %v702 = vld [vmem:[%s215 + $0xcb0] sm:$0xff]
        %v703 = vld [vmem:[%s215 + $0xcb8] sm:$0xff]
        %v704 = vld [vmem:[%s215 + $0xcc0] sm:$0xff]
        %v705 = vld [vmem:[%s215 + $0xcc8] sm:$0xff]
        %v706 = vld [vmem:[%s215 + $0xcd0] sm:$0xff]
        %v707 = vld [vmem:[%s215 + $0xcd8] sm:$0xff]
        %v708 = vld [vmem:[%s215 + $0xce0] sm:$0xff]
        %v709 = vld [vmem:[%s215 + $0xce8] sm:$0xff]
        %v710 = vld [vmem:[%s215 + $0xcf0] sm:$0xff]
        %v711 = vld [vmem:[%s215 + $0xcf8] sm:$0xff]
        %v712 = vld [vmem:[%s215 + $0xd00] sm:$0xff]
        %v713 = vld [vmem:[%s215 + $0xd08] sm:$0xff]
        %v714 = vld [vmem:[%s215 + $0xd10] sm:$0xff]
        %v715 = vld [vmem:[%s215 + $0xd18] sm:$0xff]
        %v716 = vld [vmem:[%s215 + $0xd20] sm:$0xff]
        %v717 = vld [vmem:[%s215 + $0xd28] sm:$0xff]
        %v718 = vld [vmem:[%s215 + $0xd30] sm:$0xff]
        %v719 = vld [vmem:[%s215 + $0xd38] sm:$0xff]
        %v720 = vld [vmem:[%s215 + $0xd40] sm:$0xff]
        %v721 = vld [vmem:[%s215 + $0xd48] sm:$0xff]
        %v722 = vld [vmem:[%s215 + $0xd50] sm:$0xff]
        %v723 = vld [vmem:[%s215 + $0xd58] sm:$0xff]
        %v724 = vld [vmem:[%s215 + $0xd60] sm:$0xff]
        %v725 = vld [vmem:[%s215 + $0xd68] sm:$0xff]
        %v726 = vld [vmem:[%s215 + $0xd70] sm:$0xff]
        %v727 = vld [vmem:[%s215 + $0xd78] sm:$0xff]
        %v728 = vld [vmem:[%s215 + $0xd80] sm:$0xff]
        %v729 = vld [vmem:[%s215 + $0xd88] sm:$0xff]
        %v730 = vld [vmem:[%s215 + $0xd90] sm:$0xff]
        %v731 = vld [vmem:[%s215 + $0xd98] sm:$0xff]
        %v732 = vld [vmem:[%s215 + $0xda0] sm:$0xff]
        %v733 = vld [vmem:[%s215 + $0xda8] sm:$0xff]
        %v734 = vld [vmem:[%s215 + $0xdb0] sm:$0xff]
        %v735 = vld [vmem:[%s215 + $0xdb8] sm:$0xff]
        %v736 = vld [vmem:[%s215 + $0xdc0] sm:$0xff]
        %v737 = vld [vmem:[%s215 + $0xdc8] sm:$0xff]
        %v738 = vld [vmem:[%s215 + $0xdd0] sm:$0xff]
        %v739 = vld [vmem:[%s215 + $0xdd8] sm:$0xff]
        %v740 = vld [vmem:[%s215 + $0xde0] sm:$0xff]
        %v741 = vld [vmem:[%s215 + $0xde8] sm:$0xff]
        %v742 = vld [vmem:[%s215 + $0xdf0] sm:$0xff]
        %v743 = vld [vmem:[%s215 + $0xdf8] sm:$0xff]
        %v744 = vld [vmem:[%s215 + $0xe00] sm:$0xff]
        %v745 = vld [vmem:[%s215 + $0xe08] sm:$0xff]
        %v746 = vld [vmem:[%s215 + $0xe10] sm:$0xff]
        %v747 = vld [vmem:[%s215 + $0xe18] sm:$0xff]
        %v748 = vld [vmem:[%s215 + $0xe20] sm:$0xff]
        %v749 = vld [vmem:[%s215 + $0xe28] sm:$0xff]
        %v750 = vld [vmem:[%s215 + $0xe30] sm:$0xff]
        %v751 = vld [vmem:[%s215 + $0xe38] sm:$0xff]
        %v752 = vld [vmem:[%s215 + $0xe40] sm:$0xff]
        %v753 = vld [vmem:[%s215 + $0xe48] sm:$0xff]
        %v754 = vld [vmem:[%s215 + $0xe50] sm:$0xff]
        %v755 = vld [vmem:[%s215 + $0xe58] sm:$0xff]
        %v756 = vld [vmem:[%s215 + $0xe60] sm:$0xff]
        %v757 = vld [vmem:[%s215 + $0xe68] sm:$0xff]
        %v758 = vld [vmem:[%s215 + $0xe70] sm:$0xff]
        %v759 = vld [vmem:[%s215 + $0xe78] sm:$0xff]
        %v760 = vld [vmem:[%s215 + $0xe80] sm:$0xff]
        %v761 = vld [vmem:[%s215 + $0xe88] sm:$0xff]
        %v762 = vld [vmem:[%s215 + $0xe90] sm:$0xff]
        %v763 = vld [vmem:[%s215 + $0xe98] sm:$0xff]
        %v764 = vld [vmem:[%s215 + $0xea0] sm:$0xff]
        %v765 = vld [vmem:[%s215 + $0xea8] sm:$0xff]
        %v766 = vld [vmem:[%s215 + $0xeb0] sm:$0xff]
        %v767 = vld [vmem:[%s215 + $0xeb8] sm:$0xff]
        %v768 = vld [vmem:[%s215 + $0xec0] sm:$0xff]
        %v769 = vld [vmem:[%s215 + $0xec8] sm:$0xff]
        %v770 = vld [vmem:[%s215 + $0xed0] sm:$0xff]
        %v771 = vld [vmem:[%s215 + $0xed8] sm:$0xff]
        %v772 = vld [vmem:[%s215 + $0xee0] sm:$0xff]
        %v773 = vld [vmem:[%s215 + $0xee8] sm:$0xff]
        %v774 = vld [vmem:[%s215 + $0xef0] sm:$0xff]
        %v775 = vld [vmem:[%s215 + $0xef8] sm:$0xff]
        %v776 = vld [vmem:[%s215 + $0xf00] sm:$0xff]
        %v777 = vld [vmem:[%s215 + $0xf08] sm:$0xff]
        %v778 = vld [vmem:[%s215 + $0xf10] sm:$0xff]
        %v779 = vld [vmem:[%s215 + $0xf18] sm:$0xff]
        %v780 = vld [vmem:[%s215 + $0xf20] sm:$0xff]
        %v781 = vld [vmem:[%s215 + $0xf28] sm:$0xff]
        %v782 = vld [vmem:[%s215 + $0xf30] sm:$0xff]
        %v783 = vld [vmem:[%s215 + $0xf38] sm:$0xff]
        %v784 = vld [vmem:[%s215 + $0xf40] sm:$0xff]
        %v785 = vld [vmem:[%s215 + $0xf48] sm:$0xff]
        %v786 = vld [vmem:[%s215 + $0xf50] sm:$0xff]
        %v787 = vld [vmem:[%s215 + $0xf58] sm:$0xff]
        %v788 = vld [vmem:[%s215 + $0xf60] sm:$0xff]
        %v789 = vld [vmem:[%s215 + $0xf68] sm:$0xff]
        %v790 = vld [vmem:[%s215 + $0xf70] sm:$0xff]
        %v791 = vld [vmem:[%s215 + $0xf78] sm:$0xff]
        %v792 = vld [vmem:[%s215 + $0xf80] sm:$0xff]
        %v793 = vld [vmem:[%s215 + $0xf88] sm:$0xff]
        %v794 = vld [vmem:[%s215 + $0xf90] sm:$0xff]
        %v795 = vld [vmem:[%s215 + $0xf98] sm:$0xff]
        %v796 = vld [vmem:[%s215 + $0xfa0] sm:$0xff]
        %v797 = vld [vmem:[%s215 + $0xfa8] sm:$0xff]
        %v798 = vld [vmem:[%s215 + $0xfb0] sm:$0xff]
        %v799 = vld [vmem:[%s215 + $0xfb8] sm:$0xff]
        %v800 = vld [vmem:[%s215 + $0xfc0] sm:$0xff]
        %v801 = vld [vmem:[%s215 + $0xfc8] sm:$0xff]
        %v802 = vld [vmem:[%s215 + $0xfd0] sm:$0xff]
        %v803 = vld [vmem:[%s215 + $0xfd8] sm:$0xff]
        %v804 = vld [vmem:[%s215 + $0xfe0] sm:$0xff]
        %v805 = vld [vmem:[%s215 + $0xfe8] sm:$0xff]
        %v806 = vld [vmem:[%s215 + $0xff0] sm:$0xff]
        %v807 = vld [vmem:[%s215 + $0xff8] sm:$0xff]
        %v812 = vunpack.c.l.b16 %v292
        %v813 = vunpack.c.h.b16 %v292
        %v814 = vunpack.c.l.b16 %v293
        %v815 = vunpack.c.h.b16 %v293
        %v816 = vunpack.c.l.b16 %v294
        %v817 = vunpack.c.h.b16 %v294
        %v818 = vunpack.c.l.b16 %v295
        %v819 = vunpack.c.h.b16 %v295
        %v820 = vpack.c.b16 %v812, %v812
        %v821 = vpack.c.b16 %v813, %v813
        %v822 = vpack.c.b16 %v814, %v814
        %v823 = vpack.c.b16 %v815, %v815
        %v824 = vpack.c.b16 %v816, %v816
        %v825 = vpack.c.b16 %v817, %v817
        %v826 = vpack.c.b16 %v818, %v818
        %v827 = vpack.c.b16 %v819, %v819
        %v1348 = vunpack.c.l.b16 %v296
        %v1349 = vunpack.c.h.b16 %v296
        %v1350 = vunpack.c.l.b16 %v297
        %v1351 = vunpack.c.h.b16 %v297
        %v1352 = vunpack.c.l.b16 %v298
        %v1353 = vunpack.c.h.b16 %v298
        %v1354 = vunpack.c.l.b16 %v299
        %v1355 = vunpack.c.h.b16 %v299
        %v1356 = vunpack.c.l.b16 %v300
        %v1357 = vunpack.c.h.b16 %v300
        %v1358 = vunpack.c.l.b16 %v301
        %v1359 = vunpack.c.h.b16 %v301
        %v1360 = vunpack.c.l.b16 %v302
        %v1361 = vunpack.c.h.b16 %v302
        %v1362 = vunpack.c.l.b16 %v303
        %v1363 = vunpack.c.h.b16 %v303
        %v1364 = vunpack.c.l.b16 %v304
        %v1365 = vunpack.c.h.b16 %v304
        %v1366 = vunpack.c.l.b16 %v305
        %v1367 = vunpack.c.h.b16 %v305
        %v1368 = vunpack.c.l.b16 %v306
        %v1369 = vunpack.c.h.b16 %v306
        %v1370 = vunpack.c.l.b16 %v307
        %v1371 = vunpack.c.h.b16 %v307
        %v1372 = vunpack.c.l.b16 %v308
        %v1373 = vunpack.c.h.b16 %v308
        %v1374 = vunpack.c.l.b16 %v309
        %v1375 = vunpack.c.h.b16 %v309
        %v1376 = vunpack.c.l.b16 %v310
        %v1377 = vunpack.c.h.b16 %v310
        %v1378 = vunpack.c.l.b16 %v311
        %v1379 = vunpack.c.h.b16 %v311
        %v1380 = vunpack.c.l.b16 %v312
        %v1381 = vunpack.c.h.b16 %v312
        %v1382 = vunpack.c.l.b16 %v313
        %v1383 = vunpack.c.h.b16 %v313
        %v1384 = vunpack.c.l.b16 %v314
        %v1385 = vunpack.c.h.b16 %v314
        %v1386 = vunpack.c.l.b16 %v315
        %v1387 = vunpack.c.h.b16 %v315
        %v1388 = vunpack.c.l.b16 %v316
        %v1389 = vunpack.c.h.b16 %v316
        %v1390 = vunpack.c.l.b16 %v317
        %v1391 = vunpack.c.h.b16 %v317
        %v1392 = vunpack.c.l.b16 %v318
        %v1393 = vunpack.c.h.b16 %v318
        %v1394 = vunpack.c.l.b16 %v319
        %v1395 = vunpack.c.h.b16 %v319
        %v1396 = vunpack.c.l.b16 %v320
        %v1397 = vunpack.c.h.b16 %v320
        %v1398 = vunpack.c.l.b16 %v321
        %v1399 = vunpack.c.h.b16 %v321
        %v1400 = vunpack.c.l.b16 %v322
        %v1401 = vunpack.c.h.b16 %v322
        %v1402 = vunpack.c.l.b16 %v323
        %v1403 = vunpack.c.h.b16 %v323
        %v1404 = vunpack.c.l.b16 %v324
        %v1405 = vunpack.c.h.b16 %v324
        %v1406 = vunpack.c.l.b16 %v325
        %v1407 = vunpack.c.h.b16 %v325
        %v1408 = vunpack.c.l.b16 %v326
        %v1409 = vunpack.c.h.b16 %v326
        %v1410 = vunpack.c.l.b16 %v327
        %v1411 = vunpack.c.h.b16 %v327
        %v1412 = vunpack.c.l.b16 %v328
        %v1413 = vunpack.c.h.b16 %v328
        %v1414 = vunpack.c.l.b16 %v329
        %v1415 = vunpack.c.h.b16 %v329
        %v1416 = vunpack.c.l.b16 %v330
        %v1417 = vunpack.c.h.b16 %v330
        %v1418 = vunpack.c.l.b16 %v331
        %v1419 = vunpack.c.h.b16 %v331
        %v1420 = vunpack.c.l.b16 %v332
        %v1421 = vunpack.c.h.b16 %v332
        %v1422 = vunpack.c.l.b16 %v333
        %v1423 = vunpack.c.h.b16 %v333
        %v1424 = vunpack.c.l.b16 %v334
        %v1425 = vunpack.c.h.b16 %v334
        %v1426 = vunpack.c.l.b16 %v335
        %v1427 = vunpack.c.h.b16 %v335
        %v1428 = vunpack.c.l.b16 %v336
        %v1429 = vunpack.c.h.b16 %v336
        %v1430 = vunpack.c.l.b16 %v337
        %v1431 = vunpack.c.h.b16 %v337
        %v1432 = vunpack.c.l.b16 %v338
        %v1433 = vunpack.c.h.b16 %v338
        %v1434 = vunpack.c.l.b16 %v339
        %v1435 = vunpack.c.h.b16 %v339
        %v1436 = vunpack.c.l.b16 %v340
        %v1437 = vunpack.c.h.b16 %v340
        %v1438 = vunpack.c.l.b16 %v341
        %v1439 = vunpack.c.h.b16 %v341
        %v1440 = vunpack.c.l.b16 %v342
        %v1441 = vunpack.c.h.b16 %v342
        %v1442 = vunpack.c.l.b16 %v343
        %v1443 = vunpack.c.h.b16 %v343
        %v1444 = vunpack.c.l.b16 %v344
        %v1445 = vunpack.c.h.b16 %v344
        %v1446 = vunpack.c.l.b16 %v345
        %v1447 = vunpack.c.h.b16 %v345
        %v1448 = vunpack.c.l.b16 %v346
        %v1449 = vunpack.c.h.b16 %v346
        %v1450 = vunpack.c.l.b16 %v347
        %v1451 = vunpack.c.h.b16 %v347
        %v1452 = vunpack.c.l.b16 %v348
        %v1453 = vunpack.c.h.b16 %v348
        %v1454 = vunpack.c.l.b16 %v349
        %v1455 = vunpack.c.h.b16 %v349
        %v1456 = vunpack.c.l.b16 %v350
        %v1457 = vunpack.c.h.b16 %v350
        %v1458 = vunpack.c.l.b16 %v351
        %v1459 = vunpack.c.h.b16 %v351
        %v1460 = vunpack.c.l.b16 %v352
        %v1461 = vunpack.c.h.b16 %v352
        %v1462 = vunpack.c.l.b16 %v353
        %v1463 = vunpack.c.h.b16 %v353
        %v1464 = vunpack.c.l.b16 %v354
        %v1465 = vunpack.c.h.b16 %v354
        %v1466 = vunpack.c.l.b16 %v355
        %v1467 = vunpack.c.h.b16 %v355
        %v1468 = vunpack.c.l.b16 %v356
        %v1469 = vunpack.c.h.b16 %v356
        %v1470 = vunpack.c.l.b16 %v357
        %v1471 = vunpack.c.h.b16 %v357
        %v1472 = vunpack.c.l.b16 %v358
        %v1473 = vunpack.c.h.b16 %v358
        %v1474 = vunpack.c.l.b16 %v359
        %v1475 = vunpack.c.h.b16 %v359
        %v1476 = vunpack.c.l.b16 %v360
        %v1477 = vunpack.c.h.b16 %v360
        %v1478 = vunpack.c.l.b16 %v361
        %v1479 = vunpack.c.h.b16 %v361
        %v1480 = vunpack.c.l.b16 %v362
        %v1481 = vunpack.c.h.b16 %v362
        %v1482 = vunpack.c.l.b16 %v363
        %v1483 = vunpack.c.h.b16 %v363
        %v1484 = vunpack.c.l.b16 %v364
        %v1485 = vunpack.c.h.b16 %v364
        %v1486 = vunpack.c.l.b16 %v365
        %v1487 = vunpack.c.h.b16 %v365
        %v1488 = vunpack.c.l.b16 %v366
        %v1489 = vunpack.c.h.b16 %v366
        %v1490 = vunpack.c.l.b16 %v367
        %v1491 = vunpack.c.h.b16 %v367
        %v1492 = vunpack.c.l.b16 %v368
        %v1493 = vunpack.c.h.b16 %v368
        %v1494 = vunpack.c.l.b16 %v369
        %v1495 = vunpack.c.h.b16 %v369
        %v1496 = vunpack.c.l.b16 %v370
        %v1497 = vunpack.c.h.b16 %v370
        %v1498 = vunpack.c.l.b16 %v371
        %v1499 = vunpack.c.h.b16 %v371
        %v1500 = vunpack.c.l.b16 %v372
        %v1501 = vunpack.c.h.b16 %v372
        %v1502 = vunpack.c.l.b16 %v373
        %v1503 = vunpack.c.h.b16 %v373
        %v1504 = vunpack.c.l.b16 %v374
        %v1505 = vunpack.c.h.b16 %v374
        %v1506 = vunpack.c.l.b16 %v375
        %v1507 = vunpack.c.h.b16 %v375
        %v1508 = vunpack.c.l.b16 %v376
        %v1509 = vunpack.c.h.b16 %v376
        %v1510 = vunpack.c.l.b16 %v377
        %v1511 = vunpack.c.h.b16 %v377
        %v1512 = vunpack.c.l.b16 %v378
        %v1513 = vunpack.c.h.b16 %v378
        %v1514 = vunpack.c.l.b16 %v379
        %v1515 = vunpack.c.h.b16 %v379
        %v1516 = vunpack.c.l.b16 %v380
        %v1517 = vunpack.c.h.b16 %v380
        %v1518 = vunpack.c.l.b16 %v381
        %v1519 = vunpack.c.h.b16 %v381
        %v1520 = vunpack.c.l.b16 %v382
        %v1521 = vunpack.c.h.b16 %v382
        %v1522 = vunpack.c.l.b16 %v383
        %v1523 = vunpack.c.h.b16 %v383
        %v1524 = vunpack.c.l.b16 %v384
        %v1525 = vunpack.c.h.b16 %v384
        %v1526 = vunpack.c.l.b16 %v385
        %v1527 = vunpack.c.h.b16 %v385
        %v1528 = vunpack.c.l.b16 %v386
        %v1529 = vunpack.c.h.b16 %v386
        %v1530 = vunpack.c.l.b16 %v387
        %v1531 = vunpack.c.h.b16 %v387
        %v1532 = vunpack.c.l.b16 %v388
        %v1533 = vunpack.c.h.b16 %v388
        %v1534 = vunpack.c.l.b16 %v389
        %v1535 = vunpack.c.h.b16 %v389
        %v1536 = vunpack.c.l.b16 %v390
        %v1537 = vunpack.c.h.b16 %v390
        %v1538 = vunpack.c.l.b16 %v391
        %v1539 = vunpack.c.h.b16 %v391
        %v1540 = vunpack.c.l.b16 %v392
        %v1541 = vunpack.c.h.b16 %v392
        %v1542 = vunpack.c.l.b16 %v393
        %v1543 = vunpack.c.h.b16 %v393
        %v1544 = vunpack.c.l.b16 %v394
        %v1545 = vunpack.c.h.b16 %v394
        %v1546 = vunpack.c.l.b16 %v395
        %v1547 = vunpack.c.h.b16 %v395
        %v1548 = vunpack.c.l.b16 %v396
        %v1549 = vunpack.c.h.b16 %v396
        %v1550 = vunpack.c.l.b16 %v397
        %v1551 = vunpack.c.h.b16 %v397
        %v1552 = vunpack.c.l.b16 %v398
        %v1553 = vunpack.c.h.b16 %v398
        %v1554 = vunpack.c.l.b16 %v399
        %v1555 = vunpack.c.h.b16 %v399
        %v1556 = vunpack.c.l.b16 %v400
        %v1557 = vunpack.c.h.b16 %v400
        %v1558 = vunpack.c.l.b16 %v401
        %v1559 = vunpack.c.h.b16 %v401
        %v1560 = vunpack.c.l.b16 %v402
        %v1561 = vunpack.c.h.b16 %v402
        %v1562 = vunpack.c.l.b16 %v403
        %v1563 = vunpack.c.h.b16 %v403
        %v1564 = vunpack.c.l.b16 %v404
        %v1565 = vunpack.c.h.b16 %v404
        %v1566 = vunpack.c.l.b16 %v405
        %v1567 = vunpack.c.h.b16 %v405
        %v1568 = vunpack.c.l.b16 %v406
        %v1569 = vunpack.c.h.b16 %v406
        %v1570 = vunpack.c.l.b16 %v407
        %v1571 = vunpack.c.h.b16 %v407
        %v1572 = vunpack.c.l.b16 %v408
        %v1573 = vunpack.c.h.b16 %v408
        %v1574 = vunpack.c.l.b16 %v409
        %v1575 = vunpack.c.h.b16 %v409
        %v1576 = vunpack.c.l.b16 %v410
        %v1577 = vunpack.c.h.b16 %v410
        %v1578 = vunpack.c.l.b16 %v411
        %v1579 = vunpack.c.h.b16 %v411
        %v1580 = vunpack.c.l.b16 %v412
        %v1581 = vunpack.c.h.b16 %v412
        %v1582 = vunpack.c.l.b16 %v413
        %v1583 = vunpack.c.h.b16 %v413
        %v1584 = vunpack.c.l.b16 %v414
        %v1585 = vunpack.c.h.b16 %v414
        %v1586 = vunpack.c.l.b16 %v415
        %v1587 = vunpack.c.h.b16 %v415
        %v1588 = vunpack.c.l.b16 %v416
        %v1589 = vunpack.c.h.b16 %v416
        %v1590 = vunpack.c.l.b16 %v417
        %v1591 = vunpack.c.h.b16 %v417
        %v1592 = vunpack.c.l.b16 %v418
        %v1593 = vunpack.c.h.b16 %v418
        %v1594 = vunpack.c.l.b16 %v419
        %v1595 = vunpack.c.h.b16 %v419
        %v1596 = vunpack.c.l.b16 %v420
        %v1597 = vunpack.c.h.b16 %v420
        %v1598 = vunpack.c.l.b16 %v421
        %v1599 = vunpack.c.h.b16 %v421
        %v1600 = vunpack.c.l.b16 %v422
        %v1601 = vunpack.c.h.b16 %v422
        %v1602 = vunpack.c.l.b16 %v423
        %v1603 = vunpack.c.h.b16 %v423
        %v1604 = vunpack.c.l.b16 %v424
        %v1605 = vunpack.c.h.b16 %v424
        %v1606 = vunpack.c.l.b16 %v425
        %v1607 = vunpack.c.h.b16 %v425
        %v1608 = vunpack.c.l.b16 %v426
        %v1609 = vunpack.c.h.b16 %v426
        %v1610 = vunpack.c.l.b16 %v427
        %v1611 = vunpack.c.h.b16 %v427
        %v1612 = vunpack.c.l.b16 %v428
        %v1613 = vunpack.c.h.b16 %v428
        %v1614 = vunpack.c.l.b16 %v429
        %v1615 = vunpack.c.h.b16 %v429
        %v1616 = vunpack.c.l.b16 %v430
        %v1617 = vunpack.c.h.b16 %v430
        %v1618 = vunpack.c.l.b16 %v431
        %v1619 = vunpack.c.h.b16 %v431
        %v1620 = vunpack.c.l.b16 %v432
        %v1621 = vunpack.c.h.b16 %v432
        %v1622 = vunpack.c.l.b16 %v433
        %v1623 = vunpack.c.h.b16 %v433
        %v1624 = vunpack.c.l.b16 %v434
        %v1625 = vunpack.c.h.b16 %v434
        %v1626 = vunpack.c.l.b16 %v435
        %v1627 = vunpack.c.h.b16 %v435
        %v1628 = vunpack.c.l.b16 %v436
        %v1629 = vunpack.c.h.b16 %v436
        %v1630 = vunpack.c.l.b16 %v437
        %v1631 = vunpack.c.h.b16 %v437
        %v1632 = vunpack.c.l.b16 %v438
        %v1633 = vunpack.c.h.b16 %v438
        %v1634 = vunpack.c.l.b16 %v439
        %v1635 = vunpack.c.h.b16 %v439
        %v1636 = vunpack.c.l.b16 %v440
        %v1637 = vunpack.c.h.b16 %v440
        %v1638 = vunpack.c.l.b16 %v441
        %v1639 = vunpack.c.h.b16 %v441
        %v1640 = vunpack.c.l.b16 %v442
        %v1641 = vunpack.c.h.b16 %v442
        %v1642 = vunpack.c.l.b16 %v443
        %v1643 = vunpack.c.h.b16 %v443
        %v1644 = vunpack.c.l.b16 %v444
        %v1645 = vunpack.c.h.b16 %v444
        %v1646 = vunpack.c.l.b16 %v445
        %v1647 = vunpack.c.h.b16 %v445
        %v1648 = vunpack.c.l.b16 %v446
        %v1649 = vunpack.c.h.b16 %v446
        %v1650 = vunpack.c.l.b16 %v447
        %v1651 = vunpack.c.h.b16 %v447
        %v1652 = vunpack.c.l.b16 %v448
        %v1653 = vunpack.c.h.b16 %v448
        %v1654 = vunpack.c.l.b16 %v449
        %v1655 = vunpack.c.h.b16 %v449
        %v1656 = vunpack.c.l.b16 %v450
        %v1657 = vunpack.c.h.b16 %v450
        %v1658 = vunpack.c.l.b16 %v451
        %v1659 = vunpack.c.h.b16 %v451
        %v1660 = vunpack.c.l.b16 %v452
        %v1661 = vunpack.c.h.b16 %v452
        %v1662 = vunpack.c.l.b16 %v453
        %v1663 = vunpack.c.h.b16 %v453
        %v1664 = vunpack.c.l.b16 %v454
        %v1665 = vunpack.c.h.b16 %v454
        %v1666 = vunpack.c.l.b16 %v455
        %v1667 = vunpack.c.h.b16 %v455
        %v1668 = vunpack.c.l.b16 %v456
        %v1669 = vunpack.c.h.b16 %v456
        %v1670 = vunpack.c.l.b16 %v457
        %v1671 = vunpack.c.h.b16 %v457
        %v1672 = vunpack.c.l.b16 %v458
        %v1673 = vunpack.c.h.b16 %v458
        %v1674 = vunpack.c.l.b16 %v459
        %v1675 = vunpack.c.h.b16 %v459
        %v1676 = vunpack.c.l.b16 %v460
        %v1677 = vunpack.c.h.b16 %v460
        %v1678 = vunpack.c.l.b16 %v461
        %v1679 = vunpack.c.h.b16 %v461
        %v1680 = vunpack.c.l.b16 %v462
        %v1681 = vunpack.c.h.b16 %v462
        %v1682 = vunpack.c.l.b16 %v463
        %v1683 = vunpack.c.h.b16 %v463
        %v1684 = vunpack.c.l.b16 %v464
        %v1685 = vunpack.c.h.b16 %v464
        %v1686 = vunpack.c.l.b16 %v465
        %v1687 = vunpack.c.h.b16 %v465
        %v1688 = vunpack.c.l.b16 %v466
        %v1689 = vunpack.c.h.b16 %v466
        %v1690 = vunpack.c.l.b16 %v467
        %v1691 = vunpack.c.h.b16 %v467
        %v1692 = vunpack.c.l.b16 %v468
        %v1693 = vunpack.c.h.b16 %v468
        %v1694 = vunpack.c.l.b16 %v469
        %v1695 = vunpack.c.h.b16 %v469
        %v1696 = vunpack.c.l.b16 %v470
        %v1697 = vunpack.c.h.b16 %v470
        %v1698 = vunpack.c.l.b16 %v471
        %v1699 = vunpack.c.h.b16 %v471
        %v1700 = vunpack.c.l.b16 %v472
        %v1701 = vunpack.c.h.b16 %v472
        %v1702 = vunpack.c.l.b16 %v473
        %v1703 = vunpack.c.h.b16 %v473
        %v1704 = vunpack.c.l.b16 %v474
        %v1705 = vunpack.c.h.b16 %v474
        %v1706 = vunpack.c.l.b16 %v475
        %v1707 = vunpack.c.h.b16 %v475
        %v1708 = vunpack.c.l.b16 %v476
        %v1709 = vunpack.c.h.b16 %v476
        %v1710 = vunpack.c.l.b16 %v477
        %v1711 = vunpack.c.h.b16 %v477
        %v1712 = vunpack.c.l.b16 %v478
        %v1713 = vunpack.c.h.b16 %v478
        %v1714 = vunpack.c.l.b16 %v479
        %v1715 = vunpack.c.h.b16 %v479
        %v1716 = vunpack.c.l.b16 %v480
        %v1717 = vunpack.c.h.b16 %v480
        %v1718 = vunpack.c.l.b16 %v481
        %v1719 = vunpack.c.h.b16 %v481
        %v1720 = vunpack.c.l.b16 %v482
        %v1721 = vunpack.c.h.b16 %v482
        %v1722 = vunpack.c.l.b16 %v483
        %v1723 = vunpack.c.h.b16 %v483
        %v1724 = vunpack.c.l.b16 %v484
        %v1725 = vunpack.c.h.b16 %v484
        %v1726 = vunpack.c.l.b16 %v485
        %v1727 = vunpack.c.h.b16 %v485
        %v1728 = vunpack.c.l.b16 %v486
        %v1729 = vunpack.c.h.b16 %v486
        %v1730 = vunpack.c.l.b16 %v487
        %v1731 = vunpack.c.h.b16 %v487
        %v1732 = vunpack.c.l.b16 %v488
        %v1733 = vunpack.c.h.b16 %v488
        %v1734 = vunpack.c.l.b16 %v489
        %v1735 = vunpack.c.h.b16 %v489
        %v1736 = vunpack.c.l.b16 %v490
        %v1737 = vunpack.c.h.b16 %v490
        %v1738 = vunpack.c.l.b16 %v491
        %v1739 = vunpack.c.h.b16 %v491
        %v1740 = vunpack.c.l.b16 %v492
        %v1741 = vunpack.c.h.b16 %v492
        %v1742 = vunpack.c.l.b16 %v493
        %v1743 = vunpack.c.h.b16 %v493
        %v1744 = vunpack.c.l.b16 %v494
        %v1745 = vunpack.c.h.b16 %v494
        %v1746 = vunpack.c.l.b16 %v495
        %v1747 = vunpack.c.h.b16 %v495
        %v1748 = vunpack.c.l.b16 %v496
        %v1749 = vunpack.c.h.b16 %v496
        %v1750 = vunpack.c.l.b16 %v497
        %v1751 = vunpack.c.h.b16 %v497
        %v1752 = vunpack.c.l.b16 %v498
        %v1753 = vunpack.c.h.b16 %v498
        %v1754 = vunpack.c.l.b16 %v499
        %v1755 = vunpack.c.h.b16 %v499
        %v1756 = vunpack.c.l.b16 %v500
        %v1757 = vunpack.c.h.b16 %v500
        %v1758 = vunpack.c.l.b16 %v501
        %v1759 = vunpack.c.h.b16 %v501
        %v1760 = vunpack.c.l.b16 %v502
        %v1761 = vunpack.c.h.b16 %v502
        %v1762 = vunpack.c.l.b16 %v503
        %v1763 = vunpack.c.h.b16 %v503
        %v1764 = vunpack.c.l.b16 %v504
        %v1765 = vunpack.c.h.b16 %v504
        %v1766 = vunpack.c.l.b16 %v505
        %v1767 = vunpack.c.h.b16 %v505
        %v1768 = vunpack.c.l.b16 %v506
        %v1769 = vunpack.c.h.b16 %v506
        %v1770 = vunpack.c.l.b16 %v507
        %v1771 = vunpack.c.h.b16 %v507
        %v1772 = vunpack.c.l.b16 %v508
        %v1773 = vunpack.c.h.b16 %v508
        %v1774 = vunpack.c.l.b16 %v509
        %v1775 = vunpack.c.h.b16 %v509
        %v1776 = vunpack.c.l.b16 %v510
        %v1777 = vunpack.c.h.b16 %v510
        %v1778 = vunpack.c.l.b16 %v511
        %v1779 = vunpack.c.h.b16 %v511
        %v1780 = vunpack.c.l.b16 %v512
        %v1781 = vunpack.c.h.b16 %v512
        %v1782 = vunpack.c.l.b16 %v513
        %v1783 = vunpack.c.h.b16 %v513
        %v1784 = vunpack.c.l.b16 %v514
        %v1785 = vunpack.c.h.b16 %v514
        %v1786 = vunpack.c.l.b16 %v515
        %v1787 = vunpack.c.h.b16 %v515
        %v1788 = vunpack.c.l.b16 %v516
        %v1789 = vunpack.c.h.b16 %v516
        %v1790 = vunpack.c.l.b16 %v517
        %v1791 = vunpack.c.h.b16 %v517
        %v1792 = vunpack.c.l.b16 %v518
        %v1793 = vunpack.c.h.b16 %v518
        %v1794 = vunpack.c.l.b16 %v519
        %v1795 = vunpack.c.h.b16 %v519
        %v1796 = vunpack.c.l.b16 %v520
        %v1797 = vunpack.c.h.b16 %v520
        %v1798 = vunpack.c.l.b16 %v521
        %v1799 = vunpack.c.h.b16 %v521
        %v1800 = vunpack.c.l.b16 %v522
        %v1801 = vunpack.c.h.b16 %v522
        %v1802 = vunpack.c.l.b16 %v523
        %v1803 = vunpack.c.h.b16 %v523
        %v1804 = vunpack.c.l.b16 %v524
        %v1805 = vunpack.c.h.b16 %v524
        %v1806 = vunpack.c.l.b16 %v525
        %v1807 = vunpack.c.h.b16 %v525
        %v1808 = vunpack.c.l.b16 %v526
        %v1809 = vunpack.c.h.b16 %v526
        %v1810 = vunpack.c.l.b16 %v527
        %v1811 = vunpack.c.h.b16 %v527
        %v1812 = vunpack.c.l.b16 %v528
        %v1813 = vunpack.c.h.b16 %v528
        %v1814 = vunpack.c.l.b16 %v529
        %v1815 = vunpack.c.h.b16 %v529
        %v1816 = vunpack.c.l.b16 %v530
        %v1817 = vunpack.c.h.b16 %v530
        %v1818 = vunpack.c.l.b16 %v531
        %v1819 = vunpack.c.h.b16 %v531
        %v1820 = vunpack.c.l.b16 %v532
        %v1821 = vunpack.c.h.b16 %v532
        %v1822 = vunpack.c.l.b16 %v533
        %v1823 = vunpack.c.h.b16 %v533
        %v1824 = vunpack.c.l.b16 %v534
        %v1825 = vunpack.c.h.b16 %v534
        %v1826 = vunpack.c.l.b16 %v535
        %v1827 = vunpack.c.h.b16 %v535
        %v1828 = vunpack.c.l.b16 %v536
        %v1829 = vunpack.c.h.b16 %v536
        %v1830 = vunpack.c.l.b16 %v537
        %v1831 = vunpack.c.h.b16 %v537
        %v1832 = vunpack.c.l.b16 %v538
        %v1833 = vunpack.c.h.b16 %v538
        %v1834 = vunpack.c.l.b16 %v539
        %v1835 = vunpack.c.h.b16 %v539
        %v1836 = vunpack.c.l.b16 %v540
        %v1837 = vunpack.c.h.b16 %v540
        %v1838 = vunpack.c.l.b16 %v541
        %v1839 = vunpack.c.h.b16 %v541
        %v1840 = vunpack.c.l.b16 %v542
        %v1841 = vunpack.c.h.b16 %v542
        %v1842 = vunpack.c.l.b16 %v543
        %v1843 = vunpack.c.h.b16 %v543
        %v1844 = vunpack.c.l.b16 %v544
        %v1845 = vunpack.c.h.b16 %v544
        %v1846 = vunpack.c.l.b16 %v545
        %v1847 = vunpack.c.h.b16 %v545
        %v1848 = vunpack.c.l.b16 %v546
        %v1849 = vunpack.c.h.b16 %v546
        %v1850 = vunpack.c.l.b16 %v547
        %v1851 = vunpack.c.h.b16 %v547
        %v1852 = vunpack.c.l.b16 %v548
        %v1853 = vunpack.c.h.b16 %v548
        %v1854 = vunpack.c.l.b16 %v549
        %v1855 = vunpack.c.h.b16 %v549
        %v1856 = vunpack.c.l.b16 %v550
        %v1857 = vunpack.c.h.b16 %v550
        %v1858 = vunpack.c.l.b16 %v551
        %v1859 = vunpack.c.h.b16 %v551
        %v1860 = vunpack.c.l.b16 %v552
        %v1861 = vunpack.c.h.b16 %v552
        %v1862 = vunpack.c.l.b16 %v553
        %v1863 = vunpack.c.h.b16 %v553
        %v1864 = vunpack.c.l.b16 %v554
        %v1865 = vunpack.c.h.b16 %v554
        %v1866 = vunpack.c.l.b16 %v555
        %v1867 = vunpack.c.h.b16 %v555
        %v1868 = vunpack.c.l.b16 %v556
        %v1869 = vunpack.c.h.b16 %v556
        %v1870 = vunpack.c.l.b16 %v557
        %v1871 = vunpack.c.h.b16 %v557
        %v1872 = vunpack.c.l.b16 %v558
        %v1873 = vunpack.c.h.b16 %v558
        %v1874 = vunpack.c.l.b16 %v559
        %v1875 = vunpack.c.h.b16 %v559
        %v1876 = vunpack.c.l.b16 %v560
        %v1877 = vunpack.c.h.b16 %v560
        %v1878 = vunpack.c.l.b16 %v561
        %v1879 = vunpack.c.h.b16 %v561
        %v1880 = vunpack.c.l.b16 %v562
        %v1881 = vunpack.c.h.b16 %v562
        %v1882 = vunpack.c.l.b16 %v563
        %v1883 = vunpack.c.h.b16 %v563
        %v1884 = vunpack.c.l.b16 %v564
        %v1885 = vunpack.c.h.b16 %v564
        %v1886 = vunpack.c.l.b16 %v565
        %v1887 = vunpack.c.h.b16 %v565
        %v1888 = vunpack.c.l.b16 %v566
        %v1889 = vunpack.c.h.b16 %v566
        %v1890 = vunpack.c.l.b16 %v567
        %v1891 = vunpack.c.h.b16 %v567
        %v1892 = vunpack.c.l.b16 %v568
        %v1893 = vunpack.c.h.b16 %v568
        %v1894 = vunpack.c.l.b16 %v569
        %v1895 = vunpack.c.h.b16 %v569
        %v1896 = vunpack.c.l.b16 %v570
        %v1897 = vunpack.c.h.b16 %v570
        %v1898 = vunpack.c.l.b16 %v571
        %v1899 = vunpack.c.h.b16 %v571
        %v1900 = vunpack.c.l.b16 %v572
        %v1901 = vunpack.c.h.b16 %v572
        %v1902 = vunpack.c.l.b16 %v573
        %v1903 = vunpack.c.h.b16 %v573
        %v1904 = vunpack.c.l.b16 %v574
        %v1905 = vunpack.c.h.b16 %v574
        %v1906 = vunpack.c.l.b16 %v575
        %v1907 = vunpack.c.h.b16 %v575
        %v1908 = vunpack.c.l.b16 %v576
        %v1909 = vunpack.c.h.b16 %v576
        %v1910 = vunpack.c.l.b16 %v577
        %v1911 = vunpack.c.h.b16 %v577
        %v1912 = vunpack.c.l.b16 %v578
        %v1913 = vunpack.c.h.b16 %v578
        %v1914 = vunpack.c.l.b16 %v579
        %v1915 = vunpack.c.h.b16 %v579
        %v1916 = vunpack.c.l.b16 %v580
        %v1917 = vunpack.c.h.b16 %v580
        %v1918 = vunpack.c.l.b16 %v581
        %v1919 = vunpack.c.h.b16 %v581
        %v1920 = vunpack.c.l.b16 %v582
        %v1921 = vunpack.c.h.b16 %v582
        %v1922 = vunpack.c.l.b16 %v583
        %v1923 = vunpack.c.h.b16 %v583
        %v1924 = vunpack.c.l.b16 %v584
        %v1925 = vunpack.c.h.b16 %v584
        %v1926 = vunpack.c.l.b16 %v585
        %v1927 = vunpack.c.h.b16 %v585
        %v1928 = vunpack.c.l.b16 %v586
        %v1929 = vunpack.c.h.b16 %v586
        %v1930 = vunpack.c.l.b16 %v587
        %v1931 = vunpack.c.h.b16 %v587
        %v1932 = vunpack.c.l.b16 %v588
        %v1933 = vunpack.c.h.b16 %v588
        %v1934 = vunpack.c.l.b16 %v589
        %v1935 = vunpack.c.h.b16 %v589
        %v1936 = vunpack.c.l.b16 %v590
        %v1937 = vunpack.c.h.b16 %v590
        %v1938 = vunpack.c.l.b16 %v591
        %v1939 = vunpack.c.h.b16 %v591
        %v1940 = vunpack.c.l.b16 %v592
        %v1941 = vunpack.c.h.b16 %v592
        %v1942 = vunpack.c.l.b16 %v593
        %v1943 = vunpack.c.h.b16 %v593
        %v1944 = vunpack.c.l.b16 %v594
        %v1945 = vunpack.c.h.b16 %v594
        %v1946 = vunpack.c.l.b16 %v595
        %v1947 = vunpack.c.h.b16 %v595
        %v1948 = vunpack.c.l.b16 %v596
        %v1949 = vunpack.c.h.b16 %v596
        %v1950 = vunpack.c.l.b16 %v597
        %v1951 = vunpack.c.h.b16 %v597
        %v1952 = vunpack.c.l.b16 %v598
        %v1953 = vunpack.c.h.b16 %v598
        %v1954 = vunpack.c.l.b16 %v599
        %v1955 = vunpack.c.h.b16 %v599
        %v1956 = vunpack.c.l.b16 %v600
        %v1957 = vunpack.c.h.b16 %v600
        %v1958 = vunpack.c.l.b16 %v601
        %v1959 = vunpack.c.h.b16 %v601
        %v1960 = vunpack.c.l.b16 %v602
        %v1961 = vunpack.c.h.b16 %v602
        %v1962 = vunpack.c.l.b16 %v603
        %v1963 = vunpack.c.h.b16 %v603
        %v1964 = vunpack.c.l.b16 %v604
        %v1965 = vunpack.c.h.b16 %v604
        %v1966 = vunpack.c.l.b16 %v605
        %v1967 = vunpack.c.h.b16 %v605
        %v1968 = vunpack.c.l.b16 %v606
        %v1969 = vunpack.c.h.b16 %v606
        %v1970 = vunpack.c.l.b16 %v607
        %v1971 = vunpack.c.h.b16 %v607
        %v1972 = vunpack.c.l.b16 %v608
        %v1973 = vunpack.c.h.b16 %v608
        %v1974 = vunpack.c.l.b16 %v609
        %v1975 = vunpack.c.h.b16 %v609
        %v1976 = vunpack.c.l.b16 %v610
        %v1977 = vunpack.c.h.b16 %v610
        %v1978 = vunpack.c.l.b16 %v611
        %v1979 = vunpack.c.h.b16 %v611
        %v1980 = vunpack.c.l.b16 %v612
        %v1981 = vunpack.c.h.b16 %v612
        %v1982 = vunpack.c.l.b16 %v613
        %v1983 = vunpack.c.h.b16 %v613
        %v1984 = vunpack.c.l.b16 %v614
        %v1985 = vunpack.c.h.b16 %v614
        %v1986 = vunpack.c.l.b16 %v615
        %v1987 = vunpack.c.h.b16 %v615
        %v1988 = vunpack.c.l.b16 %v616
        %v1989 = vunpack.c.h.b16 %v616
        %v1990 = vunpack.c.l.b16 %v617
        %v1991 = vunpack.c.h.b16 %v617
        %v1992 = vunpack.c.l.b16 %v618
        %v1993 = vunpack.c.h.b16 %v618
        %v1994 = vunpack.c.l.b16 %v619
        %v1995 = vunpack.c.h.b16 %v619
        %v1996 = vunpack.c.l.b16 %v620
        %v1997 = vunpack.c.h.b16 %v620
        %v1998 = vunpack.c.l.b16 %v621
        %v1999 = vunpack.c.h.b16 %v621
        %v2000 = vunpack.c.l.b16 %v622
        %v2001 = vunpack.c.h.b16 %v622
        %v2002 = vunpack.c.l.b16 %v623
        %v2003 = vunpack.c.h.b16 %v623
        %v2004 = vunpack.c.l.b16 %v624
        %v2005 = vunpack.c.h.b16 %v624
        %v2006 = vunpack.c.l.b16 %v625
        %v2007 = vunpack.c.h.b16 %v625
        %v2008 = vunpack.c.l.b16 %v626
        %v2009 = vunpack.c.h.b16 %v626
        %v2010 = vunpack.c.l.b16 %v627
        %v2011 = vunpack.c.h.b16 %v627
        %v2012 = vunpack.c.l.b16 %v628
        %v2013 = vunpack.c.h.b16 %v628
        %v2014 = vunpack.c.l.b16 %v629
        %v2015 = vunpack.c.h.b16 %v629
        %v2016 = vunpack.c.l.b16 %v630
        %v2017 = vunpack.c.h.b16 %v630
        %v2018 = vunpack.c.l.b16 %v631
        %v2019 = vunpack.c.h.b16 %v631
        %v2020 = vunpack.c.l.b16 %v632
        %v2021 = vunpack.c.h.b16 %v632
        %v2022 = vunpack.c.l.b16 %v633
        %v2023 = vunpack.c.h.b16 %v633
        %v2024 = vunpack.c.l.b16 %v634
        %v2025 = vunpack.c.h.b16 %v634
        %v2026 = vunpack.c.l.b16 %v635
        %v2027 = vunpack.c.h.b16 %v635
        %v2028 = vunpack.c.l.b16 %v636
        %v2029 = vunpack.c.h.b16 %v636
        %v2030 = vunpack.c.l.b16 %v637
        %v2031 = vunpack.c.h.b16 %v637
        %v2032 = vunpack.c.l.b16 %v638
        %v2033 = vunpack.c.h.b16 %v638
        %v2034 = vunpack.c.l.b16 %v639
        %v2035 = vunpack.c.h.b16 %v639
        %v2036 = vunpack.c.l.b16 %v640
        %v2037 = vunpack.c.h.b16 %v640
        %v2038 = vunpack.c.l.b16 %v641
        %v2039 = vunpack.c.h.b16 %v641
        %v2040 = vunpack.c.l.b16 %v642
        %v2041 = vunpack.c.h.b16 %v642
        %v2042 = vunpack.c.l.b16 %v643
        %v2043 = vunpack.c.h.b16 %v643
        %v2044 = vunpack.c.l.b16 %v644
        %v2045 = vunpack.c.h.b16 %v644
        %v2046 = vunpack.c.l.b16 %v645
        %v2047 = vunpack.c.h.b16 %v645
        %v2048 = vunpack.c.l.b16 %v646
        %v2049 = vunpack.c.h.b16 %v646
        %v2050 = vunpack.c.l.b16 %v647
        %v2051 = vunpack.c.h.b16 %v647
        %v2052 = vunpack.c.l.b16 %v648
        %v2053 = vunpack.c.h.b16 %v648
        %v2054 = vunpack.c.l.b16 %v649
        %v2055 = vunpack.c.h.b16 %v649
        %v2056 = vunpack.c.l.b16 %v650
        %v2057 = vunpack.c.h.b16 %v650
        %v2058 = vunpack.c.l.b16 %v651
        %v2059 = vunpack.c.h.b16 %v651
        %v2060 = vunpack.c.l.b16 %v652
        %v2061 = vunpack.c.h.b16 %v652
        %v2062 = vunpack.c.l.b16 %v653
        %v2063 = vunpack.c.h.b16 %v653
        %v2064 = vunpack.c.l.b16 %v654
        %v2065 = vunpack.c.h.b16 %v654
        %v2066 = vunpack.c.l.b16 %v655
        %v2067 = vunpack.c.h.b16 %v655
        %v2068 = vunpack.c.l.b16 %v656
        %v2069 = vunpack.c.h.b16 %v656
        %v2070 = vunpack.c.l.b16 %v657
        %v2071 = vunpack.c.h.b16 %v657
        %v2072 = vunpack.c.l.b16 %v658
        %v2073 = vunpack.c.h.b16 %v658
        %v2074 = vunpack.c.l.b16 %v659
        %v2075 = vunpack.c.h.b16 %v659
        %v2076 = vunpack.c.l.b16 %v660
        %v2077 = vunpack.c.h.b16 %v660
        %v2078 = vunpack.c.l.b16 %v661
        %v2079 = vunpack.c.h.b16 %v661
        %v2080 = vunpack.c.l.b16 %v662
        %v2081 = vunpack.c.h.b16 %v662
        %v2082 = vunpack.c.l.b16 %v663
        %v2083 = vunpack.c.h.b16 %v663
        %v2084 = vunpack.c.l.b16 %v664
        %v2085 = vunpack.c.h.b16 %v664
        %v2086 = vunpack.c.l.b16 %v665
        %v2087 = vunpack.c.h.b16 %v665
        %v2088 = vunpack.c.l.b16 %v666
        %v2089 = vunpack.c.h.b16 %v666
        %v2090 = vunpack.c.l.b16 %v667
        %v2091 = vunpack.c.h.b16 %v667
        %v2092 = vunpack.c.l.b16 %v668
        %v2093 = vunpack.c.h.b16 %v668
        %v2094 = vunpack.c.l.b16 %v669
        %v2095 = vunpack.c.h.b16 %v669
        %v2096 = vunpack.c.l.b16 %v670
        %v2097 = vunpack.c.h.b16 %v670
        %v2098 = vunpack.c.l.b16 %v671
        %v2099 = vunpack.c.h.b16 %v671
        %v2100 = vunpack.c.l.b16 %v672
        %v2101 = vunpack.c.h.b16 %v672
        %v2102 = vunpack.c.l.b16 %v673
        %v2103 = vunpack.c.h.b16 %v673
        %v2104 = vunpack.c.l.b16 %v674
        %v2105 = vunpack.c.h.b16 %v674
        %v2106 = vunpack.c.l.b16 %v675
        %v2107 = vunpack.c.h.b16 %v675
        %v2108 = vunpack.c.l.b16 %v676
        %v2109 = vunpack.c.h.b16 %v676
        %v2110 = vunpack.c.l.b16 %v677
        %v2111 = vunpack.c.h.b16 %v677
        %v2112 = vunpack.c.l.b16 %v678
        %v2113 = vunpack.c.h.b16 %v678
        %v2114 = vunpack.c.l.b16 %v679
        %v2115 = vunpack.c.h.b16 %v679
        %v2116 = vunpack.c.l.b16 %v680
        %v2117 = vunpack.c.h.b16 %v680
        %v2118 = vunpack.c.l.b16 %v681
        %v2119 = vunpack.c.h.b16 %v681
        %v2120 = vunpack.c.l.b16 %v682
        %v2121 = vunpack.c.h.b16 %v682
        %v2122 = vunpack.c.l.b16 %v683
        %v2123 = vunpack.c.h.b16 %v683
        %v2124 = vunpack.c.l.b16 %v684
        %v2125 = vunpack.c.h.b16 %v684
        %v2126 = vunpack.c.l.b16 %v685
        %v2127 = vunpack.c.h.b16 %v685
        %v2128 = vunpack.c.l.b16 %v686
        %v2129 = vunpack.c.h.b16 %v686
        %v2130 = vunpack.c.l.b16 %v687
        %v2131 = vunpack.c.h.b16 %v687
        %v2132 = vunpack.c.l.b16 %v688
        %v2133 = vunpack.c.h.b16 %v688
        %v2134 = vunpack.c.l.b16 %v689
        %v2135 = vunpack.c.h.b16 %v689
        %v2136 = vunpack.c.l.b16 %v690
        %v2137 = vunpack.c.h.b16 %v690
        %v2138 = vunpack.c.l.b16 %v691
        %v2139 = vunpack.c.h.b16 %v691
        %v2140 = vunpack.c.l.b16 %v692
        %v2141 = vunpack.c.h.b16 %v692
        %v2142 = vunpack.c.l.b16 %v693
        %v2143 = vunpack.c.h.b16 %v693
        %v2144 = vunpack.c.l.b16 %v694
        %v2145 = vunpack.c.h.b16 %v694
        %v2146 = vunpack.c.l.b16 %v695
        %v2147 = vunpack.c.h.b16 %v695
        %v2148 = vunpack.c.l.b16 %v696
        %v2149 = vunpack.c.h.b16 %v696
        %v2150 = vunpack.c.l.b16 %v697
        %v2151 = vunpack.c.h.b16 %v697
        %v2152 = vunpack.c.l.b16 %v698
        %v2153 = vunpack.c.h.b16 %v698
        %v2154 = vunpack.c.l.b16 %v699
        %v2155 = vunpack.c.h.b16 %v699
        %v2156 = vunpack.c.l.b16 %v700
        %v2157 = vunpack.c.h.b16 %v700
        %v2158 = vunpack.c.l.b16 %v701
        %v2159 = vunpack.c.h.b16 %v701
        %v2160 = vunpack.c.l.b16 %v702
        %v2161 = vunpack.c.h.b16 %v702
        %v2162 = vunpack.c.l.b16 %v703
        %v2163 = vunpack.c.h.b16 %v703
        %v2164 = vunpack.c.l.b16 %v704
        %v2165 = vunpack.c.h.b16 %v704
        %v2166 = vunpack.c.l.b16 %v705
        %v2167 = vunpack.c.h.b16 %v705
        %v2168 = vunpack.c.l.b16 %v706
        %v2169 = vunpack.c.h.b16 %v706
        %v2170 = vunpack.c.l.b16 %v707
        %v2171 = vunpack.c.h.b16 %v707
        %v2172 = vunpack.c.l.b16 %v708
        %v2173 = vunpack.c.h.b16 %v708
        %v2174 = vunpack.c.l.b16 %v709
        %v2175 = vunpack.c.h.b16 %v709
        %v2176 = vunpack.c.l.b16 %v710
        %v2177 = vunpack.c.h.b16 %v710
        %v2178 = vunpack.c.l.b16 %v711
        %v2179 = vunpack.c.h.b16 %v711
        %v2180 = vunpack.c.l.b16 %v712
        %v2181 = vunpack.c.h.b16 %v712
        %v2182 = vunpack.c.l.b16 %v713
        %v2183 = vunpack.c.h.b16 %v713
        %v2184 = vunpack.c.l.b16 %v714
        %v2185 = vunpack.c.h.b16 %v714
        %v2186 = vunpack.c.l.b16 %v715
        %v2187 = vunpack.c.h.b16 %v715
        %v2188 = vunpack.c.l.b16 %v716
        %v2189 = vunpack.c.h.b16 %v716
        %v2190 = vunpack.c.l.b16 %v717
        %v2191 = vunpack.c.h.b16 %v717
        %v2192 = vunpack.c.l.b16 %v718
        %v2193 = vunpack.c.h.b16 %v718
        %v2194 = vunpack.c.l.b16 %v719
        %v2195 = vunpack.c.h.b16 %v719
        %v2196 = vunpack.c.l.b16 %v720
        %v2197 = vunpack.c.h.b16 %v720
        %v2198 = vunpack.c.l.b16 %v721
        %v2199 = vunpack.c.h.b16 %v721
        %v2200 = vunpack.c.l.b16 %v722
        %v2201 = vunpack.c.h.b16 %v722
        %v2202 = vunpack.c.l.b16 %v723
        %v2203 = vunpack.c.h.b16 %v723
        %v2204 = vunpack.c.l.b16 %v724
        %v2205 = vunpack.c.h.b16 %v724
        %v2206 = vunpack.c.l.b16 %v725
        %v2207 = vunpack.c.h.b16 %v725
        %v2208 = vunpack.c.l.b16 %v726
        %v2209 = vunpack.c.h.b16 %v726
        %v2210 = vunpack.c.l.b16 %v727
        %v2211 = vunpack.c.h.b16 %v727
        %v2212 = vunpack.c.l.b16 %v728
        %v2213 = vunpack.c.h.b16 %v728
        %v2214 = vunpack.c.l.b16 %v729
        %v2215 = vunpack.c.h.b16 %v729
        %v2216 = vunpack.c.l.b16 %v730
        %v2217 = vunpack.c.h.b16 %v730
        %v2218 = vunpack.c.l.b16 %v731
        %v2219 = vunpack.c.h.b16 %v731
        %v2220 = vunpack.c.l.b16 %v732
        %v2221 = vunpack.c.h.b16 %v732
        %v2222 = vunpack.c.l.b16 %v733
        %v2223 = vunpack.c.h.b16 %v733
        %v2224 = vunpack.c.l.b16 %v734
        %v2225 = vunpack.c.h.b16 %v734
        %v2226 = vunpack.c.l.b16 %v735
        %v2227 = vunpack.c.h.b16 %v735
        %v2228 = vunpack.c.l.b16 %v736
        %v2229 = vunpack.c.h.b16 %v736
        %v2230 = vunpack.c.l.b16 %v737
        %v2231 = vunpack.c.h.b16 %v737
        %v2232 = vunpack.c.l.b16 %v738
        %v2233 = vunpack.c.h.b16 %v738
        %v2234 = vunpack.c.l.b16 %v739
        %v2235 = vunpack.c.h.b16 %v739
        %v2236 = vunpack.c.l.b16 %v740
        %v2237 = vunpack.c.h.b16 %v740
        %v2238 = vunpack.c.l.b16 %v741
        %v2239 = vunpack.c.h.b16 %v741
        %v2240 = vunpack.c.l.b16 %v742
        %v2241 = vunpack.c.h.b16 %v742
        %v2242 = vunpack.c.l.b16 %v743
        %v2243 = vunpack.c.h.b16 %v743
        %v2244 = vunpack.c.l.b16 %v744
        %v2245 = vunpack.c.h.b16 %v744
        %v2246 = vunpack.c.l.b16 %v745
        %v2247 = vunpack.c.h.b16 %v745
        %v2248 = vunpack.c.l.b16 %v746
        %v2249 = vunpack.c.h.b16 %v746
        %v2250 = vunpack.c.l.b16 %v747
        %v2251 = vunpack.c.h.b16 %v747
        %v2252 = vunpack.c.l.b16 %v748
        %v2253 = vunpack.c.h.b16 %v748
        %v2254 = vunpack.c.l.b16 %v749
        %v2255 = vunpack.c.h.b16 %v749
        %v2256 = vunpack.c.l.b16 %v750
        %v2257 = vunpack.c.h.b16 %v750
        %v2258 = vunpack.c.l.b16 %v751
        %v2259 = vunpack.c.h.b16 %v751
        %v2260 = vunpack.c.l.b16 %v752
        %v2261 = vunpack.c.h.b16 %v752
        %v2262 = vunpack.c.l.b16 %v753
        %v2263 = vunpack.c.h.b16 %v753
        %v2264 = vunpack.c.l.b16 %v754
        %v2265 = vunpack.c.h.b16 %v754
        %v2266 = vunpack.c.l.b16 %v755
        %v2267 = vunpack.c.h.b16 %v755
        %v2268 = vunpack.c.l.b16 %v756
        %v2269 = vunpack.c.h.b16 %v756
        %v2270 = vunpack.c.l.b16 %v757
        %v2271 = vunpack.c.h.b16 %v757
        %v2272 = vunpack.c.l.b16 %v758
        %v2273 = vunpack.c.h.b16 %v758
        %v2274 = vunpack.c.l.b16 %v759
        %v2275 = vunpack.c.h.b16 %v759
        %v2276 = vunpack.c.l.b16 %v760
        %v2277 = vunpack.c.h.b16 %v760
        %v2278 = vunpack.c.l.b16 %v761
        %v2279 = vunpack.c.h.b16 %v761
        %v2280 = vunpack.c.l.b16 %v762
        %v2281 = vunpack.c.h.b16 %v762
        %v2282 = vunpack.c.l.b16 %v763
        %v2283 = vunpack.c.h.b16 %v763
        %v2284 = vunpack.c.l.b16 %v764
        %v2285 = vunpack.c.h.b16 %v764
        %v2286 = vunpack.c.l.b16 %v765
        %v2287 = vunpack.c.h.b16 %v765
        %v2288 = vunpack.c.l.b16 %v766
        %v2289 = vunpack.c.h.b16 %v766
        %v2290 = vunpack.c.l.b16 %v767
        %v2291 = vunpack.c.h.b16 %v767
        %v2292 = vunpack.c.l.b16 %v768
        %v2293 = vunpack.c.h.b16 %v768
        %v2294 = vunpack.c.l.b16 %v769
        %v2295 = vunpack.c.h.b16 %v769
        %v2296 = vunpack.c.l.b16 %v770
        %v2297 = vunpack.c.h.b16 %v770
        %v2298 = vunpack.c.l.b16 %v771
        %v2299 = vunpack.c.h.b16 %v771
        %v2300 = vunpack.c.l.b16 %v772
        %v2301 = vunpack.c.h.b16 %v772
        %v2302 = vunpack.c.l.b16 %v773
        %v2303 = vunpack.c.h.b16 %v773
        %v2304 = vunpack.c.l.b16 %v774
        %v2305 = vunpack.c.h.b16 %v774
        %v2306 = vunpack.c.l.b16 %v775
        %v2307 = vunpack.c.h.b16 %v775
        %v2308 = vunpack.c.l.b16 %v776
        %v2309 = vunpack.c.h.b16 %v776
        %v2310 = vunpack.c.l.b16 %v777
        %v2311 = vunpack.c.h.b16 %v777
        %v2312 = vunpack.c.l.b16 %v778
        %v2313 = vunpack.c.h.b16 %v778
        %v2314 = vunpack.c.l.b16 %v779
        %v2315 = vunpack.c.h.b16 %v779
        %v2316 = vunpack.c.l.b16 %v780
        %v2317 = vunpack.c.h.b16 %v780
        %v2318 = vunpack.c.l.b16 %v781
        %v2319 = vunpack.c.h.b16 %v781
        %v2320 = vunpack.c.l.b16 %v782
        %v2321 = vunpack.c.h.b16 %v782
        %v2322 = vunpack.c.l.b16 %v783
        %v2323 = vunpack.c.h.b16 %v783
        %v2324 = vunpack.c.l.b16 %v784
        %v2325 = vunpack.c.h.b16 %v784
        %v2326 = vunpack.c.l.b16 %v785
        %v2327 = vunpack.c.h.b16 %v785
        %v2328 = vunpack.c.l.b16 %v786
        %v2329 = vunpack.c.h.b16 %v786
        %v2330 = vunpack.c.l.b16 %v787
        %v2331 = vunpack.c.h.b16 %v787
        %v2332 = vunpack.c.l.b16 %v788
        %v2333 = vunpack.c.h.b16 %v788
        %v2334 = vunpack.c.l.b16 %v789
        %v2335 = vunpack.c.h.b16 %v789
        %v2336 = vunpack.c.l.b16 %v790
        %v2337 = vunpack.c.h.b16 %v790
        %v2338 = vunpack.c.l.b16 %v791
        %v2339 = vunpack.c.h.b16 %v791
        %v2340 = vunpack.c.l.b16 %v792
        %v2341 = vunpack.c.h.b16 %v792
        %v2342 = vunpack.c.l.b16 %v793
        %v2343 = vunpack.c.h.b16 %v793
        %v2344 = vunpack.c.l.b16 %v794
        %v2345 = vunpack.c.h.b16 %v794
        %v2346 = vunpack.c.l.b16 %v795
        %v2347 = vunpack.c.h.b16 %v795
        %v2348 = vunpack.c.l.b16 %v796
        %v2349 = vunpack.c.h.b16 %v796
        %v2350 = vunpack.c.l.b16 %v797
        %v2351 = vunpack.c.h.b16 %v797
        %v2352 = vunpack.c.l.b16 %v798
        %v2353 = vunpack.c.h.b16 %v798
        %v2354 = vunpack.c.l.b16 %v799
        %v2355 = vunpack.c.h.b16 %v799
        %v2356 = vunpack.c.l.b16 %v800
        %v2357 = vunpack.c.h.b16 %v800
        %v2358 = vunpack.c.l.b16 %v801
        %v2359 = vunpack.c.h.b16 %v801
        %v2360 = vunpack.c.l.b16 %v802
        %v2361 = vunpack.c.h.b16 %v802
        %v2362 = vunpack.c.l.b16 %v803
        %v2363 = vunpack.c.h.b16 %v803
        %v2364 = vunpack.c.l.b16 %v804
        %v2365 = vunpack.c.h.b16 %v804
        %v2366 = vunpack.c.l.b16 %v805
        %v2367 = vunpack.c.h.b16 %v805
        %v2368 = vunpack.c.l.b16 %v806
        %v2369 = vunpack.c.h.b16 %v806
        %v2370 = vunpack.c.l.b16 %v807
        %v2371 = vunpack.c.h.b16 %v807
        %v2372 = vpack.c.b16 %v1356, %v1348
        %v2373 = vpack.c.b16 %v1357, %v1349
        %v2374 = vpack.c.b16 %v1358, %v1350
        %v2375 = vpack.c.b16 %v1359, %v1351
        %v2376 = vpack.c.b16 %v1360, %v1352
        %v2377 = vpack.c.b16 %v1361, %v1353
        %v2378 = vpack.c.b16 %v1362, %v1354
        %v2379 = vpack.c.b16 %v1363, %v1355
        %v2380 = vpack.c.b16 %v1372, %v1364
        %v2381 = vpack.c.b16 %v1373, %v1365
        %v2382 = vpack.c.b16 %v1374, %v1366
        %v2383 = vpack.c.b16 %v1375, %v1367
        %v2384 = vpack.c.b16 %v1376, %v1368
        %v2385 = vpack.c.b16 %v1377, %v1369
        %v2386 = vpack.c.b16 %v1378, %v1370
        %v2387 = vpack.c.b16 %v1379, %v1371
        %v2388 = vpack.c.b16 %v1388, %v1380
        %v2389 = vpack.c.b16 %v1389, %v1381
        %v2390 = vpack.c.b16 %v1390, %v1382
        %v2391 = vpack.c.b16 %v1391, %v1383
        %v2392 = vpack.c.b16 %v1392, %v1384
        %v2393 = vpack.c.b16 %v1393, %v1385
        %v2394 = vpack.c.b16 %v1394, %v1386
        %v2395 = vpack.c.b16 %v1395, %v1387
        %v2396 = vpack.c.b16 %v1404, %v1396
        %v2397 = vpack.c.b16 %v1405, %v1397
        %v2398 = vpack.c.b16 %v1406, %v1398
        %v2399 = vpack.c.b16 %v1407, %v1399
        %v2400 = vpack.c.b16 %v1408, %v1400
        %v2401 = vpack.c.b16 %v1409, %v1401
        %v2402 = vpack.c.b16 %v1410, %v1402
        %v2403 = vpack.c.b16 %v1411, %v1403
        %v2404 = vpack.c.b16 %v1420, %v1412
        %v2405 = vpack.c.b16 %v1421, %v1413
        %v2406 = vpack.c.b16 %v1422, %v1414
        %v2407 = vpack.c.b16 %v1423, %v1415
        %v2408 = vpack.c.b16 %v1424, %v1416
        %v2409 = vpack.c.b16 %v1425, %v1417
        %v2410 = vpack.c.b16 %v1426, %v1418
        %v2411 = vpack.c.b16 %v1427, %v1419
        %v2412 = vpack.c.b16 %v1436, %v1428
        %v2413 = vpack.c.b16 %v1437, %v1429
        %v2414 = vpack.c.b16 %v1438, %v1430
        %v2415 = vpack.c.b16 %v1439, %v1431
        %v2416 = vpack.c.b16 %v1440, %v1432
        %v2417 = vpack.c.b16 %v1441, %v1433
        %v2418 = vpack.c.b16 %v1442, %v1434
        %v2419 = vpack.c.b16 %v1443, %v1435
        %v2420 = vpack.c.b16 %v1452, %v1444
        %v2421 = vpack.c.b16 %v1453, %v1445
        %v2422 = vpack.c.b16 %v1454, %v1446
        %v2423 = vpack.c.b16 %v1455, %v1447
        %v2424 = vpack.c.b16 %v1456, %v1448
        %v2425 = vpack.c.b16 %v1457, %v1449
        %v2426 = vpack.c.b16 %v1458, %v1450
        %v2427 = vpack.c.b16 %v1459, %v1451
        %v2428 = vpack.c.b16 %v1468, %v1460
        %v2429 = vpack.c.b16 %v1469, %v1461
        %v2430 = vpack.c.b16 %v1470, %v1462
        %v2431 = vpack.c.b16 %v1471, %v1463
        %v2432 = vpack.c.b16 %v1472, %v1464
        %v2433 = vpack.c.b16 %v1473, %v1465
        %v2434 = vpack.c.b16 %v1474, %v1466
        %v2435 = vpack.c.b16 %v1475, %v1467
        %v2436 = vpack.c.b16 %v1484, %v1476
        %v2437 = vpack.c.b16 %v1485, %v1477
        %v2438 = vpack.c.b16 %v1486, %v1478
        %v2439 = vpack.c.b16 %v1487, %v1479
        %v2440 = vpack.c.b16 %v1488, %v1480
        %v2441 = vpack.c.b16 %v1489, %v1481
        %v2442 = vpack.c.b16 %v1490, %v1482
        %v2443 = vpack.c.b16 %v1491, %v1483
        %v2444 = vpack.c.b16 %v1500, %v1492
        %v2445 = vpack.c.b16 %v1501, %v1493
        %v2446 = vpack.c.b16 %v1502, %v1494
        %v2447 = vpack.c.b16 %v1503, %v1495
        %v2448 = vpack.c.b16 %v1504, %v1496
        %v2449 = vpack.c.b16 %v1505, %v1497
        %v2450 = vpack.c.b16 %v1506, %v1498
        %v2451 = vpack.c.b16 %v1507, %v1499
        %v2452 = vpack.c.b16 %v1516, %v1508
        %v2453 = vpack.c.b16 %v1517, %v1509
        %v2454 = vpack.c.b16 %v1518, %v1510
        %v2455 = vpack.c.b16 %v1519, %v1511
        %v2456 = vpack.c.b16 %v1520, %v1512
        %v2457 = vpack.c.b16 %v1521, %v1513
        %v2458 = vpack.c.b16 %v1522, %v1514
        %v2459 = vpack.c.b16 %v1523, %v1515
        %v2460 = vpack.c.b16 %v1532, %v1524
        %v2461 = vpack.c.b16 %v1533, %v1525
        %v2462 = vpack.c.b16 %v1534, %v1526
        %v2463 = vpack.c.b16 %v1535, %v1527
        %v2464 = vpack.c.b16 %v1536, %v1528
        %v2465 = vpack.c.b16 %v1537, %v1529
        %v2466 = vpack.c.b16 %v1538, %v1530
        %v2467 = vpack.c.b16 %v1539, %v1531
        %v2468 = vpack.c.b16 %v1548, %v1540
        %v2469 = vpack.c.b16 %v1549, %v1541
        %v2470 = vpack.c.b16 %v1550, %v1542
        %v2471 = vpack.c.b16 %v1551, %v1543
        %v2472 = vpack.c.b16 %v1552, %v1544
        %v2473 = vpack.c.b16 %v1553, %v1545
        %v2474 = vpack.c.b16 %v1554, %v1546
        %v2475 = vpack.c.b16 %v1555, %v1547
        %v2476 = vpack.c.b16 %v1564, %v1556
        %v2477 = vpack.c.b16 %v1565, %v1557
        %v2478 = vpack.c.b16 %v1566, %v1558
        %v2479 = vpack.c.b16 %v1567, %v1559
        %v2480 = vpack.c.b16 %v1568, %v1560
        %v2481 = vpack.c.b16 %v1569, %v1561
        %v2482 = vpack.c.b16 %v1570, %v1562
        %v2483 = vpack.c.b16 %v1571, %v1563
        %v2484 = vpack.c.b16 %v1580, %v1572
        %v2485 = vpack.c.b16 %v1581, %v1573
        %v2486 = vpack.c.b16 %v1582, %v1574
        %v2487 = vpack.c.b16 %v1583, %v1575
        %v2488 = vpack.c.b16 %v1584, %v1576
        %v2489 = vpack.c.b16 %v1585, %v1577
        %v2490 = vpack.c.b16 %v1586, %v1578
        %v2491 = vpack.c.b16 %v1587, %v1579
        %v2492 = vpack.c.b16 %v1596, %v1588
        %v2493 = vpack.c.b16 %v1597, %v1589
        %v2494 = vpack.c.b16 %v1598, %v1590
        %v2495 = vpack.c.b16 %v1599, %v1591
        %v2496 = vpack.c.b16 %v1600, %v1592
        %v2497 = vpack.c.b16 %v1601, %v1593
        %v2498 = vpack.c.b16 %v1602, %v1594
        %v2499 = vpack.c.b16 %v1603, %v1595
        %v2500 = vpack.c.b16 %v1612, %v1604
        %v2501 = vpack.c.b16 %v1613, %v1605
        %v2502 = vpack.c.b16 %v1614, %v1606
        %v2503 = vpack.c.b16 %v1615, %v1607
        %v2504 = vpack.c.b16 %v1616, %v1608
        %v2505 = vpack.c.b16 %v1617, %v1609
        %v2506 = vpack.c.b16 %v1618, %v1610
        %v2507 = vpack.c.b16 %v1619, %v1611
        %v2508 = vpack.c.b16 %v1628, %v1620
        %v2509 = vpack.c.b16 %v1629, %v1621
        %v2510 = vpack.c.b16 %v1630, %v1622
        %v2511 = vpack.c.b16 %v1631, %v1623
        %v2512 = vpack.c.b16 %v1632, %v1624
        %v2513 = vpack.c.b16 %v1633, %v1625
        %v2514 = vpack.c.b16 %v1634, %v1626
        %v2515 = vpack.c.b16 %v1635, %v1627
        %v2516 = vpack.c.b16 %v1644, %v1636
        %v2517 = vpack.c.b16 %v1645, %v1637
        %v2518 = vpack.c.b16 %v1646, %v1638
        %v2519 = vpack.c.b16 %v1647, %v1639
        %v2520 = vpack.c.b16 %v1648, %v1640
        %v2521 = vpack.c.b16 %v1649, %v1641
        %v2522 = vpack.c.b16 %v1650, %v1642
        %v2523 = vpack.c.b16 %v1651, %v1643
        %v2524 = vpack.c.b16 %v1660, %v1652
        %v2525 = vpack.c.b16 %v1661, %v1653
        %v2526 = vpack.c.b16 %v1662, %v1654
        %v2527 = vpack.c.b16 %v1663, %v1655
        %v2528 = vpack.c.b16 %v1664, %v1656
        %v2529 = vpack.c.b16 %v1665, %v1657
        %v2530 = vpack.c.b16 %v1666, %v1658
        %v2531 = vpack.c.b16 %v1667, %v1659
        %v2532 = vpack.c.b16 %v1676, %v1668
        %v2533 = vpack.c.b16 %v1677, %v1669
        %v2534 = vpack.c.b16 %v1678, %v1670
        %v2535 = vpack.c.b16 %v1679, %v1671
        %v2536 = vpack.c.b16 %v1680, %v1672
        %v2537 = vpack.c.b16 %v1681, %v1673
        %v2538 = vpack.c.b16 %v1682, %v1674
        %v2539 = vpack.c.b16 %v1683, %v1675
        %v2540 = vpack.c.b16 %v1692, %v1684
        %v2541 = vpack.c.b16 %v1693, %v1685
        %v2542 = vpack.c.b16 %v1694, %v1686
        %v2543 = vpack.c.b16 %v1695, %v1687
        %v2544 = vpack.c.b16 %v1696, %v1688
        %v2545 = vpack.c.b16 %v1697, %v1689
        %v2546 = vpack.c.b16 %v1698, %v1690
        %v2547 = vpack.c.b16 %v1699, %v1691
        %v2548 = vpack.c.b16 %v1708, %v1700
        %v2549 = vpack.c.b16 %v1709, %v1701
        %v2550 = vpack.c.b16 %v1710, %v1702
        %v2551 = vpack.c.b16 %v1711, %v1703
        %v2552 = vpack.c.b16 %v1712, %v1704
        %v2553 = vpack.c.b16 %v1713, %v1705
        %v2554 = vpack.c.b16 %v1714, %v1706
        %v2555 = vpack.c.b16 %v1715, %v1707
        %v2556 = vpack.c.b16 %v1724, %v1716
        %v2557 = vpack.c.b16 %v1725, %v1717
        %v2558 = vpack.c.b16 %v1726, %v1718
        %v2559 = vpack.c.b16 %v1727, %v1719
        %v2560 = vpack.c.b16 %v1728, %v1720
        %v2561 = vpack.c.b16 %v1729, %v1721
        %v2562 = vpack.c.b16 %v1730, %v1722
        %v2563 = vpack.c.b16 %v1731, %v1723
        %v2564 = vpack.c.b16 %v1740, %v1732
        %v2565 = vpack.c.b16 %v1741, %v1733
        %v2566 = vpack.c.b16 %v1742, %v1734
        %v2567 = vpack.c.b16 %v1743, %v1735
        %v2568 = vpack.c.b16 %v1744, %v1736
        %v2569 = vpack.c.b16 %v1745, %v1737
        %v2570 = vpack.c.b16 %v1746, %v1738
        %v2571 = vpack.c.b16 %v1747, %v1739
        %v2572 = vpack.c.b16 %v1756, %v1748
        %v2573 = vpack.c.b16 %v1757, %v1749
        %v2574 = vpack.c.b16 %v1758, %v1750
        %v2575 = vpack.c.b16 %v1759, %v1751
        %v2576 = vpack.c.b16 %v1760, %v1752
        %v2577 = vpack.c.b16 %v1761, %v1753
        %v2578 = vpack.c.b16 %v1762, %v1754
        %v2579 = vpack.c.b16 %v1763, %v1755
        %v2580 = vpack.c.b16 %v1772, %v1764
        %v2581 = vpack.c.b16 %v1773, %v1765
        %v2582 = vpack.c.b16 %v1774, %v1766
        %v2583 = vpack.c.b16 %v1775, %v1767
        %v2584 = vpack.c.b16 %v1776, %v1768
        %v2585 = vpack.c.b16 %v1777, %v1769
        %v2586 = vpack.c.b16 %v1778, %v1770
        %v2587 = vpack.c.b16 %v1779, %v1771
        %v2588 = vpack.c.b16 %v1788, %v1780
        %v2589 = vpack.c.b16 %v1789, %v1781
        %v2590 = vpack.c.b16 %v1790, %v1782
        %v2591 = vpack.c.b16 %v1791, %v1783
        %v2592 = vpack.c.b16 %v1792, %v1784
        %v2593 = vpack.c.b16 %v1793, %v1785
        %v2594 = vpack.c.b16 %v1794, %v1786
        %v2595 = vpack.c.b16 %v1795, %v1787
        %v2596 = vpack.c.b16 %v1804, %v1796
        %v2597 = vpack.c.b16 %v1805, %v1797
        %v2598 = vpack.c.b16 %v1806, %v1798
        %v2599 = vpack.c.b16 %v1807, %v1799
        %v2600 = vpack.c.b16 %v1808, %v1800
        %v2601 = vpack.c.b16 %v1809, %v1801
        %v2602 = vpack.c.b16 %v1810, %v1802
        %v2603 = vpack.c.b16 %v1811, %v1803
        %v2604 = vpack.c.b16 %v1820, %v1812
        %v2605 = vpack.c.b16 %v1821, %v1813
        %v2606 = vpack.c.b16 %v1822, %v1814
        %v2607 = vpack.c.b16 %v1823, %v1815
        %v2608 = vpack.c.b16 %v1824, %v1816
        %v2609 = vpack.c.b16 %v1825, %v1817
        %v2610 = vpack.c.b16 %v1826, %v1818
        %v2611 = vpack.c.b16 %v1827, %v1819
        %v2612 = vpack.c.b16 %v1836, %v1828
        %v2613 = vpack.c.b16 %v1837, %v1829
        %v2614 = vpack.c.b16 %v1838, %v1830
        %v2615 = vpack.c.b16 %v1839, %v1831
        %v2616 = vpack.c.b16 %v1840, %v1832
        %v2617 = vpack.c.b16 %v1841, %v1833
        %v2618 = vpack.c.b16 %v1842, %v1834
        %v2619 = vpack.c.b16 %v1843, %v1835
        %v2620 = vpack.c.b16 %v1852, %v1844
        %v2621 = vpack.c.b16 %v1853, %v1845
        %v2622 = vpack.c.b16 %v1854, %v1846
        %v2623 = vpack.c.b16 %v1855, %v1847
        %v2624 = vpack.c.b16 %v1856, %v1848
        %v2625 = vpack.c.b16 %v1857, %v1849
        %v2626 = vpack.c.b16 %v1858, %v1850
        %v2627 = vpack.c.b16 %v1859, %v1851
        %v2628 = vpack.c.b16 %v1868, %v1860
        %v2629 = vpack.c.b16 %v1869, %v1861
        %v2630 = vpack.c.b16 %v1870, %v1862
        %v2631 = vpack.c.b16 %v1871, %v1863
        %v2632 = vpack.c.b16 %v1872, %v1864
        %v2633 = vpack.c.b16 %v1873, %v1865
        %v2634 = vpack.c.b16 %v1874, %v1866
        %v2635 = vpack.c.b16 %v1875, %v1867
        %v2636 = vpack.c.b16 %v1884, %v1876
        %v2637 = vpack.c.b16 %v1885, %v1877
        %v2638 = vpack.c.b16 %v1886, %v1878
        %v2639 = vpack.c.b16 %v1887, %v1879
        %v2640 = vpack.c.b16 %v1888, %v1880
        %v2641 = vpack.c.b16 %v1889, %v1881
        %v2642 = vpack.c.b16 %v1890, %v1882
        %v2643 = vpack.c.b16 %v1891, %v1883
        %v2644 = vpack.c.b16 %v1900, %v1892
        %v2645 = vpack.c.b16 %v1901, %v1893
        %v2646 = vpack.c.b16 %v1902, %v1894
        %v2647 = vpack.c.b16 %v1903, %v1895
        %v2648 = vpack.c.b16 %v1904, %v1896
        %v2649 = vpack.c.b16 %v1905, %v1897
        %v2650 = vpack.c.b16 %v1906, %v1898
        %v2651 = vpack.c.b16 %v1907, %v1899
        %v2652 = vpack.c.b16 %v1916, %v1908
        %v2653 = vpack.c.b16 %v1917, %v1909
        %v2654 = vpack.c.b16 %v1918, %v1910
        %v2655 = vpack.c.b16 %v1919, %v1911
        %v2656 = vpack.c.b16 %v1920, %v1912
        %v2657 = vpack.c.b16 %v1921, %v1913
        %v2658 = vpack.c.b16 %v1922, %v1914
        %v2659 = vpack.c.b16 %v1923, %v1915
        %v2660 = vpack.c.b16 %v1932, %v1924
        %v2661 = vpack.c.b16 %v1933, %v1925
        %v2662 = vpack.c.b16 %v1934, %v1926
        %v2663 = vpack.c.b16 %v1935, %v1927
        %v2664 = vpack.c.b16 %v1936, %v1928
        %v2665 = vpack.c.b16 %v1937, %v1929
        %v2666 = vpack.c.b16 %v1938, %v1930
        %v2667 = vpack.c.b16 %v1939, %v1931
        %v2668 = vpack.c.b16 %v1948, %v1940
        %v2669 = vpack.c.b16 %v1949, %v1941
        %v2670 = vpack.c.b16 %v1950, %v1942
        %v2671 = vpack.c.b16 %v1951, %v1943
        %v2672 = vpack.c.b16 %v1952, %v1944
        %v2673 = vpack.c.b16 %v1953, %v1945
        %v2674 = vpack.c.b16 %v1954, %v1946
        %v2675 = vpack.c.b16 %v1955, %v1947
        %v2676 = vpack.c.b16 %v1964, %v1956
        %v2677 = vpack.c.b16 %v1965, %v1957
        %v2678 = vpack.c.b16 %v1966, %v1958
        %v2679 = vpack.c.b16 %v1967, %v1959
        %v2680 = vpack.c.b16 %v1968, %v1960
        %v2681 = vpack.c.b16 %v1969, %v1961
        %v2682 = vpack.c.b16 %v1970, %v1962
        %v2683 = vpack.c.b16 %v1971, %v1963
        %v2684 = vpack.c.b16 %v1980, %v1972
        %v2685 = vpack.c.b16 %v1981, %v1973
        %v2686 = vpack.c.b16 %v1982, %v1974
        %v2687 = vpack.c.b16 %v1983, %v1975
        %v2688 = vpack.c.b16 %v1984, %v1976
        %v2689 = vpack.c.b16 %v1985, %v1977
        %v2690 = vpack.c.b16 %v1986, %v1978
        %v2691 = vpack.c.b16 %v1987, %v1979
        %v2692 = vpack.c.b16 %v1996, %v1988
        %v2693 = vpack.c.b16 %v1997, %v1989
        %v2694 = vpack.c.b16 %v1998, %v1990
        %v2695 = vpack.c.b16 %v1999, %v1991
        %v2696 = vpack.c.b16 %v2000, %v1992
        %v2697 = vpack.c.b16 %v2001, %v1993
        %v2698 = vpack.c.b16 %v2002, %v1994
        %v2699 = vpack.c.b16 %v2003, %v1995
        %v2700 = vpack.c.b16 %v2012, %v2004
        %v2701 = vpack.c.b16 %v2013, %v2005
        %v2702 = vpack.c.b16 %v2014, %v2006
        %v2703 = vpack.c.b16 %v2015, %v2007
        %v2704 = vpack.c.b16 %v2016, %v2008
        %v2705 = vpack.c.b16 %v2017, %v2009
        %v2706 = vpack.c.b16 %v2018, %v2010
        %v2707 = vpack.c.b16 %v2019, %v2011
        %v2708 = vpack.c.b16 %v2028, %v2020
        %v2709 = vpack.c.b16 %v2029, %v2021
        %v2710 = vpack.c.b16 %v2030, %v2022
        %v2711 = vpack.c.b16 %v2031, %v2023
        %v2712 = vpack.c.b16 %v2032, %v2024
        %v2713 = vpack.c.b16 %v2033, %v2025
        %v2714 = vpack.c.b16 %v2034, %v2026
        %v2715 = vpack.c.b16 %v2035, %v2027
        %v2716 = vpack.c.b16 %v2044, %v2036
        %v2717 = vpack.c.b16 %v2045, %v2037
        %v2718 = vpack.c.b16 %v2046, %v2038
        %v2719 = vpack.c.b16 %v2047, %v2039
        %v2720 = vpack.c.b16 %v2048, %v2040
        %v2721 = vpack.c.b16 %v2049, %v2041
        %v2722 = vpack.c.b16 %v2050, %v2042
        %v2723 = vpack.c.b16 %v2051, %v2043
        %v2724 = vpack.c.b16 %v2060, %v2052
        %v2725 = vpack.c.b16 %v2061, %v2053
        %v2726 = vpack.c.b16 %v2062, %v2054
        %v2727 = vpack.c.b16 %v2063, %v2055
        %v2728 = vpack.c.b16 %v2064, %v2056
        %v2729 = vpack.c.b16 %v2065, %v2057
        %v2730 = vpack.c.b16 %v2066, %v2058
        %v2731 = vpack.c.b16 %v2067, %v2059
        %v2732 = vpack.c.b16 %v2076, %v2068
        %v2733 = vpack.c.b16 %v2077, %v2069
        %v2734 = vpack.c.b16 %v2078, %v2070
        %v2735 = vpack.c.b16 %v2079, %v2071
        %v2736 = vpack.c.b16 %v2080, %v2072
        %v2737 = vpack.c.b16 %v2081, %v2073
        %v2738 = vpack.c.b16 %v2082, %v2074
        %v2739 = vpack.c.b16 %v2083, %v2075
        %v2740 = vpack.c.b16 %v2092, %v2084
        %v2741 = vpack.c.b16 %v2093, %v2085
        %v2742 = vpack.c.b16 %v2094, %v2086
        %v2743 = vpack.c.b16 %v2095, %v2087
        %v2744 = vpack.c.b16 %v2096, %v2088
        %v2745 = vpack.c.b16 %v2097, %v2089
        %v2746 = vpack.c.b16 %v2098, %v2090
        %v2747 = vpack.c.b16 %v2099, %v2091
        %v2748 = vpack.c.b16 %v2108, %v2100
        %v2749 = vpack.c.b16 %v2109, %v2101
        %v2750 = vpack.c.b16 %v2110, %v2102
        %v2751 = vpack.c.b16 %v2111, %v2103
        %v2752 = vpack.c.b16 %v2112, %v2104
        %v2753 = vpack.c.b16 %v2113, %v2105
        %v2754 = vpack.c.b16 %v2114, %v2106
        %v2755 = vpack.c.b16 %v2115, %v2107
        %v2756 = vpack.c.b16 %v2124, %v2116
        %v2757 = vpack.c.b16 %v2125, %v2117
        %v2758 = vpack.c.b16 %v2126, %v2118
        %v2759 = vpack.c.b16 %v2127, %v2119
        %v2760 = vpack.c.b16 %v2128, %v2120
        %v2761 = vpack.c.b16 %v2129, %v2121
        %v2762 = vpack.c.b16 %v2130, %v2122
        %v2763 = vpack.c.b16 %v2131, %v2123
        %v2764 = vpack.c.b16 %v2140, %v2132
        %v2765 = vpack.c.b16 %v2141, %v2133
        %v2766 = vpack.c.b16 %v2142, %v2134
        %v2767 = vpack.c.b16 %v2143, %v2135
        %v2768 = vpack.c.b16 %v2144, %v2136
        %v2769 = vpack.c.b16 %v2145, %v2137
        %v2770 = vpack.c.b16 %v2146, %v2138
        %v2771 = vpack.c.b16 %v2147, %v2139
        %v2772 = vpack.c.b16 %v2156, %v2148
        %v2773 = vpack.c.b16 %v2157, %v2149
        %v2774 = vpack.c.b16 %v2158, %v2150
        %v2775 = vpack.c.b16 %v2159, %v2151
        %v2776 = vpack.c.b16 %v2160, %v2152
        %v2777 = vpack.c.b16 %v2161, %v2153
        %v2778 = vpack.c.b16 %v2162, %v2154
        %v2779 = vpack.c.b16 %v2163, %v2155
        %v2780 = vpack.c.b16 %v2172, %v2164
        %v2781 = vpack.c.b16 %v2173, %v2165
        %v2782 = vpack.c.b16 %v2174, %v2166
        %v2783 = vpack.c.b16 %v2175, %v2167
        %v2784 = vpack.c.b16 %v2176, %v2168
        %v2785 = vpack.c.b16 %v2177, %v2169
        %v2786 = vpack.c.b16 %v2178, %v2170
        %v2787 = vpack.c.b16 %v2179, %v2171
        %v2788 = vpack.c.b16 %v2188, %v2180
        %v2789 = vpack.c.b16 %v2189, %v2181
        %v2790 = vpack.c.b16 %v2190, %v2182
        %v2791 = vpack.c.b16 %v2191, %v2183
        %v2792 = vpack.c.b16 %v2192, %v2184
        %v2793 = vpack.c.b16 %v2193, %v2185
        %v2794 = vpack.c.b16 %v2194, %v2186
        %v2795 = vpack.c.b16 %v2195, %v2187
        %v2796 = vpack.c.b16 %v2204, %v2196
        %v2797 = vpack.c.b16 %v2205, %v2197
        %v2798 = vpack.c.b16 %v2206, %v2198
        %v2799 = vpack.c.b16 %v2207, %v2199
        %v2800 = vpack.c.b16 %v2208, %v2200
        %v2801 = vpack.c.b16 %v2209, %v2201
        %v2802 = vpack.c.b16 %v2210, %v2202
        %v2803 = vpack.c.b16 %v2211, %v2203
        %v2804 = vpack.c.b16 %v2220, %v2212
        %v2805 = vpack.c.b16 %v2221, %v2213
        %v2806 = vpack.c.b16 %v2222, %v2214
        %v2807 = vpack.c.b16 %v2223, %v2215
        %v2808 = vpack.c.b16 %v2224, %v2216
        %v2809 = vpack.c.b16 %v2225, %v2217
        %v2810 = vpack.c.b16 %v2226, %v2218
        %v2811 = vpack.c.b16 %v2227, %v2219
        %v2812 = vpack.c.b16 %v2236, %v2228
        %v2813 = vpack.c.b16 %v2237, %v2229
        %v2814 = vpack.c.b16 %v2238, %v2230
        %v2815 = vpack.c.b16 %v2239, %v2231
        %v2816 = vpack.c.b16 %v2240, %v2232
        %v2817 = vpack.c.b16 %v2241, %v2233
        %v2818 = vpack.c.b16 %v2242, %v2234
        %v2819 = vpack.c.b16 %v2243, %v2235
        %v2820 = vpack.c.b16 %v2252, %v2244
        %v2821 = vpack.c.b16 %v2253, %v2245
        %v2822 = vpack.c.b16 %v2254, %v2246
        %v2823 = vpack.c.b16 %v2255, %v2247
        %v2824 = vpack.c.b16 %v2256, %v2248
        %v2825 = vpack.c.b16 %v2257, %v2249
        %v2826 = vpack.c.b16 %v2258, %v2250
        %v2827 = vpack.c.b16 %v2259, %v2251
        %v2828 = vpack.c.b16 %v2268, %v2260
        %v2829 = vpack.c.b16 %v2269, %v2261
        %v2830 = vpack.c.b16 %v2270, %v2262
        %v2831 = vpack.c.b16 %v2271, %v2263
        %v2832 = vpack.c.b16 %v2272, %v2264
        %v2833 = vpack.c.b16 %v2273, %v2265
        %v2834 = vpack.c.b16 %v2274, %v2266
        %v2835 = vpack.c.b16 %v2275, %v2267
        %v2836 = vpack.c.b16 %v2284, %v2276
        %v2837 = vpack.c.b16 %v2285, %v2277
        %v2838 = vpack.c.b16 %v2286, %v2278
        %v2839 = vpack.c.b16 %v2287, %v2279
        %v2840 = vpack.c.b16 %v2288, %v2280
        %v2841 = vpack.c.b16 %v2289, %v2281
        %v2842 = vpack.c.b16 %v2290, %v2282
        %v2843 = vpack.c.b16 %v2291, %v2283
        %v2844 = vpack.c.b16 %v2300, %v2292
        %v2845 = vpack.c.b16 %v2301, %v2293
        %v2846 = vpack.c.b16 %v2302, %v2294
        %v2847 = vpack.c.b16 %v2303, %v2295
        %v2848 = vpack.c.b16 %v2304, %v2296
        %v2849 = vpack.c.b16 %v2305, %v2297
        %v2850 = vpack.c.b16 %v2306, %v2298
        %v2851 = vpack.c.b16 %v2307, %v2299
        %v2852 = vpack.c.b16 %v2316, %v2308
        %v2853 = vpack.c.b16 %v2317, %v2309
        %v2854 = vpack.c.b16 %v2318, %v2310
        %v2855 = vpack.c.b16 %v2319, %v2311
        %v2856 = vpack.c.b16 %v2320, %v2312
        %v2857 = vpack.c.b16 %v2321, %v2313
        %v2858 = vpack.c.b16 %v2322, %v2314
        %v2859 = vpack.c.b16 %v2323, %v2315
        %v2860 = vpack.c.b16 %v2332, %v2324
        %v2861 = vpack.c.b16 %v2333, %v2325
        %v2862 = vpack.c.b16 %v2334, %v2326
        %v2863 = vpack.c.b16 %v2335, %v2327
        %v2864 = vpack.c.b16 %v2336, %v2328
        %v2865 = vpack.c.b16 %v2337, %v2329
        %v2866 = vpack.c.b16 %v2338, %v2330
        %v2867 = vpack.c.b16 %v2339, %v2331
        %v2868 = vpack.c.b16 %v2348, %v2340
        %v2869 = vpack.c.b16 %v2349, %v2341
        %v2870 = vpack.c.b16 %v2350, %v2342
        %v2871 = vpack.c.b16 %v2351, %v2343
        %v2872 = vpack.c.b16 %v2352, %v2344
        %v2873 = vpack.c.b16 %v2353, %v2345
        %v2874 = vpack.c.b16 %v2354, %v2346
        %v2875 = vpack.c.b16 %v2355, %v2347
        %v2876 = vpack.c.b16 %v2364, %v2356
        %v2877 = vpack.c.b16 %v2365, %v2357
        %v2878 = vpack.c.b16 %v2366, %v2358
        %v2879 = vpack.c.b16 %v2367, %v2359
        %v2880 = vpack.c.b16 %v2368, %v2360
        %v2881 = vpack.c.b16 %v2369, %v2361
        %v2882 = vpack.c.b16 %v2370, %v2362
        %v2883 = vpack.c.b16 %v2371, %v2363
        %3396 = vmatprep.subr.bf16.mxu0 %v2373
        %3397 = vmatpush1.bf16.msra.mxu0 %v2372
        %3398 = vmatprep.subr.bf16.mxu0 %v2381
        %3399 = vmatpush1.bf16.msra.mxu0 %v2380
        %3400 = vmatprep.subr.bf16.mxu0 %v2389
        %3401 = vmatpush1.bf16.msra.mxu0 %v2388
        %3402 = vmatprep.subr.bf16.mxu0 %v2397
        %3403 = vmatpush1.bf16.msra.mxu0 %v2396
        %3404 = vmatprep.subr.bf16.mxu0 %v2405
        %3405 = vmatpush1.bf16.msra.mxu0 %v2404
        %3406 = vmatprep.subr.bf16.mxu0 %v2413
        %3407 = vmatpush1.bf16.msra.mxu0 %v2412
        %3408 = vmatprep.subr.bf16.mxu0 %v2421
        %3409 = vmatpush1.bf16.msra.mxu0 %v2420
        %3410 = vmatprep.subr.bf16.mxu0 %v2429
        %3411 = vmatpush1.bf16.msra.mxu0 %v2428
        %3412 = vmatprep.subr.bf16.mxu0 %v2437
        %3413 = vmatpush1.bf16.msra.mxu0 %v2436
        %3414 = vmatprep.subr.bf16.mxu0 %v2445
        %3415 = vmatpush1.bf16.msra.mxu0 %v2444
        %3416 = vmatprep.subr.bf16.mxu0 %v2453
        %3417 = vmatpush1.bf16.msra.mxu0 %v2452
        %3418 = vmatprep.subr.bf16.mxu0 %v2461
        %3419 = vmatpush1.bf16.msra.mxu0 %v2460
        %3420 = vmatprep.subr.bf16.mxu0 %v2469
        %3421 = vmatpush1.bf16.msra.mxu0 %v2468
        %3422 = vmatprep.subr.bf16.mxu0 %v2477
        %3423 = vmatpush1.bf16.msra.mxu0 %v2476
        %3424 = vmatprep.subr.bf16.mxu0 %v2485
        %3425 = vmatpush1.bf16.msra.mxu0 %v2484
        %3426 = vmatprep.subr.bf16.mxu0 %v2493
        %3427 = vmatpush1.bf16.msra.mxu0 %v2492
        %3428 = vmatprep.mubr.bf16.mxu0 %v821
        %3429 = vmatmul.mubr.bf16.gmra.mrb[0].mxu0 %v820
        %v3430 = vpop.f32.mrb[0].mxu0
        %v3431 = vadd.f32 0.0, %v3430
        %v3432 = vpop.f32.mrb[0].mxu0
        %v3433 = vadd.f32 0.0, %v3432
        %v3434 = vpop.f32.mrb[0].mxu0
        %v3435 = vpop.f32.mrb[0].mxu0
        %3436 = vdwg.mxu0
        %3437 = vmatprep.subr.bf16.mxu0 %v2501
        %3438 = vmatpush1.bf16.msra.mxu0 %v2500
        %3439 = vmatprep.subr.bf16.mxu0 %v2509
        %3440 = vmatpush1.bf16.msra.mxu0 %v2508
        %3441 = vmatprep.subr.bf16.mxu0 %v2517
        %3442 = vmatpush1.bf16.msra.mxu0 %v2516
        %3443 = vmatprep.subr.bf16.mxu0 %v2525
        %3444 = vmatpush1.bf16.msra.mxu0 %v2524
        %3445 = vmatprep.subr.bf16.mxu0 %v2533
        %3446 = vmatpush1.bf16.msra.mxu0 %v2532
        %3447 = vmatprep.subr.bf16.mxu0 %v2541
        %3448 = vmatpush1.bf16.msra.mxu0 %v2540
        %3449 = vmatprep.subr.bf16.mxu0 %v2549
        %3450 = vmatpush1.bf16.msra.mxu0 %v2548
        %3451 = vmatprep.subr.bf16.mxu0 %v2557
        %3452 = vmatpush1.bf16.msra.mxu0 %v2556
        %3453 = vmatprep.subr.bf16.mxu0 %v2565
        %3454 = vmatpush1.bf16.msra.mxu0 %v2564
        %3455 = vmatprep.subr.bf16.mxu0 %v2573
        %3456 = vmatpush1.bf16.msra.mxu0 %v2572
        %3457 = vmatprep.subr.bf16.mxu0 %v2581
        %3458 = vmatpush1.bf16.msra.mxu0 %v2580
        %3459 = vmatprep.subr.bf16.mxu0 %v2589
        %3460 = vmatpush1.bf16.msra.mxu0 %v2588
        %3461 = vmatprep.subr.bf16.mxu0 %v2597
        %3462 = vmatpush1.bf16.msra.mxu0 %v2596
        %3463 = vmatprep.subr.bf16.mxu0 %v2605
        %3464 = vmatpush1.bf16.msra.mxu0 %v2604
        %3465 = vmatprep.subr.bf16.mxu0 %v2613
        %3466 = vmatpush1.bf16.msra.mxu0 %v2612
        %3467 = vmatprep.subr.bf16.mxu0 %v2621
        %3468 = vmatpush1.bf16.msra.mxu0 %v2620
        %3469 = vmatprep.mubr.bf16.mxu0 %v823
        %3470 = vmatmul.mubr.bf16.gmra.mrb[0].mxu0 %v822
        %v3471 = vpop.f32.mrb[0].mxu0
        %v3472 = vadd.f32 %v3431, %v3471
        %v3473 = vpop.f32.mrb[0].mxu0
        %v3474 = vadd.f32 %v3433, %v3473
        %v3475 = vpop.f32.mrb[0].mxu0
        %v3476 = vpop.f32.mrb[0].mxu0
        %3477 = vdwg.mxu0
        %3478 = vmatprep.subr.bf16.mxu0 %v2629
        %3479 = vmatpush1.bf16.msra.mxu0 %v2628
        %3480 = vmatprep.subr.bf16.mxu0 %v2637
        %3481 = vmatpush1.bf16.msra.mxu0 %v2636
        %3482 = vmatprep.subr.bf16.mxu0 %v2645
        %3483 = vmatpush1.bf16.msra.mxu0 %v2644
        %3484 = vmatprep.subr.bf16.mxu0 %v2653
        %3485 = vmatpush1.bf16.msra.mxu0 %v2652
        %3486 = vmatprep.subr.bf16.mxu0 %v2661
        %3487 = vmatpush1.bf16.msra.mxu0 %v2660
        %3488 = vmatprep.subr.bf16.mxu0 %v2669
        %3489 = vmatpush1.bf16.msra.mxu0 %v2668
        %3490 = vmatprep.subr.bf16.mxu0 %v2677
        %3491 = vmatpush1.bf16.msra.mxu0 %v2676
        %3492 = vmatprep.subr.bf16.mxu0 %v2685
        %3493 = vmatpush1.bf16.msra.mxu0 %v2684
        %3494 = vmatprep.subr.bf16.mxu0 %v2693
        %3495 = vmatpush1.bf16.msra.mxu0 %v2692
        %3496 = vmatprep.subr.bf16.mxu0 %v2701
        %3497 = vmatpush1.bf16.msra.mxu0 %v2700
        %3498 = vmatprep.subr.bf16.mxu0 %v2709
        %3499 = vmatpush1.bf16.msra.mxu0 %v2708
        %3500 = vmatprep.subr.bf16.mxu0 %v2717
        %3501 = vmatpush1.bf16.msra.mxu0 %v2716
        %3502 = vmatprep.subr.bf16.mxu0 %v2725
        %3503 = vmatpush1.bf16.msra.mxu0 %v2724
        %3504 = vmatprep.subr.bf16.mxu0 %v2733
        %3505 = vmatpush1.bf16.msra.mxu0 %v2732
        %3506 = vmatprep.subr.bf16.mxu0 %v2741
        %3507 = vmatpush1.bf16.msra.mxu0 %v2740
        %3508 = vmatprep.subr.bf16.mxu0 %v2749
        %3509 = vmatpush1.bf16.msra.mxu0 %v2748
        %3510 = vmatprep.mubr.bf16.mxu0 %v825
        %3511 = vmatmul.mubr.bf16.gmra.mrb[0].mxu0 %v824
        %v3512 = vpop.f32.mrb[0].mxu0
        %v3513 = vadd.f32 %v3472, %v3512
        %v3514 = vpop.f32.mrb[0].mxu0
        %v3515 = vadd.f32 %v3474, %v3514
        %v3516 = vpop.f32.mrb[0].mxu0
        %v3517 = vpop.f32.mrb[0].mxu0
        %3518 = vdwg.mxu0
        %3519 = vmatprep.subr.bf16.mxu0 %v2757
        %3520 = vmatpush1.bf16.msra.mxu0 %v2756
        %3521 = vmatprep.subr.bf16.mxu0 %v2765
        %3522 = vmatpush1.bf16.msra.mxu0 %v2764
        %3523 = vmatprep.subr.bf16.mxu0 %v2773
        %3524 = vmatpush1.bf16.msra.mxu0 %v2772
        %3525 = vmatprep.subr.bf16.mxu0 %v2781
        %3526 = vmatpush1.bf16.msra.mxu0 %v2780
        %3527 = vmatprep.subr.bf16.mxu0 %v2789
        %3528 = vmatpush1.bf16.msra.mxu0 %v2788
        %3529 = vmatprep.subr.bf16.mxu0 %v2797
        %3530 = vmatpush1.bf16.msra.mxu0 %v2796
        %3531 = vmatprep.subr.bf16.mxu0 %v2805
        %3532 = vmatpush1.bf16.msra.mxu0 %v2804
        %3533 = vmatprep.subr.bf16.mxu0 %v2813
        %3534 = vmatpush1.bf16.msra.mxu0 %v2812
        %3535 = vmatprep.subr.bf16.mxu0 %v2821
        %3536 = vmatpush1.bf16.msra.mxu0 %v2820
        %3537 = vmatprep.subr.bf16.mxu0 %v2829
        %3538 = vmatpush1.bf16.msra.mxu0 %v2828
        %3539 = vmatprep.subr.bf16.mxu0 %v2837
        %3540 = vmatpush1.bf16.msra.mxu0 %v2836
        %3541 = vmatprep.subr.bf16.mxu0 %v2845
        %3542 = vmatpush1.bf16.msra.mxu0 %v2844
        %3543 = vmatprep.subr.bf16.mxu0 %v2853
        %3544 = vmatpush1.bf16.msra.mxu0 %v2852
        %3545 = vmatprep.subr.bf16.mxu0 %v2861
        %3546 = vmatpush1.bf16.msra.mxu0 %v2860
        %3547 = vmatprep.subr.bf16.mxu0 %v2869
        %3548 = vmatpush1.bf16.msra.mxu0 %v2868
        %3549 = vmatprep.subr.bf16.mxu0 %v2877
        %3550 = vmatpush1.bf16.msra.mxu0 %v2876
        %3551 = vmatprep.mubr.bf16.mxu0 %v827
        %3552 = vmatmul.mubr.bf16.gmra.mrb[0].mxu0 %v826
        %v3553 = vpop.f32.mrb[0].mxu0
        %v3554 = vadd.f32 %v3513, %v3553
        %v3555 = vpop.f32.mrb[0].mxu0
        %v3556 = vadd.f32 %v3515, %v3555
        %v3557 = vpop.f32.mrb[0].mxu0
        %v3558 = vpop.f32.mrb[0].mxu0
        %3559 = vdwg.mxu0
        %3560 = vmatprep.subr.bf16.mxu0 %v2375
        %3561 = vmatpush1.bf16.msra.mxu0 %v2374
        %3562 = vmatprep.subr.bf16.mxu0 %v2383
        %3563 = vmatpush1.bf16.msra.mxu0 %v2382
        %3564 = vmatprep.subr.bf16.mxu0 %v2391
        %3565 = vmatpush1.bf16.msra.mxu0 %v2390
        %3566 = vmatprep.subr.bf16.mxu0 %v2399
        %3567 = vmatpush1.bf16.msra.mxu0 %v2398
        %3568 = vmatprep.subr.bf16.mxu0 %v2407
        %3569 = vmatpush1.bf16.msra.mxu0 %v2406
        %3570 = vmatprep.subr.bf16.mxu0 %v2415
        %3571 = vmatpush1.bf16.msra.mxu0 %v2414
        %3572 = vmatprep.subr.bf16.mxu0 %v2423
        %3573 = vmatpush1.bf16.msra.mxu0 %v2422
        %3574 = vmatprep.subr.bf16.mxu0 %v2431
        %3575 = vmatpush1.bf16.msra.mxu0 %v2430
        %3576 = vmatprep.subr.bf16.mxu0 %v2439
        %3577 = vmatpush1.bf16.msra.mxu0 %v2438
        %3578 = vmatprep.subr.bf16.mxu0 %v2447
        %3579 = vmatpush1.bf16.msra.mxu0 %v2446
        %3580 = vmatprep.subr.bf16.mxu0 %v2455
        %3581 = vmatpush1.bf16.msra.mxu0 %v2454
        %3582 = vmatprep.subr.bf16.mxu0 %v2463
        %3583 = vmatpush1.bf16.msra.mxu0 %v2462
        %3584 = vmatprep.subr.bf16.mxu0 %v2471
        %3585 = vmatpush1.bf16.msra.mxu0 %v2470
        %3586 = vmatprep.subr.bf16.mxu0 %v2479
        %3587 = vmatpush1.bf16.msra.mxu0 %v2478
        %3588 = vmatprep.subr.bf16.mxu0 %v2487
        %3589 = vmatpush1.bf16.msra.mxu0 %v2486
        %3590 = vmatprep.subr.bf16.mxu0 %v2495
        %3591 = vmatpush1.bf16.msra.mxu0 %v2494
        %3592 = vmatprep.mubr.bf16.mxu0 %v821
        %3593 = vmatmul.mubr.bf16.gmra.mrb[0].mxu0 %v820
        %v3594 = vpop.f32.mrb[0].mxu0
        %v3595 = vadd.f32 0.0, %v3594
        %v3596 = vpop.f32.mrb[0].mxu0
        %v3597 = vadd.f32 0.0, %v3596
        %v3598 = vpop.f32.mrb[0].mxu0
        %v3599 = vpop.f32.mrb[0].mxu0
        %3600 = vdwg.mxu0
        %3601 = vmatprep.subr.bf16.mxu0 %v2503
        %3602 = vmatpush1.bf16.msra.mxu0 %v2502
        %3603 = vmatprep.subr.bf16.mxu0 %v2511
        %3604 = vmatpush1.bf16.msra.mxu0 %v2510
        %3605 = vmatprep.subr.bf16.mxu0 %v2519
        %3606 = vmatpush1.bf16.msra.mxu0 %v2518
        %3607 = vmatprep.subr.bf16.mxu0 %v2527
        %3608 = vmatpush1.bf16.msra.mxu0 %v2526
        %3609 = vmatprep.subr.bf16.mxu0 %v2535
        %3610 = vmatpush1.bf16.msra.mxu0 %v2534
        %3611 = vmatprep.subr.bf16.mxu0 %v2543
        %3612 = vmatpush1.bf16.msra.mxu0 %v2542
        %3613 = vmatprep.subr.bf16.mxu0 %v2551
        %3614 = vmatpush1.bf16.msra.mxu0 %v2550
        %3615 = vmatprep.subr.bf16.mxu0 %v2559
        %3616 = vmatpush1.bf16.msra.mxu0 %v2558
        %3617 = vmatprep.subr.bf16.mxu0 %v2567
        %3618 = vmatpush1.bf16.msra.mxu0 %v2566
        %3619 = vmatprep.subr.bf16.mxu0 %v2575
        %3620 = vmatpush1.bf16.msra.mxu0 %v2574
        %3621 = vmatprep.subr.bf16.mxu0 %v2583
        %3622 = vmatpush1.bf16.msra.mxu0 %v2582
        %3623 = vmatprep.subr.bf16.mxu0 %v2591
        %3624 = vmatpush1.bf16.msra.mxu0 %v2590
        %3625 = vmatprep.subr.bf16.mxu0 %v2599
        %3626 = vmatpush1.bf16.msra.mxu0 %v2598
        %3627 = vmatprep.subr.bf16.mxu0 %v2607
        %3628 = vmatpush1.bf16.msra.mxu0 %v2606
        %3629 = vmatprep.subr.bf16.mxu0 %v2615
        %3630 = vmatpush1.bf16.msra.mxu0 %v2614
        %3631 = vmatprep.subr.bf16.mxu0 %v2623
        %3632 = vmatpush1.bf16.msra.mxu0 %v2622
        %3633 = vmatprep.mubr.bf16.mxu0 %v823
        %3634 = vmatmul.mubr.bf16.gmra.mrb[0].mxu0 %v822
        %v3635 = vpop.f32.mrb[0].mxu0
        %v3636 = vadd.f32 %v3595, %v3635
        %v3637 = vpop.f32.mrb[0].mxu0
        %v3638 = vadd.f32 %v3597, %v3637
        %v3639 = vpop.f32.mrb[0].mxu0
        %v3640 = vpop.f32.mrb[0].mxu0
        %3641 = vdwg.mxu0
        %3642 = vmatprep.subr.bf16.mxu0 %v2631
        %3643 = vmatpush1.bf16.msra.mxu0 %v2630
        %3644 = vmatprep.subr.bf16.mxu0 %v2639
        %3645 = vmatpush1.bf16.msra.mxu0 %v2638
        %3646 = vmatprep.subr.bf16.mxu0 %v2647
        %3647 = vmatpush1.bf16.msra.mxu0 %v2646
        %3648 = vmatprep.subr.bf16.mxu0 %v2655
        %3649 = vmatpush1.bf16.msra.mxu0 %v2654
        %3650 = vmatprep.subr.bf16.mxu0 %v2663
        %3651 = vmatpush1.bf16.msra.mxu0 %v2662
        %3652 = vmatprep.subr.bf16.mxu0 %v2671
        %3653 = vmatpush1.bf16.msra.mxu0 %v2670
        %3654 = vmatprep.subr.bf16.mxu0 %v2679
        %3655 = vmatpush1.bf16.msra.mxu0 %v2678
        %3656 = vmatprep.subr.bf16.mxu0 %v2687
        %3657 = vmatpush1.bf16.msra.mxu0 %v2686
        %3658 = vmatprep.subr.bf16.mxu0 %v2695
        %3659 = vmatpush1.bf16.msra.mxu0 %v2694
        %3660 = vmatprep.subr.bf16.mxu0 %v2703
        %3661 = vmatpush1.bf16.msra.mxu0 %v2702
        %3662 = vmatprep.subr.bf16.mxu0 %v2711
        %3663 = vmatpush1.bf16.msra.mxu0 %v2710
        %3664 = vmatprep.subr.bf16.mxu0 %v2719
        %3665 = vmatpush1.bf16.msra.mxu0 %v2718
        %3666 = vmatprep.subr.bf16.mxu0 %v2727
        %3667 = vmatpush1.bf16.msra.mxu0 %v2726
        %3668 = vmatprep.subr.bf16.mxu0 %v2735
        %3669 = vmatpush1.bf16.msra.mxu0 %v2734
        %3670 = vmatprep.subr.bf16.mxu0 %v2743
        %3671 = vmatpush1.bf16.msra.mxu0 %v2742
        %3672 = vmatprep.subr.bf16.mxu0 %v2751
        %3673 = vmatpush1.bf16.msra.mxu0 %v2750
        %3674 = vmatprep.mubr.bf16.mxu0 %v825
        %3675 = vmatmul.mubr.bf16.gmra.mrb[0].mxu0 %v824
        %v3676 = vpop.f32.mrb[0].mxu0
        %v3677 = vadd.f32 %v3636, %v3676
        %v3678 = vpop.f32.mrb[0].mxu0
        %v3679 = vadd.f32 %v3638, %v3678
        %v3680 = vpop.f32.mrb[0].mxu0
        %v3681 = vpop.f32.mrb[0].mxu0
        %3682 = vdwg.mxu0
        %3683 = vmatprep.subr.bf16.mxu0 %v2759
        %3684 = vmatpush1.bf16.msra.mxu0 %v2758
        %3685 = vmatprep.subr.bf16.mxu0 %v2767
        %3686 = vmatpush1.bf16.msra.mxu0 %v2766
        %3687 = vmatprep.subr.bf16.mxu0 %v2775
        %3688 = vmatpush1.bf16.msra.mxu0 %v2774
        %3689 = vmatprep.subr.bf16.mxu0 %v2783
        %3690 = vmatpush1.bf16.msra.mxu0 %v2782
        %3691 = vmatprep.subr.bf16.mxu0 %v2791
        %3692 = vmatpush1.bf16.msra.mxu0 %v2790
        %3693 = vmatprep.subr.bf16.mxu0 %v2799
        %3694 = vmatpush1.bf16.msra.mxu0 %v2798
        %3695 = vmatprep.subr.bf16.mxu0 %v2807
        %3696 = vmatpush1.bf16.msra.mxu0 %v2806
        %3697 = vmatprep.subr.bf16.mxu0 %v2815
        %3698 = vmatpush1.bf16.msra.mxu0 %v2814
        %3699 = vmatprep.subr.bf16.mxu0 %v2823
        %3700 = vmatpush1.bf16.msra.mxu0 %v2822
        %3701 = vmatprep.subr.bf16.mxu0 %v2831
        %3702 = vmatpush1.bf16.msra.mxu0 %v2830
        %3703 = vmatprep.subr.bf16.mxu0 %v2839
        %3704 = vmatpush1.bf16.msra.mxu0 %v2838
        %3705 = vmatprep.subr.bf16.mxu0 %v2847
        %3706 = vmatpush1.bf16.msra.mxu0 %v2846
        %3707 = vmatprep.subr.bf16.mxu0 %v2855
        %3708 = vmatpush1.bf16.msra.mxu0 %v2854
        %3709 = vmatprep.subr.bf16.mxu0 %v2863
        %3710 = vmatpush1.bf16.msra.mxu0 %v2862
        %3711 = vmatprep.subr.bf16.mxu0 %v2871
        %3712 = vmatpush1.bf16.msra.mxu0 %v2870
        %3713 = vmatprep.subr.bf16.mxu0 %v2879
        %3714 = vmatpush1.bf16.msra.mxu0 %v2878
        %3715 = vmatprep.mubr.bf16.mxu0 %v827
        %3716 = vmatmul.mubr.bf16.gmra.mrb[0].mxu0 %v826
        %v3717 = vpop.f32.mrb[0].mxu0
        %v3718 = vadd.f32 %v3677, %v3717
        %v3719 = vpop.f32.mrb[0].mxu0
        %v3720 = vadd.f32 %v3679, %v3719
        %v3721 = vpop.f32.mrb[0].mxu0
        %v3722 = vpop.f32.mrb[0].mxu0
        %3723 = vdwg.mxu0
        %3724 = vmatprep.subr.bf16.mxu0 %v2377
        %3725 = vmatpush1.bf16.msra.mxu0 %v2376
        %3726 = vmatprep.subr.bf16.mxu0 %v2385
        %3727 = vmatpush1.bf16.msra.mxu0 %v2384
        %3728 = vmatprep.subr.bf16.mxu0 %v2393
        %3729 = vmatpush1.bf16.msra.mxu0 %v2392
        %3730 = vmatprep.subr.bf16.mxu0 %v2401
        %3731 = vmatpush1.bf16.msra.mxu0 %v2400
        %3732 = vmatprep.subr.bf16.mxu0 %v2409
        %3733 = vmatpush1.bf16.msra.mxu0 %v2408
        %3734 = vmatprep.subr.bf16.mxu0 %v2417
        %3735 = vmatpush1.bf16.msra.mxu0 %v2416
        %3736 = vmatprep.subr.bf16.mxu0 %v2425
        %3737 = vmatpush1.bf16.msra.mxu0 %v2424
        %3738 = vmatprep.subr.bf16.mxu0 %v2433
        %3739 = vmatpush1.bf16.msra.mxu0 %v2432
        %3740 = vmatprep.subr.bf16.mxu0 %v2441
        %3741 = vmatpush1.bf16.msra.mxu0 %v2440
        %3742 = vmatprep.subr.bf16.mxu0 %v2449
        %3743 = vmatpush1.bf16.msra.mxu0 %v2448
        %3744 = vmatprep.subr.bf16.mxu0 %v2457
        %3745 = vmatpush1.bf16.msra.mxu0 %v2456
        %3746 = vmatprep.subr.bf16.mxu0 %v2465
        %3747 = vmatpush1.bf16.msra.mxu0 %v2464
        %3748 = vmatprep.subr.bf16.mxu0 %v2473
        %3749 = vmatpush1.bf16.msra.mxu0 %v2472
        %3750 = vmatprep.subr.bf16.mxu0 %v2481
        %3751 = vmatpush1.bf16.msra.mxu0 %v2480
        %3752 = vmatprep.subr.bf16.mxu0 %v2489
        %3753 = vmatpush1.bf16.msra.mxu0 %v2488
        %3754 = vmatprep.subr.bf16.mxu0 %v2497
        %3755 = vmatpush1.bf16.msra.mxu0 %v2496
        %3756 = vmatprep.mubr.bf16.mxu0 %v821
        %3757 = vmatmul.mubr.bf16.gmra.mrb[0].mxu0 %v820
        %v3758 = vpop.f32.mrb[0].mxu0
        %v3759 = vadd.f32 0.0, %v3758
        %v3760 = vpop.f32.mrb[0].mxu0
        %v3761 = vadd.f32 0.0, %v3760
        %v3762 = vpop.f32.mrb[0].mxu0
        %v3763 = vpop.f32.mrb[0].mxu0
        %3764 = vdwg.mxu0
        %3765 = vmatprep.subr.bf16.mxu0 %v2505
        %3766 = vmatpush1.bf16.msra.mxu0 %v2504
        %3767 = vmatprep.subr.bf16.mxu0 %v2513
        %3768 = vmatpush1.bf16.msra.mxu0 %v2512
        %3769 = vmatprep.subr.bf16.mxu0 %v2521
        %3770 = vmatpush1.bf16.msra.mxu0 %v2520
        %3771 = vmatprep.subr.bf16.mxu0 %v2529
        %3772 = vmatpush1.bf16.msra.mxu0 %v2528
        %3773 = vmatprep.subr.bf16.mxu0 %v2537
        %3774 = vmatpush1.bf16.msra.mxu0 %v2536
        %3775 = vmatprep.subr.bf16.mxu0 %v2545
        %3776 = vmatpush1.bf16.msra.mxu0 %v2544
        %3777 = vmatprep.subr.bf16.mxu0 %v2553
        %3778 = vmatpush1.bf16.msra.mxu0 %v2552
        %3779 = vmatprep.subr.bf16.mxu0 %v2561
        %3780 = vmatpush1.bf16.msra.mxu0 %v2560
        %3781 = vmatprep.subr.bf16.mxu0 %v2569
        %3782 = vmatpush1.bf16.msra.mxu0 %v2568
        %3783 = vmatprep.subr.bf16.mxu0 %v2577
        %3784 = vmatpush1.bf16.msra.mxu0 %v2576
        %3785 = vmatprep.subr.bf16.mxu0 %v2585
        %3786 = vmatpush1.bf16.msra.mxu0 %v2584
        %3787 = vmatprep.subr.bf16.mxu0 %v2593
        %3788 = vmatpush1.bf16.msra.mxu0 %v2592
        %3789 = vmatprep.subr.bf16.mxu0 %v2601
        %3790 = vmatpush1.bf16.msra.mxu0 %v2600
        %3791 = vmatprep.subr.bf16.mxu0 %v2609
        %3792 = vmatpush1.bf16.msra.mxu0 %v2608
        %3793 = vmatprep.subr.bf16.mxu0 %v2617
        %3794 = vmatpush1.bf16.msra.mxu0 %v2616
        %3795 = vmatprep.subr.bf16.mxu0 %v2625
        %3796 = vmatpush1.bf16.msra.mxu0 %v2624
        %3797 = vmatprep.mubr.bf16.mxu0 %v823
        %3798 = vmatmul.mubr.bf16.gmra.mrb[0].mxu0 %v822
        %v3799 = vpop.f32.mrb[0].mxu0
        %v3800 = vadd.f32 %v3759, %v3799
        %v3801 = vpop.f32.mrb[0].mxu0
        %v3802 = vadd.f32 %v3761, %v3801
        %v3803 = vpop.f32.mrb[0].mxu0
        %v3804 = vpop.f32.mrb[0].mxu0
        %3805 = vdwg.mxu0
        %3806 = vmatprep.subr.bf16.mxu0 %v2633
        %3807 = vmatpush1.bf16.msra.mxu0 %v2632
        %3808 = vmatprep.subr.bf16.mxu0 %v2641
        %3809 = vmatpush1.bf16.msra.mxu0 %v2640
        %3810 = vmatprep.subr.bf16.mxu0 %v2649
        %3811 = vmatpush1.bf16.msra.mxu0 %v2648
        %3812 = vmatprep.subr.bf16.mxu0 %v2657
        %3813 = vmatpush1.bf16.msra.mxu0 %v2656
        %3814 = vmatprep.subr.bf16.mxu0 %v2665
        %3815 = vmatpush1.bf16.msra.mxu0 %v2664
        %3816 = vmatprep.subr.bf16.mxu0 %v2673
        %3817 = vmatpush1.bf16.msra.mxu0 %v2672
        %3818 = vmatprep.subr.bf16.mxu0 %v2681
        %3819 = vmatpush1.bf16.msra.mxu0 %v2680
        %3820 = vmatprep.subr.bf16.mxu0 %v2689
        %3821 = vmatpush1.bf16.msra.mxu0 %v2688
        %3822 = vmatprep.subr.bf16.mxu0 %v2697
        %3823 = vmatpush1.bf16.msra.mxu0 %v2696
        %3824 = vmatprep.subr.bf16.mxu0 %v2705
        %3825 = vmatpush1.bf16.msra.mxu0 %v2704
        %3826 = vmatprep.subr.bf16.mxu0 %v2713
        %3827 = vmatpush1.bf16.msra.mxu0 %v2712
        %3828 = vmatprep.subr.bf16.mxu0 %v2721
        %3829 = vmatpush1.bf16.msra.mxu0 %v2720
        %3830 = vmatprep.subr.bf16.mxu0 %v2729
        %3831 = vmatpush1.bf16.msra.mxu0 %v2728
        %3832 = vmatprep.subr.bf16.mxu0 %v2737
        %3833 = vmatpush1.bf16.msra.mxu0 %v2736
        %3834 = vmatprep.subr.bf16.mxu0 %v2745
        %3835 = vmatpush1.bf16.msra.mxu0 %v2744
        %3836 = vmatprep.subr.bf16.mxu0 %v2753
        %3837 = vmatpush1.bf16.msra.mxu0 %v2752
        %3838 = vmatprep.mubr.bf16.mxu0 %v825
        %3839 = vmatmul.mubr.bf16.gmra.mrb[0].mxu0 %v824
        %v3840 = vpop.f32.mrb[0].mxu0
        %v3841 = vadd.f32 %v3800, %v3840
        %v3842 = vpop.f32.mrb[0].mxu0
        %v3843 = vadd.f32 %v3802, %v3842
        %v3844 = vpop.f32.mrb[0].mxu0
        %v3845 = vpop.f32.mrb[0].mxu0
        %3846 = vdwg.mxu0
        %3847 = vmatprep.subr.bf16.mxu0 %v2761
        %3848 = vmatpush1.bf16.msra.mxu0 %v2760
        %3849 = vmatprep.subr.bf16.mxu0 %v2769
        %3850 = vmatpush1.bf16.msra.mxu0 %v2768
        %3851 = vmatprep.subr.bf16.mxu0 %v2777
        %3852 = vmatpush1.bf16.msra.mxu0 %v2776
        %3853 = vmatprep.subr.bf16.mxu0 %v2785
        %3854 = vmatpush1.bf16.msra.mxu0 %v2784
        %3855 = vmatprep.subr.bf16.mxu0 %v2793
        %3856 = vmatpush1.bf16.msra.mxu0 %v2792
        %3857 = vmatprep.subr.bf16.mxu0 %v2801
        %3858 = vmatpush1.bf16.msra.mxu0 %v2800
        %3859 = vmatprep.subr.bf16.mxu0 %v2809
        %3860 = vmatpush1.bf16.msra.mxu0 %v2808
        %3861 = vmatprep.subr.bf16.mxu0 %v2817
        %3862 = vmatpush1.bf16.msra.mxu0 %v2816
        %3863 = vmatprep.subr.bf16.mxu0 %v2825
        %3864 = vmatpush1.bf16.msra.mxu0 %v2824
        %3865 = vmatprep.subr.bf16.mxu0 %v2833
        %3866 = vmatpush1.bf16.msra.mxu0 %v2832
        %3867 = vmatprep.subr.bf16.mxu0 %v2841
        %3868 = vmatpush1.bf16.msra.mxu0 %v2840
        %3869 = vmatprep.subr.bf16.mxu0 %v2849
        %3870 = vmatpush1.bf16.msra.mxu0 %v2848
        %3871 = vmatprep.subr.bf16.mxu0 %v2857
        %3872 = vmatpush1.bf16.msra.mxu0 %v2856
        %3873 = vmatprep.subr.bf16.mxu0 %v2865
        %3874 = vmatpush1.bf16.msra.mxu0 %v2864
        %3875 = vmatprep.subr.bf16.mxu0 %v2873
        %3876 = vmatpush1.bf16.msra.mxu0 %v2872
        %3877 = vmatprep.subr.bf16.mxu0 %v2881
        %3878 = vmatpush1.bf16.msra.mxu0 %v2880
        %3879 = vmatprep.mubr.bf16.mxu0 %v827
        %3880 = vmatmul.mubr.bf16.gmra.mrb[0].mxu0 %v826
        %v3881 = vpop.f32.mrb[0].mxu0
        %v3882 = vadd.f32 %v3841, %v3881
        %v3883 = vpop.f32.mrb[0].mxu0
        %v3884 = vadd.f32 %v3843, %v3883
        %v3885 = vpop.f32.mrb[0].mxu0
        %v3886 = vpop.f32.mrb[0].mxu0
        %3887 = vdwg.mxu0
        %3888 = vmatprep.subr.bf16.mxu0 %v2379
        %3889 = vmatpush1.bf16.msra.mxu0 %v2378
        %3890 = vmatprep.subr.bf16.mxu0 %v2387
        %3891 = vmatpush1.bf16.msra.mxu0 %v2386
        %3892 = vmatprep.subr.bf16.mxu0 %v2395
        %3893 = vmatpush1.bf16.msra.mxu0 %v2394
        %3894 = vmatprep.subr.bf16.mxu0 %v2403
        %3895 = vmatpush1.bf16.msra.mxu0 %v2402
        %3896 = vmatprep.subr.bf16.mxu0 %v2411
        %3897 = vmatpush1.bf16.msra.mxu0 %v2410
        %3898 = vmatprep.subr.bf16.mxu0 %v2419
        %3899 = vmatpush1.bf16.msra.mxu0 %v2418
        %3900 = vmatprep.subr.bf16.mxu0 %v2427
        %3901 = vmatpush1.bf16.msra.mxu0 %v2426
        %3902 = vmatprep.subr.bf16.mxu0 %v2435
        %3903 = vmatpush1.bf16.msra.mxu0 %v2434
        %3904 = vmatprep.subr.bf16.mxu0 %v2443
        %3905 = vmatpush1.bf16.msra.mxu0 %v2442
        %3906 = vmatprep.subr.bf16.mxu0 %v2451
        %3907 = vmatpush1.bf16.msra.mxu0 %v2450
        %3908 = vmatprep.subr.bf16.mxu0 %v2459
        %3909 = vmatpush1.bf16.msra.mxu0 %v2458
        %3910 = vmatprep.subr.bf16.mxu0 %v2467
        %3911 = vmatpush1.bf16.msra.mxu0 %v2466
        %3912 = vmatprep.subr.bf16.mxu0 %v2475
        %3913 = vmatpush1.bf16.msra.mxu0 %v2474
        %3914 = vmatprep.subr.bf16.mxu0 %v2483
        %3915 = vmatpush1.bf16.msra.mxu0 %v2482
        %3916 = vmatprep.subr.bf16.mxu0 %v2491
        %3917 = vmatpush1.bf16.msra.mxu0 %v2490
        %3918 = vmatprep.subr.bf16.mxu0 %v2499
        %3919 = vmatpush1.bf16.msra.mxu0 %v2498
        %3920 = vmatprep.mubr.bf16.mxu0 %v821
        %3921 = vmatmul.mubr.bf16.gmra.mrb[0].mxu0 %v820
        %v3922 = vpop.f32.mrb[0].mxu0
        %v3923 = vadd.f32 0.0, %v3922
        %v3924 = vpop.f32.mrb[0].mxu0
        %v3925 = vadd.f32 0.0, %v3924
        %v3926 = vpop.f32.mrb[0].mxu0
        %v3927 = vpop.f32.mrb[0].mxu0
        %3928 = vdwg.mxu0
        %3929 = vmatprep.subr.bf16.mxu0 %v2507
        %3930 = vmatpush1.bf16.msra.mxu0 %v2506
        %3931 = vmatprep.subr.bf16.mxu0 %v2515
        %3932 = vmatpush1.bf16.msra.mxu0 %v2514
        %3933 = vmatprep.subr.bf16.mxu0 %v2523
        %3934 = vmatpush1.bf16.msra.mxu0 %v2522
        %3935 = vmatprep.subr.bf16.mxu0 %v2531
        %3936 = vmatpush1.bf16.msra.mxu0 %v2530
        %3937 = vmatprep.subr.bf16.mxu0 %v2539
        %3938 = vmatpush1.bf16.msra.mxu0 %v2538
        %3939 = vmatprep.subr.bf16.mxu0 %v2547
        %3940 = vmatpush1.bf16.msra.mxu0 %v2546
        %3941 = vmatprep.subr.bf16.mxu0 %v2555
        %3942 = vmatpush1.bf16.msra.mxu0 %v2554
        %3943 = vmatprep.subr.bf16.mxu0 %v2563
        %3944 = vmatpush1.bf16.msra.mxu0 %v2562
        %3945 = vmatprep.subr.bf16.mxu0 %v2571
        %3946 = vmatpush1.bf16.msra.mxu0 %v2570
        %3947 = vmatprep.subr.bf16.mxu0 %v2579
        %3948 = vmatpush1.bf16.msra.mxu0 %v2578
        %3949 = vmatprep.subr.bf16.mxu0 %v2587
        %3950 = vmatpush1.bf16.msra.mxu0 %v2586
        %3951 = vmatprep.subr.bf16.mxu0 %v2595
        %3952 = vmatpush1.bf16.msra.mxu0 %v2594
        %3953 = vmatprep.subr.bf16.mxu0 %v2603
        %3954 = vmatpush1.bf16.msra.mxu0 %v2602
        %3955 = vmatprep.subr.bf16.mxu0 %v2611
        %3956 = vmatpush1.bf16.msra.mxu0 %v2610
        %3957 = vmatprep.subr.bf16.mxu0 %v2619
        %3958 = vmatpush1.bf16.msra.mxu0 %v2618
        %3959 = vmatprep.subr.bf16.mxu0 %v2627
        %3960 = vmatpush1.bf16.msra.mxu0 %v2626
        %3961 = vmatprep.mubr.bf16.mxu0 %v823
        %3962 = vmatmul.mubr.bf16.gmra.mrb[0].mxu0 %v822
        %v3963 = vpop.f32.mrb[0].mxu0
        %v3964 = vadd.f32 %v3923, %v3963
        %v3965 = vpop.f32.mrb[0].mxu0
        %v3966 = vadd.f32 %v3925, %v3965
        %v3967 = vpop.f32.mrb[0].mxu0
        %v3968 = vpop.f32.mrb[0].mxu0
        %3969 = vdwg.mxu0
        %3970 = vmatprep.subr.bf16.mxu0 %v2635
        %3971 = vmatpush1.bf16.msra.mxu0 %v2634
        %3972 = vmatprep.subr.bf16.mxu0 %v2643
        %3973 = vmatpush1.bf16.msra.mxu0 %v2642
        %3974 = vmatprep.subr.bf16.mxu0 %v2651
        %3975 = vmatpush1.bf16.msra.mxu0 %v2650
        %3976 = vmatprep.subr.bf16.mxu0 %v2659
        %3977 = vmatpush1.bf16.msra.mxu0 %v2658
        %3978 = vmatprep.subr.bf16.mxu0 %v2667
        %3979 = vmatpush1.bf16.msra.mxu0 %v2666
        %3980 = vmatprep.subr.bf16.mxu0 %v2675
        %3981 = vmatpush1.bf16.msra.mxu0 %v2674
        %3982 = vmatprep.subr.bf16.mxu0 %v2683
        %3983 = vmatpush1.bf16.msra.mxu0 %v2682
        %3984 = vmatprep.subr.bf16.mxu0 %v2691
        %3985 = vmatpush1.bf16.msra.mxu0 %v2690
        %3986 = vmatprep.subr.bf16.mxu0 %v2699
        %3987 = vmatpush1.bf16.msra.mxu0 %v2698
        %3988 = vmatprep.subr.bf16.mxu0 %v2707
        %3989 = vmatpush1.bf16.msra.mxu0 %v2706
        %3990 = vmatprep.subr.bf16.mxu0 %v2715
        %3991 = vmatpush1.bf16.msra.mxu0 %v2714
        %3992 = vmatprep.subr.bf16.mxu0 %v2723
        %3993 = vmatpush1.bf16.msra.mxu0 %v2722
        %3994 = vmatprep.subr.bf16.mxu0 %v2731
        %3995 = vmatpush1.bf16.msra.mxu0 %v2730
        %3996 = vmatprep.subr.bf16.mxu0 %v2739
        %3997 = vmatpush1.bf16.msra.mxu0 %v2738
        %3998 = vmatprep.subr.bf16.mxu0 %v2747
        %3999 = vmatpush1.bf16.msra.mxu0 %v2746
        %4000 = vmatprep.subr.bf16.mxu0 %v2755
        %4001 = vmatpush1.bf16.msra.mxu0 %v2754
        %4002 = vmatprep.mubr.bf16.mxu0 %v825
        %4003 = vmatmul.mubr.bf16.gmra.mrb[0].mxu0 %v824
        %v4004 = vpop.f32.mrb[0].mxu0
        %v4005 = vadd.f32 %v3964, %v4004
        %v4006 = vpop.f32.mrb[0].mxu0
        %v4007 = vadd.f32 %v3966, %v4006
        %v4008 = vpop.f32.mrb[0].mxu0
        %v4009 = vpop.f32.mrb[0].mxu0
        %4010 = vdwg.mxu0
        %4011 = vmatprep.subr.bf16.mxu0 %v2763
        %4012 = vmatpush1.bf16.msra.mxu0 %v2762
        %4013 = vmatprep.subr.bf16.mxu0 %v2771
        %4014 = vmatpush1.bf16.msra.mxu0 %v2770
        %4015 = vmatprep.subr.bf16.mxu0 %v2779
        %4016 = vmatpush1.bf16.msra.mxu0 %v2778
        %4017 = vmatprep.subr.bf16.mxu0 %v2787
        %4018 = vmatpush1.bf16.msra.mxu0 %v2786
        %4019 = vmatprep.subr.bf16.mxu0 %v2795
        %4020 = vmatpush1.bf16.msra.mxu0 %v2794
        %4021 = vmatprep.subr.bf16.mxu0 %v2803
        %4022 = vmatpush1.bf16.msra.mxu0 %v2802
        %4023 = vmatprep.subr.bf16.mxu0 %v2811
        %4024 = vmatpush1.bf16.msra.mxu0 %v2810
        %4025 = vmatprep.subr.bf16.mxu0 %v2819
        %4026 = vmatpush1.bf16.msra.mxu0 %v2818
        %4027 = vmatprep.subr.bf16.mxu0 %v2827
        %4028 = vmatpush1.bf16.msra.mxu0 %v2826
        %4029 = vmatprep.subr.bf16.mxu0 %v2835
        %4030 = vmatpush1.bf16.msra.mxu0 %v2834
        %4031 = vmatprep.subr.bf16.mxu0 %v2843
        %4032 = vmatpush1.bf16.msra.mxu0 %v2842
        %4033 = vmatprep.subr.bf16.mxu0 %v2851
        %4034 = vmatpush1.bf16.msra.mxu0 %v2850
        %4035 = vmatprep.subr.bf16.mxu0 %v2859
        %4036 = vmatpush1.bf16.msra.mxu0 %v2858
        %4037 = vmatprep.subr.bf16.mxu0 %v2867
        %4038 = vmatpush1.bf16.msra.mxu0 %v2866
        %4039 = vmatprep.subr.bf16.mxu0 %v2875
        %4040 = vmatpush1.bf16.msra.mxu0 %v2874
        %4041 = vmatprep.subr.bf16.mxu0 %v2883
        %4042 = vmatpush1.bf16.msra.mxu0 %v2882
        %4043 = vmatprep.mubr.bf16.mxu0 %v827
        %4044 = vmatmul.mubr.bf16.gmra.mrb[0].mxu0 %v826
        %v4045 = vpop.f32.mrb[0].mxu0
        %v4046 = vadd.f32 %v4005, %v4045
        %v4047 = vpop.f32.mrb[0].mxu0
        %v4048 = vadd.f32 %v4007, %v4047
        %v4049 = vpop.f32.mrb[0].mxu0
        %v4050 = vpop.f32.mrb[0].mxu0
        %4051 = vdwg.mxu0
        %v4052 = vadd.f32 %v284, %v3554
        %v4053 = vadd.f32 %v285, %v3556
        %v4054 = vadd.f32 %v286, %v3718
        %v4055 = vadd.f32 %v287, %v3720
        %v4056 = vadd.f32 %v288, %v3882
        %v4057 = vadd.f32 %v289, %v3884
        %v4058 = vadd.f32 %v290, %v4046
        %v4059 = vadd.f32 %v291, %v4048
        %4060 = vst [vmem:[#allocation2] sm:$0xff] %v4052
        %4061 = vst [vmem:[#allocation2 + $0x8] sm:$0xff] %v4053
        %4062 = vst [vmem:[#allocation2 + $0x10] sm:$0xff] %v4054
        %4063 = vst [vmem:[#allocation2 + $0x18] sm:$0xff] %v4055
        %4064 = vst [vmem:[#allocation2 + $0x20] sm:$0xff] %v4056
        %4065 = vst [vmem:[#allocation2 + $0x28] sm:$0xff] %v4057
        %4066 = vst [vmem:[#allocation2 + $0x30] sm:$0xff] %v4058
        %4067 = vst [vmem:[#allocation2 + $0x38] sm:$0xff] %v4059
        // Predicated region
        $region45: #{variational_encoder_forward.2} parent=31 // pred_check
          %p4068 = pneg %p272
        $region46: #{variational_encoder_forward.2} parent=31 // pred_check_branch
          %4070 = sbr.rel (%p4068) target = $region48
        $region47: #{variational_encoder_forward.2} parent=31 // pred_region
          %v4071 = vld [vmem:[#allocation2] sm:$0xff]
          %v4072 = vld [vmem:[#allocation2 + $0x8] sm:$0xff]
          %v4073 = vld [vmem:[#allocation2 + $0x10] sm:$0xff]
          %v4074 = vld [vmem:[#allocation2 + $0x18] sm:$0xff]
          %v4075 = vld [vmem:[#allocation2 + $0x20] sm:$0xff]
          %v4076 = vld [vmem:[#allocation2 + $0x28] sm:$0xff]
          %v4077 = vld [vmem:[#allocation2 + $0x30] sm:$0xff]
          %v4078 = vld [vmem:[#allocation2 + $0x38] sm:$0xff]
          %v4079 = vld [vmem:[%s224] sm:$0xff]
          %v4081 = vlaneseq
          %v4082 = vshrl.u32 %v4081, 7
          %v4083 = vsub.s32 0, %v4082
          %v4084 = vrot.slane %v4079, %v4083
          %v4085 = vlaneseq
          %v4086 = vshrl.u32 %v4085, 7
          %v4087 = vsub.s32 1, %v4086
          %v4088 = vrot.slane %v4079, %v4087
          %v4089 = vlaneseq
          %v4090 = vshrl.u32 %v4089, 7
          %v4091 = vsub.s32 2, %v4090
          %v4092 = vrot.slane %v4079, %v4091
          %v4093 = vlaneseq
          %v4094 = vshrl.u32 %v4093, 7
          %v4095 = vsub.s32 3, %v4094
          %v4096 = vrot.slane %v4079, %v4095
          %v4097 = vlaneseq
          %v4098 = vshrl.u32 %v4097, 7
          %v4099 = vsub.s32 4, %v4098
          %v4100 = vrot.slane %v4079, %v4099
          %v4101 = vlaneseq
          %v4102 = vshrl.u32 %v4101, 7
          %v4103 = vsub.s32 5, %v4102
          %v4104 = vrot.slane %v4079, %v4103
          %v4105 = vlaneseq
          %v4106 = vshrl.u32 %v4105, 7
          %v4107 = vsub.s32 6, %v4106
          %v4108 = vrot.slane %v4079, %v4107
          %v4109 = vlaneseq
          %v4110 = vshrl.u32 %v4109, 7
          %v4111 = vsub.s32 7, %v4110
          %v4112 = vrot.slane %v4079, %v4111
          %v4121 = vadd.f32 %v4071, %v4084
          %v4122 = vadd.f32 %v4072, %v4088
          %v4123 = vadd.f32 %v4073, %v4092
          %v4124 = vadd.f32 %v4074, %v4096
          %v4125 = vadd.f32 %v4075, %v4100
          %v4126 = vadd.f32 %v4076, %v4104
          %v4127 = vadd.f32 %v4077, %v4108
          %v4128 = vadd.f32 %v4078, %v4112
          %v4129 = vmax.f32 %v4121, 0.0
          %v4130 = vmax.f32 %v4122, 0.0
          %v4131 = vmax.f32 %v4123, 0.0
          %v4132 = vmax.f32 %v4124, 0.0
          %v4133 = vmax.f32 %v4125, 0.0
          %v4134 = vmax.f32 %v4126, 0.0
          %v4135 = vmax.f32 %v4127, 0.0
          %v4136 = vmax.f32 %v4128, 0.0
          %v4137 = vpack.c.bf16 %v4129, %v4129
          %v4138 = vpack.c.bf16 %v4130, %v4130
          %v4139 = vpack.c.bf16 %v4131, %v4131
          %v4140 = vpack.c.bf16 %v4132, %v4132
          %v4141 = vpack.c.bf16 %v4133, %v4133
          %v4142 = vpack.c.bf16 %v4134, %v4134
          %v4143 = vpack.c.bf16 %v4135, %v4135
          %v4144 = vpack.c.bf16 %v4136, %v4136
          %v4153 = vunpack.c.l.b16 %v4137
          %v4154 = vunpack.c.l.b16 %v4138
          %v4155 = vunpack.c.l.b16 %v4139
          %v4156 = vunpack.c.l.b16 %v4140
          %v4157 = vunpack.c.l.b16 %v4141
          %v4158 = vunpack.c.l.b16 %v4142
          %v4159 = vunpack.c.l.b16 %v4143
          %v4160 = vunpack.c.l.b16 %v4144
          %v4161 = vpack.c.b16 %v4154, %v4153
          %v4162 = vpack.c.b16 %v4156, %v4155
          %v4163 = vpack.c.b16 %v4158, %v4157
          %v4164 = vpack.c.b16 %v4160, %v4159
          %4169 = vst [vmem:[%s270] sm:$0xff] %v4161
          %4170 = vst [vmem:[%s270 + $0x8] sm:$0xff] %v4162
          %4171 = vst [vmem:[%s270 + $0x10] sm:$0xff] %v4163
          %4172 = vst [vmem:[%s270 + $0x18] sm:$0xff] %v4164
        $region48: #{variational_encoder_forward.2} parent=31 // pred_fallthru
          _
        %s4173 = smul.u32 8, %s24
        %p4174 = scmp.lt.s32.totalorder %s4173, 15
        %s4175 = scalar_select %p4174, %s4173, 15
        %s4176 = smul.addr %s4175, 4
        %s4177 = scalar_lea.vmem %s3, %s4176
        // Predicated region
        $region49: #{variational_encoder_forward.2} parent=31 // pred_check
          %p4178 = pneg %p130
        $region50: #{variational_encoder_forward.2} parent=31 // pred_check_branch
          %4180 = sbr.rel (%p4178) target = $region52
        $region51: #{variational_encoder_forward.2} parent=31 // pred_region
          %s4181 = smul.u32 8, %s24
        $region52: #{variational_encoder_forward.2} parent=31 // pred_fallthru
          _
      $region32: #{variational_encoder_forward.2} parent=5 // pred_fallthru
        _
      %p4182 = scmp.le.s32.totalorder 2, %s15
      // Predicated region
      $region53: #{variational_encoder_forward.2} parent=5 // pred_check
        %p4183 = pneg %p4182
      $region54: #{variational_encoder_forward.2} parent=5 // pred_check_branch
        %4185 = sbr.rel (%p4183) target = $region56
      $region55: #{variational_encoder_forward.2} parent=5 // pred_region
        %s4186 = ssub.s32 %s15, 2
        // Predicated region
        $region57: #{variational_encoder_forward.2} parent=55 // pred_check
          %p4187 = pneg %p136
        $region58: #{variational_encoder_forward.2} parent=55 // pred_check_branch
          %4189 = sbr.rel (%p4187) target = $region60
        $region59: #{variational_encoder_forward.2} parent=55 // pred_region
          %s4190 = smul.u32 8, %s26
          %p4191 = scmp.lt.s32.totalorder %s4190, 15
          %s4192 = scalar_select %p4191, %s4190, 15
          %s4193 = smul.addr %s4192, 4
          %s4194 = scalar_lea.vmem %s3, %s4193
        $region60: #{variational_encoder_forward.2} parent=55 // pred_fallthru
          _
      $region56: #{variational_encoder_forward.2} parent=5 // pred_fallthru
        _
    $region6: #{variational_encoder_forward.2} parent=1 // loop_footer
      %s19 = sadd.s32 1, %s15
    $region7: #{variational_encoder_forward.2} parent=1 // loop_footer_branch
      %14 = sbr.rel target = $region3
    $region8: #{variational_encoder_forward.2} parent=1 // loop_exit
      _
    %4195 = vsyncpa [#allocation4], 1
    %s4196 = scalar_lea.sflag [#allocation4], 1
    %4197 = vsyncpa %s4196, 1
    %4198 = vsyncpa [#allocation6], 1
    %s4199 = scalar_lea.sflag [#allocation6], 1
    %4200 = vsyncpa %s4199, 1

// kernel: variational_encoder_forward.3
$region0: #{variational_encoder_forward.3}
  #allocation0 [shape = 'u32[]', space=smem, size = 0x4, offset = 0x4, fixed_abs, tag = 'smem constant byte address 0x4 - core index']
  #allocation1 [shape = 'u32[144,128]{1,0:T(1,128)}', space=vmem, size = 0x12000, scoped, tag = 'internal scratch']
  %s0 = inlined_call_operand.vmem [shape: bf16[8,2048], index: 0, kind: input, shape index: {}]
  %s1 = inlined_call_operand.vmem [shape: bf16[2048,1024], index: 1, kind: input, shape index: {}]
  %s2 = inlined_call_operand.vmem [shape: f32[1,1024], index: 2, kind: input, shape index: {}]
  %s3 = inlined_call_operand.hbm [shape: bf16[1024,512], index: 3, kind: input, shape index: {}]
  %s4 = inlined_call_operand.vmem [shape: f32[1,512], index: 4, kind: input, shape index: {}]
  %s5 = inlined_call_operand.hbm [shape: bf16[512,512], index: 5, kind: input, shape index: {}]
  %s6 = inlined_call_operand.vmem [shape: f32[1,512], index: 6, kind: input, shape index: {}]
  %s7 = inlined_call_operand.vmem [shape: f32[8,256], index: 7, kind: input, shape index: {}]
  %s8 = inlined_call_operand.vmem [shape: f32[8,256], index: 8, kind: output, shape index: {0}]
  %s9 = inlined_call_operand.hbm [shape: f32[1,1], index: 9, kind: output, shape index: {1}]
  %10 = xla_tuple %s8, %s9
  %s11 = sld [smem:[#allocation0]]
  $region58: #{variational_encoder_forward.3} parent=0
    _
  %s13 = ssub.s32 1, %s11
  %s14 = scalar_select 0, %s13, %s11
  $region1: #{variational_encoder_forward.3} parent=0
    #allocation2 [shape = 'u8[1048576]{0}', space=vmem, size = 0x100000, scoped, tag = 'input window, operand 3, single buffered']
    #allocation3 [shape = 's32[1]{0}', space=sflag, size = 0x4, scoped, tag = 'scoped memory for variational_encoder_forward.3']
    #allocation4 [shape = 's32[1]{0}', space=sflag, size = 0x4, scoped, tag = 'scoped memory for variational_encoder_forward.3']
    #allocation5 [shape = 'u8[524288]{0}', space=vmem, size = 0x80000, scoped, tag = 'input window, operand 5, single buffered']
    #allocation6 [shape = 's32[1]{0}', space=sflag, size = 0x4, scoped, tag = 'scoped memory for variational_encoder_forward.3']
    #allocation7 [shape = 'u8[512]{0}', space=vmem, size = 0x400, scoped, tag = 'output window, operand 1, single buffered']
    %15 = vsyncpa [#allocation3], 0
    %16 = vsyncpa [#allocation6], 0
    %17 = vsyncpa [#allocation4], 0
    // Predicated region
    $region2: #{variational_encoder_forward.3} parent=1 // pred_check
      _
    $region3: #{variational_encoder_forward.3} parent=1 // pred_check_branch
      %19 = sbr.rel (0) target = $region5
    $region4: #{variational_encoder_forward.3} parent=1 // pred_region
      _
    $region5: #{variational_encoder_forward.3} parent=1 // pred_fallthru
      _
    // Predicated region
    $region6: #{variational_encoder_forward.3} parent=1 // pred_check
      _
    $region7: #{variational_encoder_forward.3} parent=1 // pred_check_branch
      %21 = sbr.rel (0) target = $region9
    $region8: #{variational_encoder_forward.3} parent=1 // pred_region
      _
    $region9: #{variational_encoder_forward.3} parent=1 // pred_fallthru
      _
    // Predicated region
    $region10: #{variational_encoder_forward.3} parent=1 // pred_check
      _
    $region11: #{variational_encoder_forward.3} parent=1 // pred_check_branch
      %23 = sbr.rel (0) target = $region13
    $region12: #{variational_encoder_forward.3} parent=1 // pred_region
      _
    $region13: #{variational_encoder_forward.3} parent=1 // pred_fallthru
      _
    // Predicated region
    $region14: #{variational_encoder_forward.3} parent=1 // pred_check
      _
    $region15: #{variational_encoder_forward.3} parent=1 // pred_check_branch
      %25 = sbr.rel (0) target = $region17
    $region16: #{variational_encoder_forward.3} parent=1 // pred_region
      %s27 = ssub.s32 32768, 32768
      %28 = vsyncadd [#allocation3], %s27
      %s29 = sshll.u32 [#allocation2], 4
      %s30 = int_to_ptr.vmem [resolvable:$true] %s29
      %35 = dma.hbm_to_vmem [thread:$0]  %s3, 32768, %s30, [#allocation3], 256, 256, 16
    $region17: #{variational_encoder_forward.3} parent=1 // pred_fallthru
      _
    // Predicated region
    $region18: #{variational_encoder_forward.3} parent=1 // pred_check
      _
    $region19: #{variational_encoder_forward.3} parent=1 // pred_check_branch
      %37 = sbr.rel (0) target = $region21
    $region20: #{variational_encoder_forward.3} parent=1 // pred_region
      _
    $region21: #{variational_encoder_forward.3} parent=1 // pred_fallthru
      _
    // Predicated region
    $region22: #{variational_encoder_forward.3} parent=1 // pred_check
      _
    $region23: #{variational_encoder_forward.3} parent=1 // pred_check_branch
      %39 = sbr.rel (0) target = $region25
    $region24: #{variational_encoder_forward.3} parent=1 // pred_region
      %s41 = ssub.s32 16384, 16384
      %42 = vsyncadd [#allocation6], %s41
      %s43 = sshll.u32 [#allocation5], 4
      %s44 = int_to_ptr.vmem [resolvable:$true] %s43
      %49 = dma.hbm_to_vmem [thread:$0]  %s5, 16384, %s44, [#allocation6], 256, 256, 16
    $region25: #{variational_encoder_forward.3} parent=1 // pred_fallthru
      _
    // Predicated region
    $region26: #{variational_encoder_forward.3} parent=1 // pred_check
      _
    $region27: #{variational_encoder_forward.3} parent=1 // pred_check_branch
      %51 = sbr.rel (0) target = $region29
    $region28: #{variational_encoder_forward.3} parent=1 // pred_region
      _
    $region29: #{variational_encoder_forward.3} parent=1 // pred_fallthru
      _
    // Predicated region
    $region30: #{variational_encoder_forward.3} parent=1 // pred_check
      _
    $region31: #{variational_encoder_forward.3} parent=1 // pred_check_branch
      %53 = sbr.rel (0) target = $region33
    $region32: #{variational_encoder_forward.3} parent=1 // pred_region
      _
    $region33: #{variational_encoder_forward.3} parent=1 // pred_fallthru
      _
    // Predicated region
    $region34: #{variational_encoder_forward.3} parent=1 // pred_check
      _
    $region35: #{variational_encoder_forward.3} parent=1 // pred_check_branch
      %55 = sbr.rel (0) target = $region37
    $region36: #{variational_encoder_forward.3} parent=1 // pred_region
      %56 = dma.done [#allocation3], 32768
    $region37: #{variational_encoder_forward.3} parent=1 // pred_fallthru
      _
    // Predicated region
    $region38: #{variational_encoder_forward.3} parent=1 // pred_check
      _
    $region39: #{variational_encoder_forward.3} parent=1 // pred_check_branch
      %58 = sbr.rel (0) target = $region41
    $region40: #{variational_encoder_forward.3} parent=1 // pred_region
      %59 = dma.done [#allocation6], 16384
    $region41: #{variational_encoder_forward.3} parent=1 // pred_fallthru
      _
    %v60 = vld [vmem:[%s0] sm:$0xff]
    %v61 = vld [vmem:[%s0 + $0x8] sm:$0xff]
    %v62 = vld [vmem:[%s0 + $0x10] sm:$0xff]
    %v63 = vld [vmem:[%s0 + $0x18] sm:$0xff]
    %v64 = vld [vmem:[%s0 + $0x20] sm:$0xff]
    %v65 = vld [vmem:[%s0 + $0x28] sm:$0xff]
    %v66 = vld [vmem:[%s0 + $0x30] sm:$0xff]
    %v67 = vld [vmem:[%s0 + $0x38] sm:$0xff]
    %v68 = vld [vmem:[%s1] sm:$0xff]
    %v69 = vld [vmem:[%s1 + $0x8] sm:$0xff]
    %v70 = vld [vmem:[%s1 + $0x10] sm:$0xff]
    %v71 = vld [vmem:[%s1 + $0x18] sm:$0xff]
    %v72 = vld [vmem:[%s1 + $0x20] sm:$0xff]
    %v73 = vld [vmem:[%s1 + $0x28] sm:$0xff]
    %v74 = vld [vmem:[%s1 + $0x30] sm:$0xff]
    %v75 = vld [vmem:[%s1 + $0x38] sm:$0xff]
    %v76 = vld [vmem:[%s1 + $0x40] sm:$0xff]
    %v77 = vld [vmem:[%s1 + $0x48] sm:$0xff]
    %v78 = vld [vmem:[%s1 + $0x50] sm:$0xff]
    %v79 = vld [vmem:[%s1 + $0x58] sm:$0xff]
    %v80 = vld [vmem:[%s1 + $0x60] sm:$0xff]
    %v81 = vld [vmem:[%s1 + $0x68] sm:$0xff]
    %v82 = vld [vmem:[%s1 + $0x70] sm:$0xff]
    %v83 = vld [vmem:[%s1 + $0x78] sm:$0xff]
    %v84 = vld [vmem:[%s1 + $0x80] sm:$0xff]
    %v85 = vld [vmem:[%s1 + $0x88] sm:$0xff]
    %v86 = vld [vmem:[%s1 + $0x90] sm:$0xff]
    %v87 = vld [vmem:[%s1 + $0x98] sm:$0xff]
    %v88 = vld [vmem:[%s1 + $0xa0] sm:$0xff]
    %v89 = vld [vmem:[%s1 + $0xa8] sm:$0xff]
    %v90 = vld [vmem:[%s1 + $0xb0] sm:$0xff]
    %v91 = vld [vmem:[%s1 + $0xb8] sm:$0xff]
    %v92 = vld [vmem:[%s1 + $0xc0] sm:$0xff]
    %v93 = vld [vmem:[%s1 + $0xc8] sm:$0xff]
    %v94 = vld [vmem:[%s1 + $0xd0] sm:$0xff]
    %v95 = vld [vmem:[%s1 + $0xd8] sm:$0xff]
    %v96 = vld [vmem:[%s1 + $0xe0] sm:$0xff]
    %v97 = vld [vmem:[%s1 + $0xe8] sm:$0xff]
    %v98 = vld [vmem:[%s1 + $0xf0] sm:$0xff]
    %v99 = vld [vmem:[%s1 + $0xf8] sm:$0xff]
    %v100 = vld [vmem:[%s1 + $0x100] sm:$0xff]
    %v101 = vld [vmem:[%s1 + $0x108] sm:$0xff]
    %v102 = vld [vmem:[%s1 + $0x110] sm:$0xff]
    %v103 = vld [vmem:[%s1 + $0x118] sm:$0xff]
    %v104 = vld [vmem:[%s1 + $0x120] sm:$0xff]
    %v105 = vld [vmem:[%s1 + $0x128] sm:$0xff]
    %v106 = vld [vmem:[%s1 + $0x130] sm:$0xff]
    %v107 = vld [vmem:[%s1 + $0x138] sm:$0xff]
    %v108 = vld [vmem:[%s1 + $0x140] sm:$0xff]
    %v109 = vld [vmem:[%s1 + $0x148] sm:$0xff]
    %v110 = vld [vmem:[%s1 + $0x150] sm:$0xff]
    %v111 = vld [vmem:[%s1 + $0x158] sm:$0xff]
    %v112 = vld [vmem:[%s1 + $0x160] sm:$0xff]
    %v113 = vld [vmem:[%s1 + $0x168] sm:$0xff]
    %v114 = vld [vmem:[%s1 + $0x170] sm:$0xff]
    %v115 = vld [vmem:[%s1 + $0x178] sm:$0xff]
    %v116 = vld [vmem:[%s1 + $0x180] sm:$0xff]
    %v117 = vld [vmem:[%s1 + $0x188] sm:$0xff]
    %v118 = vld [vmem:[%s1 + $0x190] sm:$0xff]
    %v119 = vld [vmem:[%s1 + $0x198] sm:$0xff]
    %v120 = vld [vmem:[%s1 + $0x1a0] sm:$0xff]
    %v121 = vld [vmem:[%s1 + $0x1a8] sm:$0xff]
    %v122 = vld [vmem:[%s1 + $0x1b0] sm:$0xff]
    %v123 = vld [vmem:[%s1 + $0x1b8] sm:$0xff]
    %v124 = vld [vmem:[%s1 + $0x1c0] sm:$0xff]
    %v125 = vld [vmem:[%s1 + $0x1c8] sm:$0xff]
    %v126 = vld [vmem:[%s1 + $0x1d0] sm:$0xff]
    %v127 = vld [vmem:[%s1 + $0x1d8] sm:$0xff]
    %v128 = vld [vmem:[%s1 + $0x1e0] sm:$0xff]
    %v129 = vld [vmem:[%s1 + $0x1e8] sm:$0xff]
    %v130 = vld [vmem:[%s1 + $0x1f0] sm:$0xff]
    %v131 = vld [vmem:[%s1 + $0x1f8] sm:$0xff]
    %v132 = vld [vmem:[%s1 + $0x200] sm:$0xff]
    %v133 = vld [vmem:[%s1 + $0x208] sm:$0xff]
    %v134 = vld [vmem:[%s1 + $0x210] sm:$0xff]
    %v135 = vld [vmem:[%s1 + $0x218] sm:$0xff]
    %v136 = vld [vmem:[%s1 + $0x220] sm:$0xff]
    %v137 = vld [vmem:[%s1 + $0x228] sm:$0xff]
    %v138 = vld [vmem:[%s1 + $0x230] sm:$0xff]
    %v139 = vld [vmem:[%s1 + $0x238] sm:$0xff]
    %v140 = vld [vmem:[%s1 + $0x240] sm:$0xff]
    %v141 = vld [vmem:[%s1 + $0x248] sm:$0xff]
    %v142 = vld [vmem:[%s1 + $0x250] sm:$0xff]
    %v143 = vld [vmem:[%s1 + $0x258] sm:$0xff]
    %v144 = vld [vmem:[%s1 + $0x260] sm:$0xff]
    %v145 = vld [vmem:[%s1 + $0x268] sm:$0xff]
    %v146 = vld [vmem:[%s1 + $0x270] sm:$0xff]
    %v147 = vld [vmem:[%s1 + $0x278] sm:$0xff]
    %v148 = vld [vmem:[%s1 + $0x280] sm:$0xff]
    %v149 = vld [vmem:[%s1 + $0x288] sm:$0xff]
    %v150 = vld [vmem:[%s1 + $0x290] sm:$0xff]
    %v151 = vld [vmem:[%s1 + $0x298] sm:$0xff]
    %v152 = vld [vmem:[%s1 + $0x2a0] sm:$0xff]
    %v153 = vld [vmem:[%s1 + $0x2a8] sm:$0xff]
    %v154 = vld [vmem:[%s1 + $0x2b0] sm:$0xff]
    %v155 = vld [vmem:[%s1 + $0x2b8] sm:$0xff]
    %v156 = vld [vmem:[%s1 + $0x2c0] sm:$0xff]
    %v157 = vld [vmem:[%s1 + $0x2c8] sm:$0xff]
    %v158 = vld [vmem:[%s1 + $0x2d0] sm:$0xff]
    %v159 = vld [vmem:[%s1 + $0x2d8] sm:$0xff]
    %v160 = vld [vmem:[%s1 + $0x2e0] sm:$0xff]
    %v161 = vld [vmem:[%s1 + $0x2e8] sm:$0xff]
    %v162 = vld [vmem:[%s1 + $0x2f0] sm:$0xff]
    %v163 = vld [vmem:[%s1 + $0x2f8] sm:$0xff]
    %v164 = vld [vmem:[%s1 + $0x300] sm:$0xff]
    %v165 = vld [vmem:[%s1 + $0x308] sm:$0xff]
    %v166 = vld [vmem:[%s1 + $0x310] sm:$0xff]
    %v167 = vld [vmem:[%s1 + $0x318] sm:$0xff]
    %v168 = vld [vmem:[%s1 + $0x320] sm:$0xff]
    %v169 = vld [vmem:[%s1 + $0x328] sm:$0xff]
    %v170 = vld [vmem:[%s1 + $0x330] sm:$0xff]
    %v171 = vld [vmem:[%s1 + $0x338] sm:$0xff]
    %v172 = vld [vmem:[%s1 + $0x340] sm:$0xff]
    %v173 = vld [vmem:[%s1 + $0x348] sm:$0xff]
    %v174 = vld [vmem:[%s1 + $0x350] sm:$0xff]
    %v175 = vld [vmem:[%s1 + $0x358] sm:$0xff]
    %v176 = vld [vmem:[%s1 + $0x360] sm:$0xff]
    %v177 = vld [vmem:[%s1 + $0x368] sm:$0xff]
    %v178 = vld [vmem:[%s1 + $0x370] sm:$0xff]
    %v179 = vld [vmem:[%s1 + $0x378] sm:$0xff]
    %v180 = vld [vmem:[%s1 + $0x380] sm:$0xff]
    %v181 = vld [vmem:[%s1 + $0x388] sm:$0xff]
    %v182 = vld [vmem:[%s1 + $0x390] sm:$0xff]
    %v183 = vld [vmem:[%s1 + $0x398] sm:$0xff]
    %v184 = vld [vmem:[%s1 + $0x3a0] sm:$0xff]
    %v185 = vld [vmem:[%s1 + $0x3a8] sm:$0xff]
    %v186 = vld [vmem:[%s1 + $0x3b0] sm:$0xff]
    %v187 = vld [vmem:[%s1 + $0x3b8] sm:$0xff]
    %v188 = vld [vmem:[%s1 + $0x3c0] sm:$0xff]
    %v189 = vld [vmem:[%s1 + $0x3c8] sm:$0xff]
    %v190 = vld [vmem:[%s1 + $0x3d0] sm:$0xff]
    %v191 = vld [vmem:[%s1 + $0x3d8] sm:$0xff]
    %v192 = vld [vmem:[%s1 + $0x3e0] sm:$0xff]
    %v193 = vld [vmem:[%s1 + $0x3e8] sm:$0xff]
    %v194 = vld [vmem:[%s1 + $0x3f0] sm:$0xff]
    %v195 = vld [vmem:[%s1 + $0x3f8] sm:$0xff]
    %v196 = vld [vmem:[%s1 + $0x400] sm:$0xff]
    %v197 = vld [vmem:[%s1 + $0x408] sm:$0xff]
    %v198 = vld [vmem:[%s1 + $0x410] sm:$0xff]
    %v199 = vld [vmem:[%s1 + $0x418] sm:$0xff]
    %v200 = vld [vmem:[%s1 + $0x420] sm:$0xff]
    %v201 = vld [vmem:[%s1 + $0x428] sm:$0xff]
    %v202 = vld [vmem:[%s1 + $0x430] sm:$0xff]
    %v203 = vld [vmem:[%s1 + $0x438] sm:$0xff]
    %v204 = vld [vmem:[%s1 + $0x440] sm:$0xff]
    %v205 = vld [vmem:[%s1 + $0x448] sm:$0xff]
    %v206 = vld [vmem:[%s1 + $0x450] sm:$0xff]
    %v207 = vld [vmem:[%s1 + $0x458] sm:$0xff]
    %v208 = vld [vmem:[%s1 + $0x460] sm:$0xff]
    %v209 = vld [vmem:[%s1 + $0x468] sm:$0xff]
    %v210 = vld [vmem:[%s1 + $0x470] sm:$0xff]
    %v211 = vld [vmem:[%s1 + $0x478] sm:$0xff]
    %v212 = vld [vmem:[%s1 + $0x480] sm:$0xff]
    %v213 = vld [vmem:[%s1 + $0x488] sm:$0xff]
    %v214 = vld [vmem:[%s1 + $0x490] sm:$0xff]
    %v215 = vld [vmem:[%s1 + $0x498] sm:$0xff]
    %v216 = vld [vmem:[%s1 + $0x4a0] sm:$0xff]
    %v217 = vld [vmem:[%s1 + $0x4a8] sm:$0xff]
    %v218 = vld [vmem:[%s1 + $0x4b0] sm:$0xff]
    %v219 = vld [vmem:[%s1 + $0x4b8] sm:$0xff]
    %v220 = vld [vmem:[%s1 + $0x4c0] sm:$0xff]
    %v221 = vld [vmem:[%s1 + $0x4c8] sm:$0xff]
    %v222 = vld [vmem:[%s1 + $0x4d0] sm:$0xff]
    %v223 = vld [vmem:[%s1 + $0x4d8] sm:$0xff]
    %v224 = vld [vmem:[%s1 + $0x4e0] sm:$0xff]
    %v225 = vld [vmem:[%s1 + $0x4e8] sm:$0xff]
    %v226 = vld [vmem:[%s1 + $0x4f0] sm:$0xff]
    %v227 = vld [vmem:[%s1 + $0x4f8] sm:$0xff]
    %v228 = vld [vmem:[%s1 + $0x500] sm:$0xff]
    %v229 = vld [vmem:[%s1 + $0x508] sm:$0xff]
    %v230 = vld [vmem:[%s1 + $0x510] sm:$0xff]
    %v231 = vld [vmem:[%s1 + $0x518] sm:$0xff]
    %v232 = vld [vmem:[%s1 + $0x520] sm:$0xff]
    %v233 = vld [vmem:[%s1 + $0x528] sm:$0xff]
    %v234 = vld [vmem:[%s1 + $0x530] sm:$0xff]
    %v235 = vld [vmem:[%s1 + $0x538] sm:$0xff]
    %v236 = vld [vmem:[%s1 + $0x540] sm:$0xff]
    %v237 = vld [vmem:[%s1 + $0x548] sm:$0xff]
    %v238 = vld [vmem:[%s1 + $0x550] sm:$0xff]
    %v239 = vld [vmem:[%s1 + $0x558] sm:$0xff]
    %v240 = vld [vmem:[%s1 + $0x560] sm:$0xff]
    %v241 = vld [vmem:[%s1 + $0x568] sm:$0xff]
    %v242 = vld [vmem:[%s1 + $0x570] sm:$0xff]
    %v243 = vld [vmem:[%s1 + $0x578] sm:$0xff]
    %v244 = vld [vmem:[%s1 + $0x580] sm:$0xff]
    %v245 = vld [vmem:[%s1 + $0x588] sm:$0xff]
    %v246 = vld [vmem:[%s1 + $0x590] sm:$0xff]
    %v247 = vld [vmem:[%s1 + $0x598] sm:$0xff]
    %v248 = vld [vmem:[%s1 + $0x5a0] sm:$0xff]
    %v249 = vld [vmem:[%s1 + $0x5a8] sm:$0xff]
    %v250 = vld [vmem:[%s1 + $0x5b0] sm:$0xff]
    %v251 = vld [vmem:[%s1 + $0x5b8] sm:$0xff]
    %v252 = vld [vmem:[%s1 + $0x5c0] sm:$0xff]
    %v253 = vld [vmem:[%s1 + $0x5c8] sm:$0xff]
    %v254 = vld [vmem:[%s1 + $0x5d0] sm:$0xff]
    %v255 = vld [vmem:[%s1 + $0x5d8] sm:$0xff]
    %v256 = vld [vmem:[%s1 + $0x5e0] sm:$0xff]
    %v257 = vld [vmem:[%s1 + $0x5e8] sm:$0xff]
    %v258 = vld [vmem:[%s1 + $0x5f0] sm:$0xff]
    %v259 = vld [vmem:[%s1 + $0x5f8] sm:$0xff]
    %v260 = vld [vmem:[%s1 + $0x600] sm:$0xff]
    %v261 = vld [vmem:[%s1 + $0x608] sm:$0xff]
    %v262 = vld [vmem:[%s1 + $0x610] sm:$0xff]
    %v263 = vld [vmem:[%s1 + $0x618] sm:$0xff]
    %v264 = vld [vmem:[%s1 + $0x620] sm:$0xff]
    %v265 = vld [vmem:[%s1 + $0x628] sm:$0xff]
    %v266 = vld [vmem:[%s1 + $0x630] sm:$0xff]
    %v267 = vld [vmem:[%s1 + $0x638] sm:$0xff]
    %v268 = vld [vmem:[%s1 + $0x640] sm:$0xff]
    %v269 = vld [vmem:[%s1 + $0x648] sm:$0xff]
    %v270 = vld [vmem:[%s1 + $0x650] sm:$0xff]
    %v271 = vld [vmem:[%s1 + $0x658] sm:$0xff]
    %v272 = vld [vmem:[%s1 + $0x660] sm:$0xff]
    %v273 = vld [vmem:[%s1 + $0x668] sm:$0xff]
    %v274 = vld [vmem:[%s1 + $0x670] sm:$0xff]
    %v275 = vld [vmem:[%s1 + $0x678] sm:$0xff]
    %v276 = vld [vmem:[%s1 + $0x680] sm:$0xff]
    %v277 = vld [vmem:[%s1 + $0x688] sm:$0xff]
    %v278 = vld [vmem:[%s1 + $0x690] sm:$0xff]
    %v279 = vld [vmem:[%s1 + $0x698] sm:$0xff]
    %v280 = vld [vmem:[%s1 + $0x6a0] sm:$0xff]
    %v281 = vld [vmem:[%s1 + $0x6a8] sm:$0xff]
    %v282 = vld [vmem:[%s1 + $0x6b0] sm:$0xff]
    %v283 = vld [vmem:[%s1 + $0x6b8] sm:$0xff]
    %v284 = vld [vmem:[%s1 + $0x6c0] sm:$0xff]
    %v285 = vld [vmem:[%s1 + $0x6c8] sm:$0xff]
    %v286 = vld [vmem:[%s1 + $0x6d0] sm:$0xff]
    %v287 = vld [vmem:[%s1 + $0x6d8] sm:$0xff]
    %v288 = vld [vmem:[%s1 + $0x6e0] sm:$0xff]
    %v289 = vld [vmem:[%s1 + $0x6e8] sm:$0xff]
    %v290 = vld [vmem:[%s1 + $0x6f0] sm:$0xff]
    %v291 = vld [vmem:[%s1 + $0x6f8] sm:$0xff]
    %v292 = vld [vmem:[%s1 + $0x700] sm:$0xff]
    %v293 = vld [vmem:[%s1 + $0x708] sm:$0xff]
    %v294 = vld [vmem:[%s1 + $0x710] sm:$0xff]
    %v295 = vld [vmem:[%s1 + $0x718] sm:$0xff]
    %v296 = vld [vmem:[%s1 + $0x720] sm:$0xff]
    %v297 = vld [vmem:[%s1 + $0x728] sm:$0xff]
    %v298 = vld [vmem:[%s1 + $0x730] sm:$0xff]
    %v299 = vld [vmem:[%s1 + $0x738] sm:$0xff]
    %v300 = vld [vmem:[%s1 + $0x740] sm:$0xff]
    %v301 = vld [vmem:[%s1 + $0x748] sm:$0xff]
    %v302 = vld [vmem:[%s1 + $0x750] sm:$0xff]
    %v303 = vld [vmem:[%s1 + $0x758] sm:$0xff]
    %v304 = vld [vmem:[%s1 + $0x760] sm:$0xff]
    %v305 = vld [vmem:[%s1 + $0x768] sm:$0xff]
    %v306 = vld [vmem:[%s1 + $0x770] sm:$0xff]
    %v307 = vld [vmem:[%s1 + $0x778] sm:$0xff]
    %v308 = vld [vmem:[%s1 + $0x780] sm:$0xff]
    %v309 = vld [vmem:[%s1 + $0x788] sm:$0xff]
    %v310 = vld [vmem:[%s1 + $0x790] sm:$0xff]
    %v311 = vld [vmem:[%s1 + $0x798] sm:$0xff]
    %v312 = vld [vmem:[%s1 + $0x7a0] sm:$0xff]
    %v313 = vld [vmem:[%s1 + $0x7a8] sm:$0xff]
    %v314 = vld [vmem:[%s1 + $0x7b0] sm:$0xff]
    %v315 = vld [vmem:[%s1 + $0x7b8] sm:$0xff]
    %v316 = vld [vmem:[%s1 + $0x7c0] sm:$0xff]
    %v317 = vld [vmem:[%s1 + $0x7c8] sm:$0xff]
    %v318 = vld [vmem:[%s1 + $0x7d0] sm:$0xff]
    %v319 = vld [vmem:[%s1 + $0x7d8] sm:$0xff]
    %v320 = vld [vmem:[%s1 + $0x7e0] sm:$0xff]
    %v321 = vld [vmem:[%s1 + $0x7e8] sm:$0xff]
    %v322 = vld [vmem:[%s1 + $0x7f0] sm:$0xff]
    %v323 = vld [vmem:[%s1 + $0x7f8] sm:$0xff]
    %v324 = vld [vmem:[%s1 + $0x800] sm:$0xff]
    %v325 = vld [vmem:[%s1 + $0x808] sm:$0xff]
    %v326 = vld [vmem:[%s1 + $0x810] sm:$0xff]
    %v327 = vld [vmem:[%s1 + $0x818] sm:$0xff]
    %v328 = vld [vmem:[%s1 + $0x820] sm:$0xff]
    %v329 = vld [vmem:[%s1 + $0x828] sm:$0xff]
    %v330 = vld [vmem:[%s1 + $0x830] sm:$0xff]
    %v331 = vld [vmem:[%s1 + $0x838] sm:$0xff]
    %v332 = vld [vmem:[%s1 + $0x840] sm:$0xff]
    %v333 = vld [vmem:[%s1 + $0x848] sm:$0xff]
    %v334 = vld [vmem:[%s1 + $0x850] sm:$0xff]
    %v335 = vld [vmem:[%s1 + $0x858] sm:$0xff]
    %v336 = vld [vmem:[%s1 + $0x860] sm:$0xff]
    %v337 = vld [vmem:[%s1 + $0x868] sm:$0xff]
    %v338 = vld [vmem:[%s1 + $0x870] sm:$0xff]
    %v339 = vld [vmem:[%s1 + $0x878] sm:$0xff]
    %v340 = vld [vmem:[%s1 + $0x880] sm:$0xff]
    %v341 = vld [vmem:[%s1 + $0x888] sm:$0xff]
    %v342 = vld [vmem:[%s1 + $0x890] sm:$0xff]
    %v343 = vld [vmem:[%s1 + $0x898] sm:$0xff]
    %v344 = vld [vmem:[%s1 + $0x8a0] sm:$0xff]
    %v345 = vld [vmem:[%s1 + $0x8a8] sm:$0xff]
    %v346 = vld [vmem:[%s1 + $0x8b0] sm:$0xff]
    %v347 = vld [vmem:[%s1 + $0x8b8] sm:$0xff]
    %v348 = vld [vmem:[%s1 + $0x8c0] sm:$0xff]
    %v349 = vld [vmem:[%s1 + $0x8c8] sm:$0xff]
    %v350 = vld [vmem:[%s1 + $0x8d0] sm:$0xff]
    %v351 = vld [vmem:[%s1 + $0x8d8] sm:$0xff]
    %v352 = vld [vmem:[%s1 + $0x8e0] sm:$0xff]
    %v353 = vld [vmem:[%s1 + $0x8e8] sm:$0xff]
    %v354 = vld [vmem:[%s1 + $0x8f0] sm:$0xff]
    %v355 = vld [vmem:[%s1 + $0x8f8] sm:$0xff]
    %v356 = vld [vmem:[%s1 + $0x900] sm:$0xff]
    %v357 = vld [vmem:[%s1 + $0x908] sm:$0xff]
    %v358 = vld [vmem:[%s1 + $0x910] sm:$0xff]
    %v359 = vld [vmem:[%s1 + $0x918] sm:$0xff]
    %v360 = vld [vmem:[%s1 + $0x920] sm:$0xff]
    %v361 = vld [vmem:[%s1 + $0x928] sm:$0xff]
    %v362 = vld [vmem:[%s1 + $0x930] sm:$0xff]
    %v363 = vld [vmem:[%s1 + $0x938] sm:$0xff]
    %v364 = vld [vmem:[%s1 + $0x940] sm:$0xff]
    %v365 = vld [vmem:[%s1 + $0x948] sm:$0xff]
    %v366 = vld [vmem:[%s1 + $0x950] sm:$0xff]
    %v367 = vld [vmem:[%s1 + $0x958] sm:$0xff]
    %v368 = vld [vmem:[%s1 + $0x960] sm:$0xff]
    %v369 = vld [vmem:[%s1 + $0x968] sm:$0xff]
    %v370 = vld [vmem:[%s1 + $0x970] sm:$0xff]
    %v371 = vld [vmem:[%s1 + $0x978] sm:$0xff]
    %v372 = vld [vmem:[%s1 + $0x980] sm:$0xff]
    %v373 = vld [vmem:[%s1 + $0x988] sm:$0xff]
    %v374 = vld [vmem:[%s1 + $0x990] sm:$0xff]
    %v375 = vld [vmem:[%s1 + $0x998] sm:$0xff]
    %v376 = vld [vmem:[%s1 + $0x9a0] sm:$0xff]
    %v377 = vld [vmem:[%s1 + $0x9a8] sm:$0xff]
    %v378 = vld [vmem:[%s1 + $0x9b0] sm:$0xff]
    %v379 = vld [vmem:[%s1 + $0x9b8] sm:$0xff]
    %v380 = vld [vmem:[%s1 + $0x9c0] sm:$0xff]
    %v381 = vld [vmem:[%s1 + $0x9c8] sm:$0xff]
    %v382 = vld [vmem:[%s1 + $0x9d0] sm:$0xff]
    %v383 = vld [vmem:[%s1 + $0x9d8] sm:$0xff]
    %v384 = vld [vmem:[%s1 + $0x9e0] sm:$0xff]
    %v385 = vld [vmem:[%s1 + $0x9e8] sm:$0xff]
    %v386 = vld [vmem:[%s1 + $0x9f0] sm:$0xff]
    %v387 = vld [vmem:[%s1 + $0x9f8] sm:$0xff]
    %v388 = vld [vmem:[%s1 + $0xa00] sm:$0xff]
    %v389 = vld [vmem:[%s1 + $0xa08] sm:$0xff]
    %v390 = vld [vmem:[%s1 + $0xa10] sm:$0xff]
    %v391 = vld [vmem:[%s1 + $0xa18] sm:$0xff]
    %v392 = vld [vmem:[%s1 + $0xa20] sm:$0xff]
    %v393 = vld [vmem:[%s1 + $0xa28] sm:$0xff]
    %v394 = vld [vmem:[%s1 + $0xa30] sm:$0xff]
    %v395 = vld [vmem:[%s1 + $0xa38] sm:$0xff]
    %v396 = vld [vmem:[%s1 + $0xa40] sm:$0xff]
    %v397 = vld [vmem:[%s1 + $0xa48] sm:$0xff]
    %v398 = vld [vmem:[%s1 + $0xa50] sm:$0xff]
    %v399 = vld [vmem:[%s1 + $0xa58] sm:$0xff]
    %v400 = vld [vmem:[%s1 + $0xa60] sm:$0xff]
    %v401 = vld [vmem:[%s1 + $0xa68] sm:$0xff]
    %v402 = vld [vmem:[%s1 + $0xa70] sm:$0xff]
    %v403 = vld [vmem:[%s1 + $0xa78] sm:$0xff]
    %v404 = vld [vmem:[%s1 + $0xa80] sm:$0xff]
    %v405 = vld [vmem:[%s1 + $0xa88] sm:$0xff]
    %v406 = vld [vmem:[%s1 + $0xa90] sm:$0xff]
    %v407 = vld [vmem:[%s1 + $0xa98] sm:$0xff]
    %v408 = vld [vmem:[%s1 + $0xaa0] sm:$0xff]
    %v409 = vld [vmem:[%s1 + $0xaa8] sm:$0xff]
    %v410 = vld [vmem:[%s1 + $0xab0] sm:$0xff]
    %v411 = vld [vmem:[%s1 + $0xab8] sm:$0xff]
    %v412 = vld [vmem:[%s1 + $0xac0] sm:$0xff]
    %v413 = vld [vmem:[%s1 + $0xac8] sm:$0xff]
    %v414 = vld [vmem:[%s1 + $0xad0] sm:$0xff]
    %v415 = vld [vmem:[%s1 + $0xad8] sm:$0xff]
    %v416 = vld [vmem:[%s1 + $0xae0] sm:$0xff]
    %v417 = vld [vmem:[%s1 + $0xae8] sm:$0xff]
    %v418 = vld [vmem:[%s1 + $0xaf0] sm:$0xff]
    %v419 = vld [vmem:[%s1 + $0xaf8] sm:$0xff]
    %v420 = vld [vmem:[%s1 + $0xb00] sm:$0xff]
    %v421 = vld [vmem:[%s1 + $0xb08] sm:$0xff]
    %v422 = vld [vmem:[%s1 + $0xb10] sm:$0xff]
    %v423 = vld [vmem:[%s1 + $0xb18] sm:$0xff]
    %v424 = vld [vmem:[%s1 + $0xb20] sm:$0xff]
    %v425 = vld [vmem:[%s1 + $0xb28] sm:$0xff]
    %v426 = vld [vmem:[%s1 + $0xb30] sm:$0xff]
    %v427 = vld [vmem:[%s1 + $0xb38] sm:$0xff]
    %v428 = vld [vmem:[%s1 + $0xb40] sm:$0xff]
    %v429 = vld [vmem:[%s1 + $0xb48] sm:$0xff]
    %v430 = vld [vmem:[%s1 + $0xb50] sm:$0xff]
    %v431 = vld [vmem:[%s1 + $0xb58] sm:$0xff]
    %v432 = vld [vmem:[%s1 + $0xb60] sm:$0xff]
    %v433 = vld [vmem:[%s1 + $0xb68] sm:$0xff]
    %v434 = vld [vmem:[%s1 + $0xb70] sm:$0xff]
    %v435 = vld [vmem:[%s1 + $0xb78] sm:$0xff]
    %v436 = vld [vmem:[%s1 + $0xb80] sm:$0xff]
    %v437 = vld [vmem:[%s1 + $0xb88] sm:$0xff]
    %v438 = vld [vmem:[%s1 + $0xb90] sm:$0xff]
    %v439 = vld [vmem:[%s1 + $0xb98] sm:$0xff]
    %v440 = vld [vmem:[%s1 + $0xba0] sm:$0xff]
    %v441 = vld [vmem:[%s1 + $0xba8] sm:$0xff]
    %v442 = vld [vmem:[%s1 + $0xbb0] sm:$0xff]
    %v443 = vld [vmem:[%s1 + $0xbb8] sm:$0xff]
    %v444 = vld [vmem:[%s1 + $0xbc0] sm:$0xff]
    %v445 = vld [vmem:[%s1 + $0xbc8] sm:$0xff]
    %v446 = vld [vmem:[%s1 + $0xbd0] sm:$0xff]
    %v447 = vld [vmem:[%s1 + $0xbd8] sm:$0xff]
    %v448 = vld [vmem:[%s1 + $0xbe0] sm:$0xff]
    %v449 = vld [vmem:[%s1 + $0xbe8] sm:$0xff]
    %v450 = vld [vmem:[%s1 + $0xbf0] sm:$0xff]
    %v451 = vld [vmem:[%s1 + $0xbf8] sm:$0xff]
    %v452 = vld [vmem:[%s1 + $0xc00] sm:$0xff]
    %v453 = vld [vmem:[%s1 + $0xc08] sm:$0xff]
    %v454 = vld [vmem:[%s1 + $0xc10] sm:$0xff]
    %v455 = vld [vmem:[%s1 + $0xc18] sm:$0xff]
    %v456 = vld [vmem:[%s1 + $0xc20] sm:$0xff]
    %v457 = vld [vmem:[%s1 + $0xc28] sm:$0xff]
    %v458 = vld [vmem:[%s1 + $0xc30] sm:$0xff]
    %v459 = vld [vmem:[%s1 + $0xc38] sm:$0xff]
    %v460 = vld [vmem:[%s1 + $0xc40] sm:$0xff]
    %v461 = vld [vmem:[%s1 + $0xc48] sm:$0xff]
    %v462 = vld [vmem:[%s1 + $0xc50] sm:$0xff]
    %v463 = vld [vmem:[%s1 + $0xc58] sm:$0xff]
    %v464 = vld [vmem:[%s1 + $0xc60] sm:$0xff]
    %v465 = vld [vmem:[%s1 + $0xc68] sm:$0xff]
    %v466 = vld [vmem:[%s1 + $0xc70] sm:$0xff]
    %v467 = vld [vmem:[%s1 + $0xc78] sm:$0xff]
    %v468 = vld [vmem:[%s1 + $0xc80] sm:$0xff]
    %v469 = vld [vmem:[%s1 + $0xc88] sm:$0xff]
    %v470 = vld [vmem:[%s1 + $0xc90] sm:$0xff]
    %v471 = vld [vmem:[%s1 + $0xc98] sm:$0xff]
    %v472 = vld [vmem:[%s1 + $0xca0] sm:$0xff]
    %v473 = vld [vmem:[%s1 + $0xca8] sm:$0xff]
    %v474 = vld [vmem:[%s1 + $0xcb0] sm:$0xff]
    %v475 = vld [vmem:[%s1 + $0xcb8] sm:$0xff]
    %v476 = vld [vmem:[%s1 + $0xcc0] sm:$0xff]
    %v477 = vld [vmem:[%s1 + $0xcc8] sm:$0xff]
    %v478 = vld [vmem:[%s1 + $0xcd0] sm:$0xff]
    %v479 = vld [vmem:[%s1 + $0xcd8] sm:$0xff]
    %v480 = vld [vmem:[%s1 + $0xce0] sm:$0xff]
    %v481 = vld [vmem:[%s1 + $0xce8] sm:$0xff]
    %v482 = vld [vmem:[%s1 + $0xcf0] sm:$0xff]
    %v483 = vld [vmem:[%s1 + $0xcf8] sm:$0xff]
    %v484 = vld [vmem:[%s1 + $0xd00] sm:$0xff]
    %v485 = vld [vmem:[%s1 + $0xd08] sm:$0xff]
    %v486 = vld [vmem:[%s1 + $0xd10] sm:$0xff]
    %v487 = vld [vmem:[%s1 + $0xd18] sm:$0xff]
    %v488 = vld [vmem:[%s1 + $0xd20] sm:$0xff]
    %v489 = vld [vmem:[%s1 + $0xd28] sm:$0xff]
    %v490 = vld [vmem:[%s1 + $0xd30] sm:$0xff]
    %v491 = vld [vmem:[%s1 + $0xd38] sm:$0xff]
    %v492 = vld [vmem:[%s1 + $0xd40] sm:$0xff]
    %v493 = vld [vmem:[%s1 + $0xd48] sm:$0xff]
    %v494 = vld [vmem:[%s1 + $0xd50] sm:$0xff]
    %v495 = vld [vmem:[%s1 + $0xd58] sm:$0xff]
    %v496 = vld [vmem:[%s1 + $0xd60] sm:$0xff]
    %v497 = vld [vmem:[%s1 + $0xd68] sm:$0xff]
    %v498 = vld [vmem:[%s1 + $0xd70] sm:$0xff]
    %v499 = vld [vmem:[%s1 + $0xd78] sm:$0xff]
    %v500 = vld [vmem:[%s1 + $0xd80] sm:$0xff]
    %v501 = vld [vmem:[%s1 + $0xd88] sm:$0xff]
    %v502 = vld [vmem:[%s1 + $0xd90] sm:$0xff]
    %v503 = vld [vmem:[%s1 + $0xd98] sm:$0xff]
    %v504 = vld [vmem:[%s1 + $0xda0] sm:$0xff]
    %v505 = vld [vmem:[%s1 + $0xda8] sm:$0xff]
    %v506 = vld [vmem:[%s1 + $0xdb0] sm:$0xff]
    %v507 = vld [vmem:[%s1 + $0xdb8] sm:$0xff]
    %v508 = vld [vmem:[%s1 + $0xdc0] sm:$0xff]
    %v509 = vld [vmem:[%s1 + $0xdc8] sm:$0xff]
    %v510 = vld [vmem:[%s1 + $0xdd0] sm:$0xff]
    %v511 = vld [vmem:[%s1 + $0xdd8] sm:$0xff]
    %v512 = vld [vmem:[%s1 + $0xde0] sm:$0xff]
    %v513 = vld [vmem:[%s1 + $0xde8] sm:$0xff]
    %v514 = vld [vmem:[%s1 + $0xdf0] sm:$0xff]
    %v515 = vld [vmem:[%s1 + $0xdf8] sm:$0xff]
    %v516 = vld [vmem:[%s1 + $0xe00] sm:$0xff]
    %v517 = vld [vmem:[%s1 + $0xe08] sm:$0xff]
    %v518 = vld [vmem:[%s1 + $0xe10] sm:$0xff]
    %v519 = vld [vmem:[%s1 + $0xe18] sm:$0xff]
    %v520 = vld [vmem:[%s1 + $0xe20] sm:$0xff]
    %v521 = vld [vmem:[%s1 + $0xe28] sm:$0xff]
    %v522 = vld [vmem:[%s1 + $0xe30] sm:$0xff]
    %v523 = vld [vmem:[%s1 + $0xe38] sm:$0xff]
    %v524 = vld [vmem:[%s1 + $0xe40] sm:$0xff]
    %v525 = vld [vmem:[%s1 + $0xe48] sm:$0xff]
    %v526 = vld [vmem:[%s1 + $0xe50] sm:$0xff]
    %v527 = vld [vmem:[%s1 + $0xe58] sm:$0xff]
    %v528 = vld [vmem:[%s1 + $0xe60] sm:$0xff]
    %v529 = vld [vmem:[%s1 + $0xe68] sm:$0xff]
    %v530 = vld [vmem:[%s1 + $0xe70] sm:$0xff]
    %v531 = vld [vmem:[%s1 + $0xe78] sm:$0xff]
    %v532 = vld [vmem:[%s1 + $0xe80] sm:$0xff]
    %v533 = vld [vmem:[%s1 + $0xe88] sm:$0xff]
    %v534 = vld [vmem:[%s1 + $0xe90] sm:$0xff]
    %v535 = vld [vmem:[%s1 + $0xe98] sm:$0xff]
    %v536 = vld [vmem:[%s1 + $0xea0] sm:$0xff]
    %v537 = vld [vmem:[%s1 + $0xea8] sm:$0xff]
    %v538 = vld [vmem:[%s1 + $0xeb0] sm:$0xff]
    %v539 = vld [vmem:[%s1 + $0xeb8] sm:$0xff]
    %v540 = vld [vmem:[%s1 + $0xec0] sm:$0xff]
    %v541 = vld [vmem:[%s1 + $0xec8] sm:$0xff]
    %v542 = vld [vmem:[%s1 + $0xed0] sm:$0xff]
    %v543 = vld [vmem:[%s1 + $0xed8] sm:$0xff]
    %v544 = vld [vmem:[%s1 + $0xee0] sm:$0xff]
    %v545 = vld [vmem:[%s1 + $0xee8] sm:$0xff]
    %v546 = vld [vmem:[%s1 + $0xef0] sm:$0xff]
    %v547 = vld [vmem:[%s1 + $0xef8] sm:$0xff]
    %v548 = vld [vmem:[%s1 + $0xf00] sm:$0xff]
    %v549 = vld [vmem:[%s1 + $0xf08] sm:$0xff]
    %v550 = vld [vmem:[%s1 + $0xf10] sm:$0xff]
    %v551 = vld [vmem:[%s1 + $0xf18] sm:$0xff]
    %v552 = vld [vmem:[%s1 + $0xf20] sm:$0xff]
    %v553 = vld [vmem:[%s1 + $0xf28] sm:$0xff]
    %v554 = vld [vmem:[%s1 + $0xf30] sm:$0xff]
    %v555 = vld [vmem:[%s1 + $0xf38] sm:$0xff]
    %v556 = vld [vmem:[%s1 + $0xf40] sm:$0xff]
    %v557 = vld [vmem:[%s1 + $0xf48] sm:$0xff]
    %v558 = vld [vmem:[%s1 + $0xf50] sm:$0xff]
    %v559 = vld [vmem:[%s1 + $0xf58] sm:$0xff]
    %v560 = vld [vmem:[%s1 + $0xf60] sm:$0xff]
    %v561 = vld [vmem:[%s1 + $0xf68] sm:$0xff]
    %v562 = vld [vmem:[%s1 + $0xf70] sm:$0xff]
    %v563 = vld [vmem:[%s1 + $0xf78] sm:$0xff]
    %v564 = vld [vmem:[%s1 + $0xf80] sm:$0xff]
    %v565 = vld [vmem:[%s1 + $0xf88] sm:$0xff]
    %v566 = vld [vmem:[%s1 + $0xf90] sm:$0xff]
    %v567 = vld [vmem:[%s1 + $0xf98] sm:$0xff]
    %v568 = vld [vmem:[%s1 + $0xfa0] sm:$0xff]
    %v569 = vld [vmem:[%s1 + $0xfa8] sm:$0xff]
    %v570 = vld [vmem:[%s1 + $0xfb0] sm:$0xff]
    %v571 = vld [vmem:[%s1 + $0xfb8] sm:$0xff]
    %v572 = vld [vmem:[%s1 + $0xfc0] sm:$0xff]
    %v573 = vld [vmem:[%s1 + $0xfc8] sm:$0xff]
    %v574 = vld [vmem:[%s1 + $0xfd0] sm:$0xff]
    %v575 = vld [vmem:[%s1 + $0xfd8] sm:$0xff]
    %v576 = vld [vmem:[%s1 + $0xfe0] sm:$0xff]
    %v577 = vld [vmem:[%s1 + $0xfe8] sm:$0xff]
    %v578 = vld [vmem:[%s1 + $0xff0] sm:$0xff]
    %v579 = vld [vmem:[%s1 + $0xff8] sm:$0xff]
    %v580 = vld [vmem:[%s1 + $0x1000] sm:$0xff]
    %v581 = vld [vmem:[%s1 + $0x1008] sm:$0xff]
    %v582 = vld [vmem:[%s1 + $0x1010] sm:$0xff]
    %v583 = vld [vmem:[%s1 + $0x1018] sm:$0xff]
    %v584 = vld [vmem:[%s1 + $0x1020] sm:$0xff]
    %v585 = vld [vmem:[%s1 + $0x1028] sm:$0xff]
    %v586 = vld [vmem:[%s1 + $0x1030] sm:$0xff]
    %v587 = vld [vmem:[%s1 + $0x1038] sm:$0xff]
    %v588 = vld [vmem:[%s1 + $0x1040] sm:$0xff]
    %v589 = vld [vmem:[%s1 + $0x1048] sm:$0xff]
    %v590 = vld [vmem:[%s1 + $0x1050] sm:$0xff]
    %v591 = vld [vmem:[%s1 + $0x1058] sm:$0xff]
    %v592 = vld [vmem:[%s1 + $0x1060] sm:$0xff]
    %v593 = vld [vmem:[%s1 + $0x1068] sm:$0xff]
    %v594 = vld [vmem:[%s1 + $0x1070] sm:$0xff]
    %v595 = vld [vmem:[%s1 + $0x1078] sm:$0xff]
    %v596 = vld [vmem:[%s1 + $0x1080] sm:$0xff]
    %v597 = vld [vmem:[%s1 + $0x1088] sm:$0xff]
    %v598 = vld [vmem:[%s1 + $0x1090] sm:$0xff]
    %v599 = vld [vmem:[%s1 + $0x1098] sm:$0xff]
    %v600 = vld [vmem:[%s1 + $0x10a0] sm:$0xff]
    %v601 = vld [vmem:[%s1 + $0x10a8] sm:$0xff]
    %v602 = vld [vmem:[%s1 + $0x10b0] sm:$0xff]
    %v603 = vld [vmem:[%s1 + $0x10b8] sm:$0xff]
    %v604 = vld [vmem:[%s1 + $0x10c0] sm:$0xff]
    %v605 = vld [vmem:[%s1 + $0x10c8] sm:$0xff]
    %v606 = vld [vmem:[%s1 + $0x10d0] sm:$0xff]
    %v607 = vld [vmem:[%s1 + $0x10d8] sm:$0xff]
    %v608 = vld [vmem:[%s1 + $0x10e0] sm:$0xff]
    %v609 = vld [vmem:[%s1 + $0x10e8] sm:$0xff]
    %v610 = vld [vmem:[%s1 + $0x10f0] sm:$0xff]
    %v611 = vld [vmem:[%s1 + $0x10f8] sm:$0xff]
    %v612 = vld [vmem:[%s1 + $0x1100] sm:$0xff]
    %v613 = vld [vmem:[%s1 + $0x1108] sm:$0xff]
    %v614 = vld [vmem:[%s1 + $0x1110] sm:$0xff]
    %v615 = vld [vmem:[%s1 + $0x1118] sm:$0xff]
    %v616 = vld [vmem:[%s1 + $0x1120] sm:$0xff]
    %v617 = vld [vmem:[%s1 + $0x1128] sm:$0xff]
    %v618 = vld [vmem:[%s1 + $0x1130] sm:$0xff]
    %v619 = vld [vmem:[%s1 + $0x1138] sm:$0xff]
    %v620 = vld [vmem:[%s1 + $0x1140] sm:$0xff]
    %v621 = vld [vmem:[%s1 + $0x1148] sm:$0xff]
    %v622 = vld [vmem:[%s1 + $0x1150] sm:$0xff]
    %v623 = vld [vmem:[%s1 + $0x1158] sm:$0xff]
    %v624 = vld [vmem:[%s1 + $0x1160] sm:$0xff]
    %v625 = vld [vmem:[%s1 + $0x1168] sm:$0xff]
    %v626 = vld [vmem:[%s1 + $0x1170] sm:$0xff]
    %v627 = vld [vmem:[%s1 + $0x1178] sm:$0xff]
    %v628 = vld [vmem:[%s1 + $0x1180] sm:$0xff]
    %v629 = vld [vmem:[%s1 + $0x1188] sm:$0xff]
    %v630 = vld [vmem:[%s1 + $0x1190] sm:$0xff]
    %v631 = vld [vmem:[%s1 + $0x1198] sm:$0xff]
    %v632 = vld [vmem:[%s1 + $0x11a0] sm:$0xff]
    %v633 = vld [vmem:[%s1 + $0x11a8] sm:$0xff]
    %v634 = vld [vmem:[%s1 + $0x11b0] sm:$0xff]
    %v635 = vld [vmem:[%s1 + $0x11b8] sm:$0xff]
    %v636 = vld [vmem:[%s1 + $0x11c0] sm:$0xff]
    %v637 = vld [vmem:[%s1 + $0x11c8] sm:$0xff]
    %v638 = vld [vmem:[%s1 + $0x11d0] sm:$0xff]
    %v639 = vld [vmem:[%s1 + $0x11d8] sm:$0xff]
    %v640 = vld [vmem:[%s1 + $0x11e0] sm:$0xff]
    %v641 = vld [vmem:[%s1 + $0x11e8] sm:$0xff]
    %v642 = vld [vmem:[%s1 + $0x11f0] sm:$0xff]
    %v643 = vld [vmem:[%s1 + $0x11f8] sm:$0xff]
    %v644 = vld [vmem:[%s1 + $0x1200] sm:$0xff]
    %v645 = vld [vmem:[%s1 + $0x1208] sm:$0xff]
    %v646 = vld [vmem:[%s1 + $0x1210] sm:$0xff]
    %v647 = vld [vmem:[%s1 + $0x1218] sm:$0xff]
    %v648 = vld [vmem:[%s1 + $0x1220] sm:$0xff]
    %v649 = vld [vmem:[%s1 + $0x1228] sm:$0xff]
    %v650 = vld [vmem:[%s1 + $0x1230] sm:$0xff]
    %v651 = vld [vmem:[%s1 + $0x1238] sm:$0xff]
    %v652 = vld [vmem:[%s1 + $0x1240] sm:$0xff]
    %v653 = vld [vmem:[%s1 + $0x1248] sm:$0xff]
    %v654 = vld [vmem:[%s1 + $0x1250] sm:$0xff]
    %v655 = vld [vmem:[%s1 + $0x1258] sm:$0xff]
    %v656 = vld [vmem:[%s1 + $0x1260] sm:$0xff]
    %v657 = vld [vmem:[%s1 + $0x1268] sm:$0xff]
    %v658 = vld [vmem:[%s1 + $0x1270] sm:$0xff]
    %v659 = vld [vmem:[%s1 + $0x1278] sm:$0xff]
    %v660 = vld [vmem:[%s1 + $0x1280] sm:$0xff]
    %v661 = vld [vmem:[%s1 + $0x1288] sm:$0xff]
    %v662 = vld [vmem:[%s1 + $0x1290] sm:$0xff]
    %v663 = vld [vmem:[%s1 + $0x1298] sm:$0xff]
    %v664 = vld [vmem:[%s1 + $0x12a0] sm:$0xff]
    %v665 = vld [vmem:[%s1 + $0x12a8] sm:$0xff]
    %v666 = vld [vmem:[%s1 + $0x12b0] sm:$0xff]
    %v667 = vld [vmem:[%s1 + $0x12b8] sm:$0xff]
    %v668 = vld [vmem:[%s1 + $0x12c0] sm:$0xff]
    %v669 = vld [vmem:[%s1 + $0x12c8] sm:$0xff]
    %v670 = vld [vmem:[%s1 + $0x12d0] sm:$0xff]
    %v671 = vld [vmem:[%s1 + $0x12d8] sm:$0xff]
    %v672 = vld [vmem:[%s1 + $0x12e0] sm:$0xff]
    %v673 = vld [vmem:[%s1 + $0x12e8] sm:$0xff]
    %v674 = vld [vmem:[%s1 + $0x12f0] sm:$0xff]
    %v675 = vld [vmem:[%s1 + $0x12f8] sm:$0xff]
    %v676 = vld [vmem:[%s1 + $0x1300] sm:$0xff]
    %v677 = vld [vmem:[%s1 + $0x1308] sm:$0xff]
    %v678 = vld [vmem:[%s1 + $0x1310] sm:$0xff]
    %v679 = vld [vmem:[%s1 + $0x1318] sm:$0xff]
    %v680 = vld [vmem:[%s1 + $0x1320] sm:$0xff]
    %v681 = vld [vmem:[%s1 + $0x1328] sm:$0xff]
    %v682 = vld [vmem:[%s1 + $0x1330] sm:$0xff]
    %v683 = vld [vmem:[%s1 + $0x1338] sm:$0xff]
    %v684 = vld [vmem:[%s1 + $0x1340] sm:$0xff]
    %v685 = vld [vmem:[%s1 + $0x1348] sm:$0xff]
    %v686 = vld [vmem:[%s1 + $0x1350] sm:$0xff]
    %v687 = vld [vmem:[%s1 + $0x1358] sm:$0xff]
    %v688 = vld [vmem:[%s1 + $0x1360] sm:$0xff]
    %v689 = vld [vmem:[%s1 + $0x1368] sm:$0xff]
    %v690 = vld [vmem:[%s1 + $0x1370] sm:$0xff]
    %v691 = vld [vmem:[%s1 + $0x1378] sm:$0xff]
    %v692 = vld [vmem:[%s1 + $0x1380] sm:$0xff]
    %v693 = vld [vmem:[%s1 + $0x1388] sm:$0xff]
    %v694 = vld [vmem:[%s1 + $0x1390] sm:$0xff]
    %v695 = vld [vmem:[%s1 + $0x1398] sm:$0xff]
    %v696 = vld [vmem:[%s1 + $0x13a0] sm:$0xff]
    %v697 = vld [vmem:[%s1 + $0x13a8] sm:$0xff]
    %v698 = vld [vmem:[%s1 + $0x13b0] sm:$0xff]
    %v699 = vld [vmem:[%s1 + $0x13b8] sm:$0xff]
    %v700 = vld [vmem:[%s1 + $0x13c0] sm:$0xff]
    %v701 = vld [vmem:[%s1 + $0x13c8] sm:$0xff]
    %v702 = vld [vmem:[%s1 + $0x13d0] sm:$0xff]
    %v703 = vld [vmem:[%s1 + $0x13d8] sm:$0xff]
    %v704 = vld [vmem:[%s1 + $0x13e0] sm:$0xff]
    %v705 = vld [vmem:[%s1 + $0x13e8] sm:$0xff]
    %v706 = vld [vmem:[%s1 + $0x13f0] sm:$0xff]
    %v707 = vld [vmem:[%s1 + $0x13f8] sm:$0xff]
    %v708 = vld [vmem:[%s1 + $0x1400] sm:$0xff]
    %v709 = vld [vmem:[%s1 + $0x1408] sm:$0xff]
    %v710 = vld [vmem:[%s1 + $0x1410] sm:$0xff]
    %v711 = vld [vmem:[%s1 + $0x1418] sm:$0xff]
    %v712 = vld [vmem:[%s1 + $0x1420] sm:$0xff]
    %v713 = vld [vmem:[%s1 + $0x1428] sm:$0xff]
    %v714 = vld [vmem:[%s1 + $0x1430] sm:$0xff]
    %v715 = vld [vmem:[%s1 + $0x1438] sm:$0xff]
    %v716 = vld [vmem:[%s1 + $0x1440] sm:$0xff]
    %v717 = vld [vmem:[%s1 + $0x1448] sm:$0xff]
    %v718 = vld [vmem:[%s1 + $0x1450] sm:$0xff]
    %v719 = vld [vmem:[%s1 + $0x1458] sm:$0xff]
    %v720 = vld [vmem:[%s1 + $0x1460] sm:$0xff]
    %v721 = vld [vmem:[%s1 + $0x1468] sm:$0xff]
    %v722 = vld [vmem:[%s1 + $0x1470] sm:$0xff]
    %v723 = vld [vmem:[%s1 + $0x1478] sm:$0xff]
    %v724 = vld [vmem:[%s1 + $0x1480] sm:$0xff]
    %v725 = vld [vmem:[%s1 + $0x1488] sm:$0xff]
    %v726 = vld [vmem:[%s1 + $0x1490] sm:$0xff]
    %v727 = vld [vmem:[%s1 + $0x1498] sm:$0xff]
    %v728 = vld [vmem:[%s1 + $0x14a0] sm:$0xff]
    %v729 = vld [vmem:[%s1 + $0x14a8] sm:$0xff]
    %v730 = vld [vmem:[%s1 + $0x14b0] sm:$0xff]
    %v731 = vld [vmem:[%s1 + $0x14b8] sm:$0xff]
    %v732 = vld [vmem:[%s1 + $0x14c0] sm:$0xff]
    %v733 = vld [vmem:[%s1 + $0x14c8] sm:$0xff]
    %v734 = vld [vmem:[%s1 + $0x14d0] sm:$0xff]
    %v735 = vld [vmem:[%s1 + $0x14d8] sm:$0xff]
    %v736 = vld [vmem:[%s1 + $0x14e0] sm:$0xff]
    %v737 = vld [vmem:[%s1 + $0x14e8] sm:$0xff]
    %v738 = vld [vmem:[%s1 + $0x14f0] sm:$0xff]
    %v739 = vld [vmem:[%s1 + $0x14f8] sm:$0xff]
    %v740 = vld [vmem:[%s1 + $0x1500] sm:$0xff]
    %v741 = vld [vmem:[%s1 + $0x1508] sm:$0xff]
    %v742 = vld [vmem:[%s1 + $0x1510] sm:$0xff]
    %v743 = vld [vmem:[%s1 + $0x1518] sm:$0xff]
    %v744 = vld [vmem:[%s1 + $0x1520] sm:$0xff]
    %v745 = vld [vmem:[%s1 + $0x1528] sm:$0xff]
    %v746 = vld [vmem:[%s1 + $0x1530] sm:$0xff]
    %v747 = vld [vmem:[%s1 + $0x1538] sm:$0xff]
    %v748 = vld [vmem:[%s1 + $0x1540] sm:$0xff]
    %v749 = vld [vmem:[%s1 + $0x1548] sm:$0xff]
    %v750 = vld [vmem:[%s1 + $0x1550] sm:$0xff]
    %v751 = vld [vmem:[%s1 + $0x1558] sm:$0xff]
    %v752 = vld [vmem:[%s1 + $0x1560] sm:$0xff]
    %v753 = vld [vmem:[%s1 + $0x1568] sm:$0xff]
    %v754 = vld [vmem:[%s1 + $0x1570] sm:$0xff]
    %v755 = vld [vmem:[%s1 + $0x1578] sm:$0xff]
    %v756 = vld [vmem:[%s1 + $0x1580] sm:$0xff]
    %v757 = vld [vmem:[%s1 + $0x1588] sm:$0xff]
    %v758 = vld [vmem:[%s1 + $0x1590] sm:$0xff]
    %v759 = vld [vmem:[%s1 + $0x1598] sm:$0xff]
    %v760 = vld [vmem:[%s1 + $0x15a0] sm:$0xff]
    %v761 = vld [vmem:[%s1 + $0x15a8] sm:$0xff]
    %v762 = vld [vmem:[%s1 + $0x15b0] sm:$0xff]
    %v763 = vld [vmem:[%s1 + $0x15b8] sm:$0xff]
    %v764 = vld [vmem:[%s1 + $0x15c0] sm:$0xff]
    %v765 = vld [vmem:[%s1 + $0x15c8] sm:$0xff]
    %v766 = vld [vmem:[%s1 + $0x15d0] sm:$0xff]
    %v767 = vld [vmem:[%s1 + $0x15d8] sm:$0xff]
    %v768 = vld [vmem:[%s1 + $0x15e0] sm:$0xff]
    %v769 = vld [vmem:[%s1 + $0x15e8] sm:$0xff]
    %v770 = vld [vmem:[%s1 + $0x15f0] sm:$0xff]
    %v771 = vld [vmem:[%s1 + $0x15f8] sm:$0xff]
    %v772 = vld [vmem:[%s1 + $0x1600] sm:$0xff]
    %v773 = vld [vmem:[%s1 + $0x1608] sm:$0xff]
    %v774 = vld [vmem:[%s1 + $0x1610] sm:$0xff]
    %v775 = vld [vmem:[%s1 + $0x1618] sm:$0xff]
    %v776 = vld [vmem:[%s1 + $0x1620] sm:$0xff]
    %v777 = vld [vmem:[%s1 + $0x1628] sm:$0xff]
    %v778 = vld [vmem:[%s1 + $0x1630] sm:$0xff]
    %v779 = vld [vmem:[%s1 + $0x1638] sm:$0xff]
    %v780 = vld [vmem:[%s1 + $0x1640] sm:$0xff]
    %v781 = vld [vmem:[%s1 + $0x1648] sm:$0xff]
    %v782 = vld [vmem:[%s1 + $0x1650] sm:$0xff]
    %v783 = vld [vmem:[%s1 + $0x1658] sm:$0xff]
    %v784 = vld [vmem:[%s1 + $0x1660] sm:$0xff]
    %v785 = vld [vmem:[%s1 + $0x1668] sm:$0xff]
    %v786 = vld [vmem:[%s1 + $0x1670] sm:$0xff]
    %v787 = vld [vmem:[%s1 + $0x1678] sm:$0xff]
    %v788 = vld [vmem:[%s1 + $0x1680] sm:$0xff]
    %v789 = vld [vmem:[%s1 + $0x1688] sm:$0xff]
    %v790 = vld [vmem:[%s1 + $0x1690] sm:$0xff]
    %v791 = vld [vmem:[%s1 + $0x1698] sm:$0xff]
    %v792 = vld [vmem:[%s1 + $0x16a0] sm:$0xff]
    %v793 = vld [vmem:[%s1 + $0x16a8] sm:$0xff]
    %v794 = vld [vmem:[%s1 + $0x16b0] sm:$0xff]
    %v795 = vld [vmem:[%s1 + $0x16b8] sm:$0xff]
    %v796 = vld [vmem:[%s1 + $0x16c0] sm:$0xff]
    %v797 = vld [vmem:[%s1 + $0x16c8] sm:$0xff]
    %v798 = vld [vmem:[%s1 + $0x16d0] sm:$0xff]
    %v799 = vld [vmem:[%s1 + $0x16d8] sm:$0xff]
    %v800 = vld [vmem:[%s1 + $0x16e0] sm:$0xff]
    %v801 = vld [vmem:[%s1 + $0x16e8] sm:$0xff]
    %v802 = vld [vmem:[%s1 + $0x16f0] sm:$0xff]
    %v803 = vld [vmem:[%s1 + $0x16f8] sm:$0xff]
    %v804 = vld [vmem:[%s1 + $0x1700] sm:$0xff]
    %v805 = vld [vmem:[%s1 + $0x1708] sm:$0xff]
    %v806 = vld [vmem:[%s1 + $0x1710] sm:$0xff]
    %v807 = vld [vmem:[%s1 + $0x1718] sm:$0xff]
    %v808 = vld [vmem:[%s1 + $0x1720] sm:$0xff]
    %v809 = vld [vmem:[%s1 + $0x1728] sm:$0xff]
    %v810 = vld [vmem:[%s1 + $0x1730] sm:$0xff]
    %v811 = vld [vmem:[%s1 + $0x1738] sm:$0xff]
    %v812 = vld [vmem:[%s1 + $0x1740] sm:$0xff]
    %v813 = vld [vmem:[%s1 + $0x1748] sm:$0xff]
    %v814 = vld [vmem:[%s1 + $0x1750] sm:$0xff]
    %v815 = vld [vmem:[%s1 + $0x1758] sm:$0xff]
    %v816 = vld [vmem:[%s1 + $0x1760] sm:$0xff]
    %v817 = vld [vmem:[%s1 + $0x1768] sm:$0xff]
    %v818 = vld [vmem:[%s1 + $0x1770] sm:$0xff]
    %v819 = vld [vmem:[%s1 + $0x1778] sm:$0xff]
    %v820 = vld [vmem:[%s1 + $0x1780] sm:$0xff]
    %v821 = vld [vmem:[%s1 + $0x1788] sm:$0xff]
    %v822 = vld [vmem:[%s1 + $0x1790] sm:$0xff]
    %v823 = vld [vmem:[%s1 + $0x1798] sm:$0xff]
    %v824 = vld [vmem:[%s1 + $0x17a0] sm:$0xff]
    %v825 = vld [vmem:[%s1 + $0x17a8] sm:$0xff]
    %v826 = vld [vmem:[%s1 + $0x17b0] sm:$0xff]
    %v827 = vld [vmem:[%s1 + $0x17b8] sm:$0xff]
    %v828 = vld [vmem:[%s1 + $0x17c0] sm:$0xff]
    %v829 = vld [vmem:[%s1 + $0x17c8] sm:$0xff]
    %v830 = vld [vmem:[%s1 + $0x17d0] sm:$0xff]
    %v831 = vld [vmem:[%s1 + $0x17d8] sm:$0xff]
    %v832 = vld [vmem:[%s1 + $0x17e0] sm:$0xff]
    %v833 = vld [vmem:[%s1 + $0x17e8] sm:$0xff]
    %v834 = vld [vmem:[%s1 + $0x17f0] sm:$0xff]
    %v835 = vld [vmem:[%s1 + $0x17f8] sm:$0xff]
    %v836 = vld [vmem:[%s1 + $0x1800] sm:$0xff]
    %v837 = vld [vmem:[%s1 + $0x1808] sm:$0xff]
    %v838 = vld [vmem:[%s1 + $0x1810] sm:$0xff]
    %v839 = vld [vmem:[%s1 + $0x1818] sm:$0xff]
    %v840 = vld [vmem:[%s1 + $0x1820] sm:$0xff]
    %v841 = vld [vmem:[%s1 + $0x1828] sm:$0xff]
    %v842 = vld [vmem:[%s1 + $0x1830] sm:$0xff]
    %v843 = vld [vmem:[%s1 + $0x1838] sm:$0xff]
    %v844 = vld [vmem:[%s1 + $0x1840] sm:$0xff]
    %v845 = vld [vmem:[%s1 + $0x1848] sm:$0xff]
    %v846 = vld [vmem:[%s1 + $0x1850] sm:$0xff]
    %v847 = vld [vmem:[%s1 + $0x1858] sm:$0xff]
    %v848 = vld [vmem:[%s1 + $0x1860] sm:$0xff]
    %v849 = vld [vmem:[%s1 + $0x1868] sm:$0xff]
    %v850 = vld [vmem:[%s1 + $0x1870] sm:$0xff]
    %v851 = vld [vmem:[%s1 + $0x1878] sm:$0xff]
    %v852 = vld [vmem:[%s1 + $0x1880] sm:$0xff]
    %v853 = vld [vmem:[%s1 + $0x1888] sm:$0xff]
    %v854 = vld [vmem:[%s1 + $0x1890] sm:$0xff]
    %v855 = vld [vmem:[%s1 + $0x1898] sm:$0xff]
    %v856 = vld [vmem:[%s1 + $0x18a0] sm:$0xff]
    %v857 = vld [vmem:[%s1 + $0x18a8] sm:$0xff]
    %v858 = vld [vmem:[%s1 + $0x18b0] sm:$0xff]
    %v859 = vld [vmem:[%s1 + $0x18b8] sm:$0xff]
    %v860 = vld [vmem:[%s1 + $0x18c0] sm:$0xff]
    %v861 = vld [vmem:[%s1 + $0x18c8] sm:$0xff]
    %v862 = vld [vmem:[%s1 + $0x18d0] sm:$0xff]
    %v863 = vld [vmem:[%s1 + $0x18d8] sm:$0xff]
    %v864 = vld [vmem:[%s1 + $0x18e0] sm:$0xff]
    %v865 = vld [vmem:[%s1 + $0x18e8] sm:$0xff]
    %v866 = vld [vmem:[%s1 + $0x18f0] sm:$0xff]
    %v867 = vld [vmem:[%s1 + $0x18f8] sm:$0xff]
    %v868 = vld [vmem:[%s1 + $0x1900] sm:$0xff]
    %v869 = vld [vmem:[%s1 + $0x1908] sm:$0xff]
    %v870 = vld [vmem:[%s1 + $0x1910] sm:$0xff]
    %v871 = vld [vmem:[%s1 + $0x1918] sm:$0xff]
    %v872 = vld [vmem:[%s1 + $0x1920] sm:$0xff]
    %v873 = vld [vmem:[%s1 + $0x1928] sm:$0xff]
    %v874 = vld [vmem:[%s1 + $0x1930] sm:$0xff]
    %v875 = vld [vmem:[%s1 + $0x1938] sm:$0xff]
    %v876 = vld [vmem:[%s1 + $0x1940] sm:$0xff]
    %v877 = vld [vmem:[%s1 + $0x1948] sm:$0xff]
    %v878 = vld [vmem:[%s1 + $0x1950] sm:$0xff]
    %v879 = vld [vmem:[%s1 + $0x1958] sm:$0xff]
    %v880 = vld [vmem:[%s1 + $0x1960] sm:$0xff]
    %v881 = vld [vmem:[%s1 + $0x1968] sm:$0xff]
    %v882 = vld [vmem:[%s1 + $0x1970] sm:$0xff]
    %v883 = vld [vmem:[%s1 + $0x1978] sm:$0xff]
    %v884 = vld [vmem:[%s1 + $0x1980] sm:$0xff]
    %v885 = vld [vmem:[%s1 + $0x1988] sm:$0xff]
    %v886 = vld [vmem:[%s1 + $0x1990] sm:$0xff]
    %v887 = vld [vmem:[%s1 + $0x1998] sm:$0xff]
    %v888 = vld [vmem:[%s1 + $0x19a0] sm:$0xff]
    %v889 = vld [vmem:[%s1 + $0x19a8] sm:$0xff]
    %v890 = vld [vmem:[%s1 + $0x19b0] sm:$0xff]
    %v891 = vld [vmem:[%s1 + $0x19b8] sm:$0xff]
    %v892 = vld [vmem:[%s1 + $0x19c0] sm:$0xff]
    %v893 = vld [vmem:[%s1 + $0x19c8] sm:$0xff]
    %v894 = vld [vmem:[%s1 + $0x19d0] sm:$0xff]
    %v895 = vld [vmem:[%s1 + $0x19d8] sm:$0xff]
    %v896 = vld [vmem:[%s1 + $0x19e0] sm:$0xff]
    %v897 = vld [vmem:[%s1 + $0x19e8] sm:$0xff]
    %v898 = vld [vmem:[%s1 + $0x19f0] sm:$0xff]
    %v899 = vld [vmem:[%s1 + $0x19f8] sm:$0xff]
    %v900 = vld [vmem:[%s1 + $0x1a00] sm:$0xff]
    %v901 = vld [vmem:[%s1 + $0x1a08] sm:$0xff]
    %v902 = vld [vmem:[%s1 + $0x1a10] sm:$0xff]
    %v903 = vld [vmem:[%s1 + $0x1a18] sm:$0xff]
    %v904 = vld [vmem:[%s1 + $0x1a20] sm:$0xff]
    %v905 = vld [vmem:[%s1 + $0x1a28] sm:$0xff]
    %v906 = vld [vmem:[%s1 + $0x1a30] sm:$0xff]
    %v907 = vld [vmem:[%s1 + $0x1a38] sm:$0xff]
    %v908 = vld [vmem:[%s1 + $0x1a40] sm:$0xff]
    %v909 = vld [vmem:[%s1 + $0x1a48] sm:$0xff]
    %v910 = vld [vmem:[%s1 + $0x1a50] sm:$0xff]
    %v911 = vld [vmem:[%s1 + $0x1a58] sm:$0xff]
    %v912 = vld [vmem:[%s1 + $0x1a60] sm:$0xff]
    %v913 = vld [vmem:[%s1 + $0x1a68] sm:$0xff]
    %v914 = vld [vmem:[%s1 + $0x1a70] sm:$0xff]
    %v915 = vld [vmem:[%s1 + $0x1a78] sm:$0xff]
    %v916 = vld [vmem:[%s1 + $0x1a80] sm:$0xff]
    %v917 = vld [vmem:[%s1 + $0x1a88] sm:$0xff]
    %v918 = vld [vmem:[%s1 + $0x1a90] sm:$0xff]
    %v919 = vld [vmem:[%s1 + $0x1a98] sm:$0xff]
    %v920 = vld [vmem:[%s1 + $0x1aa0] sm:$0xff]
    %v921 = vld [vmem:[%s1 + $0x1aa8] sm:$0xff]
    %v922 = vld [vmem:[%s1 + $0x1ab0] sm:$0xff]
    %v923 = vld [vmem:[%s1 + $0x1ab8] sm:$0xff]
    %v924 = vld [vmem:[%s1 + $0x1ac0] sm:$0xff]
    %v925 = vld [vmem:[%s1 + $0x1ac8] sm:$0xff]
    %v926 = vld [vmem:[%s1 + $0x1ad0] sm:$0xff]
    %v927 = vld [vmem:[%s1 + $0x1ad8] sm:$0xff]
    %v928 = vld [vmem:[%s1 + $0x1ae0] sm:$0xff]
    %v929 = vld [vmem:[%s1 + $0x1ae8] sm:$0xff]
    %v930 = vld [vmem:[%s1 + $0x1af0] sm:$0xff]
    %v931 = vld [vmem:[%s1 + $0x1af8] sm:$0xff]
    %v932 = vld [vmem:[%s1 + $0x1b00] sm:$0xff]
    %v933 = vld [vmem:[%s1 + $0x1b08] sm:$0xff]
    %v934 = vld [vmem:[%s1 + $0x1b10] sm:$0xff]
    %v935 = vld [vmem:[%s1 + $0x1b18] sm:$0xff]
    %v936 = vld [vmem:[%s1 + $0x1b20] sm:$0xff]
    %v937 = vld [vmem:[%s1 + $0x1b28] sm:$0xff]
    %v938 = vld [vmem:[%s1 + $0x1b30] sm:$0xff]
    %v939 = vld [vmem:[%s1 + $0x1b38] sm:$0xff]
    %v940 = vld [vmem:[%s1 + $0x1b40] sm:$0xff]
    %v941 = vld [vmem:[%s1 + $0x1b48] sm:$0xff]
    %v942 = vld [vmem:[%s1 + $0x1b50] sm:$0xff]
    %v943 = vld [vmem:[%s1 + $0x1b58] sm:$0xff]
    %v944 = vld [vmem:[%s1 + $0x1b60] sm:$0xff]
    %v945 = vld [vmem:[%s1 + $0x1b68] sm:$0xff]
    %v946 = vld [vmem:[%s1 + $0x1b70] sm:$0xff]
    %v947 = vld [vmem:[%s1 + $0x1b78] sm:$0xff]
    %v948 = vld [vmem:[%s1 + $0x1b80] sm:$0xff]
    %v949 = vld [vmem:[%s1 + $0x1b88] sm:$0xff]
    %v950 = vld [vmem:[%s1 + $0x1b90] sm:$0xff]
    %v951 = vld [vmem:[%s1 + $0x1b98] sm:$0xff]
    %v952 = vld [vmem:[%s1 + $0x1ba0] sm:$0xff]
    %v953 = vld [vmem:[%s1 + $0x1ba8] sm:$0xff]
    %v954 = vld [vmem:[%s1 + $0x1bb0] sm:$0xff]
    %v955 = vld [vmem:[%s1 + $0x1bb8] sm:$0xff]
    %v956 = vld [vmem:[%s1 + $0x1bc0] sm:$0xff]
    %v957 = vld [vmem:[%s1 + $0x1bc8] sm:$0xff]
    %v958 = vld [vmem:[%s1 + $0x1bd0] sm:$0xff]
    %v959 = vld [vmem:[%s1 + $0x1bd8] sm:$0xff]
    %v960 = vld [vmem:[%s1 + $0x1be0] sm:$0xff]
    %v961 = vld [vmem:[%s1 + $0x1be8] sm:$0xff]
    %v962 = vld [vmem:[%s1 + $0x1bf0] sm:$0xff]
    %v963 = vld [vmem:[%s1 + $0x1bf8] sm:$0xff]
    %v964 = vld [vmem:[%s1 + $0x1c00] sm:$0xff]
    %v965 = vld [vmem:[%s1 + $0x1c08] sm:$0xff]
    %v966 = vld [vmem:[%s1 + $0x1c10] sm:$0xff]
    %v967 = vld [vmem:[%s1 + $0x1c18] sm:$0xff]
    %v968 = vld [vmem:[%s1 + $0x1c20] sm:$0xff]
    %v969 = vld [vmem:[%s1 + $0x1c28] sm:$0xff]
    %v970 = vld [vmem:[%s1 + $0x1c30] sm:$0xff]
    %v971 = vld [vmem:[%s1 + $0x1c38] sm:$0xff]
    %v972 = vld [vmem:[%s1 + $0x1c40] sm:$0xff]
    %v973 = vld [vmem:[%s1 + $0x1c48] sm:$0xff]
    %v974 = vld [vmem:[%s1 + $0x1c50] sm:$0xff]
    %v975 = vld [vmem:[%s1 + $0x1c58] sm:$0xff]
    %v976 = vld [vmem:[%s1 + $0x1c60] sm:$0xff]
    %v977 = vld [vmem:[%s1 + $0x1c68] sm:$0xff]
    %v978 = vld [vmem:[%s1 + $0x1c70] sm:$0xff]
    %v979 = vld [vmem:[%s1 + $0x1c78] sm:$0xff]
    %v980 = vld [vmem:[%s1 + $0x1c80] sm:$0xff]
    %v981 = vld [vmem:[%s1 + $0x1c88] sm:$0xff]
    %v982 = vld [vmem:[%s1 + $0x1c90] sm:$0xff]
    %v983 = vld [vmem:[%s1 + $0x1c98] sm:$0xff]
    %v984 = vld [vmem:[%s1 + $0x1ca0] sm:$0xff]
    %v985 = vld [vmem:[%s1 + $0x1ca8] sm:$0xff]
    %v986 = vld [vmem:[%s1 + $0x1cb0] sm:$0xff]
    %v987 = vld [vmem:[%s1 + $0x1cb8] sm:$0xff]
    %v988 = vld [vmem:[%s1 + $0x1cc0] sm:$0xff]
    %v989 = vld [vmem:[%s1 + $0x1cc8] sm:$0xff]
    %v990 = vld [vmem:[%s1 + $0x1cd0] sm:$0xff]
    %v991 = vld [vmem:[%s1 + $0x1cd8] sm:$0xff]
    %v992 = vld [vmem:[%s1 + $0x1ce0] sm:$0xff]
    %v993 = vld [vmem:[%s1 + $0x1ce8] sm:$0xff]
    %v994 = vld [vmem:[%s1 + $0x1cf0] sm:$0xff]
    %v995 = vld [vmem:[%s1 + $0x1cf8] sm:$0xff]
    %v996 = vld [vmem:[%s1 + $0x1d00] sm:$0xff]
    %v997 = vld [vmem:[%s1 + $0x1d08] sm:$0xff]
    %v998 = vld [vmem:[%s1 + $0x1d10] sm:$0xff]
    %v999 = vld [vmem:[%s1 + $0x1d18] sm:$0xff]
    %v1000 = vld [vmem:[%s1 + $0x1d20] sm:$0xff]
    %v1001 = vld [vmem:[%s1 + $0x1d28] sm:$0xff]
    %v1002 = vld [vmem:[%s1 + $0x1d30] sm:$0xff]
    %v1003 = vld [vmem:[%s1 + $0x1d38] sm:$0xff]
    %v1004 = vld [vmem:[%s1 + $0x1d40] sm:$0xff]
    %v1005 = vld [vmem:[%s1 + $0x1d48] sm:$0xff]
    %v1006 = vld [vmem:[%s1 + $0x1d50] sm:$0xff]
    %v1007 = vld [vmem:[%s1 + $0x1d58] sm:$0xff]
    %v1008 = vld [vmem:[%s1 + $0x1d60] sm:$0xff]
    %v1009 = vld [vmem:[%s1 + $0x1d68] sm:$0xff]
    %v1010 = vld [vmem:[%s1 + $0x1d70] sm:$0xff]
    %v1011 = vld [vmem:[%s1 + $0x1d78] sm:$0xff]
    %v1012 = vld [vmem:[%s1 + $0x1d80] sm:$0xff]
    %v1013 = vld [vmem:[%s1 + $0x1d88] sm:$0xff]
    %v1014 = vld [vmem:[%s1 + $0x1d90] sm:$0xff]
    %v1015 = vld [vmem:[%s1 + $0x1d98] sm:$0xff]
    %v1016 = vld [vmem:[%s1 + $0x1da0] sm:$0xff]
    %v1017 = vld [vmem:[%s1 + $0x1da8] sm:$0xff]
    %v1018 = vld [vmem:[%s1 + $0x1db0] sm:$0xff]
    %v1019 = vld [vmem:[%s1 + $0x1db8] sm:$0xff]
    %v1020 = vld [vmem:[%s1 + $0x1dc0] sm:$0xff]
    %v1021 = vld [vmem:[%s1 + $0x1dc8] sm:$0xff]
    %v1022 = vld [vmem:[%s1 + $0x1dd0] sm:$0xff]
    %v1023 = vld [vmem:[%s1 + $0x1dd8] sm:$0xff]
    %v1024 = vld [vmem:[%s1 + $0x1de0] sm:$0xff]
    %v1025 = vld [vmem:[%s1 + $0x1de8] sm:$0xff]
    %v1026 = vld [vmem:[%s1 + $0x1df0] sm:$0xff]
    %v1027 = vld [vmem:[%s1 + $0x1df8] sm:$0xff]
    %v1028 = vld [vmem:[%s1 + $0x1e00] sm:$0xff]
    %v1029 = vld [vmem:[%s1 + $0x1e08] sm:$0xff]
    %v1030 = vld [vmem:[%s1 + $0x1e10] sm:$0xff]
    %v1031 = vld [vmem:[%s1 + $0x1e18] sm:$0xff]
    %v1032 = vld [vmem:[%s1 + $0x1e20] sm:$0xff]
    %v1033 = vld [vmem:[%s1 + $0x1e28] sm:$0xff]
    %v1034 = vld [vmem:[%s1 + $0x1e30] sm:$0xff]
    %v1035 = vld [vmem:[%s1 + $0x1e38] sm:$0xff]
    %v1036 = vld [vmem:[%s1 + $0x1e40] sm:$0xff]
    %v1037 = vld [vmem:[%s1 + $0x1e48] sm:$0xff]
    %v1038 = vld [vmem:[%s1 + $0x1e50] sm:$0xff]
    %v1039 = vld [vmem:[%s1 + $0x1e58] sm:$0xff]
    %v1040 = vld [vmem:[%s1 + $0x1e60] sm:$0xff]
    %v1041 = vld [vmem:[%s1 + $0x1e68] sm:$0xff]
    %v1042 = vld [vmem:[%s1 + $0x1e70] sm:$0xff]
    %v1043 = vld [vmem:[%s1 + $0x1e78] sm:$0xff]
    %v1044 = vld [vmem:[%s1 + $0x1e80] sm:$0xff]
    %v1045 = vld [vmem:[%s1 + $0x1e88] sm:$0xff]
    %v1046 = vld [vmem:[%s1 + $0x1e90] sm:$0xff]
    %v1047 = vld [vmem:[%s1 + $0x1e98] sm:$0xff]
    %v1048 = vld [vmem:[%s1 + $0x1ea0] sm:$0xff]
    %v1049 = vld [vmem:[%s1 + $0x1ea8] sm:$0xff]
    %v1050 = vld [vmem:[%s1 + $0x1eb0] sm:$0xff]
    %v1051 = vld [vmem:[%s1 + $0x1eb8] sm:$0xff]
    %v1052 = vld [vmem:[%s1 + $0x1ec0] sm:$0xff]
    %v1053 = vld [vmem:[%s1 + $0x1ec8] sm:$0xff]
    %v1054 = vld [vmem:[%s1 + $0x1ed0] sm:$0xff]
    %v1055 = vld [vmem:[%s1 + $0x1ed8] sm:$0xff]
    %v1056 = vld [vmem:[%s1 + $0x1ee0] sm:$0xff]
    %v1057 = vld [vmem:[%s1 + $0x1ee8] sm:$0xff]
    %v1058 = vld [vmem:[%s1 + $0x1ef0] sm:$0xff]
    %v1059 = vld [vmem:[%s1 + $0x1ef8] sm:$0xff]
    %v1060 = vld [vmem:[%s1 + $0x1f00] sm:$0xff]
    %v1061 = vld [vmem:[%s1 + $0x1f08] sm:$0xff]
    %v1062 = vld [vmem:[%s1 + $0x1f10] sm:$0xff]
    %v1063 = vld [vmem:[%s1 + $0x1f18] sm:$0xff]
    %v1064 = vld [vmem:[%s1 + $0x1f20] sm:$0xff]
    %v1065 = vld [vmem:[%s1 + $0x1f28] sm:$0xff]
    %v1066 = vld [vmem:[%s1 + $0x1f30] sm:$0xff]
    %v1067 = vld [vmem:[%s1 + $0x1f38] sm:$0xff]
    %v1068 = vld [vmem:[%s1 + $0x1f40] sm:$0xff]
    %v1069 = vld [vmem:[%s1 + $0x1f48] sm:$0xff]
    %v1070 = vld [vmem:[%s1 + $0x1f50] sm:$0xff]
    %v1071 = vld [vmem:[%s1 + $0x1f58] sm:$0xff]
    %v1072 = vld [vmem:[%s1 + $0x1f60] sm:$0xff]
    %v1073 = vld [vmem:[%s1 + $0x1f68] sm:$0xff]
    %v1074 = vld [vmem:[%s1 + $0x1f70] sm:$0xff]
    %v1075 = vld [vmem:[%s1 + $0x1f78] sm:$0xff]
    %v1076 = vld [vmem:[%s1 + $0x1f80] sm:$0xff]
    %v1077 = vld [vmem:[%s1 + $0x1f88] sm:$0xff]
    %v1078 = vld [vmem:[%s1 + $0x1f90] sm:$0xff]
    %v1079 = vld [vmem:[%s1 + $0x1f98] sm:$0xff]
    %v1080 = vld [vmem:[%s1 + $0x1fa0] sm:$0xff]
    %v1081 = vld [vmem:[%s1 + $0x1fa8] sm:$0xff]
    %v1082 = vld [vmem:[%s1 + $0x1fb0] sm:$0xff]
    %v1083 = vld [vmem:[%s1 + $0x1fb8] sm:$0xff]
    %v1084 = vld [vmem:[%s1 + $0x1fc0] sm:$0xff]
    %v1085 = vld [vmem:[%s1 + $0x1fc8] sm:$0xff]
    %v1086 = vld [vmem:[%s1 + $0x1fd0] sm:$0xff]
    %v1087 = vld [vmem:[%s1 + $0x1fd8] sm:$0xff]
    %v1088 = vld [vmem:[%s1 + $0x1fe0] sm:$0xff]
    %v1089 = vld [vmem:[%s1 + $0x1fe8] sm:$0xff]
    %v1090 = vld [vmem:[%s1 + $0x1ff0] sm:$0xff]
    %v1091 = vld [vmem:[%s1 + $0x1ff8] sm:$0xff]
    %v1092 = vld [vmem:[%s2] sm:$0xff]
    %v1094 = vlaneseq
    %v1095 = vshrl.u32 %v1094, 7
    %v1096 = vsub.s32 0, %v1095
    %v1097 = vrot.slane %v1092, %v1096
    %v1098 = vlaneseq
    %v1099 = vshrl.u32 %v1098, 7
    %v1100 = vsub.s32 1, %v1099
    %v1101 = vrot.slane %v1092, %v1100
    %v1102 = vlaneseq
    %v1103 = vshrl.u32 %v1102, 7
    %v1104 = vsub.s32 2, %v1103
    %v1105 = vrot.slane %v1092, %v1104
    %v1106 = vlaneseq
    %v1107 = vshrl.u32 %v1106, 7
    %v1108 = vsub.s32 3, %v1107
    %v1109 = vrot.slane %v1092, %v1108
    %v1110 = vlaneseq
    %v1111 = vshrl.u32 %v1110, 7
    %v1112 = vsub.s32 4, %v1111
    %v1113 = vrot.slane %v1092, %v1112
    %v1114 = vlaneseq
    %v1115 = vshrl.u32 %v1114, 7
    %v1116 = vsub.s32 5, %v1115
    %v1117 = vrot.slane %v1092, %v1116
    %v1118 = vlaneseq
    %v1119 = vshrl.u32 %v1118, 7
    %v1120 = vsub.s32 6, %v1119
    %v1121 = vrot.slane %v1092, %v1120
    %v1122 = vlaneseq
    %v1123 = vshrl.u32 %v1122, 7
    %v1124 = vsub.s32 7, %v1123
    %v1125 = vrot.slane %v1092, %v1124
    %v1142 = vunpack.c.l.b16 %v60
    %v1143 = vunpack.c.h.b16 %v60
    %v1144 = vunpack.c.l.b16 %v61
    %v1145 = vunpack.c.h.b16 %v61
    %v1146 = vunpack.c.l.b16 %v62
    %v1147 = vunpack.c.h.b16 %v62
    %v1148 = vunpack.c.l.b16 %v63
    %v1149 = vunpack.c.h.b16 %v63
    %v1150 = vunpack.c.l.b16 %v64
    %v1151 = vunpack.c.h.b16 %v64
    %v1152 = vunpack.c.l.b16 %v65
    %v1153 = vunpack.c.h.b16 %v65
    %v1154 = vunpack.c.l.b16 %v66
    %v1155 = vunpack.c.h.b16 %v66
    %v1156 = vunpack.c.l.b16 %v67
    %v1157 = vunpack.c.h.b16 %v67
    %v1158 = vpack.c.b16 %v1142, %v1142
    %v1159 = vpack.c.b16 %v1143, %v1143
    %v1160 = vpack.c.b16 %v1144, %v1144
    %v1161 = vpack.c.b16 %v1145, %v1145
    %v1162 = vpack.c.b16 %v1146, %v1146
    %v1163 = vpack.c.b16 %v1147, %v1147
    %v1164 = vpack.c.b16 %v1148, %v1148
    %v1165 = vpack.c.b16 %v1149, %v1149
    %v1166 = vpack.c.b16 %v1150, %v1150
    %v1167 = vpack.c.b16 %v1151, %v1151
    %v1168 = vpack.c.b16 %v1152, %v1152
    %v1169 = vpack.c.b16 %v1153, %v1153
    %v1170 = vpack.c.b16 %v1154, %v1154
    %v1171 = vpack.c.b16 %v1155, %v1155
    %v1172 = vpack.c.b16 %v1156, %v1156
    %v1173 = vpack.c.b16 %v1157, %v1157
    %v2214 = vunpack.c.l.b16 %v68
    %v2215 = vunpack.c.h.b16 %v68
    %v2216 = vunpack.c.l.b16 %v69
    %v2217 = vunpack.c.h.b16 %v69
    %v2218 = vunpack.c.l.b16 %v70
    %v2219 = vunpack.c.h.b16 %v70
    %v2220 = vunpack.c.l.b16 %v71
    %v2221 = vunpack.c.h.b16 %v71
    %v2222 = vunpack.c.l.b16 %v72
    %v2223 = vunpack.c.h.b16 %v72
    %v2224 = vunpack.c.l.b16 %v73
    %v2225 = vunpack.c.h.b16 %v73
    %v2226 = vunpack.c.l.b16 %v74
    %v2227 = vunpack.c.h.b16 %v74
    %v2228 = vunpack.c.l.b16 %v75
    %v2229 = vunpack.c.h.b16 %v75
    %v2230 = vunpack.c.l.b16 %v76
    %v2231 = vunpack.c.h.b16 %v76
    %v2232 = vunpack.c.l.b16 %v77
    %v2233 = vunpack.c.h.b16 %v77
    %v2234 = vunpack.c.l.b16 %v78
    %v2235 = vunpack.c.h.b16 %v78
    %v2236 = vunpack.c.l.b16 %v79
    %v2237 = vunpack.c.h.b16 %v79
    %v2238 = vunpack.c.l.b16 %v80
    %v2239 = vunpack.c.h.b16 %v80
    %v2240 = vunpack.c.l.b16 %v81
    %v2241 = vunpack.c.h.b16 %v81
    %v2242 = vunpack.c.l.b16 %v82
    %v2243 = vunpack.c.h.b16 %v82
    %v2244 = vunpack.c.l.b16 %v83
    %v2245 = vunpack.c.h.b16 %v83
    %v2246 = vunpack.c.l.b16 %v84
    %v2247 = vunpack.c.h.b16 %v84
    %v2248 = vunpack.c.l.b16 %v85
    %v2249 = vunpack.c.h.b16 %v85
    %v2250 = vunpack.c.l.b16 %v86
    %v2251 = vunpack.c.h.b16 %v86
    %v2252 = vunpack.c.l.b16 %v87
    %v2253 = vunpack.c.h.b16 %v87
    %v2254 = vunpack.c.l.b16 %v88
    %v2255 = vunpack.c.h.b16 %v88
    %v2256 = vunpack.c.l.b16 %v89
    %v2257 = vunpack.c.h.b16 %v89
    %v2258 = vunpack.c.l.b16 %v90
    %v2259 = vunpack.c.h.b16 %v90
    %v2260 = vunpack.c.l.b16 %v91
    %v2261 = vunpack.c.h.b16 %v91
    %v2262 = vunpack.c.l.b16 %v92
    %v2263 = vunpack.c.h.b16 %v92
    %v2264 = vunpack.c.l.b16 %v93
    %v2265 = vunpack.c.h.b16 %v93
    %v2266 = vunpack.c.l.b16 %v94
    %v2267 = vunpack.c.h.b16 %v94
    %v2268 = vunpack.c.l.b16 %v95
    %v2269 = vunpack.c.h.b16 %v95
    %v2270 = vunpack.c.l.b16 %v96
    %v2271 = vunpack.c.h.b16 %v96
    %v2272 = vunpack.c.l.b16 %v97
    %v2273 = vunpack.c.h.b16 %v97
    %v2274 = vunpack.c.l.b16 %v98
    %v2275 = vunpack.c.h.b16 %v98
    %v2276 = vunpack.c.l.b16 %v99
    %v2277 = vunpack.c.h.b16 %v99
    %v2278 = vunpack.c.l.b16 %v100
    %v2279 = vunpack.c.h.b16 %v100
    %v2280 = vunpack.c.l.b16 %v101
    %v2281 = vunpack.c.h.b16 %v101
    %v2282 = vunpack.c.l.b16 %v102
    %v2283 = vunpack.c.h.b16 %v102
    %v2284 = vunpack.c.l.b16 %v103
    %v2285 = vunpack.c.h.b16 %v103
    %v2286 = vunpack.c.l.b16 %v104
    %v2287 = vunpack.c.h.b16 %v104
    %v2288 = vunpack.c.l.b16 %v105
    %v2289 = vunpack.c.h.b16 %v105
    %v2290 = vunpack.c.l.b16 %v106
    %v2291 = vunpack.c.h.b16 %v106
    %v2292 = vunpack.c.l.b16 %v107
    %v2293 = vunpack.c.h.b16 %v107
    %v2294 = vunpack.c.l.b16 %v108
    %v2295 = vunpack.c.h.b16 %v108
    %v2296 = vunpack.c.l.b16 %v109
    %v2297 = vunpack.c.h.b16 %v109
    %v2298 = vunpack.c.l.b16 %v110
    %v2299 = vunpack.c.h.b16 %v110
    %v2300 = vunpack.c.l.b16 %v111
    %v2301 = vunpack.c.h.b16 %v111
    %v2302 = vunpack.c.l.b16 %v112
    %v2303 = vunpack.c.h.b16 %v112
    %v2304 = vunpack.c.l.b16 %v113
    %v2305 = vunpack.c.h.b16 %v113
    %v2306 = vunpack.c.l.b16 %v114
    %v2307 = vunpack.c.h.b16 %v114
    %v2308 = vunpack.c.l.b16 %v115
    %v2309 = vunpack.c.h.b16 %v115
    %v2310 = vunpack.c.l.b16 %v116
    %v2311 = vunpack.c.h.b16 %v116
    %v2312 = vunpack.c.l.b16 %v117
    %v2313 = vunpack.c.h.b16 %v117
    %v2314 = vunpack.c.l.b16 %v118
    %v2315 = vunpack.c.h.b16 %v118
    %v2316 = vunpack.c.l.b16 %v119
    %v2317 = vunpack.c.h.b16 %v119
    %v2318 = vunpack.c.l.b16 %v120
    %v2319 = vunpack.c.h.b16 %v120
    %v2320 = vunpack.c.l.b16 %v121
    %v2321 = vunpack.c.h.b16 %v121
    %v2322 = vunpack.c.l.b16 %v122
    %v2323 = vunpack.c.h.b16 %v122
    %v2324 = vunpack.c.l.b16 %v123
    %v2325 = vunpack.c.h.b16 %v123
    %v2326 = vunpack.c.l.b16 %v124
    %v2327 = vunpack.c.h.b16 %v124
    %v2328 = vunpack.c.l.b16 %v125
    %v2329 = vunpack.c.h.b16 %v125
    %v2330 = vunpack.c.l.b16 %v126
    %v2331 = vunpack.c.h.b16 %v126
    %v2332 = vunpack.c.l.b16 %v127
    %v2333 = vunpack.c.h.b16 %v127
    %v2334 = vunpack.c.l.b16 %v128
    %v2335 = vunpack.c.h.b16 %v128
    %v2336 = vunpack.c.l.b16 %v129
    %v2337 = vunpack.c.h.b16 %v129
    %v2338 = vunpack.c.l.b16 %v130
    %v2339 = vunpack.c.h.b16 %v130
    %v2340 = vunpack.c.l.b16 %v131
    %v2341 = vunpack.c.h.b16 %v131
    %v2342 = vunpack.c.l.b16 %v132
    %v2343 = vunpack.c.h.b16 %v132
    %v2344 = vunpack.c.l.b16 %v133
    %v2345 = vunpack.c.h.b16 %v133
    %v2346 = vunpack.c.l.b16 %v134
    %v2347 = vunpack.c.h.b16 %v134
    %v2348 = vunpack.c.l.b16 %v135
    %v2349 = vunpack.c.h.b16 %v135
    %v2350 = vunpack.c.l.b16 %v136
    %v2351 = vunpack.c.h.b16 %v136
    %v2352 = vunpack.c.l.b16 %v137
    %v2353 = vunpack.c.h.b16 %v137
    %v2354 = vunpack.c.l.b16 %v138
    %v2355 = vunpack.c.h.b16 %v138
    %v2356 = vunpack.c.l.b16 %v139
    %v2357 = vunpack.c.h.b16 %v139
    %v2358 = vunpack.c.l.b16 %v140
    %v2359 = vunpack.c.h.b16 %v140
    %v2360 = vunpack.c.l.b16 %v141
    %v2361 = vunpack.c.h.b16 %v141
    %v2362 = vunpack.c.l.b16 %v142
    %v2363 = vunpack.c.h.b16 %v142
    %v2364 = vunpack.c.l.b16 %v143
    %v2365 = vunpack.c.h.b16 %v143
    %v2366 = vunpack.c.l.b16 %v144
    %v2367 = vunpack.c.h.b16 %v144
    %v2368 = vunpack.c.l.b16 %v145
    %v2369 = vunpack.c.h.b16 %v145
    %v2370 = vunpack.c.l.b16 %v146
    %v2371 = vunpack.c.h.b16 %v146
    %v2372 = vunpack.c.l.b16 %v147
    %v2373 = vunpack.c.h.b16 %v147
    %v2374 = vunpack.c.l.b16 %v148
    %v2375 = vunpack.c.h.b16 %v148
    %v2376 = vunpack.c.l.b16 %v149
    %v2377 = vunpack.c.h.b16 %v149
    %v2378 = vunpack.c.l.b16 %v150
    %v2379 = vunpack.c.h.b16 %v150
    %v2380 = vunpack.c.l.b16 %v151
    %v2381 = vunpack.c.h.b16 %v151
    %v2382 = vunpack.c.l.b16 %v152
    %v2383 = vunpack.c.h.b16 %v152
    %v2384 = vunpack.c.l.b16 %v153
    %v2385 = vunpack.c.h.b16 %v153
    %v2386 = vunpack.c.l.b16 %v154
    %v2387 = vunpack.c.h.b16 %v154
    %v2388 = vunpack.c.l.b16 %v155
    %v2389 = vunpack.c.h.b16 %v155
    %v2390 = vunpack.c.l.b16 %v156
    %v2391 = vunpack.c.h.b16 %v156
    %v2392 = vunpack.c.l.b16 %v157
    %v2393 = vunpack.c.h.b16 %v157
    %v2394 = vunpack.c.l.b16 %v158
    %v2395 = vunpack.c.h.b16 %v158
    %v2396 = vunpack.c.l.b16 %v159
    %v2397 = vunpack.c.h.b16 %v159
    %v2398 = vunpack.c.l.b16 %v160
    %v2399 = vunpack.c.h.b16 %v160
    %v2400 = vunpack.c.l.b16 %v161
    %v2401 = vunpack.c.h.b16 %v161
    %v2402 = vunpack.c.l.b16 %v162
    %v2403 = vunpack.c.h.b16 %v162
    %v2404 = vunpack.c.l.b16 %v163
    %v2405 = vunpack.c.h.b16 %v163
    %v2406 = vunpack.c.l.b16 %v164
    %v2407 = vunpack.c.h.b16 %v164
    %v2408 = vunpack.c.l.b16 %v165
    %v2409 = vunpack.c.h.b16 %v165
    %v2410 = vunpack.c.l.b16 %v166
    %v2411 = vunpack.c.h.b16 %v166
    %v2412 = vunpack.c.l.b16 %v167
    %v2413 = vunpack.c.h.b16 %v167
    %v2414 = vunpack.c.l.b16 %v168
    %v2415 = vunpack.c.h.b16 %v168
    %v2416 = vunpack.c.l.b16 %v169
    %v2417 = vunpack.c.h.b16 %v169
    %v2418 = vunpack.c.l.b16 %v170
    %v2419 = vunpack.c.h.b16 %v170
    %v2420 = vunpack.c.l.b16 %v171
    %v2421 = vunpack.c.h.b16 %v171
    %v2422 = vunpack.c.l.b16 %v172
    %v2423 = vunpack.c.h.b16 %v172
    %v2424 = vunpack.c.l.b16 %v173
    %v2425 = vunpack.c.h.b16 %v173
    %v2426 = vunpack.c.l.b16 %v174
    %v2427 = vunpack.c.h.b16 %v174
    %v2428 = vunpack.c.l.b16 %v175
    %v2429 = vunpack.c.h.b16 %v175
    %v2430 = vunpack.c.l.b16 %v176
    %v2431 = vunpack.c.h.b16 %v176
    %v2432 = vunpack.c.l.b16 %v177
    %v2433 = vunpack.c.h.b16 %v177
    %v2434 = vunpack.c.l.b16 %v178
    %v2435 = vunpack.c.h.b16 %v178
    %v2436 = vunpack.c.l.b16 %v179
    %v2437 = vunpack.c.h.b16 %v179
    %v2438 = vunpack.c.l.b16 %v180
    %v2439 = vunpack.c.h.b16 %v180
    %v2440 = vunpack.c.l.b16 %v181
    %v2441 = vunpack.c.h.b16 %v181
    %v2442 = vunpack.c.l.b16 %v182
    %v2443 = vunpack.c.h.b16 %v182
    %v2444 = vunpack.c.l.b16 %v183
    %v2445 = vunpack.c.h.b16 %v183
    %v2446 = vunpack.c.l.b16 %v184
    %v2447 = vunpack.c.h.b16 %v184
    %v2448 = vunpack.c.l.b16 %v185
    %v2449 = vunpack.c.h.b16 %v185
    %v2450 = vunpack.c.l.b16 %v186
    %v2451 = vunpack.c.h.b16 %v186
    %v2452 = vunpack.c.l.b16 %v187
    %v2453 = vunpack.c.h.b16 %v187
    %v2454 = vunpack.c.l.b16 %v188
    %v2455 = vunpack.c.h.b16 %v188
    %v2456 = vunpack.c.l.b16 %v189
    %v2457 = vunpack.c.h.b16 %v189
    %v2458 = vunpack.c.l.b16 %v190
    %v2459 = vunpack.c.h.b16 %v190
    %v2460 = vunpack.c.l.b16 %v191
    %v2461 = vunpack.c.h.b16 %v191
    %v2462 = vunpack.c.l.b16 %v192
    %v2463 = vunpack.c.h.b16 %v192
    %v2464 = vunpack.c.l.b16 %v193
    %v2465 = vunpack.c.h.b16 %v193
    %v2466 = vunpack.c.l.b16 %v194
    %v2467 = vunpack.c.h.b16 %v194
    %v2468 = vunpack.c.l.b16 %v195
    %v2469 = vunpack.c.h.b16 %v195
    %v2470 = vunpack.c.l.b16 %v196
    %v2471 = vunpack.c.h.b16 %v196
    %v2472 = vunpack.c.l.b16 %v197
    %v2473 = vunpack.c.h.b16 %v197
    %v2474 = vunpack.c.l.b16 %v198
    %v2475 = vunpack.c.h.b16 %v198
    %v2476 = vunpack.c.l.b16 %v199
    %v2477 = vunpack.c.h.b16 %v199
    %v2478 = vunpack.c.l.b16 %v200
    %v2479 = vunpack.c.h.b16 %v200
    %v2480 = vunpack.c.l.b16 %v201
    %v2481 = vunpack.c.h.b16 %v201
    %v2482 = vunpack.c.l.b16 %v202
    %v2483 = vunpack.c.h.b16 %v202
    %v2484 = vunpack.c.l.b16 %v203
    %v2485 = vunpack.c.h.b16 %v203
    %v2486 = vunpack.c.l.b16 %v204
    %v2487 = vunpack.c.h.b16 %v204
    %v2488 = vunpack.c.l.b16 %v205
    %v2489 = vunpack.c.h.b16 %v205
    %v2490 = vunpack.c.l.b16 %v206
    %v2491 = vunpack.c.h.b16 %v206
    %v2492 = vunpack.c.l.b16 %v207
    %v2493 = vunpack.c.h.b16 %v207
    %v2494 = vunpack.c.l.b16 %v208
    %v2495 = vunpack.c.h.b16 %v208
    %v2496 = vunpack.c.l.b16 %v209
    %v2497 = vunpack.c.h.b16 %v209
    %v2498 = vunpack.c.l.b16 %v210
    %v2499 = vunpack.c.h.b16 %v210
    %v2500 = vunpack.c.l.b16 %v211
    %v2501 = vunpack.c.h.b16 %v211
    %v2502 = vunpack.c.l.b16 %v212
    %v2503 = vunpack.c.h.b16 %v212
    %v2504 = vunpack.c.l.b16 %v213
    %v2505 = vunpack.c.h.b16 %v213
    %v2506 = vunpack.c.l.b16 %v214
    %v2507 = vunpack.c.h.b16 %v214
    %v2508 = vunpack.c.l.b16 %v215
    %v2509 = vunpack.c.h.b16 %v215
    %v2510 = vunpack.c.l.b16 %v216
    %v2511 = vunpack.c.h.b16 %v216
    %v2512 = vunpack.c.l.b16 %v217
    %v2513 = vunpack.c.h.b16 %v217
    %v2514 = vunpack.c.l.b16 %v218
    %v2515 = vunpack.c.h.b16 %v218
    %v2516 = vunpack.c.l.b16 %v219
    %v2517 = vunpack.c.h.b16 %v219
    %v2518 = vunpack.c.l.b16 %v220
    %v2519 = vunpack.c.h.b16 %v220
    %v2520 = vunpack.c.l.b16 %v221
    %v2521 = vunpack.c.h.b16 %v221
    %v2522 = vunpack.c.l.b16 %v222
    %v2523 = vunpack.c.h.b16 %v222
    %v2524 = vunpack.c.l.b16 %v223
    %v2525 = vunpack.c.h.b16 %v223
    %v2526 = vunpack.c.l.b16 %v224
    %v2527 = vunpack.c.h.b16 %v224
    %v2528 = vunpack.c.l.b16 %v225
    %v2529 = vunpack.c.h.b16 %v225
    %v2530 = vunpack.c.l.b16 %v226
    %v2531 = vunpack.c.h.b16 %v226
    %v2532 = vunpack.c.l.b16 %v227
    %v2533 = vunpack.c.h.b16 %v227
    %v2534 = vunpack.c.l.b16 %v228
    %v2535 = vunpack.c.h.b16 %v228
    %v2536 = vunpack.c.l.b16 %v229
    %v2537 = vunpack.c.h.b16 %v229
    %v2538 = vunpack.c.l.b16 %v230
    %v2539 = vunpack.c.h.b16 %v230
    %v2540 = vunpack.c.l.b16 %v231
    %v2541 = vunpack.c.h.b16 %v231
    %v2542 = vunpack.c.l.b16 %v232
    %v2543 = vunpack.c.h.b16 %v232
    %v2544 = vunpack.c.l.b16 %v233
    %v2545 = vunpack.c.h.b16 %v233
    %v2546 = vunpack.c.l.b16 %v234
    %v2547 = vunpack.c.h.b16 %v234
    %v2548 = vunpack.c.l.b16 %v235
    %v2549 = vunpack.c.h.b16 %v235
    %v2550 = vunpack.c.l.b16 %v236
    %v2551 = vunpack.c.h.b16 %v236
    %v2552 = vunpack.c.l.b16 %v237
    %v2553 = vunpack.c.h.b16 %v237
    %v2554 = vunpack.c.l.b16 %v238
    %v2555 = vunpack.c.h.b16 %v238
    %v2556 = vunpack.c.l.b16 %v239
    %v2557 = vunpack.c.h.b16 %v239
    %v2558 = vunpack.c.l.b16 %v240
    %v2559 = vunpack.c.h.b16 %v240
    %v2560 = vunpack.c.l.b16 %v241
    %v2561 = vunpack.c.h.b16 %v241
    %v2562 = vunpack.c.l.b16 %v242
    %v2563 = vunpack.c.h.b16 %v242
    %v2564 = vunpack.c.l.b16 %v243
    %v2565 = vunpack.c.h.b16 %v243
    %v2566 = vunpack.c.l.b16 %v244
    %v2567 = vunpack.c.h.b16 %v244
    %v2568 = vunpack.c.l.b16 %v245
    %v2569 = vunpack.c.h.b16 %v245
    %v2570 = vunpack.c.l.b16 %v246
    %v2571 = vunpack.c.h.b16 %v246
    %v2572 = vunpack.c.l.b16 %v247
    %v2573 = vunpack.c.h.b16 %v247
    %v2574 = vunpack.c.l.b16 %v248
    %v2575 = vunpack.c.h.b16 %v248
    %v2576 = vunpack.c.l.b16 %v249
    %v2577 = vunpack.c.h.b16 %v249
    %v2578 = vunpack.c.l.b16 %v250
    %v2579 = vunpack.c.h.b16 %v250
    %v2580 = vunpack.c.l.b16 %v251
    %v2581 = vunpack.c.h.b16 %v251
    %v2582 = vunpack.c.l.b16 %v252
    %v2583 = vunpack.c.h.b16 %v252
    %v2584 = vunpack.c.l.b16 %v253
    %v2585 = vunpack.c.h.b16 %v253
    %v2586 = vunpack.c.l.b16 %v254
    %v2587 = vunpack.c.h.b16 %v254
    %v2588 = vunpack.c.l.b16 %v255
    %v2589 = vunpack.c.h.b16 %v255
    %v2590 = vunpack.c.l.b16 %v256
    %v2591 = vunpack.c.h.b16 %v256
    %v2592 = vunpack.c.l.b16 %v257
    %v2593 = vunpack.c.h.b16 %v257
    %v2594 = vunpack.c.l.b16 %v258
    %v2595 = vunpack.c.h.b16 %v258
    %v2596 = vunpack.c.l.b16 %v259
    %v2597 = vunpack.c.h.b16 %v259
    %v2598 = vunpack.c.l.b16 %v260
    %v2599 = vunpack.c.h.b16 %v260
    %v2600 = vunpack.c.l.b16 %v261
    %v2601 = vunpack.c.h.b16 %v261
    %v2602 = vunpack.c.l.b16 %v262
    %v2603 = vunpack.c.h.b16 %v262
    %v2604 = vunpack.c.l.b16 %v263
    %v2605 = vunpack.c.h.b16 %v263
    %v2606 = vunpack.c.l.b16 %v264
    %v2607 = vunpack.c.h.b16 %v264
    %v2608 = vunpack.c.l.b16 %v265
    %v2609 = vunpack.c.h.b16 %v265
    %v2610 = vunpack.c.l.b16 %v266
    %v2611 = vunpack.c.h.b16 %v266
    %v2612 = vunpack.c.l.b16 %v267
    %v2613 = vunpack.c.h.b16 %v267
    %v2614 = vunpack.c.l.b16 %v268
    %v2615 = vunpack.c.h.b16 %v268
    %v2616 = vunpack.c.l.b16 %v269
    %v2617 = vunpack.c.h.b16 %v269
    %v2618 = vunpack.c.l.b16 %v270
    %v2619 = vunpack.c.h.b16 %v270
    %v2620 = vunpack.c.l.b16 %v271
    %v2621 = vunpack.c.h.b16 %v271
    %v2622 = vunpack.c.l.b16 %v272
    %v2623 = vunpack.c.h.b16 %v272
    %v2624 = vunpack.c.l.b16 %v273
    %v2625 = vunpack.c.h.b16 %v273
    %v2626 = vunpack.c.l.b16 %v274
    %v2627 = vunpack.c.h.b16 %v274
    %v2628 = vunpack.c.l.b16 %v275
    %v2629 = vunpack.c.h.b16 %v275
    %v2630 = vunpack.c.l.b16 %v276
    %v2631 = vunpack.c.h.b16 %v276
    %v2632 = vunpack.c.l.b16 %v277
    %v2633 = vunpack.c.h.b16 %v277
    %v2634 = vunpack.c.l.b16 %v278
    %v2635 = vunpack.c.h.b16 %v278
    %v2636 = vunpack.c.l.b16 %v279
    %v2637 = vunpack.c.h.b16 %v279
    %v2638 = vunpack.c.l.b16 %v280
    %v2639 = vunpack.c.h.b16 %v280
    %v2640 = vunpack.c.l.b16 %v281
    %v2641 = vunpack.c.h.b16 %v281
    %v2642 = vunpack.c.l.b16 %v282
    %v2643 = vunpack.c.h.b16 %v282
    %v2644 = vunpack.c.l.b16 %v283
    %v2645 = vunpack.c.h.b16 %v283
    %v2646 = vunpack.c.l.b16 %v284
    %v2647 = vunpack.c.h.b16 %v284
    %v2648 = vunpack.c.l.b16 %v285
    %v2649 = vunpack.c.h.b16 %v285
    %v2650 = vunpack.c.l.b16 %v286
    %v2651 = vunpack.c.h.b16 %v286
    %v2652 = vunpack.c.l.b16 %v287
    %v2653 = vunpack.c.h.b16 %v287
    %v2654 = vunpack.c.l.b16 %v288
    %v2655 = vunpack.c.h.b16 %v288
    %v2656 = vunpack.c.l.b16 %v289
    %v2657 = vunpack.c.h.b16 %v289
    %v2658 = vunpack.c.l.b16 %v290
    %v2659 = vunpack.c.h.b16 %v290
    %v2660 = vunpack.c.l.b16 %v291
    %v2661 = vunpack.c.h.b16 %v291
    %v2662 = vunpack.c.l.b16 %v292
    %v2663 = vunpack.c.h.b16 %v292
    %v2664 = vunpack.c.l.b16 %v293
    %v2665 = vunpack.c.h.b16 %v293
    %v2666 = vunpack.c.l.b16 %v294
    %v2667 = vunpack.c.h.b16 %v294
    %v2668 = vunpack.c.l.b16 %v295
    %v2669 = vunpack.c.h.b16 %v295
    %v2670 = vunpack.c.l.b16 %v296
    %v2671 = vunpack.c.h.b16 %v296
    %v2672 = vunpack.c.l.b16 %v297
    %v2673 = vunpack.c.h.b16 %v297
    %v2674 = vunpack.c.l.b16 %v298
    %v2675 = vunpack.c.h.b16 %v298
    %v2676 = vunpack.c.l.b16 %v299
    %v2677 = vunpack.c.h.b16 %v299
    %v2678 = vunpack.c.l.b16 %v300
    %v2679 = vunpack.c.h.b16 %v300
    %v2680 = vunpack.c.l.b16 %v301
    %v2681 = vunpack.c.h.b16 %v301
    %v2682 = vunpack.c.l.b16 %v302
    %v2683 = vunpack.c.h.b16 %v302
    %v2684 = vunpack.c.l.b16 %v303
    %v2685 = vunpack.c.h.b16 %v303
    %v2686 = vunpack.c.l.b16 %v304
    %v2687 = vunpack.c.h.b16 %v304
    %v2688 = vunpack.c.l.b16 %v305
    %v2689 = vunpack.c.h.b16 %v305
    %v2690 = vunpack.c.l.b16 %v306
    %v2691 = vunpack.c.h.b16 %v306
    %v2692 = vunpack.c.l.b16 %v307
    %v2693 = vunpack.c.h.b16 %v307
    %v2694 = vunpack.c.l.b16 %v308
    %v2695 = vunpack.c.h.b16 %v308
    %v2696 = vunpack.c.l.b16 %v309
    %v2697 = vunpack.c.h.b16 %v309
    %v2698 = vunpack.c.l.b16 %v310
    %v2699 = vunpack.c.h.b16 %v310
    %v2700 = vunpack.c.l.b16 %v311
    %v2701 = vunpack.c.h.b16 %v311
    %v2702 = vunpack.c.l.b16 %v312
    %v2703 = vunpack.c.h.b16 %v312
    %v2704 = vunpack.c.l.b16 %v313
    %v2705 = vunpack.c.h.b16 %v313
    %v2706 = vunpack.c.l.b16 %v314
    %v2707 = vunpack.c.h.b16 %v314
    %v2708 = vunpack.c.l.b16 %v315
    %v2709 = vunpack.c.h.b16 %v315
    %v2710 = vunpack.c.l.b16 %v316
    %v2711 = vunpack.c.h.b16 %v316
    %v2712 = vunpack.c.l.b16 %v317
    %v2713 = vunpack.c.h.b16 %v317
    %v2714 = vunpack.c.l.b16 %v318
    %v2715 = vunpack.c.h.b16 %v318
    %v2716 = vunpack.c.l.b16 %v319
    %v2717 = vunpack.c.h.b16 %v319
    %v2718 = vunpack.c.l.b16 %v320
    %v2719 = vunpack.c.h.b16 %v320
    %v2720 = vunpack.c.l.b16 %v321
    %v2721 = vunpack.c.h.b16 %v321
    %v2722 = vunpack.c.l.b16 %v322
    %v2723 = vunpack.c.h.b16 %v322
    %v2724 = vunpack.c.l.b16 %v323
    %v2725 = vunpack.c.h.b16 %v323
    %v2726 = vunpack.c.l.b16 %v324
    %v2727 = vunpack.c.h.b16 %v324
    %v2728 = vunpack.c.l.b16 %v325
    %v2729 = vunpack.c.h.b16 %v325
    %v2730 = vunpack.c.l.b16 %v326
    %v2731 = vunpack.c.h.b16 %v326
    %v2732 = vunpack.c.l.b16 %v327
    %v2733 = vunpack.c.h.b16 %v327
    %v2734 = vunpack.c.l.b16 %v328
    %v2735 = vunpack.c.h.b16 %v328
    %v2736 = vunpack.c.l.b16 %v329
    %v2737 = vunpack.c.h.b16 %v329
    %v2738 = vunpack.c.l.b16 %v330
    %v2739 = vunpack.c.h.b16 %v330
    %v2740 = vunpack.c.l.b16 %v331
    %v2741 = vunpack.c.h.b16 %v331
    %v2742 = vunpack.c.l.b16 %v332
    %v2743 = vunpack.c.h.b16 %v332
    %v2744 = vunpack.c.l.b16 %v333
    %v2745 = vunpack.c.h.b16 %v333
    %v2746 = vunpack.c.l.b16 %v334
    %v2747 = vunpack.c.h.b16 %v334
    %v2748 = vunpack.c.l.b16 %v335
    %v2749 = vunpack.c.h.b16 %v335
    %v2750 = vunpack.c.l.b16 %v336
    %v2751 = vunpack.c.h.b16 %v336
    %v2752 = vunpack.c.l.b16 %v337
    %v2753 = vunpack.c.h.b16 %v337
    %v2754 = vunpack.c.l.b16 %v338
    %v2755 = vunpack.c.h.b16 %v338
    %v2756 = vunpack.c.l.b16 %v339
    %v2757 = vunpack.c.h.b16 %v339
    %v2758 = vunpack.c.l.b16 %v340
    %v2759 = vunpack.c.h.b16 %v340
    %v2760 = vunpack.c.l.b16 %v341
    %v2761 = vunpack.c.h.b16 %v341
    %v2762 = vunpack.c.l.b16 %v342
    %v2763 = vunpack.c.h.b16 %v342
    %v2764 = vunpack.c.l.b16 %v343
    %v2765 = vunpack.c.h.b16 %v343
    %v2766 = vunpack.c.l.b16 %v344
    %v2767 = vunpack.c.h.b16 %v344
    %v2768 = vunpack.c.l.b16 %v345
    %v2769 = vunpack.c.h.b16 %v345
    %v2770 = vunpack.c.l.b16 %v346
    %v2771 = vunpack.c.h.b16 %v346
    %v2772 = vunpack.c.l.b16 %v347
    %v2773 = vunpack.c.h.b16 %v347
    %v2774 = vunpack.c.l.b16 %v348
    %v2775 = vunpack.c.h.b16 %v348
    %v2776 = vunpack.c.l.b16 %v349
    %v2777 = vunpack.c.h.b16 %v349
    %v2778 = vunpack.c.l.b16 %v350
    %v2779 = vunpack.c.h.b16 %v350
    %v2780 = vunpack.c.l.b16 %v351
    %v2781 = vunpack.c.h.b16 %v351
    %v2782 = vunpack.c.l.b16 %v352
    %v2783 = vunpack.c.h.b16 %v352
    %v2784 = vunpack.c.l.b16 %v353
    %v2785 = vunpack.c.h.b16 %v353
    %v2786 = vunpack.c.l.b16 %v354
    %v2787 = vunpack.c.h.b16 %v354
    %v2788 = vunpack.c.l.b16 %v355
    %v2789 = vunpack.c.h.b16 %v355
    %v2790 = vunpack.c.l.b16 %v356
    %v2791 = vunpack.c.h.b16 %v356
    %v2792 = vunpack.c.l.b16 %v357
    %v2793 = vunpack.c.h.b16 %v357
    %v2794 = vunpack.c.l.b16 %v358
    %v2795 = vunpack.c.h.b16 %v358
    %v2796 = vunpack.c.l.b16 %v359
    %v2797 = vunpack.c.h.b16 %v359
    %v2798 = vunpack.c.l.b16 %v360
    %v2799 = vunpack.c.h.b16 %v360
    %v2800 = vunpack.c.l.b16 %v361
    %v2801 = vunpack.c.h.b16 %v361
    %v2802 = vunpack.c.l.b16 %v362
    %v2803 = vunpack.c.h.b16 %v362
    %v2804 = vunpack.c.l.b16 %v363
    %v2805 = vunpack.c.h.b16 %v363
    %v2806 = vunpack.c.l.b16 %v364
    %v2807 = vunpack.c.h.b16 %v364
    %v2808 = vunpack.c.l.b16 %v365
    %v2809 = vunpack.c.h.b16 %v365
    %v2810 = vunpack.c.l.b16 %v366
    %v2811 = vunpack.c.h.b16 %v366
    %v2812 = vunpack.c.l.b16 %v367
    %v2813 = vunpack.c.h.b16 %v367
    %v2814 = vunpack.c.l.b16 %v368
    %v2815 = vunpack.c.h.b16 %v368
    %v2816 = vunpack.c.l.b16 %v369
    %v2817 = vunpack.c.h.b16 %v369
    %v2818 = vunpack.c.l.b16 %v370
    %v2819 = vunpack.c.h.b16 %v370
    %v2820 = vunpack.c.l.b16 %v371
    %v2821 = vunpack.c.h.b16 %v371
    %v2822 = vunpack.c.l.b16 %v372
    %v2823 = vunpack.c.h.b16 %v372
    %v2824 = vunpack.c.l.b16 %v373
    %v2825 = vunpack.c.h.b16 %v373
    %v2826 = vunpack.c.l.b16 %v374
    %v2827 = vunpack.c.h.b16 %v374
    %v2828 = vunpack.c.l.b16 %v375
    %v2829 = vunpack.c.h.b16 %v375
    %v2830 = vunpack.c.l.b16 %v376
    %v2831 = vunpack.c.h.b16 %v376
    %v2832 = vunpack.c.l.b16 %v377
    %v2833 = vunpack.c.h.b16 %v377
    %v2834 = vunpack.c.l.b16 %v378
    %v2835 = vunpack.c.h.b16 %v378
    %v2836 = vunpack.c.l.b16 %v379
    %v2837 = vunpack.c.h.b16 %v379
    %v2838 = vunpack.c.l.b16 %v380
    %v2839 = vunpack.c.h.b16 %v380
    %v2840 = vunpack.c.l.b16 %v381
    %v2841 = vunpack.c.h.b16 %v381
    %v2842 = vunpack.c.l.b16 %v382
    %v2843 = vunpack.c.h.b16 %v382
    %v2844 = vunpack.c.l.b16 %v383
    %v2845 = vunpack.c.h.b16 %v383
    %v2846 = vunpack.c.l.b16 %v384
    %v2847 = vunpack.c.h.b16 %v384
    %v2848 = vunpack.c.l.b16 %v385
    %v2849 = vunpack.c.h.b16 %v385
    %v2850 = vunpack.c.l.b16 %v386
    %v2851 = vunpack.c.h.b16 %v386
    %v2852 = vunpack.c.l.b16 %v387
    %v2853 = vunpack.c.h.b16 %v387
    %v2854 = vunpack.c.l.b16 %v388
    %v2855 = vunpack.c.h.b16 %v388
    %v2856 = vunpack.c.l.b16 %v389
    %v2857 = vunpack.c.h.b16 %v389
    %v2858 = vunpack.c.l.b16 %v390
    %v2859 = vunpack.c.h.b16 %v390
    %v2860 = vunpack.c.l.b16 %v391
    %v2861 = vunpack.c.h.b16 %v391
    %v2862 = vunpack.c.l.b16 %v392
    %v2863 = vunpack.c.h.b16 %v392
    %v2864 = vunpack.c.l.b16 %v393
    %v2865 = vunpack.c.h.b16 %v393
    %v2866 = vunpack.c.l.b16 %v394
    %v2867 = vunpack.c.h.b16 %v394
    %v2868 = vunpack.c.l.b16 %v395
    %v2869 = vunpack.c.h.b16 %v395
    %v2870 = vunpack.c.l.b16 %v396
    %v2871 = vunpack.c.h.b16 %v396
    %v2872 = vunpack.c.l.b16 %v397
    %v2873 = vunpack.c.h.b16 %v397
    %v2874 = vunpack.c.l.b16 %v398
    %v2875 = vunpack.c.h.b16 %v398
    %v2876 = vunpack.c.l.b16 %v399
    %v2877 = vunpack.c.h.b16 %v399
    %v2878 = vunpack.c.l.b16 %v400
    %v2879 = vunpack.c.h.b16 %v400
    %v2880 = vunpack.c.l.b16 %v401
    %v2881 = vunpack.c.h.b16 %v401
    %v2882 = vunpack.c.l.b16 %v402
    %v2883 = vunpack.c.h.b16 %v402
    %v2884 = vunpack.c.l.b16 %v403
    %v2885 = vunpack.c.h.b16 %v403
    %v2886 = vunpack.c.l.b16 %v404
    %v2887 = vunpack.c.h.b16 %v404
    %v2888 = vunpack.c.l.b16 %v405
    %v2889 = vunpack.c.h.b16 %v405
    %v2890 = vunpack.c.l.b16 %v406
    %v2891 = vunpack.c.h.b16 %v406
    %v2892 = vunpack.c.l.b16 %v407
    %v2893 = vunpack.c.h.b16 %v407
    %v2894 = vunpack.c.l.b16 %v408
    %v2895 = vunpack.c.h.b16 %v408
    %v2896 = vunpack.c.l.b16 %v409
    %v2897 = vunpack.c.h.b16 %v409
    %v2898 = vunpack.c.l.b16 %v410
    %v2899 = vunpack.c.h.b16 %v410
    %v2900 = vunpack.c.l.b16 %v411
    %v2901 = vunpack.c.h.b16 %v411
    %v2902 = vunpack.c.l.b16 %v412
    %v2903 = vunpack.c.h.b16 %v412
    %v2904 = vunpack.c.l.b16 %v413
    %v2905 = vunpack.c.h.b16 %v413
    %v2906 = vunpack.c.l.b16 %v414
    %v2907 = vunpack.c.h.b16 %v414
    %v2908 = vunpack.c.l.b16 %v415
    %v2909 = vunpack.c.h.b16 %v415
    %v2910 = vunpack.c.l.b16 %v416
    %v2911 = vunpack.c.h.b16 %v416
    %v2912 = vunpack.c.l.b16 %v417
    %v2913 = vunpack.c.h.b16 %v417
    %v2914 = vunpack.c.l.b16 %v418
    %v2915 = vunpack.c.h.b16 %v418
    %v2916 = vunpack.c.l.b16 %v419
    %v2917 = vunpack.c.h.b16 %v419
    %v2918 = vunpack.c.l.b16 %v420
    %v2919 = vunpack.c.h.b16 %v420
    %v2920 = vunpack.c.l.b16 %v421
    %v2921 = vunpack.c.h.b16 %v421
    %v2922 = vunpack.c.l.b16 %v422
    %v2923 = vunpack.c.h.b16 %v422
    %v2924 = vunpack.c.l.b16 %v423
    %v2925 = vunpack.c.h.b16 %v423
    %v2926 = vunpack.c.l.b16 %v424
    %v2927 = vunpack.c.h.b16 %v424
    %v2928 = vunpack.c.l.b16 %v425
    %v2929 = vunpack.c.h.b16 %v425
    %v2930 = vunpack.c.l.b16 %v426
    %v2931 = vunpack.c.h.b16 %v426
    %v2932 = vunpack.c.l.b16 %v427
    %v2933 = vunpack.c.h.b16 %v427
    %v2934 = vunpack.c.l.b16 %v428
    %v2935 = vunpack.c.h.b16 %v428
    %v2936 = vunpack.c.l.b16 %v429
    %v2937 = vunpack.c.h.b16 %v429
    %v2938 = vunpack.c.l.b16 %v430
    %v2939 = vunpack.c.h.b16 %v430
    %v2940 = vunpack.c.l.b16 %v431
    %v2941 = vunpack.c.h.b16 %v431
    %v2942 = vunpack.c.l.b16 %v432
    %v2943 = vunpack.c.h.b16 %v432
    %v2944 = vunpack.c.l.b16 %v433
    %v2945 = vunpack.c.h.b16 %v433
    %v2946 = vunpack.c.l.b16 %v434
    %v2947 = vunpack.c.h.b16 %v434
    %v2948 = vunpack.c.l.b16 %v435
    %v2949 = vunpack.c.h.b16 %v435
    %v2950 = vunpack.c.l.b16 %v436
    %v2951 = vunpack.c.h.b16 %v436
    %v2952 = vunpack.c.l.b16 %v437
    %v2953 = vunpack.c.h.b16 %v437
    %v2954 = vunpack.c.l.b16 %v438
    %v2955 = vunpack.c.h.b16 %v438
    %v2956 = vunpack.c.l.b16 %v439
    %v2957 = vunpack.c.h.b16 %v439
    %v2958 = vunpack.c.l.b16 %v440
    %v2959 = vunpack.c.h.b16 %v440
    %v2960 = vunpack.c.l.b16 %v441
    %v2961 = vunpack.c.h.b16 %v441
    %v2962 = vunpack.c.l.b16 %v442
    %v2963 = vunpack.c.h.b16 %v442
    %v2964 = vunpack.c.l.b16 %v443
    %v2965 = vunpack.c.h.b16 %v443
    %v2966 = vunpack.c.l.b16 %v444
    %v2967 = vunpack.c.h.b16 %v444
    %v2968 = vunpack.c.l.b16 %v445
    %v2969 = vunpack.c.h.b16 %v445
    %v2970 = vunpack.c.l.b16 %v446
    %v2971 = vunpack.c.h.b16 %v446
    %v2972 = vunpack.c.l.b16 %v447
    %v2973 = vunpack.c.h.b16 %v447
    %v2974 = vunpack.c.l.b16 %v448
    %v2975 = vunpack.c.h.b16 %v448
    %v2976 = vunpack.c.l.b16 %v449
    %v2977 = vunpack.c.h.b16 %v449
    %v2978 = vunpack.c.l.b16 %v450
    %v2979 = vunpack.c.h.b16 %v450
    %v2980 = vunpack.c.l.b16 %v451
    %v2981 = vunpack.c.h.b16 %v451
    %v2982 = vunpack.c.l.b16 %v452
    %v2983 = vunpack.c.h.b16 %v452
    %v2984 = vunpack.c.l.b16 %v453
    %v2985 = vunpack.c.h.b16 %v453
    %v2986 = vunpack.c.l.b16 %v454
    %v2987 = vunpack.c.h.b16 %v454
    %v2988 = vunpack.c.l.b16 %v455
    %v2989 = vunpack.c.h.b16 %v455
    %v2990 = vunpack.c.l.b16 %v456
    %v2991 = vunpack.c.h.b16 %v456
    %v2992 = vunpack.c.l.b16 %v457
    %v2993 = vunpack.c.h.b16 %v457
    %v2994 = vunpack.c.l.b16 %v458
    %v2995 = vunpack.c.h.b16 %v458
    %v2996 = vunpack.c.l.b16 %v459
    %v2997 = vunpack.c.h.b16 %v459
    %v2998 = vunpack.c.l.b16 %v460
    %v2999 = vunpack.c.h.b16 %v460
    %v3000 = vunpack.c.l.b16 %v461
    %v3001 = vunpack.c.h.b16 %v461
    %v3002 = vunpack.c.l.b16 %v462
    %v3003 = vunpack.c.h.b16 %v462
    %v3004 = vunpack.c.l.b16 %v463
    %v3005 = vunpack.c.h.b16 %v463
    %v3006 = vunpack.c.l.b16 %v464
    %v3007 = vunpack.c.h.b16 %v464
    %v3008 = vunpack.c.l.b16 %v465
    %v3009 = vunpack.c.h.b16 %v465
    %v3010 = vunpack.c.l.b16 %v466
    %v3011 = vunpack.c.h.b16 %v466
    %v3012 = vunpack.c.l.b16 %v467
    %v3013 = vunpack.c.h.b16 %v467
    %v3014 = vunpack.c.l.b16 %v468
    %v3015 = vunpack.c.h.b16 %v468
    %v3016 = vunpack.c.l.b16 %v469
    %v3017 = vunpack.c.h.b16 %v469
    %v3018 = vunpack.c.l.b16 %v470
    %v3019 = vunpack.c.h.b16 %v470
    %v3020 = vunpack.c.l.b16 %v471
    %v3021 = vunpack.c.h.b16 %v471
    %v3022 = vunpack.c.l.b16 %v472
    %v3023 = vunpack.c.h.b16 %v472
    %v3024 = vunpack.c.l.b16 %v473
    %v3025 = vunpack.c.h.b16 %v473
    %v3026 = vunpack.c.l.b16 %v474
    %v3027 = vunpack.c.h.b16 %v474
    %v3028 = vunpack.c.l.b16 %v475
    %v3029 = vunpack.c.h.b16 %v475
    %v3030 = vunpack.c.l.b16 %v476
    %v3031 = vunpack.c.h.b16 %v476
    %v3032 = vunpack.c.l.b16 %v477
    %v3033 = vunpack.c.h.b16 %v477
    %v3034 = vunpack.c.l.b16 %v478
    %v3035 = vunpack.c.h.b16 %v478
    %v3036 = vunpack.c.l.b16 %v479
    %v3037 = vunpack.c.h.b16 %v479
    %v3038 = vunpack.c.l.b16 %v480
    %v3039 = vunpack.c.h.b16 %v480
    %v3040 = vunpack.c.l.b16 %v481
    %v3041 = vunpack.c.h.b16 %v481
    %v3042 = vunpack.c.l.b16 %v482
    %v3043 = vunpack.c.h.b16 %v482
    %v3044 = vunpack.c.l.b16 %v483
    %v3045 = vunpack.c.h.b16 %v483
    %v3046 = vunpack.c.l.b16 %v484
    %v3047 = vunpack.c.h.b16 %v484
    %v3048 = vunpack.c.l.b16 %v485
    %v3049 = vunpack.c.h.b16 %v485
    %v3050 = vunpack.c.l.b16 %v486
    %v3051 = vunpack.c.h.b16 %v486
    %v3052 = vunpack.c.l.b16 %v487
    %v3053 = vunpack.c.h.b16 %v487
    %v3054 = vunpack.c.l.b16 %v488
    %v3055 = vunpack.c.h.b16 %v488
    %v3056 = vunpack.c.l.b16 %v489
    %v3057 = vunpack.c.h.b16 %v489
    %v3058 = vunpack.c.l.b16 %v490
    %v3059 = vunpack.c.h.b16 %v490
    %v3060 = vunpack.c.l.b16 %v491
    %v3061 = vunpack.c.h.b16 %v491
    %v3062 = vunpack.c.l.b16 %v492
    %v3063 = vunpack.c.h.b16 %v492
    %v3064 = vunpack.c.l.b16 %v493
    %v3065 = vunpack.c.h.b16 %v493
    %v3066 = vunpack.c.l.b16 %v494
    %v3067 = vunpack.c.h.b16 %v494
    %v3068 = vunpack.c.l.b16 %v495
    %v3069 = vunpack.c.h.b16 %v495
    %v3070 = vunpack.c.l.b16 %v496
    %v3071 = vunpack.c.h.b16 %v496
    %v3072 = vunpack.c.l.b16 %v497
    %v3073 = vunpack.c.h.b16 %v497
    %v3074 = vunpack.c.l.b16 %v498
    %v3075 = vunpack.c.h.b16 %v498
    %v3076 = vunpack.c.l.b16 %v499
    %v3077 = vunpack.c.h.b16 %v499
    %v3078 = vunpack.c.l.b16 %v500
    %v3079 = vunpack.c.h.b16 %v500
    %v3080 = vunpack.c.l.b16 %v501
    %v3081 = vunpack.c.h.b16 %v501
    %v3082 = vunpack.c.l.b16 %v502
    %v3083 = vunpack.c.h.b16 %v502
    %v3084 = vunpack.c.l.b16 %v503
    %v3085 = vunpack.c.h.b16 %v503
    %v3086 = vunpack.c.l.b16 %v504
    %v3087 = vunpack.c.h.b16 %v504
    %v3088 = vunpack.c.l.b16 %v505
    %v3089 = vunpack.c.h.b16 %v505
    %v3090 = vunpack.c.l.b16 %v506
    %v3091 = vunpack.c.h.b16 %v506
    %v3092 = vunpack.c.l.b16 %v507
    %v3093 = vunpack.c.h.b16 %v507
    %v3094 = vunpack.c.l.b16 %v508
    %v3095 = vunpack.c.h.b16 %v508
    %v3096 = vunpack.c.l.b16 %v509
    %v3097 = vunpack.c.h.b16 %v509
    %v3098 = vunpack.c.l.b16 %v510
    %v3099 = vunpack.c.h.b16 %v510
    %v3100 = vunpack.c.l.b16 %v511
    %v3101 = vunpack.c.h.b16 %v511
    %v3102 = vunpack.c.l.b16 %v512
    %v3103 = vunpack.c.h.b16 %v512
    %v3104 = vunpack.c.l.b16 %v513
    %v3105 = vunpack.c.h.b16 %v513
    %v3106 = vunpack.c.l.b16 %v514
    %v3107 = vunpack.c.h.b16 %v514
    %v3108 = vunpack.c.l.b16 %v515
    %v3109 = vunpack.c.h.b16 %v515
    %v3110 = vunpack.c.l.b16 %v516
    %v3111 = vunpack.c.h.b16 %v516
    %v3112 = vunpack.c.l.b16 %v517
    %v3113 = vunpack.c.h.b16 %v517
    %v3114 = vunpack.c.l.b16 %v518
    %v3115 = vunpack.c.h.b16 %v518
    %v3116 = vunpack.c.l.b16 %v519
    %v3117 = vunpack.c.h.b16 %v519
    %v3118 = vunpack.c.l.b16 %v520
    %v3119 = vunpack.c.h.b16 %v520
    %v3120 = vunpack.c.l.b16 %v521
    %v3121 = vunpack.c.h.b16 %v521
    %v3122 = vunpack.c.l.b16 %v522
    %v3123 = vunpack.c.h.b16 %v522
    %v3124 = vunpack.c.l.b16 %v523
    %v3125 = vunpack.c.h.b16 %v523
    %v3126 = vunpack.c.l.b16 %v524
    %v3127 = vunpack.c.h.b16 %v524
    %v3128 = vunpack.c.l.b16 %v525
    %v3129 = vunpack.c.h.b16 %v525
    %v3130 = vunpack.c.l.b16 %v526
    %v3131 = vunpack.c.h.b16 %v526
    %v3132 = vunpack.c.l.b16 %v527
    %v3133 = vunpack.c.h.b16 %v527
    %v3134 = vunpack.c.l.b16 %v528
    %v3135 = vunpack.c.h.b16 %v528
    %v3136 = vunpack.c.l.b16 %v529
    %v3137 = vunpack.c.h.b16 %v529
    %v3138 = vunpack.c.l.b16 %v530
    %v3139 = vunpack.c.h.b16 %v530
    %v3140 = vunpack.c.l.b16 %v531
    %v3141 = vunpack.c.h.b16 %v531
    %v3142 = vunpack.c.l.b16 %v532
    %v3143 = vunpack.c.h.b16 %v532
    %v3144 = vunpack.c.l.b16 %v533
    %v3145 = vunpack.c.h.b16 %v533
    %v3146 = vunpack.c.l.b16 %v534
    %v3147 = vunpack.c.h.b16 %v534
    %v3148 = vunpack.c.l.b16 %v535
    %v3149 = vunpack.c.h.b16 %v535
    %v3150 = vunpack.c.l.b16 %v536
    %v3151 = vunpack.c.h.b16 %v536
    %v3152 = vunpack.c.l.b16 %v537
    %v3153 = vunpack.c.h.b16 %v537
    %v3154 = vunpack.c.l.b16 %v538
    %v3155 = vunpack.c.h.b16 %v538
    %v3156 = vunpack.c.l.b16 %v539
    %v3157 = vunpack.c.h.b16 %v539
    %v3158 = vunpack.c.l.b16 %v540
    %v3159 = vunpack.c.h.b16 %v540
    %v3160 = vunpack.c.l.b16 %v541
    %v3161 = vunpack.c.h.b16 %v541
    %v3162 = vunpack.c.l.b16 %v542
    %v3163 = vunpack.c.h.b16 %v542
    %v3164 = vunpack.c.l.b16 %v543
    %v3165 = vunpack.c.h.b16 %v543
    %v3166 = vunpack.c.l.b16 %v544
    %v3167 = vunpack.c.h.b16 %v544
    %v3168 = vunpack.c.l.b16 %v545
    %v3169 = vunpack.c.h.b16 %v545
    %v3170 = vunpack.c.l.b16 %v546
    %v3171 = vunpack.c.h.b16 %v546
    %v3172 = vunpack.c.l.b16 %v547
    %v3173 = vunpack.c.h.b16 %v547
    %v3174 = vunpack.c.l.b16 %v548
    %v3175 = vunpack.c.h.b16 %v548
    %v3176 = vunpack.c.l.b16 %v549
    %v3177 = vunpack.c.h.b16 %v549
    %v3178 = vunpack.c.l.b16 %v550
    %v3179 = vunpack.c.h.b16 %v550
    %v3180 = vunpack.c.l.b16 %v551
    %v3181 = vunpack.c.h.b16 %v551
    %v3182 = vunpack.c.l.b16 %v552
    %v3183 = vunpack.c.h.b16 %v552
    %v3184 = vunpack.c.l.b16 %v553
    %v3185 = vunpack.c.h.b16 %v553
    %v3186 = vunpack.c.l.b16 %v554
    %v3187 = vunpack.c.h.b16 %v554
    %v3188 = vunpack.c.l.b16 %v555
    %v3189 = vunpack.c.h.b16 %v555
    %v3190 = vunpack.c.l.b16 %v556
    %v3191 = vunpack.c.h.b16 %v556
    %v3192 = vunpack.c.l.b16 %v557
    %v3193 = vunpack.c.h.b16 %v557
    %v3194 = vunpack.c.l.b16 %v558
    %v3195 = vunpack.c.h.b16 %v558
    %v3196 = vunpack.c.l.b16 %v559
    %v3197 = vunpack.c.h.b16 %v559
    %v3198 = vunpack.c.l.b16 %v560
    %v3199 = vunpack.c.h.b16 %v560
    %v3200 = vunpack.c.l.b16 %v561
    %v3201 = vunpack.c.h.b16 %v561
    %v3202 = vunpack.c.l.b16 %v562
    %v3203 = vunpack.c.h.b16 %v562
    %v3204 = vunpack.c.l.b16 %v563
    %v3205 = vunpack.c.h.b16 %v563
    %v3206 = vunpack.c.l.b16 %v564
    %v3207 = vunpack.c.h.b16 %v564
    %v3208 = vunpack.c.l.b16 %v565
    %v3209 = vunpack.c.h.b16 %v565
    %v3210 = vunpack.c.l.b16 %v566
    %v3211 = vunpack.c.h.b16 %v566
    %v3212 = vunpack.c.l.b16 %v567
    %v3213 = vunpack.c.h.b16 %v567
    %v3214 = vunpack.c.l.b16 %v568
    %v3215 = vunpack.c.h.b16 %v568
    %v3216 = vunpack.c.l.b16 %v569
    %v3217 = vunpack.c.h.b16 %v569
    %v3218 = vunpack.c.l.b16 %v570
    %v3219 = vunpack.c.h.b16 %v570
    %v3220 = vunpack.c.l.b16 %v571
    %v3221 = vunpack.c.h.b16 %v571
    %v3222 = vunpack.c.l.b16 %v572
    %v3223 = vunpack.c.h.b16 %v572
    %v3224 = vunpack.c.l.b16 %v573
    %v3225 = vunpack.c.h.b16 %v573
    %v3226 = vunpack.c.l.b16 %v574
    %v3227 = vunpack.c.h.b16 %v574
    %v3228 = vunpack.c.l.b16 %v575
    %v3229 = vunpack.c.h.b16 %v575
    %v3230 = vunpack.c.l.b16 %v576
    %v3231 = vunpack.c.h.b16 %v576
    %v3232 = vunpack.c.l.b16 %v577
    %v3233 = vunpack.c.h.b16 %v577
    %v3234 = vunpack.c.l.b16 %v578
    %v3235 = vunpack.c.h.b16 %v578
    %v3236 = vunpack.c.l.b16 %v579
    %v3237 = vunpack.c.h.b16 %v579
    %v3238 = vunpack.c.l.b16 %v580
    %v3239 = vunpack.c.h.b16 %v580
    %v3240 = vunpack.c.l.b16 %v581
    %v3241 = vunpack.c.h.b16 %v581
    %v3242 = vunpack.c.l.b16 %v582
    %v3243 = vunpack.c.h.b16 %v582
    %v3244 = vunpack.c.l.b16 %v583
    %v3245 = vunpack.c.h.b16 %v583
    %v3246 = vunpack.c.l.b16 %v584
    %v3247 = vunpack.c.h.b16 %v584
    %v3248 = vunpack.c.l.b16 %v585
    %v3249 = vunpack.c.h.b16 %v585
    %v3250 = vunpack.c.l.b16 %v586
    %v3251 = vunpack.c.h.b16 %v586
    %v3252 = vunpack.c.l.b16 %v587
    %v3253 = vunpack.c.h.b16 %v587
    %v3254 = vunpack.c.l.b16 %v588
    %v3255 = vunpack.c.h.b16 %v588
    %v3256 = vunpack.c.l.b16 %v589
    %v3257 = vunpack.c.h.b16 %v589
    %v3258 = vunpack.c.l.b16 %v590
    %v3259 = vunpack.c.h.b16 %v590
    %v3260 = vunpack.c.l.b16 %v591
    %v3261 = vunpack.c.h.b16 %v591
    %v3262 = vunpack.c.l.b16 %v592
    %v3263 = vunpack.c.h.b16 %v592
    %v3264 = vunpack.c.l.b16 %v593
    %v3265 = vunpack.c.h.b16 %v593
    %v3266 = vunpack.c.l.b16 %v594
    %v3267 = vunpack.c.h.b16 %v594
    %v3268 = vunpack.c.l.b16 %v595
    %v3269 = vunpack.c.h.b16 %v595
    %v3270 = vunpack.c.l.b16 %v596
    %v3271 = vunpack.c.h.b16 %v596
    %v3272 = vunpack.c.l.b16 %v597
    %v3273 = vunpack.c.h.b16 %v597
    %v3274 = vunpack.c.l.b16 %v598
    %v3275 = vunpack.c.h.b16 %v598
    %v3276 = vunpack.c.l.b16 %v599
    %v3277 = vunpack.c.h.b16 %v599
    %v3278 = vunpack.c.l.b16 %v600
    %v3279 = vunpack.c.h.b16 %v600
    %v3280 = vunpack.c.l.b16 %v601
    %v3281 = vunpack.c.h.b16 %v601
    %v3282 = vunpack.c.l.b16 %v602
    %v3283 = vunpack.c.h.b16 %v602
    %v3284 = vunpack.c.l.b16 %v603
    %v3285 = vunpack.c.h.b16 %v603
    %v3286 = vunpack.c.l.b16 %v604
    %v3287 = vunpack.c.h.b16 %v604
    %v3288 = vunpack.c.l.b16 %v605
    %v3289 = vunpack.c.h.b16 %v605
    %v3290 = vunpack.c.l.b16 %v606
    %v3291 = vunpack.c.h.b16 %v606
    %v3292 = vunpack.c.l.b16 %v607
    %v3293 = vunpack.c.h.b16 %v607
    %v3294 = vunpack.c.l.b16 %v608
    %v3295 = vunpack.c.h.b16 %v608
    %v3296 = vunpack.c.l.b16 %v609
    %v3297 = vunpack.c.h.b16 %v609
    %v3298 = vunpack.c.l.b16 %v610
    %v3299 = vunpack.c.h.b16 %v610
    %v3300 = vunpack.c.l.b16 %v611
    %v3301 = vunpack.c.h.b16 %v611
    %v3302 = vunpack.c.l.b16 %v612
    %v3303 = vunpack.c.h.b16 %v612
    %v3304 = vunpack.c.l.b16 %v613
    %v3305 = vunpack.c.h.b16 %v613
    %v3306 = vunpack.c.l.b16 %v614
    %v3307 = vunpack.c.h.b16 %v614
    %v3308 = vunpack.c.l.b16 %v615
    %v3309 = vunpack.c.h.b16 %v615
    %v3310 = vunpack.c.l.b16 %v616
    %v3311 = vunpack.c.h.b16 %v616
    %v3312 = vunpack.c.l.b16 %v617
    %v3313 = vunpack.c.h.b16 %v617
    %v3314 = vunpack.c.l.b16 %v618
    %v3315 = vunpack.c.h.b16 %v618
    %v3316 = vunpack.c.l.b16 %v619
    %v3317 = vunpack.c.h.b16 %v619
    %v3318 = vunpack.c.l.b16 %v620
    %v3319 = vunpack.c.h.b16 %v620
    %v3320 = vunpack.c.l.b16 %v621
    %v3321 = vunpack.c.h.b16 %v621
    %v3322 = vunpack.c.l.b16 %v622
    %v3323 = vunpack.c.h.b16 %v622
    %v3324 = vunpack.c.l.b16 %v623
    %v3325 = vunpack.c.h.b16 %v623
    %v3326 = vunpack.c.l.b16 %v624
    %v3327 = vunpack.c.h.b16 %v624
    %v3328 = vunpack.c.l.b16 %v625
    %v3329 = vunpack.c.h.b16 %v625
    %v3330 = vunpack.c.l.b16 %v626
    %v3331 = vunpack.c.h.b16 %v626
    %v3332 = vunpack.c.l.b16 %v627
    %v3333 = vunpack.c.h.b16 %v627
    %v3334 = vunpack.c.l.b16 %v628
    %v3335 = vunpack.c.h.b16 %v628
    %v3336 = vunpack.c.l.b16 %v629
    %v3337 = vunpack.c.h.b16 %v629
    %v3338 = vunpack.c.l.b16 %v630
    %v3339 = vunpack.c.h.b16 %v630
    %v3340 = vunpack.c.l.b16 %v631
    %v3341 = vunpack.c.h.b16 %v631
    %v3342 = vunpack.c.l.b16 %v632
    %v3343 = vunpack.c.h.b16 %v632
    %v3344 = vunpack.c.l.b16 %v633
    %v3345 = vunpack.c.h.b16 %v633
    %v3346 = vunpack.c.l.b16 %v634
    %v3347 = vunpack.c.h.b16 %v634
    %v3348 = vunpack.c.l.b16 %v635
    %v3349 = vunpack.c.h.b16 %v635
    %v3350 = vunpack.c.l.b16 %v636
    %v3351 = vunpack.c.h.b16 %v636
    %v3352 = vunpack.c.l.b16 %v637
    %v3353 = vunpack.c.h.b16 %v637
    %v3354 = vunpack.c.l.b16 %v638
    %v3355 = vunpack.c.h.b16 %v638
    %v3356 = vunpack.c.l.b16 %v639
    %v3357 = vunpack.c.h.b16 %v639
    %v3358 = vunpack.c.l.b16 %v640
    %v3359 = vunpack.c.h.b16 %v640
    %v3360 = vunpack.c.l.b16 %v641
    %v3361 = vunpack.c.h.b16 %v641
    %v3362 = vunpack.c.l.b16 %v642
    %v3363 = vunpack.c.h.b16 %v642
    %v3364 = vunpack.c.l.b16 %v643
    %v3365 = vunpack.c.h.b16 %v643
    %v3366 = vunpack.c.l.b16 %v644
    %v3367 = vunpack.c.h.b16 %v644
    %v3368 = vunpack.c.l.b16 %v645
    %v3369 = vunpack.c.h.b16 %v645
    %v3370 = vunpack.c.l.b16 %v646
    %v3371 = vunpack.c.h.b16 %v646
    %v3372 = vunpack.c.l.b16 %v647
    %v3373 = vunpack.c.h.b16 %v647
    %v3374 = vunpack.c.l.b16 %v648
    %v3375 = vunpack.c.h.b16 %v648
    %v3376 = vunpack.c.l.b16 %v649
    %v3377 = vunpack.c.h.b16 %v649
    %v3378 = vunpack.c.l.b16 %v650
    %v3379 = vunpack.c.h.b16 %v650
    %v3380 = vunpack.c.l.b16 %v651
    %v3381 = vunpack.c.h.b16 %v651
    %v3382 = vunpack.c.l.b16 %v652
    %v3383 = vunpack.c.h.b16 %v652
    %v3384 = vunpack.c.l.b16 %v653
    %v3385 = vunpack.c.h.b16 %v653
    %v3386 = vunpack.c.l.b16 %v654
    %v3387 = vunpack.c.h.b16 %v654
    %v3388 = vunpack.c.l.b16 %v655
    %v3389 = vunpack.c.h.b16 %v655
    %v3390 = vunpack.c.l.b16 %v656
    %v3391 = vunpack.c.h.b16 %v656
    %v3392 = vunpack.c.l.b16 %v657
    %v3393 = vunpack.c.h.b16 %v657
    %v3394 = vunpack.c.l.b16 %v658
    %v3395 = vunpack.c.h.b16 %v658
    %v3396 = vunpack.c.l.b16 %v659
    %v3397 = vunpack.c.h.b16 %v659
    %v3398 = vunpack.c.l.b16 %v660
    %v3399 = vunpack.c.h.b16 %v660
    %v3400 = vunpack.c.l.b16 %v661
    %v3401 = vunpack.c.h.b16 %v661
    %v3402 = vunpack.c.l.b16 %v662
    %v3403 = vunpack.c.h.b16 %v662
    %v3404 = vunpack.c.l.b16 %v663
    %v3405 = vunpack.c.h.b16 %v663
    %v3406 = vunpack.c.l.b16 %v664
    %v3407 = vunpack.c.h.b16 %v664
    %v3408 = vunpack.c.l.b16 %v665
    %v3409 = vunpack.c.h.b16 %v665
    %v3410 = vunpack.c.l.b16 %v666
    %v3411 = vunpack.c.h.b16 %v666
    %v3412 = vunpack.c.l.b16 %v667
    %v3413 = vunpack.c.h.b16 %v667
    %v3414 = vunpack.c.l.b16 %v668
    %v3415 = vunpack.c.h.b16 %v668
    %v3416 = vunpack.c.l.b16 %v669
    %v3417 = vunpack.c.h.b16 %v669
    %v3418 = vunpack.c.l.b16 %v670
    %v3419 = vunpack.c.h.b16 %v670
    %v3420 = vunpack.c.l.b16 %v671
    %v3421 = vunpack.c.h.b16 %v671
    %v3422 = vunpack.c.l.b16 %v672
    %v3423 = vunpack.c.h.b16 %v672
    %v3424 = vunpack.c.l.b16 %v673
    %v3425 = vunpack.c.h.b16 %v673
    %v3426 = vunpack.c.l.b16 %v674
    %v3427 = vunpack.c.h.b16 %v674
    %v3428 = vunpack.c.l.b16 %v675
    %v3429 = vunpack.c.h.b16 %v675
    %v3430 = vunpack.c.l.b16 %v676
    %v3431 = vunpack.c.h.b16 %v676
    %v3432 = vunpack.c.l.b16 %v677
    %v3433 = vunpack.c.h.b16 %v677
    %v3434 = vunpack.c.l.b16 %v678
    %v3435 = vunpack.c.h.b16 %v678
    %v3436 = vunpack.c.l.b16 %v679
    %v3437 = vunpack.c.h.b16 %v679
    %v3438 = vunpack.c.l.b16 %v680
    %v3439 = vunpack.c.h.b16 %v680
    %v3440 = vunpack.c.l.b16 %v681
    %v3441 = vunpack.c.h.b16 %v681
    %v3442 = vunpack.c.l.b16 %v682
    %v3443 = vunpack.c.h.b16 %v682
    %v3444 = vunpack.c.l.b16 %v683
    %v3445 = vunpack.c.h.b16 %v683
    %v3446 = vunpack.c.l.b16 %v684
    %v3447 = vunpack.c.h.b16 %v684
    %v3448 = vunpack.c.l.b16 %v685
    %v3449 = vunpack.c.h.b16 %v685
    %v3450 = vunpack.c.l.b16 %v686
    %v3451 = vunpack.c.h.b16 %v686
    %v3452 = vunpack.c.l.b16 %v687
    %v3453 = vunpack.c.h.b16 %v687
    %v3454 = vunpack.c.l.b16 %v688
    %v3455 = vunpack.c.h.b16 %v688
    %v3456 = vunpack.c.l.b16 %v689
    %v3457 = vunpack.c.h.b16 %v689
    %v3458 = vunpack.c.l.b16 %v690
    %v3459 = vunpack.c.h.b16 %v690
    %v3460 = vunpack.c.l.b16 %v691
    %v3461 = vunpack.c.h.b16 %v691
    %v3462 = vunpack.c.l.b16 %v692
    %v3463 = vunpack.c.h.b16 %v692
    %v3464 = vunpack.c.l.b16 %v693
    %v3465 = vunpack.c.h.b16 %v693
    %v3466 = vunpack.c.l.b16 %v694
    %v3467 = vunpack.c.h.b16 %v694
    %v3468 = vunpack.c.l.b16 %v695
    %v3469 = vunpack.c.h.b16 %v695
    %v3470 = vunpack.c.l.b16 %v696
    %v3471 = vunpack.c.h.b16 %v696
    %v3472 = vunpack.c.l.b16 %v697
    %v3473 = vunpack.c.h.b16 %v697
    %v3474 = vunpack.c.l.b16 %v698
    %v3475 = vunpack.c.h.b16 %v698
    %v3476 = vunpack.c.l.b16 %v699
    %v3477 = vunpack.c.h.b16 %v699
    %v3478 = vunpack.c.l.b16 %v700
    %v3479 = vunpack.c.h.b16 %v700
    %v3480 = vunpack.c.l.b16 %v701
    %v3481 = vunpack.c.h.b16 %v701
    %v3482 = vunpack.c.l.b16 %v702
    %v3483 = vunpack.c.h.b16 %v702
    %v3484 = vunpack.c.l.b16 %v703
    %v3485 = vunpack.c.h.b16 %v703
    %v3486 = vunpack.c.l.b16 %v704
    %v3487 = vunpack.c.h.b16 %v704
    %v3488 = vunpack.c.l.b16 %v705
    %v3489 = vunpack.c.h.b16 %v705
    %v3490 = vunpack.c.l.b16 %v706
    %v3491 = vunpack.c.h.b16 %v706
    %v3492 = vunpack.c.l.b16 %v707
    %v3493 = vunpack.c.h.b16 %v707
    %v3494 = vunpack.c.l.b16 %v708
    %v3495 = vunpack.c.h.b16 %v708
    %v3496 = vunpack.c.l.b16 %v709
    %v3497 = vunpack.c.h.b16 %v709
    %v3498 = vunpack.c.l.b16 %v710
    %v3499 = vunpack.c.h.b16 %v710
    %v3500 = vunpack.c.l.b16 %v711
    %v3501 = vunpack.c.h.b16 %v711
    %v3502 = vunpack.c.l.b16 %v712
    %v3503 = vunpack.c.h.b16 %v712
    %v3504 = vunpack.c.l.b16 %v713
    %v3505 = vunpack.c.h.b16 %v713
    %v3506 = vunpack.c.l.b16 %v714
    %v3507 = vunpack.c.h.b16 %v714
    %v3508 = vunpack.c.l.b16 %v715
    %v3509 = vunpack.c.h.b16 %v715
    %v3510 = vunpack.c.l.b16 %v716
    %v3511 = vunpack.c.h.b16 %v716
    %v3512 = vunpack.c.l.b16 %v717
    %v3513 = vunpack.c.h.b16 %v717
    %v3514 = vunpack.c.l.b16 %v718
    %v3515 = vunpack.c.h.b16 %v718
    %v3516 = vunpack.c.l.b16 %v719
    %v3517 = vunpack.c.h.b16 %v719
    %v3518 = vunpack.c.l.b16 %v720
    %v3519 = vunpack.c.h.b16 %v720
    %v3520 = vunpack.c.l.b16 %v721
    %v3521 = vunpack.c.h.b16 %v721
    %v3522 = vunpack.c.l.b16 %v722
    %v3523 = vunpack.c.h.b16 %v722
    %v3524 = vunpack.c.l.b16 %v723
    %v3525 = vunpack.c.h.b16 %v723
    %v3526 = vunpack.c.l.b16 %v724
    %v3527 = vunpack.c.h.b16 %v724
    %v3528 = vunpack.c.l.b16 %v725
    %v3529 = vunpack.c.h.b16 %v725
    %v3530 = vunpack.c.l.b16 %v726
    %v3531 = vunpack.c.h.b16 %v726
    %v3532 = vunpack.c.l.b16 %v727
    %v3533 = vunpack.c.h.b16 %v727
    %v3534 = vunpack.c.l.b16 %v728
    %v3535 = vunpack.c.h.b16 %v728
    %v3536 = vunpack.c.l.b16 %v729
    %v3537 = vunpack.c.h.b16 %v729
    %v3538 = vunpack.c.l.b16 %v730
    %v3539 = vunpack.c.h.b16 %v730
    %v3540 = vunpack.c.l.b16 %v731
    %v3541 = vunpack.c.h.b16 %v731
    %v3542 = vunpack.c.l.b16 %v732
    %v3543 = vunpack.c.h.b16 %v732
    %v3544 = vunpack.c.l.b16 %v733
    %v3545 = vunpack.c.h.b16 %v733
    %v3546 = vunpack.c.l.b16 %v734
    %v3547 = vunpack.c.h.b16 %v734
    %v3548 = vunpack.c.l.b16 %v735
    %v3549 = vunpack.c.h.b16 %v735
    %v3550 = vunpack.c.l.b16 %v736
    %v3551 = vunpack.c.h.b16 %v736
    %v3552 = vunpack.c.l.b16 %v737
    %v3553 = vunpack.c.h.b16 %v737
    %v3554 = vunpack.c.l.b16 %v738
    %v3555 = vunpack.c.h.b16 %v738
    %v3556 = vunpack.c.l.b16 %v739
    %v3557 = vunpack.c.h.b16 %v739
    %v3558 = vunpack.c.l.b16 %v740
    %v3559 = vunpack.c.h.b16 %v740
    %v3560 = vunpack.c.l.b16 %v741
    %v3561 = vunpack.c.h.b16 %v741
    %v3562 = vunpack.c.l.b16 %v742
    %v3563 = vunpack.c.h.b16 %v742
    %v3564 = vunpack.c.l.b16 %v743
    %v3565 = vunpack.c.h.b16 %v743
    %v3566 = vunpack.c.l.b16 %v744
    %v3567 = vunpack.c.h.b16 %v744
    %v3568 = vunpack.c.l.b16 %v745
    %v3569 = vunpack.c.h.b16 %v745
    %v3570 = vunpack.c.l.b16 %v746
    %v3571 = vunpack.c.h.b16 %v746
    %v3572 = vunpack.c.l.b16 %v747
    %v3573 = vunpack.c.h.b16 %v747
    %v3574 = vunpack.c.l.b16 %v748
    %v3575 = vunpack.c.h.b16 %v748
    %v3576 = vunpack.c.l.b16 %v749
    %v3577 = vunpack.c.h.b16 %v749
    %v3578 = vunpack.c.l.b16 %v750
    %v3579 = vunpack.c.h.b16 %v750
    %v3580 = vunpack.c.l.b16 %v751
    %v3581 = vunpack.c.h.b16 %v751
    %v3582 = vunpack.c.l.b16 %v752
    %v3583 = vunpack.c.h.b16 %v752
    %v3584 = vunpack.c.l.b16 %v753
    %v3585 = vunpack.c.h.b16 %v753
    %v3586 = vunpack.c.l.b16 %v754
    %v3587 = vunpack.c.h.b16 %v754
    %v3588 = vunpack.c.l.b16 %v755
    %v3589 = vunpack.c.h.b16 %v755
    %v3590 = vunpack.c.l.b16 %v756
    %v3591 = vunpack.c.h.b16 %v756
    %v3592 = vunpack.c.l.b16 %v757
    %v3593 = vunpack.c.h.b16 %v757
    %v3594 = vunpack.c.l.b16 %v758
    %v3595 = vunpack.c.h.b16 %v758
    %v3596 = vunpack.c.l.b16 %v759
    %v3597 = vunpack.c.h.b16 %v759
    %v3598 = vunpack.c.l.b16 %v760
    %v3599 = vunpack.c.h.b16 %v760
    %v3600 = vunpack.c.l.b16 %v761
    %v3601 = vunpack.c.h.b16 %v761
    %v3602 = vunpack.c.l.b16 %v762
    %v3603 = vunpack.c.h.b16 %v762
    %v3604 = vunpack.c.l.b16 %v763
    %v3605 = vunpack.c.h.b16 %v763
    %v3606 = vunpack.c.l.b16 %v764
    %v3607 = vunpack.c.h.b16 %v764
    %v3608 = vunpack.c.l.b16 %v765
    %v3609 = vunpack.c.h.b16 %v765
    %v3610 = vunpack.c.l.b16 %v766
    %v3611 = vunpack.c.h.b16 %v766
    %v3612 = vunpack.c.l.b16 %v767
    %v3613 = vunpack.c.h.b16 %v767
    %v3614 = vunpack.c.l.b16 %v768
    %v3615 = vunpack.c.h.b16 %v768
    %v3616 = vunpack.c.l.b16 %v769
    %v3617 = vunpack.c.h.b16 %v769
    %v3618 = vunpack.c.l.b16 %v770
    %v3619 = vunpack.c.h.b16 %v770
    %v3620 = vunpack.c.l.b16 %v771
    %v3621 = vunpack.c.h.b16 %v771
    %v3622 = vunpack.c.l.b16 %v772
    %v3623 = vunpack.c.h.b16 %v772
    %v3624 = vunpack.c.l.b16 %v773
    %v3625 = vunpack.c.h.b16 %v773
    %v3626 = vunpack.c.l.b16 %v774
    %v3627 = vunpack.c.h.b16 %v774
    %v3628 = vunpack.c.l.b16 %v775
    %v3629 = vunpack.c.h.b16 %v775
    %v3630 = vunpack.c.l.b16 %v776
    %v3631 = vunpack.c.h.b16 %v776
    %v3632 = vunpack.c.l.b16 %v777
    %v3633 = vunpack.c.h.b16 %v777
    %v3634 = vunpack.c.l.b16 %v778
    %v3635 = vunpack.c.h.b16 %v778
    %v3636 = vunpack.c.l.b16 %v779
    %v3637 = vunpack.c.h.b16 %v779
    %v3638 = vunpack.c.l.b16 %v780
    %v3639 = vunpack.c.h.b16 %v780
    %v3640 = vunpack.c.l.b16 %v781
    %v3641 = vunpack.c.h.b16 %v781
    %v3642 = vunpack.c.l.b16 %v782
    %v3643 = vunpack.c.h.b16 %v782
    %v3644 = vunpack.c.l.b16 %v783
    %v3645 = vunpack.c.h.b16 %v783
    %v3646 = vunpack.c.l.b16 %v784
    %v3647 = vunpack.c.h.b16 %v784
    %v3648 = vunpack.c.l.b16 %v785
    %v3649 = vunpack.c.h.b16 %v785
    %v3650 = vunpack.c.l.b16 %v786
    %v3651 = vunpack.c.h.b16 %v786
    %v3652 = vunpack.c.l.b16 %v787
    %v3653 = vunpack.c.h.b16 %v787
    %v3654 = vunpack.c.l.b16 %v788
    %v3655 = vunpack.c.h.b16 %v788
    %v3656 = vunpack.c.l.b16 %v789
    %v3657 = vunpack.c.h.b16 %v789
    %v3658 = vunpack.c.l.b16 %v790
    %v3659 = vunpack.c.h.b16 %v790
    %v3660 = vunpack.c.l.b16 %v791
    %v3661 = vunpack.c.h.b16 %v791
    %v3662 = vunpack.c.l.b16 %v792
    %v3663 = vunpack.c.h.b16 %v792
    %v3664 = vunpack.c.l.b16 %v793
    %v3665 = vunpack.c.h.b16 %v793
    %v3666 = vunpack.c.l.b16 %v794
    %v3667 = vunpack.c.h.b16 %v794
    %v3668 = vunpack.c.l.b16 %v795
    %v3669 = vunpack.c.h.b16 %v795
    %v3670 = vunpack.c.l.b16 %v796
    %v3671 = vunpack.c.h.b16 %v796
    %v3672 = vunpack.c.l.b16 %v797
    %v3673 = vunpack.c.h.b16 %v797
    %v3674 = vunpack.c.l.b16 %v798
    %v3675 = vunpack.c.h.b16 %v798
    %v3676 = vunpack.c.l.b16 %v799
    %v3677 = vunpack.c.h.b16 %v799
    %v3678 = vunpack.c.l.b16 %v800
    %v3679 = vunpack.c.h.b16 %v800
    %v3680 = vunpack.c.l.b16 %v801
    %v3681 = vunpack.c.h.b16 %v801
    %v3682 = vunpack.c.l.b16 %v802
    %v3683 = vunpack.c.h.b16 %v802
    %v3684 = vunpack.c.l.b16 %v803
    %v3685 = vunpack.c.h.b16 %v803
    %v3686 = vunpack.c.l.b16 %v804
    %v3687 = vunpack.c.h.b16 %v804
    %v3688 = vunpack.c.l.b16 %v805
    %v3689 = vunpack.c.h.b16 %v805
    %v3690 = vunpack.c.l.b16 %v806
    %v3691 = vunpack.c.h.b16 %v806
    %v3692 = vunpack.c.l.b16 %v807
    %v3693 = vunpack.c.h.b16 %v807
    %v3694 = vunpack.c.l.b16 %v808
    %v3695 = vunpack.c.h.b16 %v808
    %v3696 = vunpack.c.l.b16 %v809
    %v3697 = vunpack.c.h.b16 %v809
    %v3698 = vunpack.c.l.b16 %v810
    %v3699 = vunpack.c.h.b16 %v810
    %v3700 = vunpack.c.l.b16 %v811
    %v3701 = vunpack.c.h.b16 %v811
    %v3702 = vunpack.c.l.b16 %v812
    %v3703 = vunpack.c.h.b16 %v812
    %v3704 = vunpack.c.l.b16 %v813
    %v3705 = vunpack.c.h.b16 %v813
    %v3706 = vunpack.c.l.b16 %v814
    %v3707 = vunpack.c.h.b16 %v814
    %v3708 = vunpack.c.l.b16 %v815
    %v3709 = vunpack.c.h.b16 %v815
    %v3710 = vunpack.c.l.b16 %v816
    %v3711 = vunpack.c.h.b16 %v816
    %v3712 = vunpack.c.l.b16 %v817
    %v3713 = vunpack.c.h.b16 %v817
    %v3714 = vunpack.c.l.b16 %v818
    %v3715 = vunpack.c.h.b16 %v818
    %v3716 = vunpack.c.l.b16 %v819
    %v3717 = vunpack.c.h.b16 %v819
    %v3718 = vunpack.c.l.b16 %v820
    %v3719 = vunpack.c.h.b16 %v820
    %v3720 = vunpack.c.l.b16 %v821
    %v3721 = vunpack.c.h.b16 %v821
    %v3722 = vunpack.c.l.b16 %v822
    %v3723 = vunpack.c.h.b16 %v822
    %v3724 = vunpack.c.l.b16 %v823
    %v3725 = vunpack.c.h.b16 %v823
    %v3726 = vunpack.c.l.b16 %v824
    %v3727 = vunpack.c.h.b16 %v824
    %v3728 = vunpack.c.l.b16 %v825
    %v3729 = vunpack.c.h.b16 %v825
    %v3730 = vunpack.c.l.b16 %v826
    %v3731 = vunpack.c.h.b16 %v826
    %v3732 = vunpack.c.l.b16 %v827
    %v3733 = vunpack.c.h.b16 %v827
    %v3734 = vunpack.c.l.b16 %v828
    %v3735 = vunpack.c.h.b16 %v828
    %v3736 = vunpack.c.l.b16 %v829
    %v3737 = vunpack.c.h.b16 %v829
    %v3738 = vunpack.c.l.b16 %v830
    %v3739 = vunpack.c.h.b16 %v830
    %v3740 = vunpack.c.l.b16 %v831
    %v3741 = vunpack.c.h.b16 %v831
    %v3742 = vunpack.c.l.b16 %v832
    %v3743 = vunpack.c.h.b16 %v832
    %v3744 = vunpack.c.l.b16 %v833
    %v3745 = vunpack.c.h.b16 %v833
    %v3746 = vunpack.c.l.b16 %v834
    %v3747 = vunpack.c.h.b16 %v834
    %v3748 = vunpack.c.l.b16 %v835
    %v3749 = vunpack.c.h.b16 %v835
    %v3750 = vunpack.c.l.b16 %v836
    %v3751 = vunpack.c.h.b16 %v836
    %v3752 = vunpack.c.l.b16 %v837
    %v3753 = vunpack.c.h.b16 %v837
    %v3754 = vunpack.c.l.b16 %v838
    %v3755 = vunpack.c.h.b16 %v838
    %v3756 = vunpack.c.l.b16 %v839
    %v3757 = vunpack.c.h.b16 %v839
    %v3758 = vunpack.c.l.b16 %v840
    %v3759 = vunpack.c.h.b16 %v840
    %v3760 = vunpack.c.l.b16 %v841
    %v3761 = vunpack.c.h.b16 %v841
    %v3762 = vunpack.c.l.b16 %v842
    %v3763 = vunpack.c.h.b16 %v842
    %v3764 = vunpack.c.l.b16 %v843
    %v3765 = vunpack.c.h.b16 %v843
    %v3766 = vunpack.c.l.b16 %v844
    %v3767 = vunpack.c.h.b16 %v844
    %v3768 = vunpack.c.l.b16 %v845
    %v3769 = vunpack.c.h.b16 %v845
    %v3770 = vunpack.c.l.b16 %v846
    %v3771 = vunpack.c.h.b16 %v846
    %v3772 = vunpack.c.l.b16 %v847
    %v3773 = vunpack.c.h.b16 %v847
    %v3774 = vunpack.c.l.b16 %v848
    %v3775 = vunpack.c.h.b16 %v848
    %v3776 = vunpack.c.l.b16 %v849
    %v3777 = vunpack.c.h.b16 %v849
    %v3778 = vunpack.c.l.b16 %v850
    %v3779 = vunpack.c.h.b16 %v850
    %v3780 = vunpack.c.l.b16 %v851
    %v3781 = vunpack.c.h.b16 %v851
    %v3782 = vunpack.c.l.b16 %v852
    %v3783 = vunpack.c.h.b16 %v852
    %v3784 = vunpack.c.l.b16 %v853
    %v3785 = vunpack.c.h.b16 %v853
    %v3786 = vunpack.c.l.b16 %v854
    %v3787 = vunpack.c.h.b16 %v854
    %v3788 = vunpack.c.l.b16 %v855
    %v3789 = vunpack.c.h.b16 %v855
    %v3790 = vunpack.c.l.b16 %v856
    %v3791 = vunpack.c.h.b16 %v856
    %v3792 = vunpack.c.l.b16 %v857
    %v3793 = vunpack.c.h.b16 %v857
    %v3794 = vunpack.c.l.b16 %v858
    %v3795 = vunpack.c.h.b16 %v858
    %v3796 = vunpack.c.l.b16 %v859
    %v3797 = vunpack.c.h.b16 %v859
    %v3798 = vunpack.c.l.b16 %v860
    %v3799 = vunpack.c.h.b16 %v860
    %v3800 = vunpack.c.l.b16 %v861
    %v3801 = vunpack.c.h.b16 %v861
    %v3802 = vunpack.c.l.b16 %v862
    %v3803 = vunpack.c.h.b16 %v862
    %v3804 = vunpack.c.l.b16 %v863
    %v3805 = vunpack.c.h.b16 %v863
    %v3806 = vunpack.c.l.b16 %v864
    %v3807 = vunpack.c.h.b16 %v864
    %v3808 = vunpack.c.l.b16 %v865
    %v3809 = vunpack.c.h.b16 %v865
    %v3810 = vunpack.c.l.b16 %v866
    %v3811 = vunpack.c.h.b16 %v866
    %v3812 = vunpack.c.l.b16 %v867
    %v3813 = vunpack.c.h.b16 %v867
    %v3814 = vunpack.c.l.b16 %v868
    %v3815 = vunpack.c.h.b16 %v868
    %v3816 = vunpack.c.l.b16 %v869
    %v3817 = vunpack.c.h.b16 %v869
    %v3818 = vunpack.c.l.b16 %v870
    %v3819 = vunpack.c.h.b16 %v870
    %v3820 = vunpack.c.l.b16 %v871
    %v3821 = vunpack.c.h.b16 %v871
    %v3822 = vunpack.c.l.b16 %v872
    %v3823 = vunpack.c.h.b16 %v872
    %v3824 = vunpack.c.l.b16 %v873
    %v3825 = vunpack.c.h.b16 %v873
    %v3826 = vunpack.c.l.b16 %v874
    %v3827 = vunpack.c.h.b16 %v874
    %v3828 = vunpack.c.l.b16 %v875
    %v3829 = vunpack.c.h.b16 %v875
    %v3830 = vunpack.c.l.b16 %v876
    %v3831 = vunpack.c.h.b16 %v876
    %v3832 = vunpack.c.l.b16 %v877
    %v3833 = vunpack.c.h.b16 %v877
    %v3834 = vunpack.c.l.b16 %v878
    %v3835 = vunpack.c.h.b16 %v878
    %v3836 = vunpack.c.l.b16 %v879
    %v3837 = vunpack.c.h.b16 %v879
    %v3838 = vunpack.c.l.b16 %v880
    %v3839 = vunpack.c.h.b16 %v880
    %v3840 = vunpack.c.l.b16 %v881
    %v3841 = vunpack.c.h.b16 %v881
    %v3842 = vunpack.c.l.b16 %v882
    %v3843 = vunpack.c.h.b16 %v882
    %v3844 = vunpack.c.l.b16 %v883
    %v3845 = vunpack.c.h.b16 %v883
    %v3846 = vunpack.c.l.b16 %v884
    %v3847 = vunpack.c.h.b16 %v884
    %v3848 = vunpack.c.l.b16 %v885
    %v3849 = vunpack.c.h.b16 %v885
    %v3850 = vunpack.c.l.b16 %v886
    %v3851 = vunpack.c.h.b16 %v886
    %v3852 = vunpack.c.l.b16 %v887
    %v3853 = vunpack.c.h.b16 %v887
    %v3854 = vunpack.c.l.b16 %v888
    %v3855 = vunpack.c.h.b16 %v888
    %v3856 = vunpack.c.l.b16 %v889
    %v3857 = vunpack.c.h.b16 %v889
    %v3858 = vunpack.c.l.b16 %v890
    %v3859 = vunpack.c.h.b16 %v890
    %v3860 = vunpack.c.l.b16 %v891
    %v3861 = vunpack.c.h.b16 %v891
    %v3862 = vunpack.c.l.b16 %v892
    %v3863 = vunpack.c.h.b16 %v892
    %v3864 = vunpack.c.l.b16 %v893
    %v3865 = vunpack.c.h.b16 %v893
    %v3866 = vunpack.c.l.b16 %v894
    %v3867 = vunpack.c.h.b16 %v894
    %v3868 = vunpack.c.l.b16 %v895
    %v3869 = vunpack.c.h.b16 %v895
    %v3870 = vunpack.c.l.b16 %v896
    %v3871 = vunpack.c.h.b16 %v896
    %v3872 = vunpack.c.l.b16 %v897
    %v3873 = vunpack.c.h.b16 %v897
    %v3874 = vunpack.c.l.b16 %v898
    %v3875 = vunpack.c.h.b16 %v898
    %v3876 = vunpack.c.l.b16 %v899
    %v3877 = vunpack.c.h.b16 %v899
    %v3878 = vunpack.c.l.b16 %v900
    %v3879 = vunpack.c.h.b16 %v900
    %v3880 = vunpack.c.l.b16 %v901
    %v3881 = vunpack.c.h.b16 %v901
    %v3882 = vunpack.c.l.b16 %v902
    %v3883 = vunpack.c.h.b16 %v902
    %v3884 = vunpack.c.l.b16 %v903
    %v3885 = vunpack.c.h.b16 %v903
    %v3886 = vunpack.c.l.b16 %v904
    %v3887 = vunpack.c.h.b16 %v904
    %v3888 = vunpack.c.l.b16 %v905
    %v3889 = vunpack.c.h.b16 %v905
    %v3890 = vunpack.c.l.b16 %v906
    %v3891 = vunpack.c.h.b16 %v906
    %v3892 = vunpack.c.l.b16 %v907
    %v3893 = vunpack.c.h.b16 %v907
    %v3894 = vunpack.c.l.b16 %v908
    %v3895 = vunpack.c.h.b16 %v908
    %v3896 = vunpack.c.l.b16 %v909
    %v3897 = vunpack.c.h.b16 %v909
    %v3898 = vunpack.c.l.b16 %v910
    %v3899 = vunpack.c.h.b16 %v910
    %v3900 = vunpack.c.l.b16 %v911
    %v3901 = vunpack.c.h.b16 %v911
    %v3902 = vunpack.c.l.b16 %v912
    %v3903 = vunpack.c.h.b16 %v912
    %v3904 = vunpack.c.l.b16 %v913
    %v3905 = vunpack.c.h.b16 %v913
    %v3906 = vunpack.c.l.b16 %v914
    %v3907 = vunpack.c.h.b16 %v914
    %v3908 = vunpack.c.l.b16 %v915
    %v3909 = vunpack.c.h.b16 %v915
    %v3910 = vunpack.c.l.b16 %v916
    %v3911 = vunpack.c.h.b16 %v916
    %v3912 = vunpack.c.l.b16 %v917
    %v3913 = vunpack.c.h.b16 %v917
    %v3914 = vunpack.c.l.b16 %v918
    %v3915 = vunpack.c.h.b16 %v918
    %v3916 = vunpack.c.l.b16 %v919
    %v3917 = vunpack.c.h.b16 %v919
    %v3918 = vunpack.c.l.b16 %v920
    %v3919 = vunpack.c.h.b16 %v920
    %v3920 = vunpack.c.l.b16 %v921
    %v3921 = vunpack.c.h.b16 %v921
    %v3922 = vunpack.c.l.b16 %v922
    %v3923 = vunpack.c.h.b16 %v922
    %v3924 = vunpack.c.l.b16 %v923
    %v3925 = vunpack.c.h.b16 %v923
    %v3926 = vunpack.c.l.b16 %v924
    %v3927 = vunpack.c.h.b16 %v924
    %v3928 = vunpack.c.l.b16 %v925
    %v3929 = vunpack.c.h.b16 %v925
    %v3930 = vunpack.c.l.b16 %v926
    %v3931 = vunpack.c.h.b16 %v926
    %v3932 = vunpack.c.l.b16 %v927
    %v3933 = vunpack.c.h.b16 %v927
    %v3934 = vunpack.c.l.b16 %v928
    %v3935 = vunpack.c.h.b16 %v928
    %v3936 = vunpack.c.l.b16 %v929
    %v3937 = vunpack.c.h.b16 %v929
    %v3938 = vunpack.c.l.b16 %v930
    %v3939 = vunpack.c.h.b16 %v930
    %v3940 = vunpack.c.l.b16 %v931
    %v3941 = vunpack.c.h.b16 %v931
    %v3942 = vunpack.c.l.b16 %v932
    %v3943 = vunpack.c.h.b16 %v932
    %v3944 = vunpack.c.l.b16 %v933
    %v3945 = vunpack.c.h.b16 %v933
    %v3946 = vunpack.c.l.b16 %v934
    %v3947 = vunpack.c.h.b16 %v934
    %v3948 = vunpack.c.l.b16 %v935
    %v3949 = vunpack.c.h.b16 %v935
    %v3950 = vunpack.c.l.b16 %v936
    %v3951 = vunpack.c.h.b16 %v936
    %v3952 = vunpack.c.l.b16 %v937
    %v3953 = vunpack.c.h.b16 %v937
    %v3954 = vunpack.c.l.b16 %v938
    %v3955 = vunpack.c.h.b16 %v938
    %v3956 = vunpack.c.l.b16 %v939
    %v3957 = vunpack.c.h.b16 %v939
    %v3958 = vunpack.c.l.b16 %v940
    %v3959 = vunpack.c.h.b16 %v940
    %v3960 = vunpack.c.l.b16 %v941
    %v3961 = vunpack.c.h.b16 %v941
    %v3962 = vunpack.c.l.b16 %v942
    %v3963 = vunpack.c.h.b16 %v942
    %v3964 = vunpack.c.l.b16 %v943
    %v3965 = vunpack.c.h.b16 %v943
    %v3966 = vunpack.c.l.b16 %v944
    %v3967 = vunpack.c.h.b16 %v944
    %v3968 = vunpack.c.l.b16 %v945
    %v3969 = vunpack.c.h.b16 %v945
    %v3970 = vunpack.c.l.b16 %v946
    %v3971 = vunpack.c.h.b16 %v946
    %v3972 = vunpack.c.l.b16 %v947
    %v3973 = vunpack.c.h.b16 %v947
    %v3974 = vunpack.c.l.b16 %v948
    %v3975 = vunpack.c.h.b16 %v948
    %v3976 = vunpack.c.l.b16 %v949
    %v3977 = vunpack.c.h.b16 %v949
    %v3978 = vunpack.c.l.b16 %v950
    %v3979 = vunpack.c.h.b16 %v950
    %v3980 = vunpack.c.l.b16 %v951
    %v3981 = vunpack.c.h.b16 %v951
    %v3982 = vunpack.c.l.b16 %v952
    %v3983 = vunpack.c.h.b16 %v952
    %v3984 = vunpack.c.l.b16 %v953
    %v3985 = vunpack.c.h.b16 %v953
    %v3986 = vunpack.c.l.b16 %v954
    %v3987 = vunpack.c.h.b16 %v954
    %v3988 = vunpack.c.l.b16 %v955
    %v3989 = vunpack.c.h.b16 %v955
    %v3990 = vunpack.c.l.b16 %v956
    %v3991 = vunpack.c.h.b16 %v956
    %v3992 = vunpack.c.l.b16 %v957
    %v3993 = vunpack.c.h.b16 %v957
    %v3994 = vunpack.c.l.b16 %v958
    %v3995 = vunpack.c.h.b16 %v958
    %v3996 = vunpack.c.l.b16 %v959
    %v3997 = vunpack.c.h.b16 %v959
    %v3998 = vunpack.c.l.b16 %v960
    %v3999 = vunpack.c.h.b16 %v960
    %v4000 = vunpack.c.l.b16 %v961
    %v4001 = vunpack.c.h.b16 %v961
    %v4002 = vunpack.c.l.b16 %v962
    %v4003 = vunpack.c.h.b16 %v962
    %v4004 = vunpack.c.l.b16 %v963
    %v4005 = vunpack.c.h.b16 %v963
    %v4006 = vunpack.c.l.b16 %v964
    %v4007 = vunpack.c.h.b16 %v964
    %v4008 = vunpack.c.l.b16 %v965
    %v4009 = vunpack.c.h.b16 %v965
    %v4010 = vunpack.c.l.b16 %v966
    %v4011 = vunpack.c.h.b16 %v966
    %v4012 = vunpack.c.l.b16 %v967
    %v4013 = vunpack.c.h.b16 %v967
    %v4014 = vunpack.c.l.b16 %v968
    %v4015 = vunpack.c.h.b16 %v968
    %v4016 = vunpack.c.l.b16 %v969
    %v4017 = vunpack.c.h.b16 %v969
    %v4018 = vunpack.c.l.b16 %v970
    %v4019 = vunpack.c.h.b16 %v970
    %v4020 = vunpack.c.l.b16 %v971
    %v4021 = vunpack.c.h.b16 %v971
    %v4022 = vunpack.c.l.b16 %v972
    %v4023 = vunpack.c.h.b16 %v972
    %v4024 = vunpack.c.l.b16 %v973
    %v4025 = vunpack.c.h.b16 %v973
    %v4026 = vunpack.c.l.b16 %v974
    %v4027 = vunpack.c.h.b16 %v974
    %v4028 = vunpack.c.l.b16 %v975
    %v4029 = vunpack.c.h.b16 %v975
    %v4030 = vunpack.c.l.b16 %v976
    %v4031 = vunpack.c.h.b16 %v976
    %v4032 = vunpack.c.l.b16 %v977
    %v4033 = vunpack.c.h.b16 %v977
    %v4034 = vunpack.c.l.b16 %v978
    %v4035 = vunpack.c.h.b16 %v978
    %v4036 = vunpack.c.l.b16 %v979
    %v4037 = vunpack.c.h.b16 %v979
    %v4038 = vunpack.c.l.b16 %v980
    %v4039 = vunpack.c.h.b16 %v980
    %v4040 = vunpack.c.l.b16 %v981
    %v4041 = vunpack.c.h.b16 %v981
    %v4042 = vunpack.c.l.b16 %v982
    %v4043 = vunpack.c.h.b16 %v982
    %v4044 = vunpack.c.l.b16 %v983
    %v4045 = vunpack.c.h.b16 %v983
    %v4046 = vunpack.c.l.b16 %v984
    %v4047 = vunpack.c.h.b16 %v984
    %v4048 = vunpack.c.l.b16 %v985
    %v4049 = vunpack.c.h.b16 %v985
    %v4050 = vunpack.c.l.b16 %v986
    %v4051 = vunpack.c.h.b16 %v986
    %v4052 = vunpack.c.l.b16 %v987
    %v4053 = vunpack.c.h.b16 %v987
    %v4054 = vunpack.c.l.b16 %v988
    %v4055 = vunpack.c.h.b16 %v988
    %v4056 = vunpack.c.l.b16 %v989
    %v4057 = vunpack.c.h.b16 %v989
    %v4058 = vunpack.c.l.b16 %v990
    %v4059 = vunpack.c.h.b16 %v990
    %v4060 = vunpack.c.l.b16 %v991
    %v4061 = vunpack.c.h.b16 %v991
    %v4062 = vunpack.c.l.b16 %v992
    %v4063 = vunpack.c.h.b16 %v992
    %v4064 = vunpack.c.l.b16 %v993
    %v4065 = vunpack.c.h.b16 %v993
    %v4066 = vunpack.c.l.b16 %v994
    %v4067 = vunpack.c.h.b16 %v994
    %v4068 = vunpack.c.l.b16 %v995
    %v4069 = vunpack.c.h.b16 %v995
    %v4070 = vunpack.c.l.b16 %v996
    %v4071 = vunpack.c.h.b16 %v996
    %v4072 = vunpack.c.l.b16 %v997
    %v4073 = vunpack.c.h.b16 %v997
    %v4074 = vunpack.c.l.b16 %v998
    %v4075 = vunpack.c.h.b16 %v998
    %v4076 = vunpack.c.l.b16 %v999
    %v4077 = vunpack.c.h.b16 %v999
    %v4078 = vunpack.c.l.b16 %v1000
    %v4079 = vunpack.c.h.b16 %v1000
    %v4080 = vunpack.c.l.b16 %v1001
    %v4081 = vunpack.c.h.b16 %v1001
    %v4082 = vunpack.c.l.b16 %v1002
    %v4083 = vunpack.c.h.b16 %v1002
    %v4084 = vunpack.c.l.b16 %v1003
    %v4085 = vunpack.c.h.b16 %v1003
    %v4086 = vunpack.c.l.b16 %v1004
    %v4087 = vunpack.c.h.b16 %v1004
    %v4088 = vunpack.c.l.b16 %v1005
    %v4089 = vunpack.c.h.b16 %v1005
    %v4090 = vunpack.c.l.b16 %v1006
    %v4091 = vunpack.c.h.b16 %v1006
    %v4092 = vunpack.c.l.b16 %v1007
    %v4093 = vunpack.c.h.b16 %v1007
    %v4094 = vunpack.c.l.b16 %v1008
    %v4095 = vunpack.c.h.b16 %v1008
    %v4096 = vunpack.c.l.b16 %v1009
    %v4097 = vunpack.c.h.b16 %v1009
    %v4098 = vunpack.c.l.b16 %v1010
    %v4099 = vunpack.c.h.b16 %v1010
    %v4100 = vunpack.c.l.b16 %v1011
    %v4101 = vunpack.c.h.b16 %v1011
    %v4102 = vunpack.c.l.b16 %v1012
    %v4103 = vunpack.c.h.b16 %v1012
    %v4104 = vunpack.c.l.b16 %v1013
    %v4105 = vunpack.c.h.b16 %v1013
    %v4106 = vunpack.c.l.b16 %v1014
    %v4107 = vunpack.c.h.b16 %v1014
    %v4108 = vunpack.c.l.b16 %v1015
    %v4109 = vunpack.c.h.b16 %v1015
    %v4110 = vunpack.c.l.b16 %v1016
    %v4111 = vunpack.c.h.b16 %v1016
    %v4112 = vunpack.c.l.b16 %v1017
    %v4113 = vunpack.c.h.b16 %v1017
    %v4114 = vunpack.c.l.b16 %v1018
    %v4115 = vunpack.c.h.b16 %v1018
    %v4116 = vunpack.c.l.b16 %v1019
    %v4117 = vunpack.c.h.b16 %v1019
    %v4118 = vunpack.c.l.b16 %v1020
    %v4119 = vunpack.c.h.b16 %v1020
    %v4120 = vunpack.c.l.b16 %v1021
    %v4121 = vunpack.c.h.b16 %v1021
    %v4122 = vunpack.c.l.b16 %v1022
    %v4123 = vunpack.c.h.b16 %v1022
    %v4124 = vunpack.c.l.b16 %v1023
    %v4125 = vunpack.c.h.b16 %v1023
    %v4126 = vunpack.c.l.b16 %v1024
    %v4127 = vunpack.c.h.b16 %v1024
    %v4128 = vunpack.c.l.b16 %v1025
    %v4129 = vunpack.c.h.b16 %v1025
    %v4130 = vunpack.c.l.b16 %v1026
    %v4131 = vunpack.c.h.b16 %v1026
    %v4132 = vunpack.c.l.b16 %v1027
    %v4133 = vunpack.c.h.b16 %v1027
    %v4134 = vunpack.c.l.b16 %v1028
    %v4135 = vunpack.c.h.b16 %v1028
    %v4136 = vunpack.c.l.b16 %v1029
    %v4137 = vunpack.c.h.b16 %v1029
    %v4138 = vunpack.c.l.b16 %v1030
    %v4139 = vunpack.c.h.b16 %v1030
    %v4140 = vunpack.c.l.b16 %v1031
    %v4141 = vunpack.c.h.b16 %v1031
    %v4142 = vunpack.c.l.b16 %v1032
    %v4143 = vunpack.c.h.b16 %v1032
    %v4144 = vunpack.c.l.b16 %v1033
    %v4145 = vunpack.c.h.b16 %v1033
    %v4146 = vunpack.c.l.b16 %v1034
    %v4147 = vunpack.c.h.b16 %v1034
    %v4148 = vunpack.c.l.b16 %v1035
    %v4149 = vunpack.c.h.b16 %v1035
    %v4150 = vunpack.c.l.b16 %v1036
    %v4151 = vunpack.c.h.b16 %v1036
    %v4152 = vunpack.c.l.b16 %v1037
    %v4153 = vunpack.c.h.b16 %v1037
    %v4154 = vunpack.c.l.b16 %v1038
    %v4155 = vunpack.c.h.b16 %v1038
    %v4156 = vunpack.c.l.b16 %v1039
    %v4157 = vunpack.c.h.b16 %v1039
    %v4158 = vunpack.c.l.b16 %v1040
    %v4159 = vunpack.c.h.b16 %v1040
    %v4160 = vunpack.c.l.b16 %v1041
    %v4161 = vunpack.c.h.b16 %v1041
    %v4162 = vunpack.c.l.b16 %v1042
    %v4163 = vunpack.c.h.b16 %v1042
    %v4164 = vunpack.c.l.b16 %v1043
    %v4165 = vunpack.c.h.b16 %v1043
    %v4166 = vunpack.c.l.b16 %v1044
    %v4167 = vunpack.c.h.b16 %v1044
    %v4168 = vunpack.c.l.b16 %v1045
    %v4169 = vunpack.c.h.b16 %v1045
    %v4170 = vunpack.c.l.b16 %v1046
    %v4171 = vunpack.c.h.b16 %v1046
    %v4172 = vunpack.c.l.b16 %v1047
    %v4173 = vunpack.c.h.b16 %v1047
    %v4174 = vunpack.c.l.b16 %v1048
    %v4175 = vunpack.c.h.b16 %v1048
    %v4176 = vunpack.c.l.b16 %v1049
    %v4177 = vunpack.c.h.b16 %v1049
    %v4178 = vunpack.c.l.b16 %v1050
    %v4179 = vunpack.c.h.b16 %v1050
    %v4180 = vunpack.c.l.b16 %v1051
    %v4181 = vunpack.c.h.b16 %v1051
    %v4182 = vunpack.c.l.b16 %v1052
    %v4183 = vunpack.c.h.b16 %v1052
    %v4184 = vunpack.c.l.b16 %v1053
    %v4185 = vunpack.c.h.b16 %v1053
    %v4186 = vunpack.c.l.b16 %v1054
    %v4187 = vunpack.c.h.b16 %v1054
    %v4188 = vunpack.c.l.b16 %v1055
    %v4189 = vunpack.c.h.b16 %v1055
    %v4190 = vunpack.c.l.b16 %v1056
    %v4191 = vunpack.c.h.b16 %v1056
    %v4192 = vunpack.c.l.b16 %v1057
    %v4193 = vunpack.c.h.b16 %v1057
    %v4194 = vunpack.c.l.b16 %v1058
    %v4195 = vunpack.c.h.b16 %v1058
    %v4196 = vunpack.c.l.b16 %v1059
    %v4197 = vunpack.c.h.b16 %v1059
    %v4198 = vunpack.c.l.b16 %v1060
    %v4199 = vunpack.c.h.b16 %v1060
    %v4200 = vunpack.c.l.b16 %v1061
    %v4201 = vunpack.c.h.b16 %v1061
    %v4202 = vunpack.c.l.b16 %v1062
    %v4203 = vunpack.c.h.b16 %v1062
    %v4204 = vunpack.c.l.b16 %v1063
    %v4205 = vunpack.c.h.b16 %v1063
    %v4206 = vunpack.c.l.b16 %v1064
    %v4207 = vunpack.c.h.b16 %v1064
    %v4208 = vunpack.c.l.b16 %v1065
    %v4209 = vunpack.c.h.b16 %v1065
    %v4210 = vunpack.c.l.b16 %v1066
    %v4211 = vunpack.c.h.b16 %v1066
    %v4212 = vunpack.c.l.b16 %v1067
    %v4213 = vunpack.c.h.b16 %v1067
    %v4214 = vunpack.c.l.b16 %v1068
    %v4215 = vunpack.c.h.b16 %v1068
    %v4216 = vunpack.c.l.b16 %v1069
    %v4217 = vunpack.c.h.b16 %v1069
    %v4218 = vunpack.c.l.b16 %v1070
    %v4219 = vunpack.c.h.b16 %v1070
    %v4220 = vunpack.c.l.b16 %v1071
    %v4221 = vunpack.c.h.b16 %v1071
    %v4222 = vunpack.c.l.b16 %v1072
    %v4223 = vunpack.c.h.b16 %v1072
    %v4224 = vunpack.c.l.b16 %v1073
    %v4225 = vunpack.c.h.b16 %v1073
    %v4226 = vunpack.c.l.b16 %v1074
    %v4227 = vunpack.c.h.b16 %v1074
    %v4228 = vunpack.c.l.b16 %v1075
    %v4229 = vunpack.c.h.b16 %v1075
    %v4230 = vunpack.c.l.b16 %v1076
    %v4231 = vunpack.c.h.b16 %v1076
    %v4232 = vunpack.c.l.b16 %v1077
    %v4233 = vunpack.c.h.b16 %v1077
    %v4234 = vunpack.c.l.b16 %v1078
    %v4235 = vunpack.c.h.b16 %v1078
    %v4236 = vunpack.c.l.b16 %v1079
    %v4237 = vunpack.c.h.b16 %v1079
    %v4238 = vunpack.c.l.b16 %v1080
    %v4239 = vunpack.c.h.b16 %v1080
    %v4240 = vunpack.c.l.b16 %v1081
    %v4241 = vunpack.c.h.b16 %v1081
    %v4242 = vunpack.c.l.b16 %v1082
    %v4243 = vunpack.c.h.b16 %v1082
    %v4244 = vunpack.c.l.b16 %v1083
    %v4245 = vunpack.c.h.b16 %v1083
    %v4246 = vunpack.c.l.b16 %v1084
    %v4247 = vunpack.c.h.b16 %v1084
    %v4248 = vunpack.c.l.b16 %v1085
    %v4249 = vunpack.c.h.b16 %v1085
    %v4250 = vunpack.c.l.b16 %v1086
    %v4251 = vunpack.c.h.b16 %v1086
    %v4252 = vunpack.c.l.b16 %v1087
    %v4253 = vunpack.c.h.b16 %v1087
    %v4254 = vunpack.c.l.b16 %v1088
    %v4255 = vunpack.c.h.b16 %v1088
    %v4256 = vunpack.c.l.b16 %v1089
    %v4257 = vunpack.c.h.b16 %v1089
    %v4258 = vunpack.c.l.b16 %v1090
    %v4259 = vunpack.c.h.b16 %v1090
    %v4260 = vunpack.c.l.b16 %v1091
    %v4261 = vunpack.c.h.b16 %v1091
    %v4262 = vpack.c.b16 %v2222, %v2214
    %v4263 = vpack.c.b16 %v2223, %v2215
    %v4264 = vpack.c.b16 %v2224, %v2216
    %v4265 = vpack.c.b16 %v2225, %v2217
    %v4266 = vpack.c.b16 %v2226, %v2218
    %v4267 = vpack.c.b16 %v2227, %v2219
    %v4268 = vpack.c.b16 %v2228, %v2220
    %v4269 = vpack.c.b16 %v2229, %v2221
    %v4270 = vpack.c.b16 %v2238, %v2230
    %v4271 = vpack.c.b16 %v2239, %v2231
    %v4272 = vpack.c.b16 %v2240, %v2232
    %v4273 = vpack.c.b16 %v2241, %v2233
    %v4274 = vpack.c.b16 %v2242, %v2234
    %v4275 = vpack.c.b16 %v2243, %v2235
    %v4276 = vpack.c.b16 %v2244, %v2236
    %v4277 = vpack.c.b16 %v2245, %v2237
    %v4278 = vpack.c.b16 %v2254, %v2246
    %v4279 = vpack.c.b16 %v2255, %v2247
    %v4280 = vpack.c.b16 %v2256, %v2248
    %v4281 = vpack.c.b16 %v2257, %v2249
    %v4282 = vpack.c.b16 %v2258, %v2250
    %v4283 = vpack.c.b16 %v2259, %v2251
    %v4284 = vpack.c.b16 %v2260, %v2252
    %v4285 = vpack.c.b16 %v2261, %v2253
    %v4286 = vpack.c.b16 %v2270, %v2262
    %v4287 = vpack.c.b16 %v2271, %v2263
    %v4288 = vpack.c.b16 %v2272, %v2264
    %v4289 = vpack.c.b16 %v2273, %v2265
    %v4290 = vpack.c.b16 %v2274, %v2266
    %v4291 = vpack.c.b16 %v2275, %v2267
    %v4292 = vpack.c.b16 %v2276, %v2268
    %v4293 = vpack.c.b16 %v2277, %v2269
    %v4294 = vpack.c.b16 %v2286, %v2278
    %v4295 = vpack.c.b16 %v2287, %v2279
    %v4296 = vpack.c.b16 %v2288, %v2280
    %v4297 = vpack.c.b16 %v2289, %v2281
    %v4298 = vpack.c.b16 %v2290, %v2282
    %v4299 = vpack.c.b16 %v2291, %v2283
    %v4300 = vpack.c.b16 %v2292, %v2284
    %v4301 = vpack.c.b16 %v2293, %v2285
    %v4302 = vpack.c.b16 %v2302, %v2294
    %v4303 = vpack.c.b16 %v2303, %v2295
    %v4304 = vpack.c.b16 %v2304, %v2296
    %v4305 = vpack.c.b16 %v2305, %v2297
    %v4306 = vpack.c.b16 %v2306, %v2298
    %v4307 = vpack.c.b16 %v2307, %v2299
    %v4308 = vpack.c.b16 %v2308, %v2300
    %v4309 = vpack.c.b16 %v2309, %v2301
    %v4310 = vpack.c.b16 %v2318, %v2310
    %v4311 = vpack.c.b16 %v2319, %v2311
    %v4312 = vpack.c.b16 %v2320, %v2312
    %v4313 = vpack.c.b16 %v2321, %v2313
    %v4314 = vpack.c.b16 %v2322, %v2314
    %v4315 = vpack.c.b16 %v2323, %v2315
    %v4316 = vpack.c.b16 %v2324, %v2316
    %v4317 = vpack.c.b16 %v2325, %v2317
    %v4318 = vpack.c.b16 %v2334, %v2326
    %v4319 = vpack.c.b16 %v2335, %v2327
    %v4320 = vpack.c.b16 %v2336, %v2328
    %v4321 = vpack.c.b16 %v2337, %v2329
    %v4322 = vpack.c.b16 %v2338, %v2330
    %v4323 = vpack.c.b16 %v2339, %v2331
    %v4324 = vpack.c.b16 %v2340, %v2332
    %v4325 = vpack.c.b16 %v2341, %v2333
    %v4326 = vpack.c.b16 %v2350, %v2342
    %v4327 = vpack.c.b16 %v2351, %v2343
    %v4328 = vpack.c.b16 %v2352, %v2344
    %v4329 = vpack.c.b16 %v2353, %v2345
    %v4330 = vpack.c.b16 %v2354, %v2346
    %v4331 = vpack.c.b16 %v2355, %v2347
    %v4332 = vpack.c.b16 %v2356, %v2348
    %v4333 = vpack.c.b16 %v2357, %v2349
    %v4334 = vpack.c.b16 %v2366, %v2358
    %v4335 = vpack.c.b16 %v2367, %v2359
    %v4336 = vpack.c.b16 %v2368, %v2360
    %v4337 = vpack.c.b16 %v2369, %v2361
    %v4338 = vpack.c.b16 %v2370, %v2362
    %v4339 = vpack.c.b16 %v2371, %v2363
    %v4340 = vpack.c.b16 %v2372, %v2364
    %v4341 = vpack.c.b16 %v2373, %v2365
    %v4342 = vpack.c.b16 %v2382, %v2374
    %v4343 = vpack.c.b16 %v2383, %v2375
    %v4344 = vpack.c.b16 %v2384, %v2376
    %v4345 = vpack.c.b16 %v2385, %v2377
    %v4346 = vpack.c.b16 %v2386, %v2378
    %v4347 = vpack.c.b16 %v2387, %v2379
    %v4348 = vpack.c.b16 %v2388, %v2380
    %v4349 = vpack.c.b16 %v2389, %v2381
    %v4350 = vpack.c.b16 %v2398, %v2390
    %v4351 = vpack.c.b16 %v2399, %v2391
    %v4352 = vpack.c.b16 %v2400, %v2392
    %v4353 = vpack.c.b16 %v2401, %v2393
    %v4354 = vpack.c.b16 %v2402, %v2394
    %v4355 = vpack.c.b16 %v2403, %v2395
    %v4356 = vpack.c.b16 %v2404, %v2396
    %v4357 = vpack.c.b16 %v2405, %v2397
    %v4358 = vpack.c.b16 %v2414, %v2406
    %v4359 = vpack.c.b16 %v2415, %v2407
    %v4360 = vpack.c.b16 %v2416, %v2408
    %v4361 = vpack.c.b16 %v2417, %v2409
    %v4362 = vpack.c.b16 %v2418, %v2410
    %v4363 = vpack.c.b16 %v2419, %v2411
    %v4364 = vpack.c.b16 %v2420, %v2412
    %v4365 = vpack.c.b16 %v2421, %v2413
    %v4366 = vpack.c.b16 %v2430, %v2422
    %v4367 = vpack.c.b16 %v2431, %v2423
    %v4368 = vpack.c.b16 %v2432, %v2424
    %v4369 = vpack.c.b16 %v2433, %v2425
    %v4370 = vpack.c.b16 %v2434, %v2426
    %v4371 = vpack.c.b16 %v2435, %v2427
    %v4372 = vpack.c.b16 %v2436, %v2428
    %v4373 = vpack.c.b16 %v2437, %v2429
    %v4374 = vpack.c.b16 %v2446, %v2438
    %v4375 = vpack.c.b16 %v2447, %v2439
    %v4376 = vpack.c.b16 %v2448, %v2440
    %v4377 = vpack.c.b16 %v2449, %v2441
    %v4378 = vpack.c.b16 %v2450, %v2442
    %v4379 = vpack.c.b16 %v2451, %v2443
    %v4380 = vpack.c.b16 %v2452, %v2444
    %v4381 = vpack.c.b16 %v2453, %v2445
    %v4382 = vpack.c.b16 %v2462, %v2454
    %v4383 = vpack.c.b16 %v2463, %v2455
    %v4384 = vpack.c.b16 %v2464, %v2456
    %v4385 = vpack.c.b16 %v2465, %v2457
    %v4386 = vpack.c.b16 %v2466, %v2458
    %v4387 = vpack.c.b16 %v2467, %v2459
    %v4388 = vpack.c.b16 %v2468, %v2460
    %v4389 = vpack.c.b16 %v2469, %v2461
    %v4390 = vpack.c.b16 %v2478, %v2470
    %v4391 = vpack.c.b16 %v2479, %v2471
    %v4392 = vpack.c.b16 %v2480, %v2472
    %v4393 = vpack.c.b16 %v2481, %v2473
    %v4394 = vpack.c.b16 %v2482, %v2474
    %v4395 = vpack.c.b16 %v2483, %v2475
    %v4396 = vpack.c.b16 %v2484, %v2476
    %v4397 = vpack.c.b16 %v2485, %v2477
    %v4398 = vpack.c.b16 %v2494, %v2486
    %v4399 = vpack.c.b16 %v2495, %v2487
    %v4400 = vpack.c.b16 %v2496, %v2488
    %v4401 = vpack.c.b16 %v2497, %v2489
    %v4402 = vpack.c.b16 %v2498, %v2490
    %v4403 = vpack.c.b16 %v2499, %v2491
    %v4404 = vpack.c.b16 %v2500, %v2492
    %v4405 = vpack.c.b16 %v2501, %v2493
    %v4406 = vpack.c.b16 %v2510, %v2502
    %v4407 = vpack.c.b16 %v2511, %v2503
    %v4408 = vpack.c.b16 %v2512, %v2504
    %v4409 = vpack.c.b16 %v2513, %v2505
    %v4410 = vpack.c.b16 %v2514, %v2506
    %v4411 = vpack.c.b16 %v2515, %v2507
    %v4412 = vpack.c.b16 %v2516, %v2508
    %v4413 = vpack.c.b16 %v2517, %v2509
    %v4414 = vpack.c.b16 %v2526, %v2518
    %v4415 = vpack.c.b16 %v2527, %v2519
    %v4416 = vpack.c.b16 %v2528, %v2520
    %v4417 = vpack.c.b16 %v2529, %v2521
    %v4418 = vpack.c.b16 %v2530, %v2522
    %v4419 = vpack.c.b16 %v2531, %v2523
    %v4420 = vpack.c.b16 %v2532, %v2524
    %v4421 = vpack.c.b16 %v2533, %v2525
    %v4422 = vpack.c.b16 %v2542, %v2534
    %v4423 = vpack.c.b16 %v2543, %v2535
    %v4424 = vpack.c.b16 %v2544, %v2536
    %v4425 = vpack.c.b16 %v2545, %v2537
    %v4426 = vpack.c.b16 %v2546, %v2538
    %v4427 = vpack.c.b16 %v2547, %v2539
    %v4428 = vpack.c.b16 %v2548, %v2540
    %v4429 = vpack.c.b16 %v2549, %v2541
    %v4430 = vpack.c.b16 %v2558, %v2550
    %v4431 = vpack.c.b16 %v2559, %v2551
    %v4432 = vpack.c.b16 %v2560, %v2552
    %v4433 = vpack.c.b16 %v2561, %v2553
    %v4434 = vpack.c.b16 %v2562, %v2554
    %v4435 = vpack.c.b16 %v2563, %v2555
    %v4436 = vpack.c.b16 %v2564, %v2556
    %v4437 = vpack.c.b16 %v2565, %v2557
    %v4438 = vpack.c.b16 %v2574, %v2566
    %v4439 = vpack.c.b16 %v2575, %v2567
    %v4440 = vpack.c.b16 %v2576, %v2568
    %v4441 = vpack.c.b16 %v2577, %v2569
    %v4442 = vpack.c.b16 %v2578, %v2570
    %v4443 = vpack.c.b16 %v2579, %v2571
    %v4444 = vpack.c.b16 %v2580, %v2572
    %v4445 = vpack.c.b16 %v2581, %v2573
    %v4446 = vpack.c.b16 %v2590, %v2582
    %v4447 = vpack.c.b16 %v2591, %v2583
    %v4448 = vpack.c.b16 %v2592, %v2584
    %v4449 = vpack.c.b16 %v2593, %v2585
    %v4450 = vpack.c.b16 %v2594, %v2586
    %v4451 = vpack.c.b16 %v2595, %v2587
    %v4452 = vpack.c.b16 %v2596, %v2588
    %v4453 = vpack.c.b16 %v2597, %v2589
    %v4454 = vpack.c.b16 %v2606, %v2598
    %v4455 = vpack.c.b16 %v2607, %v2599
    %v4456 = vpack.c.b16 %v2608, %v2600
    %v4457 = vpack.c.b16 %v2609, %v2601
    %v4458 = vpack.c.b16 %v2610, %v2602
    %v4459 = vpack.c.b16 %v2611, %v2603
    %v4460 = vpack.c.b16 %v2612, %v2604
    %v4461 = vpack.c.b16 %v2613, %v2605
    %v4462 = vpack.c.b16 %v2622, %v2614
    %v4463 = vpack.c.b16 %v2623, %v2615
    %v4464 = vpack.c.b16 %v2624, %v2616
    %v4465 = vpack.c.b16 %v2625, %v2617
    %v4466 = vpack.c.b16 %v2626, %v2618
    %v4467 = vpack.c.b16 %v2627, %v2619
    %v4468 = vpack.c.b16 %v2628, %v2620
    %v4469 = vpack.c.b16 %v2629, %v2621
    %v4470 = vpack.c.b16 %v2638, %v2630
    %v4471 = vpack.c.b16 %v2639, %v2631
    %v4472 = vpack.c.b16 %v2640, %v2632
    %v4473 = vpack.c.b16 %v2641, %v2633
    %v4474 = vpack.c.b16 %v2642, %v2634
    %v4475 = vpack.c.b16 %v2643, %v2635
    %v4476 = vpack.c.b16 %v2644, %v2636
    %v4477 = vpack.c.b16 %v2645, %v2637
    %v4478 = vpack.c.b16 %v2654, %v2646
    %v4479 = vpack.c.b16 %v2655, %v2647
    %v4480 = vpack.c.b16 %v2656, %v2648
    %v4481 = vpack.c.b16 %v2657, %v2649
    %v4482 = vpack.c.b16 %v2658, %v2650
    %v4483 = vpack.c.b16 %v2659, %v2651
    %v4484 = vpack.c.b16 %v2660, %v2652
    %v4485 = vpack.c.b16 %v2661, %v2653
    %v4486 = vpack.c.b16 %v2670, %v2662
    %v4487 = vpack.c.b16 %v2671, %v2663
    %v4488 = vpack.c.b16 %v2672, %v2664
    %v4489 = vpack.c.b16 %v2673, %v2665
    %v4490 = vpack.c.b16 %v2674, %v2666
    %v4491 = vpack.c.b16 %v2675, %v2667
    %v4492 = vpack.c.b16 %v2676, %v2668
    %v4493 = vpack.c.b16 %v2677, %v2669
    %v4494 = vpack.c.b16 %v2686, %v2678
    %v4495 = vpack.c.b16 %v2687, %v2679
    %v4496 = vpack.c.b16 %v2688, %v2680
    %v4497 = vpack.c.b16 %v2689, %v2681
    %v4498 = vpack.c.b16 %v2690, %v2682
    %v4499 = vpack.c.b16 %v2691, %v2683
    %v4500 = vpack.c.b16 %v2692, %v2684
    %v4501 = vpack.c.b16 %v2693, %v2685
    %v4502 = vpack.c.b16 %v2702, %v2694
    %v4503 = vpack.c.b16 %v2703, %v2695
    %v4504 = vpack.c.b16 %v2704, %v2696
    %v4505 = vpack.c.b16 %v2705, %v2697
    %v4506 = vpack.c.b16 %v2706, %v2698
    %v4507 = vpack.c.b16 %v2707, %v2699
    %v4508 = vpack.c.b16 %v2708, %v2700
    %v4509 = vpack.c.b16 %v2709, %v2701
    %v4510 = vpack.c.b16 %v2718, %v2710
    %v4511 = vpack.c.b16 %v2719, %v2711
    %v4512 = vpack.c.b16 %v2720, %v2712
    %v4513 = vpack.c.b16 %v2721, %v2713
    %v4514 = vpack.c.b16 %v2722, %v2714
    %v4515 = vpack.c.b16 %v2723, %v2715
    %v4516 = vpack.c.b16 %v2724, %v2716
    %v4517 = vpack.c.b16 %v2725, %v2717
    %v4518 = vpack.c.b16 %v2734, %v2726
    %v4519 = vpack.c.b16 %v2735, %v2727
    %v4520 = vpack.c.b16 %v2736, %v2728
    %v4521 = vpack.c.b16 %v2737, %v2729
    %v4522 = vpack.c.b16 %v2738, %v2730
    %v4523 = vpack.c.b16 %v2739, %v2731
    %v4524 = vpack.c.b16 %v2740, %v2732
    %v4525 = vpack.c.b16 %v2741, %v2733
    %v4526 = vpack.c.b16 %v2750, %v2742
    %v4527 = vpack.c.b16 %v2751, %v2743
    %v4528 = vpack.c.b16 %v2752, %v2744
    %v4529 = vpack.c.b16 %v2753, %v2745
    %v4530 = vpack.c.b16 %v2754, %v2746
    %v4531 = vpack.c.b16 %v2755, %v2747
    %v4532 = vpack.c.b16 %v2756, %v2748
    %v4533 = vpack.c.b16 %v2757, %v2749
    %v4534 = vpack.c.b16 %v2766, %v2758
    %v4535 = vpack.c.b16 %v2767, %v2759
    %v4536 = vpack.c.b16 %v2768, %v2760
    %v4537 = vpack.c.b16 %v2769, %v2761
    %v4538 = vpack.c.b16 %v2770, %v2762
    %v4539 = vpack.c.b16 %v2771, %v2763
    %v4540 = vpack.c.b16 %v2772, %v2764
    %v4541 = vpack.c.b16 %v2773, %v2765
    %v4542 = vpack.c.b16 %v2782, %v2774
    %v4543 = vpack.c.b16 %v2783, %v2775
    %v4544 = vpack.c.b16 %v2784, %v2776
    %v4545 = vpack.c.b16 %v2785, %v2777
    %v4546 = vpack.c.b16 %v2786, %v2778
    %v4547 = vpack.c.b16 %v2787, %v2779
    %v4548 = vpack.c.b16 %v2788, %v2780
    %v4549 = vpack.c.b16 %v2789, %v2781
    %v4550 = vpack.c.b16 %v2798, %v2790
    %v4551 = vpack.c.b16 %v2799, %v2791
    %v4552 = vpack.c.b16 %v2800, %v2792
    %v4553 = vpack.c.b16 %v2801, %v2793
    %v4554 = vpack.c.b16 %v2802, %v2794
    %v4555 = vpack.c.b16 %v2803, %v2795
    %v4556 = vpack.c.b16 %v2804, %v2796
    %v4557 = vpack.c.b16 %v2805, %v2797
    %v4558 = vpack.c.b16 %v2814, %v2806
    %v4559 = vpack.c.b16 %v2815, %v2807
    %v4560 = vpack.c.b16 %v2816, %v2808
    %v4561 = vpack.c.b16 %v2817, %v2809
    %v4562 = vpack.c.b16 %v2818, %v2810
    %v4563 = vpack.c.b16 %v2819, %v2811
    %v4564 = vpack.c.b16 %v2820, %v2812
    %v4565 = vpack.c.b16 %v2821, %v2813
    %v4566 = vpack.c.b16 %v2830, %v2822
    %v4567 = vpack.c.b16 %v2831, %v2823
    %v4568 = vpack.c.b16 %v2832, %v2824
    %v4569 = vpack.c.b16 %v2833, %v2825
    %v4570 = vpack.c.b16 %v2834, %v2826
    %v4571 = vpack.c.b16 %v2835, %v2827
    %v4572 = vpack.c.b16 %v2836, %v2828
    %v4573 = vpack.c.b16 %v2837, %v2829
    %v4574 = vpack.c.b16 %v2846, %v2838
    %v4575 = vpack.c.b16 %v2847, %v2839
    %v4576 = vpack.c.b16 %v2848, %v2840
    %v4577 = vpack.c.b16 %v2849, %v2841
    %v4578 = vpack.c.b16 %v2850, %v2842
    %v4579 = vpack.c.b16 %v2851, %v2843
    %v4580 = vpack.c.b16 %v2852, %v2844
    %v4581 = vpack.c.b16 %v2853, %v2845
    %v4582 = vpack.c.b16 %v2862, %v2854
    %v4583 = vpack.c.b16 %v2863, %v2855
    %v4584 = vpack.c.b16 %v2864, %v2856
    %v4585 = vpack.c.b16 %v2865, %v2857
    %v4586 = vpack.c.b16 %v2866, %v2858
    %v4587 = vpack.c.b16 %v2867, %v2859
    %v4588 = vpack.c.b16 %v2868, %v2860
    %v4589 = vpack.c.b16 %v2869, %v2861
    %v4590 = vpack.c.b16 %v2878, %v2870
    %v4591 = vpack.c.b16 %v2879, %v2871
    %v4592 = vpack.c.b16 %v2880, %v2872
    %v4593 = vpack.c.b16 %v2881, %v2873
    %v4594 = vpack.c.b16 %v2882, %v2874
    %v4595 = vpack.c.b16 %v2883, %v2875
    %v4596 = vpack.c.b16 %v2884, %v2876
    %v4597 = vpack.c.b16 %v2885, %v2877
    %v4598 = vpack.c.b16 %v2894, %v2886
    %v4599 = vpack.c.b16 %v2895, %v2887
    %v4600 = vpack.c.b16 %v2896, %v2888
    %v4601 = vpack.c.b16 %v2897, %v2889
    %v4602 = vpack.c.b16 %v2898, %v2890
    %v4603 = vpack.c.b16 %v2899, %v2891
    %v4604 = vpack.c.b16 %v2900, %v2892
    %v4605 = vpack.c.b16 %v2901, %v2893
    %v4606 = vpack.c.b16 %v2910, %v2902
    %v4607 = vpack.c.b16 %v2911, %v2903
    %v4608 = vpack.c.b16 %v2912, %v2904
    %v4609 = vpack.c.b16 %v2913, %v2905
    %v4610 = vpack.c.b16 %v2914, %v2906
    %v4611 = vpack.c.b16 %v2915, %v2907
    %v4612 = vpack.c.b16 %v2916, %v2908
    %v4613 = vpack.c.b16 %v2917, %v2909
    %v4614 = vpack.c.b16 %v2926, %v2918
    %v4615 = vpack.c.b16 %v2927, %v2919
    %v4616 = vpack.c.b16 %v2928, %v2920
    %v4617 = vpack.c.b16 %v2929, %v2921
    %v4618 = vpack.c.b16 %v2930, %v2922
    %v4619 = vpack.c.b16 %v2931, %v2923
    %v4620 = vpack.c.b16 %v2932, %v2924
    %v4621 = vpack.c.b16 %v2933, %v2925
    %v4622 = vpack.c.b16 %v2942, %v2934
    %v4623 = vpack.c.b16 %v2943, %v2935
    %v4624 = vpack.c.b16 %v2944, %v2936
    %v4625 = vpack.c.b16 %v2945, %v2937
    %v4626 = vpack.c.b16 %v2946, %v2938
    %v4627 = vpack.c.b16 %v2947, %v2939
    %v4628 = vpack.c.b16 %v2948, %v2940
    %v4629 = vpack.c.b16 %v2949, %v2941
    %v4630 = vpack.c.b16 %v2958, %v2950
    %v4631 = vpack.c.b16 %v2959, %v2951
    %v4632 = vpack.c.b16 %v2960, %v2952
    %v4633 = vpack.c.b16 %v2961, %v2953
    %v4634 = vpack.c.b16 %v2962, %v2954
    %v4635 = vpack.c.b16 %v2963, %v2955
    %v4636 = vpack.c.b16 %v2964, %v2956
    %v4637 = vpack.c.b16 %v2965, %v2957
    %v4638 = vpack.c.b16 %v2974, %v2966
    %v4639 = vpack.c.b16 %v2975, %v2967
    %v4640 = vpack.c.b16 %v2976, %v2968
    %v4641 = vpack.c.b16 %v2977, %v2969
    %v4642 = vpack.c.b16 %v2978, %v2970
    %v4643 = vpack.c.b16 %v2979, %v2971
    %v4644 = vpack.c.b16 %v2980, %v2972
    %v4645 = vpack.c.b16 %v2981, %v2973
    %v4646 = vpack.c.b16 %v2990, %v2982
    %v4647 = vpack.c.b16 %v2991, %v2983
    %v4648 = vpack.c.b16 %v2992, %v2984
    %v4649 = vpack.c.b16 %v2993, %v2985
    %v4650 = vpack.c.b16 %v2994, %v2986
    %v4651 = vpack.c.b16 %v2995, %v2987
    %v4652 = vpack.c.b16 %v2996, %v2988
    %v4653 = vpack.c.b16 %v2997, %v2989
    %v4654 = vpack.c.b16 %v3006, %v2998
    %v4655 = vpack.c.b16 %v3007, %v2999
    %v4656 = vpack.c.b16 %v3008, %v3000
    %v4657 = vpack.c.b16 %v3009, %v3001
    %v4658 = vpack.c.b16 %v3010, %v3002
    %v4659 = vpack.c.b16 %v3011, %v3003
    %v4660 = vpack.c.b16 %v3012, %v3004
    %v4661 = vpack.c.b16 %v3013, %v3005
    %v4662 = vpack.c.b16 %v3022, %v3014
    %v4663 = vpack.c.b16 %v3023, %v3015
    %v4664 = vpack.c.b16 %v3024, %v3016
    %v4665 = vpack.c.b16 %v3025, %v3017
    %v4666 = vpack.c.b16 %v3026, %v3018
    %v4667 = vpack.c.b16 %v3027, %v3019
    %v4668 = vpack.c.b16 %v3028, %v3020
    %v4669 = vpack.c.b16 %v3029, %v3021
    %v4670 = vpack.c.b16 %v3038, %v3030
    %v4671 = vpack.c.b16 %v3039, %v3031
    %v4672 = vpack.c.b16 %v3040, %v3032
    %v4673 = vpack.c.b16 %v3041, %v3033
    %v4674 = vpack.c.b16 %v3042, %v3034
    %v4675 = vpack.c.b16 %v3043, %v3035
    %v4676 = vpack.c.b16 %v3044, %v3036
    %v4677 = vpack.c.b16 %v3045, %v3037
    %v4678 = vpack.c.b16 %v3054, %v3046
    %v4679 = vpack.c.b16 %v3055, %v3047
    %v4680 = vpack.c.b16 %v3056, %v3048
    %v4681 = vpack.c.b16 %v3057, %v3049
    %v4682 = vpack.c.b16 %v3058, %v3050
    %v4683 = vpack.c.b16 %v3059, %v3051
    %v4684 = vpack.c.b16 %v3060, %v3052
    %v4685 = vpack.c.b16 %v3061, %v3053
    %v4686 = vpack.c.b16 %v3070, %v3062
    %v4687 = vpack.c.b16 %v3071, %v3063
    %v4688 = vpack.c.b16 %v3072, %v3064
    %v4689 = vpack.c.b16 %v3073, %v3065
    %v4690 = vpack.c.b16 %v3074, %v3066
    %v4691 = vpack.c.b16 %v3075, %v3067
    %v4692 = vpack.c.b16 %v3076, %v3068
    %v4693 = vpack.c.b16 %v3077, %v3069
    %v4694 = vpack.c.b16 %v3086, %v3078
    %v4695 = vpack.c.b16 %v3087, %v3079
    %v4696 = vpack.c.b16 %v3088, %v3080
    %v4697 = vpack.c.b16 %v3089, %v3081
    %v4698 = vpack.c.b16 %v3090, %v3082
    %v4699 = vpack.c.b16 %v3091, %v3083
    %v4700 = vpack.c.b16 %v3092, %v3084
    %v4701 = vpack.c.b16 %v3093, %v3085
    %v4702 = vpack.c.b16 %v3102, %v3094
    %v4703 = vpack.c.b16 %v3103, %v3095
    %v4704 = vpack.c.b16 %v3104, %v3096
    %v4705 = vpack.c.b16 %v3105, %v3097
    %v4706 = vpack.c.b16 %v3106, %v3098
    %v4707 = vpack.c.b16 %v3107, %v3099
    %v4708 = vpack.c.b16 %v3108, %v3100
    %v4709 = vpack.c.b16 %v3109, %v3101
    %v4710 = vpack.c.b16 %v3118, %v3110
    %v4711 = vpack.c.b16 %v3119, %v3111
    %v4712 = vpack.c.b16 %v3120, %v3112
    %v4713 = vpack.c.b16 %v3121, %v3113
    %v4714 = vpack.c.b16 %v3122, %v3114
    %v4715 = vpack.c.b16 %v3123, %v3115
    %v4716 = vpack.c.b16 %v3124, %v3116
    %v4717 = vpack.c.b16 %v3125, %v3117
    %v4718 = vpack.c.b16 %v3134, %v3126
    %v4719 = vpack.c.b16 %v3135, %v3127
    %v4720 = vpack.c.b16 %v3136, %v3128
    %v4721 = vpack.c.b16 %v3137, %v3129
    %v4722 = vpack.c.b16 %v3138, %v3130
    %v4723 = vpack.c.b16 %v3139, %v3131
    %v4724 = vpack.c.b16 %v3140, %v3132
    %v4725 = vpack.c.b16 %v3141, %v3133
    %v4726 = vpack.c.b16 %v3150, %v3142
    %v4727 = vpack.c.b16 %v3151, %v3143
    %v4728 = vpack.c.b16 %v3152, %v3144
    %v4729 = vpack.c.b16 %v3153, %v3145
    %v4730 = vpack.c.b16 %v3154, %v3146
    %v4731 = vpack.c.b16 %v3155, %v3147
    %v4732 = vpack.c.b16 %v3156, %v3148
    %v4733 = vpack.c.b16 %v3157, %v3149
    %v4734 = vpack.c.b16 %v3166, %v3158
    %v4735 = vpack.c.b16 %v3167, %v3159
    %v4736 = vpack.c.b16 %v3168, %v3160
    %v4737 = vpack.c.b16 %v3169, %v3161
    %v4738 = vpack.c.b16 %v3170, %v3162
    %v4739 = vpack.c.b16 %v3171, %v3163
    %v4740 = vpack.c.b16 %v3172, %v3164
    %v4741 = vpack.c.b16 %v3173, %v3165
    %v4742 = vpack.c.b16 %v3182, %v3174
    %v4743 = vpack.c.b16 %v3183, %v3175
    %v4744 = vpack.c.b16 %v3184, %v3176
    %v4745 = vpack.c.b16 %v3185, %v3177
    %v4746 = vpack.c.b16 %v3186, %v3178
    %v4747 = vpack.c.b16 %v3187, %v3179
    %v4748 = vpack.c.b16 %v3188, %v3180
    %v4749 = vpack.c.b16 %v3189, %v3181
    %v4750 = vpack.c.b16 %v3198, %v3190
    %v4751 = vpack.c.b16 %v3199, %v3191
    %v4752 = vpack.c.b16 %v3200, %v3192
    %v4753 = vpack.c.b16 %v3201, %v3193
    %v4754 = vpack.c.b16 %v3202, %v3194
    %v4755 = vpack.c.b16 %v3203, %v3195
    %v4756 = vpack.c.b16 %v3204, %v3196
    %v4757 = vpack.c.b16 %v3205, %v3197
    %v4758 = vpack.c.b16 %v3214, %v3206
    %v4759 = vpack.c.b16 %v3215, %v3207
    %v4760 = vpack.c.b16 %v3216, %v3208
    %v4761 = vpack.c.b16 %v3217, %v3209
    %v4762 = vpack.c.b16 %v3218, %v3210
    %v4763 = vpack.c.b16 %v3219, %v3211
    %v4764 = vpack.c.b16 %v3220, %v3212
    %v4765 = vpack.c.b16 %v3221, %v3213
    %v4766 = vpack.c.b16 %v3230, %v3222
    %v4767 = vpack.c.b16 %v3231, %v3223
    %v4768 = vpack.c.b16 %v3232, %v3224
    %v4769 = vpack.c.b16 %v3233, %v3225
    %v4770 = vpack.c.b16 %v3234, %v3226
    %v4771 = vpack.c.b16 %v3235, %v3227
    %v4772 = vpack.c.b16 %v3236, %v3228
    %v4773 = vpack.c.b16 %v3237, %v3229
    %v4774 = vpack.c.b16 %v3246, %v3238
    %v4775 = vpack.c.b16 %v3247, %v3239
    %v4776 = vpack.c.b16 %v3248, %v3240
    %v4777 = vpack.c.b16 %v3249, %v3241
    %v4778 = vpack.c.b16 %v3250, %v3242
    %v4779 = vpack.c.b16 %v3251, %v3243
    %v4780 = vpack.c.b16 %v3252, %v3244
    %v4781 = vpack.c.b16 %v3253, %v3245
    %v4782 = vpack.c.b16 %v3262, %v3254
    %v4783 = vpack.c.b16 %v3263, %v3255
    %v4784 = vpack.c.b16 %v3264, %v3256
    %v4785 = vpack.c.b16 %v3265, %v3257
    %v4786 = vpack.c.b16 %v3266, %v3258
    %v4787 = vpack.c.b16 %v3267, %v3259
    %v4788 = vpack.c.b16 %v3268, %v3260
    %v4789 = vpack.c.b16 %v3269, %v3261
    %v4790 = vpack.c.b16 %v3278, %v3270
    %v4791 = vpack.c.b16 %v3279, %v3271
    %v4792 = vpack.c.b16 %v3280, %v3272
    %v4793 = vpack.c.b16 %v3281, %v3273
    %v4794 = vpack.c.b16 %v3282, %v3274
    %v4795 = vpack.c.b16 %v3283, %v3275
    %v4796 = vpack.c.b16 %v3284, %v3276
    %v4797 = vpack.c.b16 %v3285, %v3277
    %v4798 = vpack.c.b16 %v3294, %v3286
    %v4799 = vpack.c.b16 %v3295, %v3287
    %v4800 = vpack.c.b16 %v3296, %v3288
    %v4801 = vpack.c.b16 %v3297, %v3289
    %v4802 = vpack.c.b16 %v3298, %v3290
    %v4803 = vpack.c.b16 %v3299, %v3291
    %v4804 = vpack.c.b16 %v3300, %v3292
    %v4805 = vpack.c.b16 %v3301, %v3293
    %v4806 = vpack.c.b16 %v3310, %v3302
    %v4807 = vpack.c.b16 %v3311, %v3303
    %v4808 = vpack.c.b16 %v3312, %v3304
    %v4809 = vpack.c.b16 %v3313, %v3305
    %v4810 = vpack.c.b16 %v3314, %v3306
    %v4811 = vpack.c.b16 %v3315, %v3307
    %v4812 = vpack.c.b16 %v3316, %v3308
    %v4813 = vpack.c.b16 %v3317, %v3309
    %v4814 = vpack.c.b16 %v3326, %v3318
    %v4815 = vpack.c.b16 %v3327, %v3319
    %v4816 = vpack.c.b16 %v3328, %v3320
    %v4817 = vpack.c.b16 %v3329, %v3321
    %v4818 = vpack.c.b16 %v3330, %v3322
    %v4819 = vpack.c.b16 %v3331, %v3323
    %v4820 = vpack.c.b16 %v3332, %v3324
    %v4821 = vpack.c.b16 %v3333, %v3325
    %v4822 = vpack.c.b16 %v3342, %v3334
    %v4823 = vpack.c.b16 %v3343, %v3335
    %v4824 = vpack.c.b16 %v3344, %v3336
    %v4825 = vpack.c.b16 %v3345, %v3337
    %v4826 = vpack.c.b16 %v3346, %v3338
    %v4827 = vpack.c.b16 %v3347, %v3339
    %v4828 = vpack.c.b16 %v3348, %v3340
    %v4829 = vpack.c.b16 %v3349, %v3341
    %v4830 = vpack.c.b16 %v3358, %v3350
    %v4831 = vpack.c.b16 %v3359, %v3351
    %v4832 = vpack.c.b16 %v3360, %v3352
    %v4833 = vpack.c.b16 %v3361, %v3353
    %v4834 = vpack.c.b16 %v3362, %v3354
    %v4835 = vpack.c.b16 %v3363, %v3355
    %v4836 = vpack.c.b16 %v3364, %v3356
    %v4837 = vpack.c.b16 %v3365, %v3357
    %v4838 = vpack.c.b16 %v3374, %v3366
    %v4839 = vpack.c.b16 %v3375, %v3367
    %v4840 = vpack.c.b16 %v3376, %v3368
    %v4841 = vpack.c.b16 %v3377, %v3369
    %v4842 = vpack.c.b16 %v3378, %v3370
    %v4843 = vpack.c.b16 %v3379, %v3371
    %v4844 = vpack.c.b16 %v3380, %v3372
    %v4845 = vpack.c.b16 %v3381, %v3373
    %v4846 = vpack.c.b16 %v3390, %v3382
    %v4847 = vpack.c.b16 %v3391, %v3383
    %v4848 = vpack.c.b16 %v3392, %v3384
    %v4849 = vpack.c.b16 %v3393, %v3385
    %v4850 = vpack.c.b16 %v3394, %v3386
    %v4851 = vpack.c.b16 %v3395, %v3387
    %v4852 = vpack.c.b16 %v3396, %v3388
    %v4853 = vpack.c.b16 %v3397, %v3389
    %v4854 = vpack.c.b16 %v3406, %v3398
    %v4855 = vpack.c.b16 %v3407, %v3399
    %v4856 = vpack.c.b16 %v3408, %v3400
    %v4857 = vpack.c.b16 %v3409, %v3401
    %v4858 = vpack.c.b16 %v3410, %v3402
    %v4859 = vpack.c.b16 %v3411, %v3403
    %v4860 = vpack.c.b16 %v3412, %v3404
    %v4861 = vpack.c.b16 %v3413, %v3405
    %v4862 = vpack.c.b16 %v3422, %v3414
    %v4863 = vpack.c.b16 %v3423, %v3415
    %v4864 = vpack.c.b16 %v3424, %v3416
    %v4865 = vpack.c.b16 %v3425, %v3417
    %v4866 = vpack.c.b16 %v3426, %v3418
    %v4867 = vpack.c.b16 %v3427, %v3419
    %v4868 = vpack.c.b16 %v3428, %v3420
    %v4869 = vpack.c.b16 %v3429, %v3421
    %v4870 = vpack.c.b16 %v3438, %v3430
    %v4871 = vpack.c.b16 %v3439, %v3431
    %v4872 = vpack.c.b16 %v3440, %v3432
    %v4873 = vpack.c.b16 %v3441, %v3433
    %v4874 = vpack.c.b16 %v3442, %v3434
    %v4875 = vpack.c.b16 %v3443, %v3435
    %v4876 = vpack.c.b16 %v3444, %v3436
    %v4877 = vpack.c.b16 %v3445, %v3437
    %v4878 = vpack.c.b16 %v3454, %v3446
    %v4879 = vpack.c.b16 %v3455, %v3447
    %v4880 = vpack.c.b16 %v3456, %v3448
    %v4881 = vpack.c.b16 %v3457, %v3449
    %v4882 = vpack.c.b16 %v3458, %v3450
    %v4883 = vpack.c.b16 %v3459, %v3451
    %v4884 = vpack.c.b16 %v3460, %v3452
    %v4885 = vpack.c.b16 %v3461, %v3453
    %v4886 = vpack.c.b16 %v3470, %v3462
    %v4887 = vpack.c.b16 %v3471, %v3463
    %v4888 = vpack.c.b16 %v3472, %v3464
    %v4889 = vpack.c.b16 %v3473, %v3465
    %v4890 = vpack.c.b16 %v3474, %v3466
    %v4891 = vpack.c.b16 %v3475, %v3467
    %v4892 = vpack.c.b16 %v3476, %v3468
    %v4893 = vpack.c.b16 %v3477, %v3469
    %v4894 = vpack.c.b16 %v3486, %v3478
    %v4895 = vpack.c.b16 %v3487, %v3479
    %v4896 = vpack.c.b16 %v3488, %v3480
    %v4897 = vpack.c.b16 %v3489, %v3481
    %v4898 = vpack.c.b16 %v3490, %v3482
    %v4899 = vpack.c.b16 %v3491, %v3483
    %v4900 = vpack.c.b16 %v3492, %v3484
    %v4901 = vpack.c.b16 %v3493, %v3485
    %v4902 = vpack.c.b16 %v3502, %v3494
    %v4903 = vpack.c.b16 %v3503, %v3495
    %v4904 = vpack.c.b16 %v3504, %v3496
    %v4905 = vpack.c.b16 %v3505, %v3497
    %v4906 = vpack.c.b16 %v3506, %v3498
    %v4907 = vpack.c.b16 %v3507, %v3499
    %v4908 = vpack.c.b16 %v3508, %v3500
    %v4909 = vpack.c.b16 %v3509, %v3501
    %v4910 = vpack.c.b16 %v3518, %v3510
    %v4911 = vpack.c.b16 %v3519, %v3511
    %v4912 = vpack.c.b16 %v3520, %v3512
    %v4913 = vpack.c.b16 %v3521, %v3513
    %v4914 = vpack.c.b16 %v3522, %v3514
    %v4915 = vpack.c.b16 %v3523, %v3515
    %v4916 = vpack.c.b16 %v3524, %v3516
    %v4917 = vpack.c.b16 %v3525, %v3517
    %v4918 = vpack.c.b16 %v3534, %v3526
    %v4919 = vpack.c.b16 %v3535, %v3527
    %v4920 = vpack.c.b16 %v3536, %v3528
    %v4921 = vpack.c.b16 %v3537, %v3529
    %v4922 = vpack.c.b16 %v3538, %v3530
    %v4923 = vpack.c.b16 %v3539, %v3531
    %v4924 = vpack.c.b16 %v3540, %v3532
    %v4925 = vpack.c.b16 %v3541, %v3533
    %v4926 = vpack.c.b16 %v3550, %v3542
    %v4927 = vpack.c.b16 %v3551, %v3543
    %v4928 = vpack.c.b16 %v3552, %v3544
    %v4929 = vpack.c.b16 %v3553, %v3545
    %v4930 = vpack.c.b16 %v3554, %v3546
    %v4931 = vpack.c.b16 %v3555, %v3547
    %v4932 = vpack.c.b16 %v3556, %v3548
    %v4933 = vpack.c.b16 %v3557, %v3549
    %v4934 = vpack.c.b16 %v3566, %v3558
    %v4935 = vpack.c.b16 %v3567, %v3559
    %v4936 = vpack.c.b16 %v3568, %v3560
    %v4937 = vpack.c.b16 %v3569, %v3561
    %v4938 = vpack.c.b16 %v3570, %v3562
    %v4939 = vpack.c.b16 %v3571, %v3563
    %v4940 = vpack.c.b16 %v3572, %v3564
    %v4941 = vpack.c.b16 %v3573, %v3565
    %v4942 = vpack.c.b16 %v3582, %v3574
    %v4943 = vpack.c.b16 %v3583, %v3575
    %v4944 = vpack.c.b16 %v3584, %v3576
    %v4945 = vpack.c.b16 %v3585, %v3577
    %v4946 = vpack.c.b16 %v3586, %v3578
    %v4947 = vpack.c.b16 %v3587, %v3579
    %v4948 = vpack.c.b16 %v3588, %v3580
    %v4949 = vpack.c.b16 %v3589, %v3581
    %v4950 = vpack.c.b16 %v3598, %v3590
    %v4951 = vpack.c.b16 %v3599, %v3591
    %v4952 = vpack.c.b16 %v3600, %v3592
    %v4953 = vpack.c.b16 %v3601, %v3593
    %v4954 = vpack.c.b16 %v3602, %v3594
    %v4955 = vpack.c.b16 %v3603, %v3595
    %v4956 = vpack.c.b16 %v3604, %v3596
    %v4957 = vpack.c.b16 %v3605, %v3597
    %v4958 = vpack.c.b16 %v3614, %v3606
    %v4959 = vpack.c.b16 %v3615, %v3607
    %v4960 = vpack.c.b16 %v3616, %v3608
    %v4961 = vpack.c.b16 %v3617, %v3609
    %v4962 = vpack.c.b16 %v3618, %v3610
    %v4963 = vpack.c.b16 %v3619, %v3611
    %v4964 = vpack.c.b16 %v3620, %v3612
    %v4965 = vpack.c.b16 %v3621, %v3613
    %v4966 = vpack.c.b16 %v3630, %v3622
    %v4967 = vpack.c.b16 %v3631, %v3623
    %v4968 = vpack.c.b16 %v3632, %v3624
    %v4969 = vpack.c.b16 %v3633, %v3625
    %v4970 = vpack.c.b16 %v3634, %v3626
    %v4971 = vpack.c.b16 %v3635, %v3627
    %v4972 = vpack.c.b16 %v3636, %v3628
    %v4973 = vpack.c.b16 %v3637, %v3629
    %v4974 = vpack.c.b16 %v3646, %v3638
    %v4975 = vpack.c.b16 %v3647, %v3639
    %v4976 = vpack.c.b16 %v3648, %v3640
    %v4977 = vpack.c.b16 %v3649, %v3641
    %v4978 = vpack.c.b16 %v3650, %v3642
    %v4979 = vpack.c.b16 %v3651, %v3643
    %v4980 = vpack.c.b16 %v3652, %v3644
    %v4981 = vpack.c.b16 %v3653, %v3645
    %v4982 = vpack.c.b16 %v3662, %v3654
    %v4983 = vpack.c.b16 %v3663, %v3655
    %v4984 = vpack.c.b16 %v3664, %v3656
    %v4985 = vpack.c.b16 %v3665, %v3657
    %v4986 = vpack.c.b16 %v3666, %v3658
    %v4987 = vpack.c.b16 %v3667, %v3659
    %v4988 = vpack.c.b16 %v3668, %v3660
    %v4989 = vpack.c.b16 %v3669, %v3661
    %v4990 = vpack.c.b16 %v3678, %v3670
    %v4991 = vpack.c.b16 %v3679, %v3671
    %v4992 = vpack.c.b16 %v3680, %v3672
    %v4993 = vpack.c.b16 %v3681, %v3673
    %v4994 = vpack.c.b16 %v3682, %v3674
    %v4995 = vpack.c.b16 %v3683, %v3675
    %v4996 = vpack.c.b16 %v3684, %v3676
    %v4997 = vpack.c.b16 %v3685, %v3677
    %v4998 = vpack.c.b16 %v3694, %v3686
    %v4999 = vpack.c.b16 %v3695, %v3687
    %v5000 = vpack.c.b16 %v3696, %v3688
    %v5001 = vpack.c.b16 %v3697, %v3689
    %v5002 = vpack.c.b16 %v3698, %v3690
    %v5003 = vpack.c.b16 %v3699, %v3691
    %v5004 = vpack.c.b16 %v3700, %v3692
    %v5005 = vpack.c.b16 %v3701, %v3693
    %v5006 = vpack.c.b16 %v3710, %v3702
    %v5007 = vpack.c.b16 %v3711, %v3703
    %v5008 = vpack.c.b16 %v3712, %v3704
    %v5009 = vpack.c.b16 %v3713, %v3705
    %v5010 = vpack.c.b16 %v3714, %v3706
    %v5011 = vpack.c.b16 %v3715, %v3707
    %v5012 = vpack.c.b16 %v3716, %v3708
    %v5013 = vpack.c.b16 %v3717, %v3709
    %v5014 = vpack.c.b16 %v3726, %v3718
    %v5015 = vpack.c.b16 %v3727, %v3719
    %v5016 = vpack.c.b16 %v3728, %v3720
    %v5017 = vpack.c.b16 %v3729, %v3721
    %v5018 = vpack.c.b16 %v3730, %v3722
    %v5019 = vpack.c.b16 %v3731, %v3723
    %v5020 = vpack.c.b16 %v3732, %v3724
    %v5021 = vpack.c.b16 %v3733, %v3725
    %v5022 = vpack.c.b16 %v3742, %v3734
    %v5023 = vpack.c.b16 %v3743, %v3735
    %v5024 = vpack.c.b16 %v3744, %v3736
    %v5025 = vpack.c.b16 %v3745, %v3737
    %v5026 = vpack.c.b16 %v3746, %v3738
    %v5027 = vpack.c.b16 %v3747, %v3739
    %v5028 = vpack.c.b16 %v3748, %v3740
    %v5029 = vpack.c.b16 %v3749, %v3741
    %v5030 = vpack.c.b16 %v3758, %v3750
    %v5031 = vpack.c.b16 %v3759, %v3751
    %v5032 = vpack.c.b16 %v3760, %v3752
    %v5033 = vpack.c.b16 %v3761, %v3753
    %v5034 = vpack.c.b16 %v3762, %v3754
    %v5035 = vpack.c.b16 %v3763, %v3755
    %v5036 = vpack.c.b16 %v3764, %v3756
    %v5037 = vpack.c.b16 %v3765, %v3757
    %v5038 = vpack.c.b16 %v3774, %v3766
    %v5039 = vpack.c.b16 %v3775, %v3767
    %v5040 = vpack.c.b16 %v3776, %v3768
    %v5041 = vpack.c.b16 %v3777, %v3769
    %v5042 = vpack.c.b16 %v3778, %v3770
    %v5043 = vpack.c.b16 %v3779, %v3771
    %v5044 = vpack.c.b16 %v3780, %v3772
    %v5045 = vpack.c.b16 %v3781, %v3773
    %v5046 = vpack.c.b16 %v3790, %v3782
    %v5047 = vpack.c.b16 %v3791, %v3783
    %v5048 = vpack.c.b16 %v3792, %v3784
    %v5049 = vpack.c.b16 %v3793, %v3785
    %v5050 = vpack.c.b16 %v3794, %v3786
    %v5051 = vpack.c.b16 %v3795, %v3787
    %v5052 = vpack.c.b16 %v3796, %v3788
    %v5053 = vpack.c.b16 %v3797, %v3789
    %v5054 = vpack.c.b16 %v3806, %v3798
    %v5055 = vpack.c.b16 %v3807, %v3799
    %v5056 = vpack.c.b16 %v3808, %v3800
    %v5057 = vpack.c.b16 %v3809, %v3801
    %v5058 = vpack.c.b16 %v3810, %v3802
    %v5059 = vpack.c.b16 %v3811, %v3803
    %v5060 = vpack.c.b16 %v3812, %v3804
    %v5061 = vpack.c.b16 %v3813, %v3805
    %v5062 = vpack.c.b16 %v3822, %v3814
    %v5063 = vpack.c.b16 %v3823, %v3815
    %v5064 = vpack.c.b16 %v3824, %v3816
    %v5065 = vpack.c.b16 %v3825, %v3817
    %v5066 = vpack.c.b16 %v3826, %v3818
    %v5067 = vpack.c.b16 %v3827, %v3819
    %v5068 = vpack.c.b16 %v3828, %v3820
    %v5069 = vpack.c.b16 %v3829, %v3821
    %v5070 = vpack.c.b16 %v3838, %v3830
    %v5071 = vpack.c.b16 %v3839, %v3831
    %v5072 = vpack.c.b16 %v3840, %v3832
    %v5073 = vpack.c.b16 %v3841, %v3833
    %v5074 = vpack.c.b16 %v3842, %v3834
    %v5075 = vpack.c.b16 %v3843, %v3835
    %v5076 = vpack.c.b16 %v3844, %v3836
    %v5077 = vpack.c.b16 %v3845, %v3837
    %v5078 = vpack.c.b16 %v3854, %v3846
    %v5079 = vpack.c.b16 %v3855, %v3847
    %v5080 = vpack.c.b16 %v3856, %v3848
    %v5081 = vpack.c.b16 %v3857, %v3849
    %v5082 = vpack.c.b16 %v3858, %v3850
    %v5083 = vpack.c.b16 %v3859, %v3851
    %v5084 = vpack.c.b16 %v3860, %v3852
    %v5085 = vpack.c.b16 %v3861, %v3853
    %v5086 = vpack.c.b16 %v3870, %v3862
    %v5087 = vpack.c.b16 %v3871, %v3863
    %v5088 = vpack.c.b16 %v3872, %v3864
    %v5089 = vpack.c.b16 %v3873, %v3865
    %v5090 = vpack.c.b16 %v3874, %v3866
    %v5091 = vpack.c.b16 %v3875, %v3867
    %v5092 = vpack.c.b16 %v3876, %v3868
    %v5093 = vpack.c.b16 %v3877, %v3869
    %v5094 = vpack.c.b16 %v3886, %v3878
    %v5095 = vpack.c.b16 %v3887, %v3879
    %v5096 = vpack.c.b16 %v3888, %v3880
    %v5097 = vpack.c.b16 %v3889, %v3881
    %v5098 = vpack.c.b16 %v3890, %v3882
    %v5099 = vpack.c.b16 %v3891, %v3883
    %v5100 = vpack.c.b16 %v3892, %v3884
    %v5101 = vpack.c.b16 %v3893, %v3885
    %v5102 = vpack.c.b16 %v3902, %v3894
    %v5103 = vpack.c.b16 %v3903, %v3895
    %v5104 = vpack.c.b16 %v3904, %v3896
    %v5105 = vpack.c.b16 %v3905, %v3897
    %v5106 = vpack.c.b16 %v3906, %v3898
    %v5107 = vpack.c.b16 %v3907, %v3899
    %v5108 = vpack.c.b16 %v3908, %v3900
    %v5109 = vpack.c.b16 %v3909, %v3901
    %v5110 = vpack.c.b16 %v3918, %v3910
    %v5111 = vpack.c.b16 %v3919, %v3911
    %v5112 = vpack.c.b16 %v3920, %v3912
    %v5113 = vpack.c.b16 %v3921, %v3913
    %v5114 = vpack.c.b16 %v3922, %v3914
    %v5115 = vpack.c.b16 %v3923, %v3915
    %v5116 = vpack.c.b16 %v3924, %v3916
    %v5117 = vpack.c.b16 %v3925, %v3917
    %v5118 = vpack.c.b16 %v3934, %v3926
    %v5119 = vpack.c.b16 %v3935, %v3927
    %v5120 = vpack.c.b16 %v3936, %v3928
    %v5121 = vpack.c.b16 %v3937, %v3929
    %v5122 = vpack.c.b16 %v3938, %v3930
    %v5123 = vpack.c.b16 %v3939, %v3931
    %v5124 = vpack.c.b16 %v3940, %v3932
    %v5125 = vpack.c.b16 %v3941, %v3933
    %v5126 = vpack.c.b16 %v3950, %v3942
    %v5127 = vpack.c.b16 %v3951, %v3943
    %v5128 = vpack.c.b16 %v3952, %v3944
    %v5129 = vpack.c.b16 %v3953, %v3945
    %v5130 = vpack.c.b16 %v3954, %v3946
    %v5131 = vpack.c.b16 %v3955, %v3947
    %v5132 = vpack.c.b16 %v3956, %v3948
    %v5133 = vpack.c.b16 %v3957, %v3949
    %v5134 = vpack.c.b16 %v3966, %v3958
    %v5135 = vpack.c.b16 %v3967, %v3959
    %v5136 = vpack.c.b16 %v3968, %v3960
    %v5137 = vpack.c.b16 %v3969, %v3961
    %v5138 = vpack.c.b16 %v3970, %v3962
    %v5139 = vpack.c.b16 %v3971, %v3963
    %v5140 = vpack.c.b16 %v3972, %v3964
    %v5141 = vpack.c.b16 %v3973, %v3965
    %v5142 = vpack.c.b16 %v3982, %v3974
    %v5143 = vpack.c.b16 %v3983, %v3975
    %v5144 = vpack.c.b16 %v3984, %v3976
    %v5145 = vpack.c.b16 %v3985, %v3977
    %v5146 = vpack.c.b16 %v3986, %v3978
    %v5147 = vpack.c.b16 %v3987, %v3979
    %v5148 = vpack.c.b16 %v3988, %v3980
    %v5149 = vpack.c.b16 %v3989, %v3981
    %v5150 = vpack.c.b16 %v3998, %v3990
    %v5151 = vpack.c.b16 %v3999, %v3991
    %v5152 = vpack.c.b16 %v4000, %v3992
    %v5153 = vpack.c.b16 %v4001, %v3993
    %v5154 = vpack.c.b16 %v4002, %v3994
    %v5155 = vpack.c.b16 %v4003, %v3995
    %v5156 = vpack.c.b16 %v4004, %v3996
    %v5157 = vpack.c.b16 %v4005, %v3997
    %v5158 = vpack.c.b16 %v4014, %v4006
    %v5159 = vpack.c.b16 %v4015, %v4007
    %v5160 = vpack.c.b16 %v4016, %v4008
    %v5161 = vpack.c.b16 %v4017, %v4009
    %v5162 = vpack.c.b16 %v4018, %v4010
    %v5163 = vpack.c.b16 %v4019, %v4011
    %v5164 = vpack.c.b16 %v4020, %v4012
    %v5165 = vpack.c.b16 %v4021, %v4013
    %v5166 = vpack.c.b16 %v4030, %v4022
    %v5167 = vpack.c.b16 %v4031, %v4023
    %v5168 = vpack.c.b16 %v4032, %v4024
    %v5169 = vpack.c.b16 %v4033, %v4025
    %v5170 = vpack.c.b16 %v4034, %v4026
    %v5171 = vpack.c.b16 %v4035, %v4027
    %v5172 = vpack.c.b16 %v4036, %v4028
    %v5173 = vpack.c.b16 %v4037, %v4029
    %v5174 = vpack.c.b16 %v4046, %v4038
    %v5175 = vpack.c.b16 %v4047, %v4039
    %v5176 = vpack.c.b16 %v4048, %v4040
    %v5177 = vpack.c.b16 %v4049, %v4041
    %v5178 = vpack.c.b16 %v4050, %v4042
    %v5179 = vpack.c.b16 %v4051, %v4043
    %v5180 = vpack.c.b16 %v4052, %v4044
    %v5181 = vpack.c.b16 %v4053, %v4045
    %v5182 = vpack.c.b16 %v4062, %v4054
    %v5183 = vpack.c.b16 %v4063, %v4055
    %v5184 = vpack.c.b16 %v4064, %v4056
    %v5185 = vpack.c.b16 %v4065, %v4057
    %v5186 = vpack.c.b16 %v4066, %v4058
    %v5187 = vpack.c.b16 %v4067, %v4059
    %v5188 = vpack.c.b16 %v4068, %v4060
    %v5189 = vpack.c.b16 %v4069, %v4061
    %v5190 = vpack.c.b16 %v4078, %v4070
    %v5191 = vpack.c.b16 %v4079, %v4071
    %v5192 = vpack.c.b16 %v4080, %v4072
    %v5193 = vpack.c.b16 %v4081, %v4073
    %v5194 = vpack.c.b16 %v4082, %v4074
    %v5195 = vpack.c.b16 %v4083, %v4075
    %v5196 = vpack.c.b16 %v4084, %v4076
    %v5197 = vpack.c.b16 %v4085, %v4077
    %v5198 = vpack.c.b16 %v4094, %v4086
    %v5199 = vpack.c.b16 %v4095, %v4087
    %v5200 = vpack.c.b16 %v4096, %v4088
    %v5201 = vpack.c.b16 %v4097, %v4089
    %v5202 = vpack.c.b16 %v4098, %v4090
    %v5203 = vpack.c.b16 %v4099, %v4091
    %v5204 = vpack.c.b16 %v4100, %v4092
    %v5205 = vpack.c.b16 %v4101, %v4093
    %v5206 = vpack.c.b16 %v4110, %v4102
    %v5207 = vpack.c.b16 %v4111, %v4103
    %v5208 = vpack.c.b16 %v4112, %v4104
    %v5209 = vpack.c.b16 %v4113, %v4105
    %v5210 = vpack.c.b16 %v4114, %v4106
    %v5211 = vpack.c.b16 %v4115, %v4107
    %v5212 = vpack.c.b16 %v4116, %v4108
    %v5213 = vpack.c.b16 %v4117, %v4109
    %v5214 = vpack.c.b16 %v4126, %v4118
    %v5215 = vpack.c.b16 %v4127, %v4119
    %v5216 = vpack.c.b16 %v4128, %v4120
    %v5217 = vpack.c.b16 %v4129, %v4121
    %v5218 = vpack.c.b16 %v4130, %v4122
    %v5219 = vpack.c.b16 %v4131, %v4123
    %v5220 = vpack.c.b16 %v4132, %v4124
    %v5221 = vpack.c.b16 %v4133, %v4125
    %v5222 = vpack.c.b16 %v4142, %v4134
    %v5223 = vpack.c.b16 %v4143, %v4135
    %v5224 = vpack.c.b16 %v4144, %v4136
    %v5225 = vpack.c.b16 %v4145, %v4137
    %v5226 = vpack.c.b16 %v4146, %v4138
    %v5227 = vpack.c.b16 %v4147, %v4139
    %v5228 = vpack.c.b16 %v4148, %v4140
    %v5229 = vpack.c.b16 %v4149, %v4141
    %v5230 = vpack.c.b16 %v4158, %v4150
    %v5231 = vpack.c.b16 %v4159, %v4151
    %v5232 = vpack.c.b16 %v4160, %v4152
    %v5233 = vpack.c.b16 %v4161, %v4153
    %v5234 = vpack.c.b16 %v4162, %v4154
    %v5235 = vpack.c.b16 %v4163, %v4155
    %v5236 = vpack.c.b16 %v4164, %v4156
    %v5237 = vpack.c.b16 %v4165, %v4157
    %v5238 = vpack.c.b16 %v4174, %v4166
    %v5239 = vpack.c.b16 %v4175, %v4167
    %v5240 = vpack.c.b16 %v4176, %v4168
    %v5241 = vpack.c.b16 %v4177, %v4169
    %v5242 = vpack.c.b16 %v4178, %v4170
    %v5243 = vpack.c.b16 %v4179, %v4171
    %v5244 = vpack.c.b16 %v4180, %v4172
    %v5245 = vpack.c.b16 %v4181, %v4173
    %v5246 = vpack.c.b16 %v4190, %v4182
    %v5247 = vpack.c.b16 %v4191, %v4183
    %v5248 = vpack.c.b16 %v4192, %v4184
    %v5249 = vpack.c.b16 %v4193, %v4185
    %v5250 = vpack.c.b16 %v4194, %v4186
    %v5251 = vpack.c.b16 %v4195, %v4187
    %v5252 = vpack.c.b16 %v4196, %v4188
    %v5253 = vpack.c.b16 %v4197, %v4189
    %v5254 = vpack.c.b16 %v4206, %v4198
    %v5255 = vpack.c.b16 %v4207, %v4199
    %v5256 = vpack.c.b16 %v4208, %v4200
    %v5257 = vpack.c.b16 %v4209, %v4201
    %v5258 = vpack.c.b16 %v4210, %v4202
    %v5259 = vpack.c.b16 %v4211, %v4203
    %v5260 = vpack.c.b16 %v4212, %v4204
    %v5261 = vpack.c.b16 %v4213, %v4205
    %v5262 = vpack.c.b16 %v4222, %v4214
    %v5263 = vpack.c.b16 %v4223, %v4215
    %v5264 = vpack.c.b16 %v4224, %v4216
    %v5265 = vpack.c.b16 %v4225, %v4217
    %v5266 = vpack.c.b16 %v4226, %v4218
    %v5267 = vpack.c.b16 %v4227, %v4219
    %v5268 = vpack.c.b16 %v4228, %v4220
    %v5269 = vpack.c.b16 %v4229, %v4221
    %v5270 = vpack.c.b16 %v4238, %v4230
    %v5271 = vpack.c.b16 %v4239, %v4231
    %v5272 = vpack.c.b16 %v4240, %v4232
    %v5273 = vpack.c.b16 %v4241, %v4233
    %v5274 = vpack.c.b16 %v4242, %v4234
    %v5275 = vpack.c.b16 %v4243, %v4235
    %v5276 = vpack.c.b16 %v4244, %v4236
    %v5277 = vpack.c.b16 %v4245, %v4237
    %v5278 = vpack.c.b16 %v4254, %v4246
    %v5279 = vpack.c.b16 %v4255, %v4247
    %v5280 = vpack.c.b16 %v4256, %v4248
    %v5281 = vpack.c.b16 %v4257, %v4249
    %v5282 = vpack.c.b16 %v4258, %v4250
    %v5283 = vpack.c.b16 %v4259, %v4251
    %v5284 = vpack.c.b16 %v4260, %v4252
    %v5285 = vpack.c.b16 %v4261, %v4253
    %6310 = vmatprep.subr.bf16.mxu0 %v4263
    %6311 = vmatpush1.bf16.msra.mxu0 %v4262
    %6312 = vmatprep.subr.bf16.mxu0 %v4271
    %6313 = vmatpush1.bf16.msra.mxu0 %v4270
    %6314 = vmatprep.subr.bf16.mxu0 %v4279
    %6315 = vmatpush1.bf16.msra.mxu0 %v4278
    %6316 = vmatprep.subr.bf16.mxu0 %v4287
    %6317 = vmatpush1.bf16.msra.mxu0 %v4286
    %6318 = vmatprep.subr.bf16.mxu0 %v4295
    %6319 = vmatpush1.bf16.msra.mxu0 %v4294
    %6320 = vmatprep.subr.bf16.mxu0 %v4303
    %6321 = vmatpush1.bf16.msra.mxu0 %v4302
    %6322 = vmatprep.subr.bf16.mxu0 %v4311
    %6323 = vmatpush1.bf16.msra.mxu0 %v4310
    %6324 = vmatprep.subr.bf16.mxu0 %v4319
    %6325 = vmatpush1.bf16.msra.mxu0 %v4318
    %6326 = vmatprep.subr.bf16.mxu0 %v4327
    %6327 = vmatpush1.bf16.msra.mxu0 %v4326
    %6328 = vmatprep.subr.bf16.mxu0 %v4335
    %6329 = vmatpush1.bf16.msra.mxu0 %v4334
    %6330 = vmatprep.subr.bf16.mxu0 %v4343
    %6331 = vmatpush1.bf16.msra.mxu0 %v4342
    %6332 = vmatprep.subr.bf16.mxu0 %v4351
    %6333 = vmatpush1.bf16.msra.mxu0 %v4350
    %6334 = vmatprep.subr.bf16.mxu0 %v4359
    %6335 = vmatpush1.bf16.msra.mxu0 %v4358
    %6336 = vmatprep.subr.bf16.mxu0 %v4367
    %6337 = vmatpush1.bf16.msra.mxu0 %v4366
    %6338 = vmatprep.subr.bf16.mxu0 %v4375
    %6339 = vmatpush1.bf16.msra.mxu0 %v4374
    %6340 = vmatprep.subr.bf16.mxu0 %v4383
    %6341 = vmatpush1.bf16.msra.mxu0 %v4382
    %6342 = vmatprep.mubr.bf16.mxu0 %v1159
    %6343 = vmatmul.mubr.bf16.gmra.mrb[0].mxu0 %v1158
    %v6344 = vpop.f32.mrb[0].mxu0
    %v6345 = vadd.f32 %v1097, %v6344
    %v6346 = vpop.f32.mrb[0].mxu0
    %v6347 = vadd.f32 %v1101, %v6346
    %v6348 = vpop.f32.mrb[0].mxu0
    %v6349 = vpop.f32.mrb[0].mxu0
    %6350 = vdwg.mxu0
    %6351 = vmatprep.subr.bf16.mxu0 %v4391
    %6352 = vmatpush1.bf16.msra.mxu0 %v4390
    %6353 = vmatprep.subr.bf16.mxu0 %v4399
    %6354 = vmatpush1.bf16.msra.mxu0 %v4398
    %6355 = vmatprep.subr.bf16.mxu0 %v4407
    %6356 = vmatpush1.bf16.msra.mxu0 %v4406
    %6357 = vmatprep.subr.bf16.mxu0 %v4415
    %6358 = vmatpush1.bf16.msra.mxu0 %v4414
    %6359 = vmatprep.subr.bf16.mxu0 %v4423
    %6360 = vmatpush1.bf16.msra.mxu0 %v4422
    %6361 = vmatprep.subr.bf16.mxu0 %v4431
    %6362 = vmatpush1.bf16.msra.mxu0 %v4430
    %6363 = vmatprep.subr.bf16.mxu0 %v4439
    %6364 = vmatpush1.bf16.msra.mxu0 %v4438
    %6365 = vmatprep.subr.bf16.mxu0 %v4447
    %6366 = vmatpush1.bf16.msra.mxu0 %v4446
    %6367 = vmatprep.subr.bf16.mxu0 %v4455
    %6368 = vmatpush1.bf16.msra.mxu0 %v4454
    %6369 = vmatprep.subr.bf16.mxu0 %v4463
    %6370 = vmatpush1.bf16.msra.mxu0 %v4462
    %6371 = vmatprep.subr.bf16.mxu0 %v4471
    %6372 = vmatpush1.bf16.msra.mxu0 %v4470
    %6373 = vmatprep.subr.bf16.mxu0 %v4479
    %6374 = vmatpush1.bf16.msra.mxu0 %v4478
    %6375 = vmatprep.subr.bf16.mxu0 %v4487
    %6376 = vmatpush1.bf16.msra.mxu0 %v4486
    %6377 = vmatprep.subr.bf16.mxu0 %v4495
    %6378 = vmatpush1.bf16.msra.mxu0 %v4494
    %6379 = vmatprep.subr.bf16.mxu0 %v4503
    %6380 = vmatpush1.bf16.msra.mxu0 %v4502
    %6381 = vmatprep.subr.bf16.mxu0 %v4511
    %6382 = vmatpush1.bf16.msra.mxu0 %v4510
    %6383 = vmatprep.mubr.bf16.mxu0 %v1161
    %6384 = vmatmul.mubr.bf16.gmra.mrb[0].mxu0 %v1160
    %v6385 = vpop.f32.mrb[0].mxu0
    %v6386 = vadd.f32 %v6345, %v6385
    %v6387 = vpop.f32.mrb[0].mxu0
    %v6388 = vadd.f32 %v6347, %v6387
    %v6389 = vpop.f32.mrb[0].mxu0
    %v6390 = vpop.f32.mrb[0].mxu0
    %6391 = vdwg.mxu0
    %6392 = vmatprep.subr.bf16.mxu0 %v4519
    %6393 = vmatpush1.bf16.msra.mxu0 %v4518
    %6394 = vmatprep.subr.bf16.mxu0 %v4527
    %6395 = vmatpush1.bf16.msra.mxu0 %v4526
    %6396 = vmatprep.subr.bf16.mxu0 %v4535
    %6397 = vmatpush1.bf16.msra.mxu0 %v4534
    %6398 = vmatprep.subr.bf16.mxu0 %v4543
    %6399 = vmatpush1.bf16.msra.mxu0 %v4542
    %6400 = vmatprep.subr.bf16.mxu0 %v4551
    %6401 = vmatpush1.bf16.msra.mxu0 %v4550
    %6402 = vmatprep.subr.bf16.mxu0 %v4559
    %6403 = vmatpush1.bf16.msra.mxu0 %v4558
    %6404 = vmatprep.subr.bf16.mxu0 %v4567
    %6405 = vmatpush1.bf16.msra.mxu0 %v4566
    %6406 = vmatprep.subr.bf16.mxu0 %v4575
    %6407 = vmatpush1.bf16.msra.mxu0 %v4574
    %6408 = vmatprep.subr.bf16.mxu0 %v4583
    %6409 = vmatpush1.bf16.msra.mxu0 %v4582
    %6410 = vmatprep.subr.bf16.mxu0 %v4591
    %6411 = vmatpush1.bf16.msra.mxu0 %v4590
    %6412 = vmatprep.subr.bf16.mxu0 %v4599
    %6413 = vmatpush1.bf16.msra.mxu0 %v4598
    %6414 = vmatprep.subr.bf16.mxu0 %v4607
    %6415 = vmatpush1.bf16.msra.mxu0 %v4606
    %6416 = vmatprep.subr.bf16.mxu0 %v4615
    %6417 = vmatpush1.bf16.msra.mxu0 %v4614
    %6418 = vmatprep.subr.bf16.mxu0 %v4623
    %6419 = vmatpush1.bf16.msra.mxu0 %v4622
    %6420 = vmatprep.subr.bf16.mxu0 %v4631
    %6421 = vmatpush1.bf16.msra.mxu0 %v4630
    %6422 = vmatprep.subr.bf16.mxu0 %v4639
    %6423 = vmatpush1.bf16.msra.mxu0 %v4638
    %6424 = vmatprep.mubr.bf16.mxu0 %v1163
    %6425 = vmatmul.mubr.bf16.gmra.mrb[0].mxu0 %v1162
    %v6426 = vpop.f32.mrb[0].mxu0
    %v6427 = vadd.f32 %v6386, %v6426
    %v6428 = vpop.f32.mrb[0].mxu0
    %v6429 = vadd.f32 %v6388, %v6428
    %v6430 = vpop.f32.mrb[0].mxu0
    %v6431 = vpop.f32.mrb[0].mxu0
    %6432 = vdwg.mxu0
    %6433 = vmatprep.subr.bf16.mxu0 %v4647
    %6434 = vmatpush1.bf16.msra.mxu0 %v4646
    %6435 = vmatprep.subr.bf16.mxu0 %v4655
    %6436 = vmatpush1.bf16.msra.mxu0 %v4654
    %6437 = vmatprep.subr.bf16.mxu0 %v4663
    %6438 = vmatpush1.bf16.msra.mxu0 %v4662
    %6439 = vmatprep.subr.bf16.mxu0 %v4671
    %6440 = vmatpush1.bf16.msra.mxu0 %v4670
    %6441 = vmatprep.subr.bf16.mxu0 %v4679
    %6442 = vmatpush1.bf16.msra.mxu0 %v4678
    %6443 = vmatprep.subr.bf16.mxu0 %v4687
    %6444 = vmatpush1.bf16.msra.mxu0 %v4686
    %6445 = vmatprep.subr.bf16.mxu0 %v4695
    %6446 = vmatpush1.bf16.msra.mxu0 %v4694
    %6447 = vmatprep.subr.bf16.mxu0 %v4703
    %6448 = vmatpush1.bf16.msra.mxu0 %v4702
    %6449 = vmatprep.subr.bf16.mxu0 %v4711
    %6450 = vmatpush1.bf16.msra.mxu0 %v4710
    %6451 = vmatprep.subr.bf16.mxu0 %v4719
    %6452 = vmatpush1.bf16.msra.mxu0 %v4718
    %6453 = vmatprep.subr.bf16.mxu0 %v4727
    %6454 = vmatpush1.bf16.msra.mxu0 %v4726
    %6455 = vmatprep.subr.bf16.mxu0 %v4735
    %6456 = vmatpush1.bf16.msra.mxu0 %v4734
    %6457 = vmatprep.subr.bf16.mxu0 %v4743
    %6458 = vmatpush1.bf16.msra.mxu0 %v4742
    %6459 = vmatprep.subr.bf16.mxu0 %v4751
    %6460 = vmatpush1.bf16.msra.mxu0 %v4750
    %6461 = vmatprep.subr.bf16.mxu0 %v4759
    %6462 = vmatpush1.bf16.msra.mxu0 %v4758
    %6463 = vmatprep.subr.bf16.mxu0 %v4767
    %6464 = vmatpush1.bf16.msra.mxu0 %v4766
    %6465 = vmatprep.mubr.bf16.mxu0 %v1165
    %6466 = vmatmul.mubr.bf16.gmra.mrb[0].mxu0 %v1164
    %v6467 = vpop.f32.mrb[0].mxu0
    %v6468 = vadd.f32 %v6427, %v6467
    %v6469 = vpop.f32.mrb[0].mxu0
    %v6470 = vadd.f32 %v6429, %v6469
    %v6471 = vpop.f32.mrb[0].mxu0
    %v6472 = vpop.f32.mrb[0].mxu0
    %6473 = vdwg.mxu0
    %6474 = vmatprep.subr.bf16.mxu0 %v4775
    %6475 = vmatpush1.bf16.msra.mxu0 %v4774
    %6476 = vmatprep.subr.bf16.mxu0 %v4783
    %6477 = vmatpush1.bf16.msra.mxu0 %v4782
    %6478 = vmatprep.subr.bf16.mxu0 %v4791
    %6479 = vmatpush1.bf16.msra.mxu0 %v4790
    %6480 = vmatprep.subr.bf16.mxu0 %v4799
    %6481 = vmatpush1.bf16.msra.mxu0 %v4798
    %6482 = vmatprep.subr.bf16.mxu0 %v4807
    %6483 = vmatpush1.bf16.msra.mxu0 %v4806
    %6484 = vmatprep.subr.bf16.mxu0 %v4815
    %6485 = vmatpush1.bf16.msra.mxu0 %v4814
    %6486 = vmatprep.subr.bf16.mxu0 %v4823
    %6487 = vmatpush1.bf16.msra.mxu0 %v4822
    %6488 = vmatprep.subr.bf16.mxu0 %v4831
    %6489 = vmatpush1.bf16.msra.mxu0 %v4830
    %6490 = vmatprep.subr.bf16.mxu0 %v4839
    %6491 = vmatpush1.bf16.msra.mxu0 %v4838
    %6492 = vmatprep.subr.bf16.mxu0 %v4847
    %6493 = vmatpush1.bf16.msra.mxu0 %v4846
    %6494 = vmatprep.subr.bf16.mxu0 %v4855
    %6495 = vmatpush1.bf16.msra.mxu0 %v4854
    %6496 = vmatprep.subr.bf16.mxu0 %v4863
    %6497 = vmatpush1.bf16.msra.mxu0 %v4862
    %6498 = vmatprep.subr.bf16.mxu0 %v4871
    %6499 = vmatpush1.bf16.msra.mxu0 %v4870
    %6500 = vmatprep.subr.bf16.mxu0 %v4879
    %6501 = vmatpush1.bf16.msra.mxu0 %v4878
    %6502 = vmatprep.subr.bf16.mxu0 %v4887
    %6503 = vmatpush1.bf16.msra.mxu0 %v4886
    %6504 = vmatprep.subr.bf16.mxu0 %v4895
    %6505 = vmatpush1.bf16.msra.mxu0 %v4894
    %6506 = vmatprep.mubr.bf16.mxu0 %v1167
    %6507 = vmatmul.mubr.bf16.gmra.mrb[0].mxu0 %v1166
    %v6508 = vpop.f32.mrb[0].mxu0
    %v6509 = vadd.f32 %v6468, %v6508
    %v6510 = vpop.f32.mrb[0].mxu0
    %v6511 = vadd.f32 %v6470, %v6510
    %v6512 = vpop.f32.mrb[0].mxu0
    %v6513 = vpop.f32.mrb[0].mxu0
    %6514 = vdwg.mxu0
    %6515 = vmatprep.subr.bf16.mxu0 %v4903
    %6516 = vmatpush1.bf16.msra.mxu0 %v4902
    %6517 = vmatprep.subr.bf16.mxu0 %v4911
    %6518 = vmatpush1.bf16.msra.mxu0 %v4910
    %6519 = vmatprep.subr.bf16.mxu0 %v4919
    %6520 = vmatpush1.bf16.msra.mxu0 %v4918
    %6521 = vmatprep.subr.bf16.mxu0 %v4927
    %6522 = vmatpush1.bf16.msra.mxu0 %v4926
    %6523 = vmatprep.subr.bf16.mxu0 %v4935
    %6524 = vmatpush1.bf16.msra.mxu0 %v4934
    %6525 = vmatprep.subr.bf16.mxu0 %v4943
    %6526 = vmatpush1.bf16.msra.mxu0 %v4942
    %6527 = vmatprep.subr.bf16.mxu0 %v4951
    %6528 = vmatpush1.bf16.msra.mxu0 %v4950
    %6529 = vmatprep.subr.bf16.mxu0 %v4959
    %6530 = vmatpush1.bf16.msra.mxu0 %v4958
    %6531 = vmatprep.subr.bf16.mxu0 %v4967
    %6532 = vmatpush1.bf16.msra.mxu0 %v4966
    %6533 = vmatprep.subr.bf16.mxu0 %v4975
    %6534 = vmatpush1.bf16.msra.mxu0 %v4974
    %6535 = vmatprep.subr.bf16.mxu0 %v4983
    %6536 = vmatpush1.bf16.msra.mxu0 %v4982
    %6537 = vmatprep.subr.bf16.mxu0 %v4991
    %6538 = vmatpush1.bf16.msra.mxu0 %v4990
    %6539 = vmatprep.subr.bf16.mxu0 %v4999
    %6540 = vmatpush1.bf16.msra.mxu0 %v4998
    %6541 = vmatprep.subr.bf16.mxu0 %v5007
    %6542 = vmatpush1.bf16.msra.mxu0 %v5006
    %6543 = vmatprep.subr.bf16.mxu0 %v5015
    %6544 = vmatpush1.bf16.msra.mxu0 %v5014
    %6545 = vmatprep.subr.bf16.mxu0 %v5023
    %6546 = vmatpush1.bf16.msra.mxu0 %v5022
    %6547 = vmatprep.mubr.bf16.mxu0 %v1169
    %6548 = vmatmul.mubr.bf16.gmra.mrb[0].mxu0 %v1168
    %v6549 = vpop.f32.mrb[0].mxu0
    %v6550 = vadd.f32 %v6509, %v6549
    %v6551 = vpop.f32.mrb[0].mxu0
    %v6552 = vadd.f32 %v6511, %v6551
    %v6553 = vpop.f32.mrb[0].mxu0
    %v6554 = vpop.f32.mrb[0].mxu0
    %6555 = vdwg.mxu0
    %6556 = vmatprep.subr.bf16.mxu0 %v5031
    %6557 = vmatpush1.bf16.msra.mxu0 %v5030
    %6558 = vmatprep.subr.bf16.mxu0 %v5039
    %6559 = vmatpush1.bf16.msra.mxu0 %v5038
    %6560 = vmatprep.subr.bf16.mxu0 %v5047
    %6561 = vmatpush1.bf16.msra.mxu0 %v5046
    %6562 = vmatprep.subr.bf16.mxu0 %v5055
    %6563 = vmatpush1.bf16.msra.mxu0 %v5054
    %6564 = vmatprep.subr.bf16.mxu0 %v5063
    %6565 = vmatpush1.bf16.msra.mxu0 %v5062
    %6566 = vmatprep.subr.bf16.mxu0 %v5071
    %6567 = vmatpush1.bf16.msra.mxu0 %v5070
    %6568 = vmatprep.subr.bf16.mxu0 %v5079
    %6569 = vmatpush1.bf16.msra.mxu0 %v5078
    %6570 = vmatprep.subr.bf16.mxu0 %v5087
    %6571 = vmatpush1.bf16.msra.mxu0 %v5086
    %6572 = vmatprep.subr.bf16.mxu0 %v5095
    %6573 = vmatpush1.bf16.msra.mxu0 %v5094
    %6574 = vmatprep.subr.bf16.mxu0 %v5103
    %6575 = vmatpush1.bf16.msra.mxu0 %v5102
    %6576 = vmatprep.subr.bf16.mxu0 %v5111
    %6577 = vmatpush1.bf16.msra.mxu0 %v5110
    %6578 = vmatprep.subr.bf16.mxu0 %v5119
    %6579 = vmatpush1.bf16.msra.mxu0 %v5118
    %6580 = vmatprep.subr.bf16.mxu0 %v5127
    %6581 = vmatpush1.bf16.msra.mxu0 %v5126
    %6582 = vmatprep.subr.bf16.mxu0 %v5135
    %6583 = vmatpush1.bf16.msra.mxu0 %v5134
    %6584 = vmatprep.subr.bf16.mxu0 %v5143
    %6585 = vmatpush1.bf16.msra.mxu0 %v5142
    %6586 = vmatprep.subr.bf16.mxu0 %v5151
    %6587 = vmatpush1.bf16.msra.mxu0 %v5150
    %6588 = vmatprep.mubr.bf16.mxu0 %v1171
    %6589 = vmatmul.mubr.bf16.gmra.mrb[0].mxu0 %v1170
    %v6590 = vpop.f32.mrb[0].mxu0
    %v6591 = vadd.f32 %v6550, %v6590
    %v6592 = vpop.f32.mrb[0].mxu0
    %v6593 = vadd.f32 %v6552, %v6592
    %v6594 = vpop.f32.mrb[0].mxu0
    %v6595 = vpop.f32.mrb[0].mxu0
    %6596 = vdwg.mxu0
    %6597 = vmatprep.subr.bf16.mxu0 %v5159
    %6598 = vmatpush1.bf16.msra.mxu0 %v5158
    %6599 = vmatprep.subr.bf16.mxu0 %v5167
    %6600 = vmatpush1.bf16.msra.mxu0 %v5166
    %6601 = vmatprep.subr.bf16.mxu0 %v5175
    %6602 = vmatpush1.bf16.msra.mxu0 %v5174
    %6603 = vmatprep.subr.bf16.mxu0 %v5183
    %6604 = vmatpush1.bf16.msra.mxu0 %v5182
    %6605 = vmatprep.subr.bf16.mxu0 %v5191
    %6606 = vmatpush1.bf16.msra.mxu0 %v5190
    %6607 = vmatprep.subr.bf16.mxu0 %v5199
    %6608 = vmatpush1.bf16.msra.mxu0 %v5198
    %6609 = vmatprep.subr.bf16.mxu0 %v5207
    %6610 = vmatpush1.bf16.msra.mxu0 %v5206
    %6611 = vmatprep.subr.bf16.mxu0 %v5215
    %6612 = vmatpush1.bf16.msra.mxu0 %v5214
    %6613 = vmatprep.subr.bf16.mxu0 %v5223
    %6614 = vmatpush1.bf16.msra.mxu0 %v5222
    %6615 = vmatprep.subr.bf16.mxu0 %v5231
    %6616 = vmatpush1.bf16.msra.mxu0 %v5230
    %6617 = vmatprep.subr.bf16.mxu0 %v5239
    %6618 = vmatpush1.bf16.msra.mxu0 %v5238
    %6619 = vmatprep.subr.bf16.mxu0 %v5247
    %6620 = vmatpush1.bf16.msra.mxu0 %v5246
    %6621 = vmatprep.subr.bf16.mxu0 %v5255
    %6622 = vmatpush1.bf16.msra.mxu0 %v5254
    %6623 = vmatprep.subr.bf16.mxu0 %v5263
    %6624 = vmatpush1.bf16.msra.mxu0 %v5262
    %6625 = vmatprep.subr.bf16.mxu0 %v5271
    %6626 = vmatpush1.bf16.msra.mxu0 %v5270
    %6627 = vmatprep.subr.bf16.mxu0 %v5279
    %6628 = vmatpush1.bf16.msra.mxu0 %v5278
    %6629 = vmatprep.mubr.bf16.mxu0 %v1173
    %6630 = vmatmul.mubr.bf16.gmra.mrb[0].mxu0 %v1172
    %v6631 = vpop.f32.mrb[0].mxu0
    %v6632 = vadd.f32 %v6591, %v6631
    %v6633 = vpop.f32.mrb[0].mxu0
    %v6634 = vadd.f32 %v6593, %v6633
    %v6635 = vpop.f32.mrb[0].mxu0
    %v6636 = vpop.f32.mrb[0].mxu0
    %6637 = vdwg.mxu0
    %6638 = vmatprep.subr.bf16.mxu0 %v4265
    %6639 = vmatpush1.bf16.msra.mxu0 %v4264
    %6640 = vmatprep.subr.bf16.mxu0 %v4273
    %6641 = vmatpush1.bf16.msra.mxu0 %v4272
    %6642 = vmatprep.subr.bf16.mxu0 %v4281
    %6643 = vmatpush1.bf16.msra.mxu0 %v4280
    %6644 = vmatprep.subr.bf16.mxu0 %v4289
    %6645 = vmatpush1.bf16.msra.mxu0 %v4288
    %6646 = vmatprep.subr.bf16.mxu0 %v4297
    %6647 = vmatpush1.bf16.msra.mxu0 %v4296
    %6648 = vmatprep.subr.bf16.mxu0 %v4305
    %6649 = vmatpush1.bf16.msra.mxu0 %v4304
    %6650 = vmatprep.subr.bf16.mxu0 %v4313
    %6651 = vmatpush1.bf16.msra.mxu0 %v4312
    %6652 = vmatprep.subr.bf16.mxu0 %v4321
    %6653 = vmatpush1.bf16.msra.mxu0 %v4320
    %6654 = vmatprep.subr.bf16.mxu0 %v4329
    %6655 = vmatpush1.bf16.msra.mxu0 %v4328
    %6656 = vmatprep.subr.bf16.mxu0 %v4337
    %6657 = vmatpush1.bf16.msra.mxu0 %v4336
    %6658 = vmatprep.subr.bf16.mxu0 %v4345
    %6659 = vmatpush1.bf16.msra.mxu0 %v4344
    %6660 = vmatprep.subr.bf16.mxu0 %v4353
    %6661 = vmatpush1.bf16.msra.mxu0 %v4352
    %6662 = vmatprep.subr.bf16.mxu0 %v4361
    %6663 = vmatpush1.bf16.msra.mxu0 %v4360
    %6664 = vmatprep.subr.bf16.mxu0 %v4369
    %6665 = vmatpush1.bf16.msra.mxu0 %v4368
    %6666 = vmatprep.subr.bf16.mxu0 %v4377
    %6667 = vmatpush1.bf16.msra.mxu0 %v4376
    %6668 = vmatprep.subr.bf16.mxu0 %v4385
    %6669 = vmatpush1.bf16.msra.mxu0 %v4384
    %6670 = vmatprep.mubr.bf16.mxu0 %v1159
    %6671 = vmatmul.mubr.bf16.gmra.mrb[0].mxu0 %v1158
    %v6672 = vpop.f32.mrb[0].mxu0
    %v6673 = vadd.f32 %v1105, %v6672
    %v6674 = vpop.f32.mrb[0].mxu0
    %v6675 = vadd.f32 %v1109, %v6674
    %v6676 = vpop.f32.mrb[0].mxu0
    %v6677 = vpop.f32.mrb[0].mxu0
    %6678 = vdwg.mxu0
    %6679 = vmatprep.subr.bf16.mxu0 %v4393
    %6680 = vmatpush1.bf16.msra.mxu0 %v4392
    %6681 = vmatprep.subr.bf16.mxu0 %v4401
    %6682 = vmatpush1.bf16.msra.mxu0 %v4400
    %6683 = vmatprep.subr.bf16.mxu0 %v4409
    %6684 = vmatpush1.bf16.msra.mxu0 %v4408
    %6685 = vmatprep.subr.bf16.mxu0 %v4417
    %6686 = vmatpush1.bf16.msra.mxu0 %v4416
    %6687 = vmatprep.subr.bf16.mxu0 %v4425
    %6688 = vmatpush1.bf16.msra.mxu0 %v4424
    %6689 = vmatprep.subr.bf16.mxu0 %v4433
    %6690 = vmatpush1.bf16.msra.mxu0 %v4432
    %6691 = vmatprep.subr.bf16.mxu0 %v4441
    %6692 = vmatpush1.bf16.msra.mxu0 %v4440
    %6693 = vmatprep.subr.bf16.mxu0 %v4449
    %6694 = vmatpush1.bf16.msra.mxu0 %v4448
    %6695 = vmatprep.subr.bf16.mxu0 %v4457
    %6696 = vmatpush1.bf16.msra.mxu0 %v4456
    %6697 = vmatprep.subr.bf16.mxu0 %v4465
    %6698 = vmatpush1.bf16.msra.mxu0 %v4464
    %6699 = vmatprep.subr.bf16.mxu0 %v4473
    %6700 = vmatpush1.bf16.msra.mxu0 %v4472
    %6701 = vmatprep.subr.bf16.mxu0 %v4481
    %6702 = vmatpush1.bf16.msra.mxu0 %v4480
    %6703 = vmatprep.subr.bf16.mxu0 %v4489
    %6704 = vmatpush1.bf16.msra.mxu0 %v4488
    %6705 = vmatprep.subr.bf16.mxu0 %v4497
    %6706 = vmatpush1.bf16.msra.mxu0 %v4496
    %6707 = vmatprep.subr.bf16.mxu0 %v4505
    %6708 = vmatpush1.bf16.msra.mxu0 %v4504
    %6709 = vmatprep.subr.bf16.mxu0 %v4513
    %6710 = vmatpush1.bf16.msra.mxu0 %v4512
    %6711 = vmatprep.mubr.bf16.mxu0 %v1161
    %6712 = vmatmul.mubr.bf16.gmra.mrb[0].mxu0 %v1160
    %v6713 = vpop.f32.mrb[0].mxu0
    %v6714 = vadd.f32 %v6673, %v6713
    %v6715 = vpop.f32.mrb[0].mxu0
    %v6716 = vadd.f32 %v6675, %v6715
    %v6717 = vpop.f32.mrb[0].mxu0
    %v6718 = vpop.f32.mrb[0].mxu0
    %6719 = vdwg.mxu0
    %6720 = vmatprep.subr.bf16.mxu0 %v4521
    %6721 = vmatpush1.bf16.msra.mxu0 %v4520
    %6722 = vmatprep.subr.bf16.mxu0 %v4529
    %6723 = vmatpush1.bf16.msra.mxu0 %v4528
    %6724 = vmatprep.subr.bf16.mxu0 %v4537
    %6725 = vmatpush1.bf16.msra.mxu0 %v4536
    %6726 = vmatprep.subr.bf16.mxu0 %v4545
    %6727 = vmatpush1.bf16.msra.mxu0 %v4544
    %6728 = vmatprep.subr.bf16.mxu0 %v4553
    %6729 = vmatpush1.bf16.msra.mxu0 %v4552
    %6730 = vmatprep.subr.bf16.mxu0 %v4561
    %6731 = vmatpush1.bf16.msra.mxu0 %v4560
    %6732 = vmatprep.subr.bf16.mxu0 %v4569
    %6733 = vmatpush1.bf16.msra.mxu0 %v4568
    %6734 = vmatprep.subr.bf16.mxu0 %v4577
    %6735 = vmatpush1.bf16.msra.mxu0 %v4576
    %6736 = vmatprep.subr.bf16.mxu0 %v4585
    %6737 = vmatpush1.bf16.msra.mxu0 %v4584
    %6738 = vmatprep.subr.bf16.mxu0 %v4593
    %6739 = vmatpush1.bf16.msra.mxu0 %v4592
    %6740 = vmatprep.subr.bf16.mxu0 %v4601
    %6741 = vmatpush1.bf16.msra.mxu0 %v4600
    %6742 = vmatprep.subr.bf16.mxu0 %v4609
    %6743 = vmatpush1.bf16.msra.mxu0 %v4608
    %6744 = vmatprep.subr.bf16.mxu0 %v4617
    %6745 = vmatpush1.bf16.msra.mxu0 %v4616
    %6746 = vmatprep.subr.bf16.mxu0 %v4625
    %6747 = vmatpush1.bf16.msra.mxu0 %v4624
    %6748 = vmatprep.subr.bf16.mxu0 %v4633
    %6749 = vmatpush1.bf16.msra.mxu0 %v4632
    %6750 = vmatprep.subr.bf16.mxu0 %v4641
    %6751 = vmatpush1.bf16.msra.mxu0 %v4640
    %6752 = vmatprep.mubr.bf16.mxu0 %v1163
    %6753 = vmatmul.mubr.bf16.gmra.mrb[0].mxu0 %v1162
    %v6754 = vpop.f32.mrb[0].mxu0
    %v6755 = vadd.f32 %v6714, %v6754
    %v6756 = vpop.f32.mrb[0].mxu0
    %v6757 = vadd.f32 %v6716, %v6756
    %v6758 = vpop.f32.mrb[0].mxu0
    %v6759 = vpop.f32.mrb[0].mxu0
    %6760 = vdwg.mxu0
    %6761 = vmatprep.subr.bf16.mxu0 %v4649
    %6762 = vmatpush1.bf16.msra.mxu0 %v4648
    %6763 = vmatprep.subr.bf16.mxu0 %v4657
    %6764 = vmatpush1.bf16.msra.mxu0 %v4656
    %6765 = vmatprep.subr.bf16.mxu0 %v4665
    %6766 = vmatpush1.bf16.msra.mxu0 %v4664
    %6767 = vmatprep.subr.bf16.mxu0 %v4673
    %6768 = vmatpush1.bf16.msra.mxu0 %v4672
    %6769 = vmatprep.subr.bf16.mxu0 %v4681
    %6770 = vmatpush1.bf16.msra.mxu0 %v4680
    %6771 = vmatprep.subr.bf16.mxu0 %v4689
    %6772 = vmatpush1.bf16.msra.mxu0 %v4688
    %6773 = vmatprep.subr.bf16.mxu0 %v4697
    %6774 = vmatpush1.bf16.msra.mxu0 %v4696
    %6775 = vmatprep.subr.bf16.mxu0 %v4705
    %6776 = vmatpush1.bf16.msra.mxu0 %v4704
    %6777 = vmatprep.subr.bf16.mxu0 %v4713
    %6778 = vmatpush1.bf16.msra.mxu0 %v4712
    %6779 = vmatprep.subr.bf16.mxu0 %v4721
    %6780 = vmatpush1.bf16.msra.mxu0 %v4720
    %6781 = vmatprep.subr.bf16.mxu0 %v4729
    %6782 = vmatpush1.bf16.msra.mxu0 %v4728
    %6783 = vmatprep.subr.bf16.mxu0 %v4737
    %6784 = vmatpush1.bf16.msra.mxu0 %v4736
    %6785 = vmatprep.subr.bf16.mxu0 %v4745
    %6786 = vmatpush1.bf16.msra.mxu0 %v4744
    %6787 = vmatprep.subr.bf16.mxu0 %v4753
    %6788 = vmatpush1.bf16.msra.mxu0 %v4752
    %6789 = vmatprep.subr.bf16.mxu0 %v4761
    %6790 = vmatpush1.bf16.msra.mxu0 %v4760
    %6791 = vmatprep.subr.bf16.mxu0 %v4769
    %6792 = vmatpush1.bf16.msra.mxu0 %v4768
    %6793 = vmatprep.mubr.bf16.mxu0 %v1165
    %6794 = vmatmul.mubr.bf16.gmra.mrb[0].mxu0 %v1164
    %v6795 = vpop.f32.mrb[0].mxu0
    %v6796 = vadd.f32 %v6755, %v6795
    %v6797 = vpop.f32.mrb[0].mxu0
    %v6798 = vadd.f32 %v6757, %v6797
    %v6799 = vpop.f32.mrb[0].mxu0
    %v6800 = vpop.f32.mrb[0].mxu0
    %6801 = vdwg.mxu0
    %6802 = vmatprep.subr.bf16.mxu0 %v4777
    %6803 = vmatpush1.bf16.msra.mxu0 %v4776
    %6804 = vmatprep.subr.bf16.mxu0 %v4785
    %6805 = vmatpush1.bf16.msra.mxu0 %v4784
    %6806 = vmatprep.subr.bf16.mxu0 %v4793
    %6807 = vmatpush1.bf16.msra.mxu0 %v4792
    %6808 = vmatprep.subr.bf16.mxu0 %v4801
    %6809 = vmatpush1.bf16.msra.mxu0 %v4800
    %6810 = vmatprep.subr.bf16.mxu0 %v4809
    %6811 = vmatpush1.bf16.msra.mxu0 %v4808
    %6812 = vmatprep.subr.bf16.mxu0 %v4817
    %6813 = vmatpush1.bf16.msra.mxu0 %v4816
    %6814 = vmatprep.subr.bf16.mxu0 %v4825
    %6815 = vmatpush1.bf16.msra.mxu0 %v4824
    %6816 = vmatprep.subr.bf16.mxu0 %v4833
    %6817 = vmatpush1.bf16.msra.mxu0 %v4832
    %6818 = vmatprep.subr.bf16.mxu0 %v4841
    %6819 = vmatpush1.bf16.msra.mxu0 %v4840
    %6820 = vmatprep.subr.bf16.mxu0 %v4849
    %6821 = vmatpush1.bf16.msra.mxu0 %v4848
    %6822 = vmatprep.subr.bf16.mxu0 %v4857
    %6823 = vmatpush1.bf16.msra.mxu0 %v4856
    %6824 = vmatprep.subr.bf16.mxu0 %v4865
    %6825 = vmatpush1.bf16.msra.mxu0 %v4864
    %6826 = vmatprep.subr.bf16.mxu0 %v4873
    %6827 = vmatpush1.bf16.msra.mxu0 %v4872
    %6828 = vmatprep.subr.bf16.mxu0 %v4881
    %6829 = vmatpush1.bf16.msra.mxu0 %v4880
    %6830 = vmatprep.subr.bf16.mxu0 %v4889
    %6831 = vmatpush1.bf16.msra.mxu0 %v4888
    %6832 = vmatprep.subr.bf16.mxu0 %v4897
    %6833 = vmatpush1.bf16.msra.mxu0 %v4896
    %6834 = vmatprep.mubr.bf16.mxu0 %v1167
    %6835 = vmatmul.mubr.bf16.gmra.mrb[0].mxu0 %v1166
    %v6836 = vpop.f32.mrb[0].mxu0
    %v6837 = vadd.f32 %v6796, %v6836
    %v6838 = vpop.f32.mrb[0].mxu0
    %v6839 = vadd.f32 %v6798, %v6838
    %v6840 = vpop.f32.mrb[0].mxu0
    %v6841 = vpop.f32.mrb[0].mxu0
    %6842 = vdwg.mxu0
    %6843 = vmatprep.subr.bf16.mxu0 %v4905
    %6844 = vmatpush1.bf16.msra.mxu0 %v4904
    %6845 = vmatprep.subr.bf16.mxu0 %v4913
    %6846 = vmatpush1.bf16.msra.mxu0 %v4912
    %6847 = vmatprep.subr.bf16.mxu0 %v4921
    %6848 = vmatpush1.bf16.msra.mxu0 %v4920
    %6849 = vmatprep.subr.bf16.mxu0 %v4929
    %6850 = vmatpush1.bf16.msra.mxu0 %v4928
    %6851 = vmatprep.subr.bf16.mxu0 %v4937
    %6852 = vmatpush1.bf16.msra.mxu0 %v4936
    %6853 = vmatprep.subr.bf16.mxu0 %v4945
    %6854 = vmatpush1.bf16.msra.mxu0 %v4944
    %6855 = vmatprep.subr.bf16.mxu0 %v4953
    %6856 = vmatpush1.bf16.msra.mxu0 %v4952
    %6857 = vmatprep.subr.bf16.mxu0 %v4961
    %6858 = vmatpush1.bf16.msra.mxu0 %v4960
    %6859 = vmatprep.subr.bf16.mxu0 %v4969
    %6860 = vmatpush1.bf16.msra.mxu0 %v4968
    %6861 = vmatprep.subr.bf16.mxu0 %v4977
    %6862 = vmatpush1.bf16.msra.mxu0 %v4976
    %6863 = vmatprep.subr.bf16.mxu0 %v4985
    %6864 = vmatpush1.bf16.msra.mxu0 %v4984
    %6865 = vmatprep.subr.bf16.mxu0 %v4993
    %6866 = vmatpush1.bf16.msra.mxu0 %v4992
    %6867 = vmatprep.subr.bf16.mxu0 %v5001
    %6868 = vmatpush1.bf16.msra.mxu0 %v5000
    %6869 = vmatprep.subr.bf16.mxu0 %v5009
    %6870 = vmatpush1.bf16.msra.mxu0 %v5008
    %6871 = vmatprep.subr.bf16.mxu0 %v5017
    %6872 = vmatpush1.bf16.msra.mxu0 %v5016
    %6873 = vmatprep.subr.bf16.mxu0 %v5025
    %6874 = vmatpush1.bf16.msra.mxu0 %v5024
    %6875 = vmatprep.mubr.bf16.mxu0 %v1169
    %6876 = vmatmul.mubr.bf16.gmra.mrb[0].mxu0 %v1168
    %v6877 = vpop.f32.mrb[0].mxu0
    %v6878 = vadd.f32 %v6837, %v6877
    %v6879 = vpop.f32.mrb[0].mxu0
    %v6880 = vadd.f32 %v6839, %v6879
    %v6881 = vpop.f32.mrb[0].mxu0
    %v6882 = vpop.f32.mrb[0].mxu0
    %6883 = vdwg.mxu0
    %6884 = vmatprep.subr.bf16.mxu0 %v5033
    %6885 = vmatpush1.bf16.msra.mxu0 %v5032
    %6886 = vmatprep.subr.bf16.mxu0 %v5041
    %6887 = vmatpush1.bf16.msra.mxu0 %v5040
    %6888 = vmatprep.subr.bf16.mxu0 %v5049
    %6889 = vmatpush1.bf16.msra.mxu0 %v5048
    %6890 = vmatprep.subr.bf16.mxu0 %v5057
    %6891 = vmatpush1.bf16.msra.mxu0 %v5056
    %6892 = vmatprep.subr.bf16.mxu0 %v5065
    %6893 = vmatpush1.bf16.msra.mxu0 %v5064
    %6894 = vmatprep.subr.bf16.mxu0 %v5073
    %6895 = vmatpush1.bf16.msra.mxu0 %v5072
    %6896 = vmatprep.subr.bf16.mxu0 %v5081
    %6897 = vmatpush1.bf16.msra.mxu0 %v5080
    %6898 = vmatprep.subr.bf16.mxu0 %v5089
    %6899 = vmatpush1.bf16.msra.mxu0 %v5088
    %6900 = vmatprep.subr.bf16.mxu0 %v5097
    %6901 = vmatpush1.bf16.msra.mxu0 %v5096
    %6902 = vmatprep.subr.bf16.mxu0 %v5105
    %6903 = vmatpush1.bf16.msra.mxu0 %v5104
    %6904 = vmatprep.subr.bf16.mxu0 %v5113
    %6905 = vmatpush1.bf16.msra.mxu0 %v5112
    %6906 = vmatprep.subr.bf16.mxu0 %v5121
    %6907 = vmatpush1.bf16.msra.mxu0 %v5120
    %6908 = vmatprep.subr.bf16.mxu0 %v5129
    %6909 = vmatpush1.bf16.msra.mxu0 %v5128
    %6910 = vmatprep.subr.bf16.mxu0 %v5137
    %6911 = vmatpush1.bf16.msra.mxu0 %v5136
    %6912 = vmatprep.subr.bf16.mxu0 %v5145
    %6913 = vmatpush1.bf16.msra.mxu0 %v5144
    %6914 = vmatprep.subr.bf16.mxu0 %v5153
    %6915 = vmatpush1.bf16.msra.mxu0 %v5152
    %6916 = vmatprep.mubr.bf16.mxu0 %v1171
    %6917 = vmatmul.mubr.bf16.gmra.mrb[0].mxu0 %v1170
    %v6918 = vpop.f32.mrb[0].mxu0
    %v6919 = vadd.f32 %v6878, %v6918
    %v6920 = vpop.f32.mrb[0].mxu0
    %v6921 = vadd.f32 %v6880, %v6920
    %v6922 = vpop.f32.mrb[0].mxu0
    %v6923 = vpop.f32.mrb[0].mxu0
    %6924 = vdwg.mxu0
    %6925 = vmatprep.subr.bf16.mxu0 %v5161
    %6926 = vmatpush1.bf16.msra.mxu0 %v5160
    %6927 = vmatprep.subr.bf16.mxu0 %v5169
    %6928 = vmatpush1.bf16.msra.mxu0 %v5168
    %6929 = vmatprep.subr.bf16.mxu0 %v5177
    %6930 = vmatpush1.bf16.msra.mxu0 %v5176
    %6931 = vmatprep.subr.bf16.mxu0 %v5185
    %6932 = vmatpush1.bf16.msra.mxu0 %v5184
    %6933 = vmatprep.subr.bf16.mxu0 %v5193
    %6934 = vmatpush1.bf16.msra.mxu0 %v5192
    %6935 = vmatprep.subr.bf16.mxu0 %v5201
    %6936 = vmatpush1.bf16.msra.mxu0 %v5200
    %6937 = vmatprep.subr.bf16.mxu0 %v5209
    %6938 = vmatpush1.bf16.msra.mxu0 %v5208
    %6939 = vmatprep.subr.bf16.mxu0 %v5217
    %6940 = vmatpush1.bf16.msra.mxu0 %v5216
    %6941 = vmatprep.subr.bf16.mxu0 %v5225
    %6942 = vmatpush1.bf16.msra.mxu0 %v5224
    %6943 = vmatprep.subr.bf16.mxu0 %v5233
    %6944 = vmatpush1.bf16.msra.mxu0 %v5232
    %6945 = vmatprep.subr.bf16.mxu0 %v5241
    %6946 = vmatpush1.bf16.msra.mxu0 %v5240
    %6947 = vmatprep.subr.bf16.mxu0 %v5249
    %6948 = vmatpush1.bf16.msra.mxu0 %v5248
    %6949 = vmatprep.subr.bf16.mxu0 %v5257
    %6950 = vmatpush1.bf16.msra.mxu0 %v5256
    %6951 = vmatprep.subr.bf16.mxu0 %v5265
    %6952 = vmatpush1.bf16.msra.mxu0 %v5264
    %6953 = vmatprep.subr.bf16.mxu0 %v5273
    %6954 = vmatpush1.bf16.msra.mxu0 %v5272
    %6955 = vmatprep.subr.bf16.mxu0 %v5281
    %6956 = vmatpush1.bf16.msra.mxu0 %v5280
    %6957 = vmatprep.mubr.bf16.mxu0 %v1173
    %6958 = vmatmul.mubr.bf16.gmra.mrb[0].mxu0 %v1172
    %v6959 = vpop.f32.mrb[0].mxu0
    %v6960 = vadd.f32 %v6919, %v6959
    %v6961 = vpop.f32.mrb[0].mxu0
    %v6962 = vadd.f32 %v6921, %v6961
    %v6963 = vpop.f32.mrb[0].mxu0
    %v6964 = vpop.f32.mrb[0].mxu0
    %6965 = vdwg.mxu0
    %6966 = vmatprep.subr.bf16.mxu0 %v4267
    %6967 = vmatpush1.bf16.msra.mxu0 %v4266
    %6968 = vmatprep.subr.bf16.mxu0 %v4275
    %6969 = vmatpush1.bf16.msra.mxu0 %v4274
    %6970 = vmatprep.subr.bf16.mxu0 %v4283
    %6971 = vmatpush1.bf16.msra.mxu0 %v4282
    %6972 = vmatprep.subr.bf16.mxu0 %v4291
    %6973 = vmatpush1.bf16.msra.mxu0 %v4290
    %6974 = vmatprep.subr.bf16.mxu0 %v4299
    %6975 = vmatpush1.bf16.msra.mxu0 %v4298
    %6976 = vmatprep.subr.bf16.mxu0 %v4307
    %6977 = vmatpush1.bf16.msra.mxu0 %v4306
    %6978 = vmatprep.subr.bf16.mxu0 %v4315
    %6979 = vmatpush1.bf16.msra.mxu0 %v4314
    %6980 = vmatprep.subr.bf16.mxu0 %v4323
    %6981 = vmatpush1.bf16.msra.mxu0 %v4322
    %6982 = vmatprep.subr.bf16.mxu0 %v4331
    %6983 = vmatpush1.bf16.msra.mxu0 %v4330
    %6984 = vmatprep.subr.bf16.mxu0 %v4339
    %6985 = vmatpush1.bf16.msra.mxu0 %v4338
    %6986 = vmatprep.subr.bf16.mxu0 %v4347
    %6987 = vmatpush1.bf16.msra.mxu0 %v4346
    %6988 = vmatprep.subr.bf16.mxu0 %v4355
    %6989 = vmatpush1.bf16.msra.mxu0 %v4354
    %6990 = vmatprep.subr.bf16.mxu0 %v4363
    %6991 = vmatpush1.bf16.msra.mxu0 %v4362
    %6992 = vmatprep.subr.bf16.mxu0 %v4371
    %6993 = vmatpush1.bf16.msra.mxu0 %v4370
    %6994 = vmatprep.subr.bf16.mxu0 %v4379
    %6995 = vmatpush1.bf16.msra.mxu0 %v4378
    %6996 = vmatprep.subr.bf16.mxu0 %v4387
    %6997 = vmatpush1.bf16.msra.mxu0 %v4386
    %6998 = vmatprep.mubr.bf16.mxu0 %v1159
    %6999 = vmatmul.mubr.bf16.gmra.mrb[0].mxu0 %v1158
    %v7000 = vpop.f32.mrb[0].mxu0
    %v7001 = vadd.f32 %v1113, %v7000
    %v7002 = vpop.f32.mrb[0].mxu0
    %v7003 = vadd.f32 %v1117, %v7002
    %v7004 = vpop.f32.mrb[0].mxu0
    %v7005 = vpop.f32.mrb[0].mxu0
    %7006 = vdwg.mxu0
    %7007 = vmatprep.subr.bf16.mxu0 %v4395
    %7008 = vmatpush1.bf16.msra.mxu0 %v4394
    %7009 = vmatprep.subr.bf16.mxu0 %v4403
    %7010 = vmatpush1.bf16.msra.mxu0 %v4402
    %7011 = vmatprep.subr.bf16.mxu0 %v4411
    %7012 = vmatpush1.bf16.msra.mxu0 %v4410
    %7013 = vmatprep.subr.bf16.mxu0 %v4419
    %7014 = vmatpush1.bf16.msra.mxu0 %v4418
    %7015 = vmatprep.subr.bf16.mxu0 %v4427
    %7016 = vmatpush1.bf16.msra.mxu0 %v4426
    %7017 = vmatprep.subr.bf16.mxu0 %v4435
    %7018 = vmatpush1.bf16.msra.mxu0 %v4434
    %7019 = vmatprep.subr.bf16.mxu0 %v4443
    %7020 = vmatpush1.bf16.msra.mxu0 %v4442
    %7021 = vmatprep.subr.bf16.mxu0 %v4451
    %7022 = vmatpush1.bf16.msra.mxu0 %v4450
    %7023 = vmatprep.subr.bf16.mxu0 %v4459
    %7024 = vmatpush1.bf16.msra.mxu0 %v4458
    %7025 = vmatprep.subr.bf16.mxu0 %v4467
    %7026 = vmatpush1.bf16.msra.mxu0 %v4466
    %7027 = vmatprep.subr.bf16.mxu0 %v4475
    %7028 = vmatpush1.bf16.msra.mxu0 %v4474
    %7029 = vmatprep.subr.bf16.mxu0 %v4483
    %7030 = vmatpush1.bf16.msra.mxu0 %v4482
    %7031 = vmatprep.subr.bf16.mxu0 %v4491
    %7032 = vmatpush1.bf16.msra.mxu0 %v4490
    %7033 = vmatprep.subr.bf16.mxu0 %v4499
    %7034 = vmatpush1.bf16.msra.mxu0 %v4498
    %7035 = vmatprep.subr.bf16.mxu0 %v4507
    %7036 = vmatpush1.bf16.msra.mxu0 %v4506
    %7037 = vmatprep.subr.bf16.mxu0 %v4515
    %7038 = vmatpush1.bf16.msra.mxu0 %v4514
    %7039 = vmatprep.mubr.bf16.mxu0 %v1161
    %7040 = vmatmul.mubr.bf16.gmra.mrb[0].mxu0 %v1160
    %v7041 = vpop.f32.mrb[0].mxu0
    %v7042 = vadd.f32 %v7001, %v7041
    %v7043 = vpop.f32.mrb[0].mxu0
    %v7044 = vadd.f32 %v7003, %v7043
    %v7045 = vpop.f32.mrb[0].mxu0
    %v7046 = vpop.f32.mrb[0].mxu0
    %7047 = vdwg.mxu0
    %7048 = vmatprep.subr.bf16.mxu0 %v4523
    %7049 = vmatpush1.bf16.msra.mxu0 %v4522
    %7050 = vmatprep.subr.bf16.mxu0 %v4531
    %7051 = vmatpush1.bf16.msra.mxu0 %v4530
    %7052 = vmatprep.subr.bf16.mxu0 %v4539
    %7053 = vmatpush1.bf16.msra.mxu0 %v4538
    %7054 = vmatprep.subr.bf16.mxu0 %v4547
    %7055 = vmatpush1.bf16.msra.mxu0 %v4546
    %7056 = vmatprep.subr.bf16.mxu0 %v4555
    %7057 = vmatpush1.bf16.msra.mxu0 %v4554
    %7058 = vmatprep.subr.bf16.mxu0 %v4563
    %7059 = vmatpush1.bf16.msra.mxu0 %v4562
    %7060 = vmatprep.subr.bf16.mxu0 %v4571
    %7061 = vmatpush1.bf16.msra.mxu0 %v4570
    %7062 = vmatprep.subr.bf16.mxu0 %v4579
    %7063 = vmatpush1.bf16.msra.mxu0 %v4578
    %7064 = vmatprep.subr.bf16.mxu0 %v4587
    %7065 = vmatpush1.bf16.msra.mxu0 %v4586
    %7066 = vmatprep.subr.bf16.mxu0 %v4595
    %7067 = vmatpush1.bf16.msra.mxu0 %v4594
    %7068 = vmatprep.subr.bf16.mxu0 %v4603
    %7069 = vmatpush1.bf16.msra.mxu0 %v4602
    %7070 = vmatprep.subr.bf16.mxu0 %v4611
    %7071 = vmatpush1.bf16.msra.mxu0 %v4610
    %7072 = vmatprep.subr.bf16.mxu0 %v4619
    %7073 = vmatpush1.bf16.msra.mxu0 %v4618
    %7074 = vmatprep.subr.bf16.mxu0 %v4627
    %7075 = vmatpush1.bf16.msra.mxu0 %v4626
    %7076 = vmatprep.subr.bf16.mxu0 %v4635
    %7077 = vmatpush1.bf16.msra.mxu0 %v4634
    %7078 = vmatprep.subr.bf16.mxu0 %v4643
    %7079 = vmatpush1.bf16.msra.mxu0 %v4642
    %7080 = vmatprep.mubr.bf16.mxu0 %v1163
    %7081 = vmatmul.mubr.bf16.gmra.mrb[0].mxu0 %v1162
    %v7082 = vpop.f32.mrb[0].mxu0
    %v7083 = vadd.f32 %v7042, %v7082
    %v7084 = vpop.f32.mrb[0].mxu0
    %v7085 = vadd.f32 %v7044, %v7084
    %v7086 = vpop.f32.mrb[0].mxu0
    %v7087 = vpop.f32.mrb[0].mxu0
    %7088 = vdwg.mxu0
    %7089 = vmatprep.subr.bf16.mxu0 %v4651
    %7090 = vmatpush1.bf16.msra.mxu0 %v4650
    %7091 = vmatprep.subr.bf16.mxu0 %v4659
    %7092 = vmatpush1.bf16.msra.mxu0 %v4658
    %7093 = vmatprep.subr.bf16.mxu0 %v4667
    %7094 = vmatpush1.bf16.msra.mxu0 %v4666
    %7095 = vmatprep.subr.bf16.mxu0 %v4675
    %7096 = vmatpush1.bf16.msra.mxu0 %v4674
    %7097 = vmatprep.subr.bf16.mxu0 %v4683
    %7098 = vmatpush1.bf16.msra.mxu0 %v4682
    %7099 = vmatprep.subr.bf16.mxu0 %v4691
    %7100 = vmatpush1.bf16.msra.mxu0 %v4690
    %7101 = vmatprep.subr.bf16.mxu0 %v4699
    %7102 = vmatpush1.bf16.msra.mxu0 %v4698
    %7103 = vmatprep.subr.bf16.mxu0 %v4707
    %7104 = vmatpush1.bf16.msra.mxu0 %v4706
    %7105 = vmatprep.subr.bf16.mxu0 %v4715
    %7106 = vmatpush1.bf16.msra.mxu0 %v4714
    %7107 = vmatprep.subr.bf16.mxu0 %v4723
    %7108 = vmatpush1.bf16.msra.mxu0 %v4722
    %7109 = vmatprep.subr.bf16.mxu0 %v4731
    %7110 = vmatpush1.bf16.msra.mxu0 %v4730
    %7111 = vmatprep.subr.bf16.mxu0 %v4739
    %7112 = vmatpush1.bf16.msra.mxu0 %v4738
    %7113 = vmatprep.subr.bf16.mxu0 %v4747
    %7114 = vmatpush1.bf16.msra.mxu0 %v4746
    %7115 = vmatprep.subr.bf16.mxu0 %v4755
    %7116 = vmatpush1.bf16.msra.mxu0 %v4754
    %7117 = vmatprep.subr.bf16.mxu0 %v4763
    %7118 = vmatpush1.bf16.msra.mxu0 %v4762
    %7119 = vmatprep.subr.bf16.mxu0 %v4771
    %7120 = vmatpush1.bf16.msra.mxu0 %v4770
    %7121 = vmatprep.mubr.bf16.mxu0 %v1165
    %7122 = vmatmul.mubr.bf16.gmra.mrb[0].mxu0 %v1164
    %v7123 = vpop.f32.mrb[0].mxu0
    %v7124 = vadd.f32 %v7083, %v7123
    %v7125 = vpop.f32.mrb[0].mxu0
    %v7126 = vadd.f32 %v7085, %v7125
    %v7127 = vpop.f32.mrb[0].mxu0
    %v7128 = vpop.f32.mrb[0].mxu0
    %7129 = vdwg.mxu0
    %7130 = vmatprep.subr.bf16.mxu0 %v4779
    %7131 = vmatpush1.bf16.msra.mxu0 %v4778
    %7132 = vmatprep.subr.bf16.mxu0 %v4787
    %7133 = vmatpush1.bf16.msra.mxu0 %v4786
    %7134 = vmatprep.subr.bf16.mxu0 %v4795
    %7135 = vmatpush1.bf16.msra.mxu0 %v4794
    %7136 = vmatprep.subr.bf16.mxu0 %v4803
    %7137 = vmatpush1.bf16.msra.mxu0 %v4802
    %7138 = vmatprep.subr.bf16.mxu0 %v4811
    %7139 = vmatpush1.bf16.msra.mxu0 %v4810
    %7140 = vmatprep.subr.bf16.mxu0 %v4819
    %7141 = vmatpush1.bf16.msra.mxu0 %v4818
    %7142 = vmatprep.subr.bf16.mxu0 %v4827
    %7143 = vmatpush1.bf16.msra.mxu0 %v4826
    %7144 = vmatprep.subr.bf16.mxu0 %v4835
    %7145 = vmatpush1.bf16.msra.mxu0 %v4834
    %7146 = vmatprep.subr.bf16.mxu0 %v4843
    %7147 = vmatpush1.bf16.msra.mxu0 %v4842
    %7148 = vmatprep.subr.bf16.mxu0 %v4851
    %7149 = vmatpush1.bf16.msra.mxu0 %v4850
    %7150 = vmatprep.subr.bf16.mxu0 %v4859
    %7151 = vmatpush1.bf16.msra.mxu0 %v4858
    %7152 = vmatprep.subr.bf16.mxu0 %v4867
    %7153 = vmatpush1.bf16.msra.mxu0 %v4866
    %7154 = vmatprep.subr.bf16.mxu0 %v4875
    %7155 = vmatpush1.bf16.msra.mxu0 %v4874
    %7156 = vmatprep.subr.bf16.mxu0 %v4883
    %7157 = vmatpush1.bf16.msra.mxu0 %v4882
    %7158 = vmatprep.subr.bf16.mxu0 %v4891
    %7159 = vmatpush1.bf16.msra.mxu0 %v4890
    %7160 = vmatprep.subr.bf16.mxu0 %v4899
    %7161 = vmatpush1.bf16.msra.mxu0 %v4898
    %7162 = vmatprep.mubr.bf16.mxu0 %v1167
    %7163 = vmatmul.mubr.bf16.gmra.mrb[0].mxu0 %v1166
    %v7164 = vpop.f32.mrb[0].mxu0
    %v7165 = vadd.f32 %v7124, %v7164
    %v7166 = vpop.f32.mrb[0].mxu0
    %v7167 = vadd.f32 %v7126, %v7166
    %v7168 = vpop.f32.mrb[0].mxu0
    %v7169 = vpop.f32.mrb[0].mxu0
    %7170 = vdwg.mxu0
    %7171 = vmatprep.subr.bf16.mxu0 %v4907
    %7172 = vmatpush1.bf16.msra.mxu0 %v4906
    %7173 = vmatprep.subr.bf16.mxu0 %v4915
    %7174 = vmatpush1.bf16.msra.mxu0 %v4914
    %7175 = vmatprep.subr.bf16.mxu0 %v4923
    %7176 = vmatpush1.bf16.msra.mxu0 %v4922
    %7177 = vmatprep.subr.bf16.mxu0 %v4931
    %7178 = vmatpush1.bf16.msra.mxu0 %v4930
    %7179 = vmatprep.subr.bf16.mxu0 %v4939
    %7180 = vmatpush1.bf16.msra.mxu0 %v4938
    %7181 = vmatprep.subr.bf16.mxu0 %v4947
    %7182 = vmatpush1.bf16.msra.mxu0 %v4946
    %7183 = vmatprep.subr.bf16.mxu0 %v4955
    %7184 = vmatpush1.bf16.msra.mxu0 %v4954
    %7185 = vmatprep.subr.bf16.mxu0 %v4963
    %7186 = vmatpush1.bf16.msra.mxu0 %v4962
    %7187 = vmatprep.subr.bf16.mxu0 %v4971
    %7188 = vmatpush1.bf16.msra.mxu0 %v4970
    %7189 = vmatprep.subr.bf16.mxu0 %v4979
    %7190 = vmatpush1.bf16.msra.mxu0 %v4978
    %7191 = vmatprep.subr.bf16.mxu0 %v4987
    %7192 = vmatpush1.bf16.msra.mxu0 %v4986
    %7193 = vmatprep.subr.bf16.mxu0 %v4995
    %7194 = vmatpush1.bf16.msra.mxu0 %v4994
    %7195 = vmatprep.subr.bf16.mxu0 %v5003
    %7196 = vmatpush1.bf16.msra.mxu0 %v5002
    %7197 = vmatprep.subr.bf16.mxu0 %v5011
    %7198 = vmatpush1.bf16.msra.mxu0 %v5010
    %7199 = vmatprep.subr.bf16.mxu0 %v5019
    %7200 = vmatpush1.bf16.msra.mxu0 %v5018
    %7201 = vmatprep.subr.bf16.mxu0 %v5027
    %7202 = vmatpush1.bf16.msra.mxu0 %v5026
    %7203 = vmatprep.mubr.bf16.mxu0 %v1169
    %7204 = vmatmul.mubr.bf16.gmra.mrb[0].mxu0 %v1168
    %v7205 = vpop.f32.mrb[0].mxu0
    %v7206 = vadd.f32 %v7165, %v7205
    %v7207 = vpop.f32.mrb[0].mxu0
    %v7208 = vadd.f32 %v7167, %v7207
    %v7209 = vpop.f32.mrb[0].mxu0
    %v7210 = vpop.f32.mrb[0].mxu0
    %7211 = vdwg.mxu0
    %7212 = vmatprep.subr.bf16.mxu0 %v5035
    %7213 = vmatpush1.bf16.msra.mxu0 %v5034
    %7214 = vmatprep.subr.bf16.mxu0 %v5043
    %7215 = vmatpush1.bf16.msra.mxu0 %v5042
    %7216 = vmatprep.subr.bf16.mxu0 %v5051
    %7217 = vmatpush1.bf16.msra.mxu0 %v5050
    %7218 = vmatprep.subr.bf16.mxu0 %v5059
    %7219 = vmatpush1.bf16.msra.mxu0 %v5058
    %7220 = vmatprep.subr.bf16.mxu0 %v5067
    %7221 = vmatpush1.bf16.msra.mxu0 %v5066
    %7222 = vmatprep.subr.bf16.mxu0 %v5075
    %7223 = vmatpush1.bf16.msra.mxu0 %v5074
    %7224 = vmatprep.subr.bf16.mxu0 %v5083
    %7225 = vmatpush1.bf16.msra.mxu0 %v5082
    %7226 = vmatprep.subr.bf16.mxu0 %v5091
    %7227 = vmatpush1.bf16.msra.mxu0 %v5090
    %7228 = vmatprep.subr.bf16.mxu0 %v5099
    %7229 = vmatpush1.bf16.msra.mxu0 %v5098
    %7230 = vmatprep.subr.bf16.mxu0 %v5107
    %7231 = vmatpush1.bf16.msra.mxu0 %v5106
    %7232 = vmatprep.subr.bf16.mxu0 %v5115
    %7233 = vmatpush1.bf16.msra.mxu0 %v5114
    %7234 = vmatprep.subr.bf16.mxu0 %v5123
    %7235 = vmatpush1.bf16.msra.mxu0 %v5122
    %7236 = vmatprep.subr.bf16.mxu0 %v5131
    %7237 = vmatpush1.bf16.msra.mxu0 %v5130
    %7238 = vmatprep.subr.bf16.mxu0 %v5139
    %7239 = vmatpush1.bf16.msra.mxu0 %v5138
    %7240 = vmatprep.subr.bf16.mxu0 %v5147
    %7241 = vmatpush1.bf16.msra.mxu0 %v5146
    %7242 = vmatprep.subr.bf16.mxu0 %v5155
    %7243 = vmatpush1.bf16.msra.mxu0 %v5154
    %7244 = vmatprep.mubr.bf16.mxu0 %v1171
    %7245 = vmatmul.mubr.bf16.gmra.mrb[0].mxu0 %v1170
    %v7246 = vpop.f32.mrb[0].mxu0
    %v7247 = vadd.f32 %v7206, %v7246
    %v7248 = vpop.f32.mrb[0].mxu0
    %v7249 = vadd.f32 %v7208, %v7248
    %v7250 = vpop.f32.mrb[0].mxu0
    %v7251 = vpop.f32.mrb[0].mxu0
    %7252 = vdwg.mxu0
    %7253 = vmatprep.subr.bf16.mxu0 %v5163
    %7254 = vmatpush1.bf16.msra.mxu0 %v5162
    %7255 = vmatprep.subr.bf16.mxu0 %v5171
    %7256 = vmatpush1.bf16.msra.mxu0 %v5170
    %7257 = vmatprep.subr.bf16.mxu0 %v5179
    %7258 = vmatpush1.bf16.msra.mxu0 %v5178
    %7259 = vmatprep.subr.bf16.mxu0 %v5187
    %7260 = vmatpush1.bf16.msra.mxu0 %v5186
    %7261 = vmatprep.subr.bf16.mxu0 %v5195
    %7262 = vmatpush1.bf16.msra.mxu0 %v5194
    %7263 = vmatprep.subr.bf16.mxu0 %v5203
    %7264 = vmatpush1.bf16.msra.mxu0 %v5202
    %7265 = vmatprep.subr.bf16.mxu0 %v5211
    %7266 = vmatpush1.bf16.msra.mxu0 %v5210
    %7267 = vmatprep.subr.bf16.mxu0 %v5219
    %7268 = vmatpush1.bf16.msra.mxu0 %v5218
    %7269 = vmatprep.subr.bf16.mxu0 %v5227
    %7270 = vmatpush1.bf16.msra.mxu0 %v5226
    %7271 = vmatprep.subr.bf16.mxu0 %v5235
    %7272 = vmatpush1.bf16.msra.mxu0 %v5234
    %7273 = vmatprep.subr.bf16.mxu0 %v5243
    %7274 = vmatpush1.bf16.msra.mxu0 %v5242
    %7275 = vmatprep.subr.bf16.mxu0 %v5251
    %7276 = vmatpush1.bf16.msra.mxu0 %v5250
    %7277 = vmatprep.subr.bf16.mxu0 %v5259
    %7278 = vmatpush1.bf16.msra.mxu0 %v5258
    %7279 = vmatprep.subr.bf16.mxu0 %v5267
    %7280 = vmatpush1.bf16.msra.mxu0 %v5266
    %7281 = vmatprep.subr.bf16.mxu0 %v5275
    %7282 = vmatpush1.bf16.msra.mxu0 %v5274
    %7283 = vmatprep.subr.bf16.mxu0 %v5283
    %7284 = vmatpush1.bf16.msra.mxu0 %v5282
    %7285 = vmatprep.mubr.bf16.mxu0 %v1173
    %7286 = vmatmul.mubr.bf16.gmra.mrb[0].mxu0 %v1172
    %v7287 = vpop.f32.mrb[0].mxu0
    %v7288 = vadd.f32 %v7247, %v7287
    %v7289 = vpop.f32.mrb[0].mxu0
    %v7290 = vadd.f32 %v7249, %v7289
    %v7291 = vpop.f32.mrb[0].mxu0
    %v7292 = vpop.f32.mrb[0].mxu0
    %7293 = vdwg.mxu0
    %7294 = vmatprep.subr.bf16.mxu0 %v4269
    %7295 = vmatpush1.bf16.msra.mxu0 %v4268
    %7296 = vmatprep.subr.bf16.mxu0 %v4277
    %7297 = vmatpush1.bf16.msra.mxu0 %v4276
    %7298 = vmatprep.subr.bf16.mxu0 %v4285
    %7299 = vmatpush1.bf16.msra.mxu0 %v4284
    %7300 = vmatprep.subr.bf16.mxu0 %v4293
    %7301 = vmatpush1.bf16.msra.mxu0 %v4292
    %7302 = vmatprep.subr.bf16.mxu0 %v4301
    %7303 = vmatpush1.bf16.msra.mxu0 %v4300
    %7304 = vmatprep.subr.bf16.mxu0 %v4309
    %7305 = vmatpush1.bf16.msra.mxu0 %v4308
    %7306 = vmatprep.subr.bf16.mxu0 %v4317
    %7307 = vmatpush1.bf16.msra.mxu0 %v4316
    %7308 = vmatprep.subr.bf16.mxu0 %v4325
    %7309 = vmatpush1.bf16.msra.mxu0 %v4324
    %7310 = vmatprep.subr.bf16.mxu0 %v4333
    %7311 = vmatpush1.bf16.msra.mxu0 %v4332
    %7312 = vmatprep.subr.bf16.mxu0 %v4341
    %7313 = vmatpush1.bf16.msra.mxu0 %v4340
    %7314 = vmatprep.subr.bf16.mxu0 %v4349
    %7315 = vmatpush1.bf16.msra.mxu0 %v4348
    %7316 = vmatprep.subr.bf16.mxu0 %v4357
    %7317 = vmatpush1.bf16.msra.mxu0 %v4356
    %7318 = vmatprep.subr.bf16.mxu0 %v4365
    %7319 = vmatpush1.bf16.msra.mxu0 %v4364
    %7320 = vmatprep.subr.bf16.mxu0 %v4373
    %7321 = vmatpush1.bf16.msra.mxu0 %v4372
    %7322 = vmatprep.subr.bf16.mxu0 %v4381
    %7323 = vmatpush1.bf16.msra.mxu0 %v4380
    %7324 = vmatprep.subr.bf16.mxu0 %v4389
    %7325 = vmatpush1.bf16.msra.mxu0 %v4388
    %7326 = vmatprep.mubr.bf16.mxu0 %v1159
    %7327 = vmatmul.mubr.bf16.gmra.mrb[0].mxu0 %v1158
    %v7328 = vpop.f32.mrb[0].mxu0
    %v7329 = vadd.f32 %v1121, %v7328
    %v7330 = vpop.f32.mrb[0].mxu0
    %v7331 = vadd.f32 %v1125, %v7330
    %v7332 = vpop.f32.mrb[0].mxu0
    %v7333 = vpop.f32.mrb[0].mxu0
    %7334 = vdwg.mxu0
    %7335 = vmatprep.subr.bf16.mxu0 %v4397
    %7336 = vmatpush1.bf16.msra.mxu0 %v4396
    %7337 = vmatprep.subr.bf16.mxu0 %v4405
    %7338 = vmatpush1.bf16.msra.mxu0 %v4404
    %7339 = vmatprep.subr.bf16.mxu0 %v4413
    %7340 = vmatpush1.bf16.msra.mxu0 %v4412
    %7341 = vmatprep.subr.bf16.mxu0 %v4421
    %7342 = vmatpush1.bf16.msra.mxu0 %v4420
    %7343 = vmatprep.subr.bf16.mxu0 %v4429
    %7344 = vmatpush1.bf16.msra.mxu0 %v4428
    %7345 = vmatprep.subr.bf16.mxu0 %v4437
    %7346 = vmatpush1.bf16.msra.mxu0 %v4436
    %7347 = vmatprep.subr.bf16.mxu0 %v4445
    %7348 = vmatpush1.bf16.msra.mxu0 %v4444
    %7349 = vmatprep.subr.bf16.mxu0 %v4453
    %7350 = vmatpush1.bf16.msra.mxu0 %v4452
    %7351 = vmatprep.subr.bf16.mxu0 %v4461
    %7352 = vmatpush1.bf16.msra.mxu0 %v4460
    %7353 = vmatprep.subr.bf16.mxu0 %v4469
    %7354 = vmatpush1.bf16.msra.mxu0 %v4468
    %7355 = vmatprep.subr.bf16.mxu0 %v4477
    %7356 = vmatpush1.bf16.msra.mxu0 %v4476
    %7357 = vmatprep.subr.bf16.mxu0 %v4485
    %7358 = vmatpush1.bf16.msra.mxu0 %v4484
    %7359 = vmatprep.subr.bf16.mxu0 %v4493
    %7360 = vmatpush1.bf16.msra.mxu0 %v4492
    %7361 = vmatprep.subr.bf16.mxu0 %v4501
    %7362 = vmatpush1.bf16.msra.mxu0 %v4500
    %7363 = vmatprep.subr.bf16.mxu0 %v4509
    %7364 = vmatpush1.bf16.msra.mxu0 %v4508
    %7365 = vmatprep.subr.bf16.mxu0 %v4517
    %7366 = vmatpush1.bf16.msra.mxu0 %v4516
    %7367 = vmatprep.mubr.bf16.mxu0 %v1161
    %7368 = vmatmul.mubr.bf16.gmra.mrb[0].mxu0 %v1160
    %v7369 = vpop.f32.mrb[0].mxu0
    %v7370 = vadd.f32 %v7329, %v7369
    %v7371 = vpop.f32.mrb[0].mxu0
    %v7372 = vadd.f32 %v7331, %v7371
    %v7373 = vpop.f32.mrb[0].mxu0
    %v7374 = vpop.f32.mrb[0].mxu0
    %7375 = vdwg.mxu0
    %7376 = vmatprep.subr.bf16.mxu0 %v4525
    %7377 = vmatpush1.bf16.msra.mxu0 %v4524
    %7378 = vmatprep.subr.bf16.mxu0 %v4533
    %7379 = vmatpush1.bf16.msra.mxu0 %v4532
    %7380 = vmatprep.subr.bf16.mxu0 %v4541
    %7381 = vmatpush1.bf16.msra.mxu0 %v4540
    %7382 = vmatprep.subr.bf16.mxu0 %v4549
    %7383 = vmatpush1.bf16.msra.mxu0 %v4548
    %7384 = vmatprep.subr.bf16.mxu0 %v4557
    %7385 = vmatpush1.bf16.msra.mxu0 %v4556
    %7386 = vmatprep.subr.bf16.mxu0 %v4565
    %7387 = vmatpush1.bf16.msra.mxu0 %v4564
    %7388 = vmatprep.subr.bf16.mxu0 %v4573
    %7389 = vmatpush1.bf16.msra.mxu0 %v4572
    %7390 = vmatprep.subr.bf16.mxu0 %v4581
    %7391 = vmatpush1.bf16.msra.mxu0 %v4580
    %7392 = vmatprep.subr.bf16.mxu0 %v4589
    %7393 = vmatpush1.bf16.msra.mxu0 %v4588
    %7394 = vmatprep.subr.bf16.mxu0 %v4597
    %7395 = vmatpush1.bf16.msra.mxu0 %v4596
    %7396 = vmatprep.subr.bf16.mxu0 %v4605
    %7397 = vmatpush1.bf16.msra.mxu0 %v4604
    %7398 = vmatprep.subr.bf16.mxu0 %v4613
    %7399 = vmatpush1.bf16.msra.mxu0 %v4612
    %7400 = vmatprep.subr.bf16.mxu0 %v4621
    %7401 = vmatpush1.bf16.msra.mxu0 %v4620
    %7402 = vmatprep.subr.bf16.mxu0 %v4629
    %7403 = vmatpush1.bf16.msra.mxu0 %v4628
    %7404 = vmatprep.subr.bf16.mxu0 %v4637
    %7405 = vmatpush1.bf16.msra.mxu0 %v4636
    %7406 = vmatprep.subr.bf16.mxu0 %v4645
    %7407 = vmatpush1.bf16.msra.mxu0 %v4644
    %7408 = vmatprep.mubr.bf16.mxu0 %v1163
    %7409 = vmatmul.mubr.bf16.gmra.mrb[0].mxu0 %v1162
    %v7410 = vpop.f32.mrb[0].mxu0
    %v7411 = vadd.f32 %v7370, %v7410
    %v7412 = vpop.f32.mrb[0].mxu0
    %v7413 = vadd.f32 %v7372, %v7412
    %v7414 = vpop.f32.mrb[0].mxu0
    %v7415 = vpop.f32.mrb[0].mxu0
    %7416 = vdwg.mxu0
    %7417 = vmatprep.subr.bf16.mxu0 %v4653
    %7418 = vmatpush1.bf16.msra.mxu0 %v4652
    %7419 = vmatprep.subr.bf16.mxu0 %v4661
    %7420 = vmatpush1.bf16.msra.mxu0 %v4660
    %7421 = vmatprep.subr.bf16.mxu0 %v4669
    %7422 = vmatpush1.bf16.msra.mxu0 %v4668
    %7423 = vmatprep.subr.bf16.mxu0 %v4677
    %7424 = vmatpush1.bf16.msra.mxu0 %v4676
    %7425 = vmatprep.subr.bf16.mxu0 %v4685
    %7426 = vmatpush1.bf16.msra.mxu0 %v4684
    %7427 = vmatprep.subr.bf16.mxu0 %v4693
    %7428 = vmatpush1.bf16.msra.mxu0 %v4692
    %7429 = vmatprep.subr.bf16.mxu0 %v4701
    %7430 = vmatpush1.bf16.msra.mxu0 %v4700
    %7431 = vmatprep.subr.bf16.mxu0 %v4709
    %7432 = vmatpush1.bf16.msra.mxu0 %v4708
    %7433 = vmatprep.subr.bf16.mxu0 %v4717
    %7434 = vmatpush1.bf16.msra.mxu0 %v4716
    %7435 = vmatprep.subr.bf16.mxu0 %v4725
    %7436 = vmatpush1.bf16.msra.mxu0 %v4724
    %7437 = vmatprep.subr.bf16.mxu0 %v4733
    %7438 = vmatpush1.bf16.msra.mxu0 %v4732
    %7439 = vmatprep.subr.bf16.mxu0 %v4741
    %7440 = vmatpush1.bf16.msra.mxu0 %v4740
    %7441 = vmatprep.subr.bf16.mxu0 %v4749
    %7442 = vmatpush1.bf16.msra.mxu0 %v4748
    %7443 = vmatprep.subr.bf16.mxu0 %v4757
    %7444 = vmatpush1.bf16.msra.mxu0 %v4756
    %7445 = vmatprep.subr.bf16.mxu0 %v4765
    %7446 = vmatpush1.bf16.msra.mxu0 %v4764
    %7447 = vmatprep.subr.bf16.mxu0 %v4773
    %7448 = vmatpush1.bf16.msra.mxu0 %v4772
    %7449 = vmatprep.mubr.bf16.mxu0 %v1165
    %7450 = vmatmul.mubr.bf16.gmra.mrb[0].mxu0 %v1164
    %v7451 = vpop.f32.mrb[0].mxu0
    %v7452 = vadd.f32 %v7411, %v7451
    %v7453 = vpop.f32.mrb[0].mxu0
    %v7454 = vadd.f32 %v7413, %v7453
    %v7455 = vpop.f32.mrb[0].mxu0
    %v7456 = vpop.f32.mrb[0].mxu0
    %7457 = vdwg.mxu0
    %7458 = vmatprep.subr.bf16.mxu0 %v4781
    %7459 = vmatpush1.bf16.msra.mxu0 %v4780
    %7460 = vmatprep.subr.bf16.mxu0 %v4789
    %7461 = vmatpush1.bf16.msra.mxu0 %v4788
    %7462 = vmatprep.subr.bf16.mxu0 %v4797
    %7463 = vmatpush1.bf16.msra.mxu0 %v4796
    %7464 = vmatprep.subr.bf16.mxu0 %v4805
    %7465 = vmatpush1.bf16.msra.mxu0 %v4804
    %7466 = vmatprep.subr.bf16.mxu0 %v4813
    %7467 = vmatpush1.bf16.msra.mxu0 %v4812
    %7468 = vmatprep.subr.bf16.mxu0 %v4821
    %7469 = vmatpush1.bf16.msra.mxu0 %v4820
    %7470 = vmatprep.subr.bf16.mxu0 %v4829
    %7471 = vmatpush1.bf16.msra.mxu0 %v4828
    %7472 = vmatprep.subr.bf16.mxu0 %v4837
    %7473 = vmatpush1.bf16.msra.mxu0 %v4836
    %7474 = vmatprep.subr.bf16.mxu0 %v4845
    %7475 = vmatpush1.bf16.msra.mxu0 %v4844
    %7476 = vmatprep.subr.bf16.mxu0 %v4853
    %7477 = vmatpush1.bf16.msra.mxu0 %v4852
    %7478 = vmatprep.subr.bf16.mxu0 %v4861
    %7479 = vmatpush1.bf16.msra.mxu0 %v4860
    %7480 = vmatprep.subr.bf16.mxu0 %v4869
    %7481 = vmatpush1.bf16.msra.mxu0 %v4868
    %7482 = vmatprep.subr.bf16.mxu0 %v4877
    %7483 = vmatpush1.bf16.msra.mxu0 %v4876
    %7484 = vmatprep.subr.bf16.mxu0 %v4885
    %7485 = vmatpush1.bf16.msra.mxu0 %v4884
    %7486 = vmatprep.subr.bf16.mxu0 %v4893
    %7487 = vmatpush1.bf16.msra.mxu0 %v4892
    %7488 = vmatprep.subr.bf16.mxu0 %v4901
    %7489 = vmatpush1.bf16.msra.mxu0 %v4900
    %7490 = vmatprep.mubr.bf16.mxu0 %v1167
    %7491 = vmatmul.mubr.bf16.gmra.mrb[0].mxu0 %v1166
    %v7492 = vpop.f32.mrb[0].mxu0
    %v7493 = vadd.f32 %v7452, %v7492
    %v7494 = vpop.f32.mrb[0].mxu0
    %v7495 = vadd.f32 %v7454, %v7494
    %v7496 = vpop.f32.mrb[0].mxu0
    %v7497 = vpop.f32.mrb[0].mxu0
    %7498 = vdwg.mxu0
    %7499 = vmatprep.subr.bf16.mxu0 %v4909
    %7500 = vmatpush1.bf16.msra.mxu0 %v4908
    %7501 = vmatprep.subr.bf16.mxu0 %v4917
    %7502 = vmatpush1.bf16.msra.mxu0 %v4916
    %7503 = vmatprep.subr.bf16.mxu0 %v4925
    %7504 = vmatpush1.bf16.msra.mxu0 %v4924
    %7505 = vmatprep.subr.bf16.mxu0 %v4933
    %7506 = vmatpush1.bf16.msra.mxu0 %v4932
    %7507 = vmatprep.subr.bf16.mxu0 %v4941
    %7508 = vmatpush1.bf16.msra.mxu0 %v4940
    %7509 = vmatprep.subr.bf16.mxu0 %v4949
    %7510 = vmatpush1.bf16.msra.mxu0 %v4948
    %7511 = vmatprep.subr.bf16.mxu0 %v4957
    %7512 = vmatpush1.bf16.msra.mxu0 %v4956
    %7513 = vmatprep.subr.bf16.mxu0 %v4965
    %7514 = vmatpush1.bf16.msra.mxu0 %v4964
    %7515 = vmatprep.subr.bf16.mxu0 %v4973
    %7516 = vmatpush1.bf16.msra.mxu0 %v4972
    %7517 = vmatprep.subr.bf16.mxu0 %v4981
    %7518 = vmatpush1.bf16.msra.mxu0 %v4980
    %7519 = vmatprep.subr.bf16.mxu0 %v4989
    %7520 = vmatpush1.bf16.msra.mxu0 %v4988
    %7521 = vmatprep.subr.bf16.mxu0 %v4997
    %7522 = vmatpush1.bf16.msra.mxu0 %v4996
    %7523 = vmatprep.subr.bf16.mxu0 %v5005
    %7524 = vmatpush1.bf16.msra.mxu0 %v5004
    %7525 = vmatprep.subr.bf16.mxu0 %v5013
    %7526 = vmatpush1.bf16.msra.mxu0 %v5012
    %7527 = vmatprep.subr.bf16.mxu0 %v5021
    %7528 = vmatpush1.bf16.msra.mxu0 %v5020
    %7529 = vmatprep.subr.bf16.mxu0 %v5029
    %7530 = vmatpush1.bf16.msra.mxu0 %v5028
    %7531 = vmatprep.mubr.bf16.mxu0 %v1169
    %7532 = vmatmul.mubr.bf16.gmra.mrb[0].mxu0 %v1168
    %v7533 = vpop.f32.mrb[0].mxu0
    %v7534 = vadd.f32 %v7493, %v7533
    %v7535 = vpop.f32.mrb[0].mxu0
    %v7536 = vadd.f32 %v7495, %v7535
    %v7537 = vpop.f32.mrb[0].mxu0
    %v7538 = vpop.f32.mrb[0].mxu0
    %7539 = vdwg.mxu0
    %7540 = vmatprep.subr.bf16.mxu0 %v5037
    %7541 = vmatpush1.bf16.msra.mxu0 %v5036
    %7542 = vmatprep.subr.bf16.mxu0 %v5045
    %7543 = vmatpush1.bf16.msra.mxu0 %v5044
    %7544 = vmatprep.subr.bf16.mxu0 %v5053
    %7545 = vmatpush1.bf16.msra.mxu0 %v5052
    %7546 = vmatprep.subr.bf16.mxu0 %v5061
    %7547 = vmatpush1.bf16.msra.mxu0 %v5060
    %7548 = vmatprep.subr.bf16.mxu0 %v5069
    %7549 = vmatpush1.bf16.msra.mxu0 %v5068
    %7550 = vmatprep.subr.bf16.mxu0 %v5077
    %7551 = vmatpush1.bf16.msra.mxu0 %v5076
    %7552 = vmatprep.subr.bf16.mxu0 %v5085
    %7553 = vmatpush1.bf16.msra.mxu0 %v5084
    %7554 = vmatprep.subr.bf16.mxu0 %v5093
    %7555 = vmatpush1.bf16.msra.mxu0 %v5092
    %7556 = vmatprep.subr.bf16.mxu0 %v5101
    %7557 = vmatpush1.bf16.msra.mxu0 %v5100
    %7558 = vmatprep.subr.bf16.mxu0 %v5109
    %7559 = vmatpush1.bf16.msra.mxu0 %v5108
    %7560 = vmatprep.subr.bf16.mxu0 %v5117
    %7561 = vmatpush1.bf16.msra.mxu0 %v5116
    %7562 = vmatprep.subr.bf16.mxu0 %v5125
    %7563 = vmatpush1.bf16.msra.mxu0 %v5124
    %7564 = vmatprep.subr.bf16.mxu0 %v5133
    %7565 = vmatpush1.bf16.msra.mxu0 %v5132
    %7566 = vmatprep.subr.bf16.mxu0 %v5141
    %7567 = vmatpush1.bf16.msra.mxu0 %v5140
    %7568 = vmatprep.subr.bf16.mxu0 %v5149
    %7569 = vmatpush1.bf16.msra.mxu0 %v5148
    %7570 = vmatprep.subr.bf16.mxu0 %v5157
    %7571 = vmatpush1.bf16.msra.mxu0 %v5156
    %7572 = vmatprep.mubr.bf16.mxu0 %v1171
    %7573 = vmatmul.mubr.bf16.gmra.mrb[0].mxu0 %v1170
    %v7574 = vpop.f32.mrb[0].mxu0
    %v7575 = vadd.f32 %v7534, %v7574
    %v7576 = vpop.f32.mrb[0].mxu0
    %v7577 = vadd.f32 %v7536, %v7576
    %v7578 = vpop.f32.mrb[0].mxu0
    %v7579 = vpop.f32.mrb[0].mxu0
    %7580 = vdwg.mxu0
    %7581 = vmatprep.subr.bf16.mxu0 %v5165
    %7582 = vmatpush1.bf16.msra.mxu0 %v5164
    %7583 = vmatprep.subr.bf16.mxu0 %v5173
    %7584 = vmatpush1.bf16.msra.mxu0 %v5172
    %7585 = vmatprep.subr.bf16.mxu0 %v5181
    %7586 = vmatpush1.bf16.msra.mxu0 %v5180
    %7587 = vmatprep.subr.bf16.mxu0 %v5189
    %7588 = vmatpush1.bf16.msra.mxu0 %v5188
    %7589 = vmatprep.subr.bf16.mxu0 %v5197
    %7590 = vmatpush1.bf16.msra.mxu0 %v5196
    %7591 = vmatprep.subr.bf16.mxu0 %v5205
    %7592 = vmatpush1.bf16.msra.mxu0 %v5204
    %7593 = vmatprep.subr.bf16.mxu0 %v5213
    %7594 = vmatpush1.bf16.msra.mxu0 %v5212
    %7595 = vmatprep.subr.bf16.mxu0 %v5221
    %7596 = vmatpush1.bf16.msra.mxu0 %v5220
    %7597 = vmatprep.subr.bf16.mxu0 %v5229
    %7598 = vmatpush1.bf16.msra.mxu0 %v5228
    %7599 = vmatprep.subr.bf16.mxu0 %v5237
    %7600 = vmatpush1.bf16.msra.mxu0 %v5236
    %7601 = vmatprep.subr.bf16.mxu0 %v5245
    %7602 = vmatpush1.bf16.msra.mxu0 %v5244
    %7603 = vmatprep.subr.bf16.mxu0 %v5253
    %7604 = vmatpush1.bf16.msra.mxu0 %v5252
    %7605 = vmatprep.subr.bf16.mxu0 %v5261
    %7606 = vmatpush1.bf16.msra.mxu0 %v5260
    %7607 = vmatprep.subr.bf16.mxu0 %v5269
    %7608 = vmatpush1.bf16.msra.mxu0 %v5268
    %7609 = vmatprep.subr.bf16.mxu0 %v5277
    %7610 = vmatpush1.bf16.msra.mxu0 %v5276
    %7611 = vmatprep.subr.bf16.mxu0 %v5285
    %7612 = vmatpush1.bf16.msra.mxu0 %v5284
    %7613 = vmatprep.mubr.bf16.mxu0 %v1173
    %7614 = vmatmul.mubr.bf16.gmra.mrb[0].mxu0 %v1172
    %v7615 = vpop.f32.mrb[0].mxu0
    %v7616 = vadd.f32 %v7575, %v7615
    %v7617 = vpop.f32.mrb[0].mxu0
    %v7618 = vadd.f32 %v7577, %v7617
    %v7619 = vpop.f32.mrb[0].mxu0
    %v7620 = vpop.f32.mrb[0].mxu0
    %7621 = vdwg.mxu0
    %v7622 = vmax.f32 %v6632, 0.0
    %v7623 = vmax.f32 %v6634, 0.0
    %v7624 = vmax.f32 %v6960, 0.0
    %v7625 = vmax.f32 %v6962, 0.0
    %v7626 = vmax.f32 %v7288, 0.0
    %v7627 = vmax.f32 %v7290, 0.0
    %v7628 = vmax.f32 %v7616, 0.0
    %v7629 = vmax.f32 %v7618, 0.0
    %v7630 = vpack.c.bf16 %v7622, %v7622
    %v7631 = vpack.c.bf16 %v7623, %v7623
    %v7632 = vpack.c.bf16 %v7624, %v7624
    %v7633 = vpack.c.bf16 %v7625, %v7625
    %v7634 = vpack.c.bf16 %v7626, %v7626
    %v7635 = vpack.c.bf16 %v7627, %v7627
    %v7636 = vpack.c.bf16 %v7628, %v7628
    %v7637 = vpack.c.bf16 %v7629, %v7629
    %v7638 = vld [vmem:[#allocation2] sm:$0xff]
    %v7639 = vld [vmem:[#allocation2 + $0x8] sm:$0xff]
    %v7640 = vld [vmem:[#allocation2 + $0x10] sm:$0xff]
    %v7641 = vld [vmem:[#allocation2 + $0x18] sm:$0xff]
    %v7642 = vld [vmem:[#allocation2 + $0x20] sm:$0xff]
    %v7643 = vld [vmem:[#allocation2 + $0x28] sm:$0xff]
    %v7644 = vld [vmem:[#allocation2 + $0x30] sm:$0xff]
    %v7645 = vld [vmem:[#allocation2 + $0x38] sm:$0xff]
    %v7646 = vld [vmem:[#allocation2 + $0x40] sm:$0xff]
    %v7647 = vld [vmem:[#allocation2 + $0x48] sm:$0xff]
    %v7648 = vld [vmem:[#allocation2 + $0x50] sm:$0xff]
    %v7649 = vld [vmem:[#allocation2 + $0x58] sm:$0xff]
    %v7650 = vld [vmem:[#allocation2 + $0x60] sm:$0xff]
    %v7651 = vld [vmem:[#allocation2 + $0x68] sm:$0xff]
    %v7652 = vld [vmem:[#allocation2 + $0x70] sm:$0xff]
    %v7653 = vld [vmem:[#allocation2 + $0x78] sm:$0xff]
    %v7654 = vld [vmem:[#allocation2 + $0x80] sm:$0xff]
    %v7655 = vld [vmem:[#allocation2 + $0x88] sm:$0xff]
    %v7656 = vld [vmem:[#allocation2 + $0x90] sm:$0xff]
    %v7657 = vld [vmem:[#allocation2 + $0x98] sm:$0xff]
    %v7658 = vld [vmem:[#allocation2 + $0xa0] sm:$0xff]
    %v7659 = vld [vmem:[#allocation2 + $0xa8] sm:$0xff]
    %v7660 = vld [vmem:[#allocation2 + $0xb0] sm:$0xff]
    %v7661 = vld [vmem:[#allocation2 + $0xb8] sm:$0xff]
    %v7662 = vld [vmem:[#allocation2 + $0xc0] sm:$0xff]
    %v7663 = vld [vmem:[#allocation2 + $0xc8] sm:$0xff]
    %v7664 = vld [vmem:[#allocation2 + $0xd0] sm:$0xff]
    %v7665 = vld [vmem:[#allocation2 + $0xd8] sm:$0xff]
    %v7666 = vld [vmem:[#allocation2 + $0xe0] sm:$0xff]
    %v7667 = vld [vmem:[#allocation2 + $0xe8] sm:$0xff]
    %v7668 = vld [vmem:[#allocation2 + $0xf0] sm:$0xff]
    %v7669 = vld [vmem:[#allocation2 + $0xf8] sm:$0xff]
    %v7670 = vld [vmem:[#allocation2 + $0x100] sm:$0xff]
    %v7671 = vld [vmem:[#allocation2 + $0x108] sm:$0xff]
    %v7672 = vld [vmem:[#allocation2 + $0x110] sm:$0xff]
    %v7673 = vld [vmem:[#allocation2 + $0x118] sm:$0xff]
    %v7674 = vld [vmem:[#allocation2 + $0x120] sm:$0xff]
    %v7675 = vld [vmem:[#allocation2 + $0x128] sm:$0xff]
    %v7676 = vld [vmem:[#allocation2 + $0x130] sm:$0xff]
    %v7677 = vld [vmem:[#allocation2 + $0x138] sm:$0xff]
    %v7678 = vld [vmem:[#allocation2 + $0x140] sm:$0xff]
    %v7679 = vld [vmem:[#allocation2 + $0x148] sm:$0xff]
    %v7680 = vld [vmem:[#allocation2 + $0x150] sm:$0xff]
    %v7681 = vld [vmem:[#allocation2 + $0x158] sm:$0xff]
    %v7682 = vld [vmem:[#allocation2 + $0x160] sm:$0xff]
    %v7683 = vld [vmem:[#allocation2 + $0x168] sm:$0xff]
    %v7684 = vld [vmem:[#allocation2 + $0x170] sm:$0xff]
    %v7685 = vld [vmem:[#allocation2 + $0x178] sm:$0xff]
    %v7686 = vld [vmem:[#allocation2 + $0x180] sm:$0xff]
    %v7687 = vld [vmem:[#allocation2 + $0x188] sm:$0xff]
    %v7688 = vld [vmem:[#allocation2 + $0x190] sm:$0xff]
    %v7689 = vld [vmem:[#allocation2 + $0x198] sm:$0xff]
    %v7690 = vld [vmem:[#allocation2 + $0x1a0] sm:$0xff]
    %v7691 = vld [vmem:[#allocation2 + $0x1a8] sm:$0xff]
    %v7692 = vld [vmem:[#allocation2 + $0x1b0] sm:$0xff]
    %v7693 = vld [vmem:[#allocation2 + $0x1b8] sm:$0xff]
    %v7694 = vld [vmem:[#allocation2 + $0x1c0] sm:$0xff]
    %v7695 = vld [vmem:[#allocation2 + $0x1c8] sm:$0xff]
    %v7696 = vld [vmem:[#allocation2 + $0x1d0] sm:$0xff]
    %v7697 = vld [vmem:[#allocation2 + $0x1d8] sm:$0xff]
    %v7698 = vld [vmem:[#allocation2 + $0x1e0] sm:$0xff]
    %v7699 = vld [vmem:[#allocation2 + $0x1e8] sm:$0xff]
    %v7700 = vld [vmem:[#allocation2 + $0x1f0] sm:$0xff]
    %v7701 = vld [vmem:[#allocation2 + $0x1f8] sm:$0xff]
    %v7702 = vld [vmem:[#allocation2 + $0x200] sm:$0xff]
    %v7703 = vld [vmem:[#allocation2 + $0x208] sm:$0xff]
    %v7704 = vld [vmem:[#allocation2 + $0x210] sm:$0xff]
    %v7705 = vld [vmem:[#allocation2 + $0x218] sm:$0xff]
    %v7706 = vld [vmem:[#allocation2 + $0x220] sm:$0xff]
    %v7707 = vld [vmem:[#allocation2 + $0x228] sm:$0xff]
    %v7708 = vld [vmem:[#allocation2 + $0x230] sm:$0xff]
    %v7709 = vld [vmem:[#allocation2 + $0x238] sm:$0xff]
    %v7710 = vld [vmem:[#allocation2 + $0x240] sm:$0xff]
    %v7711 = vld [vmem:[#allocation2 + $0x248] sm:$0xff]
    %v7712 = vld [vmem:[#allocation2 + $0x250] sm:$0xff]
    %v7713 = vld [vmem:[#allocation2 + $0x258] sm:$0xff]
    %v7714 = vld [vmem:[#allocation2 + $0x260] sm:$0xff]
    %v7715 = vld [vmem:[#allocation2 + $0x268] sm:$0xff]
    %v7716 = vld [vmem:[#allocation2 + $0x270] sm:$0xff]
    %v7717 = vld [vmem:[#allocation2 + $0x278] sm:$0xff]
    %v7718 = vld [vmem:[#allocation2 + $0x280] sm:$0xff]
    %v7719 = vld [vmem:[#allocation2 + $0x288] sm:$0xff]
    %v7720 = vld [vmem:[#allocation2 + $0x290] sm:$0xff]
    %v7721 = vld [vmem:[#allocation2 + $0x298] sm:$0xff]
    %v7722 = vld [vmem:[#allocation2 + $0x2a0] sm:$0xff]
    %v7723 = vld [vmem:[#allocation2 + $0x2a8] sm:$0xff]
    %v7724 = vld [vmem:[#allocation2 + $0x2b0] sm:$0xff]
    %v7725 = vld [vmem:[#allocation2 + $0x2b8] sm:$0xff]
    %v7726 = vld [vmem:[#allocation2 + $0x2c0] sm:$0xff]
    %v7727 = vld [vmem:[#allocation2 + $0x2c8] sm:$0xff]
    %v7728 = vld [vmem:[#allocation2 + $0x2d0] sm:$0xff]
    %v7729 = vld [vmem:[#allocation2 + $0x2d8] sm:$0xff]
    %v7730 = vld [vmem:[#allocation2 + $0x2e0] sm:$0xff]
    %v7731 = vld [vmem:[#allocation2 + $0x2e8] sm:$0xff]
    %v7732 = vld [vmem:[#allocation2 + $0x2f0] sm:$0xff]
    %v7733 = vld [vmem:[#allocation2 + $0x2f8] sm:$0xff]
    %v7734 = vld [vmem:[#allocation2 + $0x300] sm:$0xff]
    %v7735 = vld [vmem:[#allocation2 + $0x308] sm:$0xff]
    %v7736 = vld [vmem:[#allocation2 + $0x310] sm:$0xff]
    %v7737 = vld [vmem:[#allocation2 + $0x318] sm:$0xff]
    %v7738 = vld [vmem:[#allocation2 + $0x320] sm:$0xff]
    %v7739 = vld [vmem:[#allocation2 + $0x328] sm:$0xff]
    %v7740 = vld [vmem:[#allocation2 + $0x330] sm:$0xff]
    %v7741 = vld [vmem:[#allocation2 + $0x338] sm:$0xff]
    %v7742 = vld [vmem:[#allocation2 + $0x340] sm:$0xff]
    %v7743 = vld [vmem:[#allocation2 + $0x348] sm:$0xff]
    %v7744 = vld [vmem:[#allocation2 + $0x350] sm:$0xff]
    %v7745 = vld [vmem:[#allocation2 + $0x358] sm:$0xff]
    %v7746 = vld [vmem:[#allocation2 + $0x360] sm:$0xff]
    %v7747 = vld [vmem:[#allocation2 + $0x368] sm:$0xff]
    %v7748 = vld [vmem:[#allocation2 + $0x370] sm:$0xff]
    %v7749 = vld [vmem:[#allocation2 + $0x378] sm:$0xff]
    %v7750 = vld [vmem:[#allocation2 + $0x380] sm:$0xff]
    %v7751 = vld [vmem:[#allocation2 + $0x388] sm:$0xff]
    %v7752 = vld [vmem:[#allocation2 + $0x390] sm:$0xff]
    %v7753 = vld [vmem:[#allocation2 + $0x398] sm:$0xff]
    %v7754 = vld [vmem:[#allocation2 + $0x3a0] sm:$0xff]
    %v7755 = vld [vmem:[#allocation2 + $0x3a8] sm:$0xff]
    %v7756 = vld [vmem:[#allocation2 + $0x3b0] sm:$0xff]
    %v7757 = vld [vmem:[#allocation2 + $0x3b8] sm:$0xff]
    %v7758 = vld [vmem:[#allocation2 + $0x3c0] sm:$0xff]
    %v7759 = vld [vmem:[#allocation2 + $0x3c8] sm:$0xff]
    %v7760 = vld [vmem:[#allocation2 + $0x3d0] sm:$0xff]
    %v7761 = vld [vmem:[#allocation2 + $0x3d8] sm:$0xff]
    %v7762 = vld [vmem:[#allocation2 + $0x3e0] sm:$0xff]
    %v7763 = vld [vmem:[#allocation2 + $0x3e8] sm:$0xff]
    %v7764 = vld [vmem:[#allocation2 + $0x3f0] sm:$0xff]
    %v7765 = vld [vmem:[#allocation2 + $0x3f8] sm:$0xff]
    %v7766 = vld [vmem:[#allocation2 + $0x400] sm:$0xff]
    %v7767 = vld [vmem:[#allocation2 + $0x408] sm:$0xff]
    %v7768 = vld [vmem:[#allocation2 + $0x410] sm:$0xff]
    %v7769 = vld [vmem:[#allocation2 + $0x418] sm:$0xff]
    %v7770 = vld [vmem:[#allocation2 + $0x420] sm:$0xff]
    %v7771 = vld [vmem:[#allocation2 + $0x428] sm:$0xff]
    %v7772 = vld [vmem:[#allocation2 + $0x430] sm:$0xff]
    %v7773 = vld [vmem:[#allocation2 + $0x438] sm:$0xff]
    %v7774 = vld [vmem:[#allocation2 + $0x440] sm:$0xff]
    %v7775 = vld [vmem:[#allocation2 + $0x448] sm:$0xff]
    %v7776 = vld [vmem:[#allocation2 + $0x450] sm:$0xff]
    %v7777 = vld [vmem:[#allocation2 + $0x458] sm:$0xff]
    %v7778 = vld [vmem:[#allocation2 + $0x460] sm:$0xff]
    %v7779 = vld [vmem:[#allocation2 + $0x468] sm:$0xff]
    %v7780 = vld [vmem:[#allocation2 + $0x470] sm:$0xff]
    %v7781 = vld [vmem:[#allocation2 + $0x478] sm:$0xff]
    %v7782 = vld [vmem:[#allocation2 + $0x480] sm:$0xff]
    %v7783 = vld [vmem:[#allocation2 + $0x488] sm:$0xff]
    %v7784 = vld [vmem:[#allocation2 + $0x490] sm:$0xff]
    %v7785 = vld [vmem:[#allocation2 + $0x498] sm:$0xff]
    %v7786 = vld [vmem:[#allocation2 + $0x4a0] sm:$0xff]
    %v7787 = vld [vmem:[#allocation2 + $0x4a8] sm:$0xff]
    %v7788 = vld [vmem:[#allocation2 + $0x4b0] sm:$0xff]
    %v7789 = vld [vmem:[#allocation2 + $0x4b8] sm:$0xff]
    %v7790 = vld [vmem:[#allocation2 + $0x4c0] sm:$0xff]
    %v7791 = vld [vmem:[#allocation2 + $0x4c8] sm:$0xff]
    %v7792 = vld [vmem:[#allocation2 + $0x4d0] sm:$0xff]
    %v7793 = vld [vmem:[#allocation2 + $0x4d8] sm:$0xff]
    %v7794 = vld [vmem:[#allocation2 + $0x4e0] sm:$0xff]
    %v7795 = vld [vmem:[#allocation2 + $0x4e8] sm:$0xff]
    %v7796 = vld [vmem:[#allocation2 + $0x4f0] sm:$0xff]
    %v7797 = vld [vmem:[#allocation2 + $0x4f8] sm:$0xff]
    %v7798 = vld [vmem:[#allocation2 + $0x500] sm:$0xff]
    %v7799 = vld [vmem:[#allocation2 + $0x508] sm:$0xff]
    %v7800 = vld [vmem:[#allocation2 + $0x510] sm:$0xff]
    %v7801 = vld [vmem:[#allocation2 + $0x518] sm:$0xff]
    %v7802 = vld [vmem:[#allocation2 + $0x520] sm:$0xff]
    %v7803 = vld [vmem:[#allocation2 + $0x528] sm:$0xff]
    %v7804 = vld [vmem:[#allocation2 + $0x530] sm:$0xff]
    %v7805 = vld [vmem:[#allocation2 + $0x538] sm:$0xff]
    %v7806 = vld [vmem:[#allocation2 + $0x540] sm:$0xff]
    %v7807 = vld [vmem:[#allocation2 + $0x548] sm:$0xff]
    %v7808 = vld [vmem:[#allocation2 + $0x550] sm:$0xff]
    %v7809 = vld [vmem:[#allocation2 + $0x558] sm:$0xff]
    %v7810 = vld [vmem:[#allocation2 + $0x560] sm:$0xff]
    %v7811 = vld [vmem:[#allocation2 + $0x568] sm:$0xff]
    %v7812 = vld [vmem:[#allocation2 + $0x570] sm:$0xff]
    %v7813 = vld [vmem:[#allocation2 + $0x578] sm:$0xff]
    %v7814 = vld [vmem:[#allocation2 + $0x580] sm:$0xff]
    %v7815 = vld [vmem:[#allocation2 + $0x588] sm:$0xff]
    %v7816 = vld [vmem:[#allocation2 + $0x590] sm:$0xff]
    %v7817 = vld [vmem:[#allocation2 + $0x598] sm:$0xff]
    %v7818 = vld [vmem:[#allocation2 + $0x5a0] sm:$0xff]
    %v7819 = vld [vmem:[#allocation2 + $0x5a8] sm:$0xff]
    %v7820 = vld [vmem:[#allocation2 + $0x5b0] sm:$0xff]
    %v7821 = vld [vmem:[#allocation2 + $0x5b8] sm:$0xff]
    %v7822 = vld [vmem:[#allocation2 + $0x5c0] sm:$0xff]
    %v7823 = vld [vmem:[#allocation2 + $0x5c8] sm:$0xff]
    %v7824 = vld [vmem:[#allocation2 + $0x5d0] sm:$0xff]
    %v7825 = vld [vmem:[#allocation2 + $0x5d8] sm:$0xff]
    %v7826 = vld [vmem:[#allocation2 + $0x5e0] sm:$0xff]
    %v7827 = vld [vmem:[#allocation2 + $0x5e8] sm:$0xff]
    %v7828 = vld [vmem:[#allocation2 + $0x5f0] sm:$0xff]
    %v7829 = vld [vmem:[#allocation2 + $0x5f8] sm:$0xff]
    %v7830 = vld [vmem:[#allocation2 + $0x600] sm:$0xff]
    %v7831 = vld [vmem:[#allocation2 + $0x608] sm:$0xff]
    %v7832 = vld [vmem:[#allocation2 + $0x610] sm:$0xff]
    %v7833 = vld [vmem:[#allocation2 + $0x618] sm:$0xff]
    %v7834 = vld [vmem:[#allocation2 + $0x620] sm:$0xff]
    %v7835 = vld [vmem:[#allocation2 + $0x628] sm:$0xff]
    %v7836 = vld [vmem:[#allocation2 + $0x630] sm:$0xff]
    %v7837 = vld [vmem:[#allocation2 + $0x638] sm:$0xff]
    %v7838 = vld [vmem:[#allocation2 + $0x640] sm:$0xff]
    %v7839 = vld [vmem:[#allocation2 + $0x648] sm:$0xff]
    %v7840 = vld [vmem:[#allocation2 + $0x650] sm:$0xff]
    %v7841 = vld [vmem:[#allocation2 + $0x658] sm:$0xff]
    %v7842 = vld [vmem:[#allocation2 + $0x660] sm:$0xff]
    %v7843 = vld [vmem:[#allocation2 + $0x668] sm:$0xff]
    %v7844 = vld [vmem:[#allocation2 + $0x670] sm:$0xff]
    %v7845 = vld [vmem:[#allocation2 + $0x678] sm:$0xff]
    %v7846 = vld [vmem:[#allocation2 + $0x680] sm:$0xff]
    %v7847 = vld [vmem:[#allocation2 + $0x688] sm:$0xff]
    %v7848 = vld [vmem:[#allocation2 + $0x690] sm:$0xff]
    %v7849 = vld [vmem:[#allocation2 + $0x698] sm:$0xff]
    %v7850 = vld [vmem:[#allocation2 + $0x6a0] sm:$0xff]
    %v7851 = vld [vmem:[#allocation2 + $0x6a8] sm:$0xff]
    %v7852 = vld [vmem:[#allocation2 + $0x6b0] sm:$0xff]
    %v7853 = vld [vmem:[#allocation2 + $0x6b8] sm:$0xff]
    %v7854 = vld [vmem:[#allocation2 + $0x6c0] sm:$0xff]
    %v7855 = vld [vmem:[#allocation2 + $0x6c8] sm:$0xff]
    %v7856 = vld [vmem:[#allocation2 + $0x6d0] sm:$0xff]
    %v7857 = vld [vmem:[#allocation2 + $0x6d8] sm:$0xff]
    %v7858 = vld [vmem:[#allocation2 + $0x6e0] sm:$0xff]
    %v7859 = vld [vmem:[#allocation2 + $0x6e8] sm:$0xff]
    %v7860 = vld [vmem:[#allocation2 + $0x6f0] sm:$0xff]
    %v7861 = vld [vmem:[#allocation2 + $0x6f8] sm:$0xff]
    %v7862 = vld [vmem:[#allocation2 + $0x700] sm:$0xff]
    %v7863 = vld [vmem:[#allocation2 + $0x708] sm:$0xff]
    %v7864 = vld [vmem:[#allocation2 + $0x710] sm:$0xff]
    %v7865 = vld [vmem:[#allocation2 + $0x718] sm:$0xff]
    %v7866 = vld [vmem:[#allocation2 + $0x720] sm:$0xff]
    %v7867 = vld [vmem:[#allocation2 + $0x728] sm:$0xff]
    %v7868 = vld [vmem:[#allocation2 + $0x730] sm:$0xff]
    %v7869 = vld [vmem:[#allocation2 + $0x738] sm:$0xff]
    %v7870 = vld [vmem:[#allocation2 + $0x740] sm:$0xff]
    %v7871 = vld [vmem:[#allocation2 + $0x748] sm:$0xff]
    %v7872 = vld [vmem:[#allocation2 + $0x750] sm:$0xff]
    %v7873 = vld [vmem:[#allocation2 + $0x758] sm:$0xff]
    %v7874 = vld [vmem:[#allocation2 + $0x760] sm:$0xff]
    %v7875 = vld [vmem:[#allocation2 + $0x768] sm:$0xff]
    %v7876 = vld [vmem:[#allocation2 + $0x770] sm:$0xff]
    %v7877 = vld [vmem:[#allocation2 + $0x778] sm:$0xff]
    %v7878 = vld [vmem:[#allocation2 + $0x780] sm:$0xff]
    %v7879 = vld [vmem:[#allocation2 + $0x788] sm:$0xff]
    %v7880 = vld [vmem:[#allocation2 + $0x790] sm:$0xff]
    %v7881 = vld [vmem:[#allocation2 + $0x798] sm:$0xff]
    %v7882 = vld [vmem:[#allocation2 + $0x7a0] sm:$0xff]
    %v7883 = vld [vmem:[#allocation2 + $0x7a8] sm:$0xff]
    %v7884 = vld [vmem:[#allocation2 + $0x7b0] sm:$0xff]
    %v7885 = vld [vmem:[#allocation2 + $0x7b8] sm:$0xff]
    %v7886 = vld [vmem:[#allocation2 + $0x7c0] sm:$0xff]
    %v7887 = vld [vmem:[#allocation2 + $0x7c8] sm:$0xff]
    %v7888 = vld [vmem:[#allocation2 + $0x7d0] sm:$0xff]
    %v7889 = vld [vmem:[#allocation2 + $0x7d8] sm:$0xff]
    %v7890 = vld [vmem:[#allocation2 + $0x7e0] sm:$0xff]
    %v7891 = vld [vmem:[#allocation2 + $0x7e8] sm:$0xff]
    %v7892 = vld [vmem:[#allocation2 + $0x7f0] sm:$0xff]
    %v7893 = vld [vmem:[#allocation2 + $0x7f8] sm:$0xff]
    %v7894 = vld [vmem:[%s4] sm:$0xf]
    %v7896 = vlaneseq
    %v7897 = vshrl.u32 %v7896, 7
    %v7898 = vsub.s32 0, %v7897
    %v7899 = vrot.slane %v7894, %v7898
    %v7900 = vlaneseq
    %v7901 = vshrl.u32 %v7900, 7
    %v7902 = vsub.s32 1, %v7901
    %v7903 = vrot.slane %v7894, %v7902
    %v7904 = vlaneseq
    %v7905 = vshrl.u32 %v7904, 7
    %v7906 = vsub.s32 2, %v7905
    %v7907 = vrot.slane %v7894, %v7906
    %v7908 = vlaneseq
    %v7909 = vshrl.u32 %v7908, 7
    %v7910 = vsub.s32 3, %v7909
    %v7911 = vrot.slane %v7894, %v7910
    %v8172 = vunpack.c.l.b16 %v7638
    %v8173 = vunpack.c.h.b16 %v7638
    %v8174 = vunpack.c.l.b16 %v7639
    %v8175 = vunpack.c.h.b16 %v7639
    %v8176 = vunpack.c.l.b16 %v7640
    %v8177 = vunpack.c.h.b16 %v7640
    %v8178 = vunpack.c.l.b16 %v7641
    %v8179 = vunpack.c.h.b16 %v7641
    %v8180 = vunpack.c.l.b16 %v7642
    %v8181 = vunpack.c.h.b16 %v7642
    %v8182 = vunpack.c.l.b16 %v7643
    %v8183 = vunpack.c.h.b16 %v7643
    %v8184 = vunpack.c.l.b16 %v7644
    %v8185 = vunpack.c.h.b16 %v7644
    %v8186 = vunpack.c.l.b16 %v7645
    %v8187 = vunpack.c.h.b16 %v7645
    %v8188 = vunpack.c.l.b16 %v7646
    %v8189 = vunpack.c.h.b16 %v7646
    %v8190 = vunpack.c.l.b16 %v7647
    %v8191 = vunpack.c.h.b16 %v7647
    %v8192 = vunpack.c.l.b16 %v7648
    %v8193 = vunpack.c.h.b16 %v7648
    %v8194 = vunpack.c.l.b16 %v7649
    %v8195 = vunpack.c.h.b16 %v7649
    %v8196 = vunpack.c.l.b16 %v7650
    %v8197 = vunpack.c.h.b16 %v7650
    %v8198 = vunpack.c.l.b16 %v7651
    %v8199 = vunpack.c.h.b16 %v7651
    %v8200 = vunpack.c.l.b16 %v7652
    %v8201 = vunpack.c.h.b16 %v7652
    %v8202 = vunpack.c.l.b16 %v7653
    %v8203 = vunpack.c.h.b16 %v7653
    %v8204 = vunpack.c.l.b16 %v7654
    %v8205 = vunpack.c.h.b16 %v7654
    %v8206 = vunpack.c.l.b16 %v7655
    %v8207 = vunpack.c.h.b16 %v7655
    %v8208 = vunpack.c.l.b16 %v7656
    %v8209 = vunpack.c.h.b16 %v7656
    %v8210 = vunpack.c.l.b16 %v7657
    %v8211 = vunpack.c.h.b16 %v7657
    %v8212 = vunpack.c.l.b16 %v7658
    %v8213 = vunpack.c.h.b16 %v7658
    %v8214 = vunpack.c.l.b16 %v7659
    %v8215 = vunpack.c.h.b16 %v7659
    %v8216 = vunpack.c.l.b16 %v7660
    %v8217 = vunpack.c.h.b16 %v7660
    %v8218 = vunpack.c.l.b16 %v7661
    %v8219 = vunpack.c.h.b16 %v7661
    %v8220 = vunpack.c.l.b16 %v7662
    %v8221 = vunpack.c.h.b16 %v7662
    %v8222 = vunpack.c.l.b16 %v7663
    %v8223 = vunpack.c.h.b16 %v7663
    %v8224 = vunpack.c.l.b16 %v7664
    %v8225 = vunpack.c.h.b16 %v7664
    %v8226 = vunpack.c.l.b16 %v7665
    %v8227 = vunpack.c.h.b16 %v7665
    %v8228 = vunpack.c.l.b16 %v7666
    %v8229 = vunpack.c.h.b16 %v7666
    %v8230 = vunpack.c.l.b16 %v7667
    %v8231 = vunpack.c.h.b16 %v7667
    %v8232 = vunpack.c.l.b16 %v7668
    %v8233 = vunpack.c.h.b16 %v7668
    %v8234 = vunpack.c.l.b16 %v7669
    %v8235 = vunpack.c.h.b16 %v7669
    %v8236 = vunpack.c.l.b16 %v7670
    %v8237 = vunpack.c.h.b16 %v7670
    %v8238 = vunpack.c.l.b16 %v7671
    %v8239 = vunpack.c.h.b16 %v7671
    %v8240 = vunpack.c.l.b16 %v7672
    %v8241 = vunpack.c.h.b16 %v7672
    %v8242 = vunpack.c.l.b16 %v7673
    %v8243 = vunpack.c.h.b16 %v7673
    %v8244 = vunpack.c.l.b16 %v7674
    %v8245 = vunpack.c.h.b16 %v7674
    %v8246 = vunpack.c.l.b16 %v7675
    %v8247 = vunpack.c.h.b16 %v7675
    %v8248 = vunpack.c.l.b16 %v7676
    %v8249 = vunpack.c.h.b16 %v7676
    %v8250 = vunpack.c.l.b16 %v7677
    %v8251 = vunpack.c.h.b16 %v7677
    %v8252 = vunpack.c.l.b16 %v7678
    %v8253 = vunpack.c.h.b16 %v7678
    %v8254 = vunpack.c.l.b16 %v7679
    %v8255 = vunpack.c.h.b16 %v7679
    %v8256 = vunpack.c.l.b16 %v7680
    %v8257 = vunpack.c.h.b16 %v7680
    %v8258 = vunpack.c.l.b16 %v7681
    %v8259 = vunpack.c.h.b16 %v7681
    %v8260 = vunpack.c.l.b16 %v7682
    %v8261 = vunpack.c.h.b16 %v7682
    %v8262 = vunpack.c.l.b16 %v7683
    %v8263 = vunpack.c.h.b16 %v7683
    %v8264 = vunpack.c.l.b16 %v7684
    %v8265 = vunpack.c.h.b16 %v7684
    %v8266 = vunpack.c.l.b16 %v7685
    %v8267 = vunpack.c.h.b16 %v7685
    %v8268 = vunpack.c.l.b16 %v7686
    %v8269 = vunpack.c.h.b16 %v7686
    %v8270 = vunpack.c.l.b16 %v7687
    %v8271 = vunpack.c.h.b16 %v7687
    %v8272 = vunpack.c.l.b16 %v7688
    %v8273 = vunpack.c.h.b16 %v7688
    %v8274 = vunpack.c.l.b16 %v7689
    %v8275 = vunpack.c.h.b16 %v7689
    %v8276 = vunpack.c.l.b16 %v7690
    %v8277 = vunpack.c.h.b16 %v7690
    %v8278 = vunpack.c.l.b16 %v7691
    %v8279 = vunpack.c.h.b16 %v7691
    %v8280 = vunpack.c.l.b16 %v7692
    %v8281 = vunpack.c.h.b16 %v7692
    %v8282 = vunpack.c.l.b16 %v7693
    %v8283 = vunpack.c.h.b16 %v7693
    %v8284 = vunpack.c.l.b16 %v7694
    %v8285 = vunpack.c.h.b16 %v7694
    %v8286 = vunpack.c.l.b16 %v7695
    %v8287 = vunpack.c.h.b16 %v7695
    %v8288 = vunpack.c.l.b16 %v7696
    %v8289 = vunpack.c.h.b16 %v7696
    %v8290 = vunpack.c.l.b16 %v7697
    %v8291 = vunpack.c.h.b16 %v7697
    %v8292 = vunpack.c.l.b16 %v7698
    %v8293 = vunpack.c.h.b16 %v7698
    %v8294 = vunpack.c.l.b16 %v7699
    %v8295 = vunpack.c.h.b16 %v7699
    %v8296 = vunpack.c.l.b16 %v7700
    %v8297 = vunpack.c.h.b16 %v7700
    %v8298 = vunpack.c.l.b16 %v7701
    %v8299 = vunpack.c.h.b16 %v7701
    %v8300 = vunpack.c.l.b16 %v7702
    %v8301 = vunpack.c.h.b16 %v7702
    %v8302 = vunpack.c.l.b16 %v7703
    %v8303 = vunpack.c.h.b16 %v7703
    %v8304 = vunpack.c.l.b16 %v7704
    %v8305 = vunpack.c.h.b16 %v7704
    %v8306 = vunpack.c.l.b16 %v7705
    %v8307 = vunpack.c.h.b16 %v7705
    %v8308 = vunpack.c.l.b16 %v7706
    %v8309 = vunpack.c.h.b16 %v7706
    %v8310 = vunpack.c.l.b16 %v7707
    %v8311 = vunpack.c.h.b16 %v7707
    %v8312 = vunpack.c.l.b16 %v7708
    %v8313 = vunpack.c.h.b16 %v7708
    %v8314 = vunpack.c.l.b16 %v7709
    %v8315 = vunpack.c.h.b16 %v7709
    %v8316 = vunpack.c.l.b16 %v7710
    %v8317 = vunpack.c.h.b16 %v7710
    %v8318 = vunpack.c.l.b16 %v7711
    %v8319 = vunpack.c.h.b16 %v7711
    %v8320 = vunpack.c.l.b16 %v7712
    %v8321 = vunpack.c.h.b16 %v7712
    %v8322 = vunpack.c.l.b16 %v7713
    %v8323 = vunpack.c.h.b16 %v7713
    %v8324 = vunpack.c.l.b16 %v7714
    %v8325 = vunpack.c.h.b16 %v7714
    %v8326 = vunpack.c.l.b16 %v7715
    %v8327 = vunpack.c.h.b16 %v7715
    %v8328 = vunpack.c.l.b16 %v7716
    %v8329 = vunpack.c.h.b16 %v7716
    %v8330 = vunpack.c.l.b16 %v7717
    %v8331 = vunpack.c.h.b16 %v7717
    %v8332 = vunpack.c.l.b16 %v7718
    %v8333 = vunpack.c.h.b16 %v7718
    %v8334 = vunpack.c.l.b16 %v7719
    %v8335 = vunpack.c.h.b16 %v7719
    %v8336 = vunpack.c.l.b16 %v7720
    %v8337 = vunpack.c.h.b16 %v7720
    %v8338 = vunpack.c.l.b16 %v7721
    %v8339 = vunpack.c.h.b16 %v7721
    %v8340 = vunpack.c.l.b16 %v7722
    %v8341 = vunpack.c.h.b16 %v7722
    %v8342 = vunpack.c.l.b16 %v7723
    %v8343 = vunpack.c.h.b16 %v7723
    %v8344 = vunpack.c.l.b16 %v7724
    %v8345 = vunpack.c.h.b16 %v7724
    %v8346 = vunpack.c.l.b16 %v7725
    %v8347 = vunpack.c.h.b16 %v7725
    %v8348 = vunpack.c.l.b16 %v7726
    %v8349 = vunpack.c.h.b16 %v7726
    %v8350 = vunpack.c.l.b16 %v7727
    %v8351 = vunpack.c.h.b16 %v7727
    %v8352 = vunpack.c.l.b16 %v7728
    %v8353 = vunpack.c.h.b16 %v7728
    %v8354 = vunpack.c.l.b16 %v7729
    %v8355 = vunpack.c.h.b16 %v7729
    %v8356 = vunpack.c.l.b16 %v7730
    %v8357 = vunpack.c.h.b16 %v7730
    %v8358 = vunpack.c.l.b16 %v7731
    %v8359 = vunpack.c.h.b16 %v7731
    %v8360 = vunpack.c.l.b16 %v7732
    %v8361 = vunpack.c.h.b16 %v7732
    %v8362 = vunpack.c.l.b16 %v7733
    %v8363 = vunpack.c.h.b16 %v7733
    %v8364 = vunpack.c.l.b16 %v7734
    %v8365 = vunpack.c.h.b16 %v7734
    %v8366 = vunpack.c.l.b16 %v7735
    %v8367 = vunpack.c.h.b16 %v7735
    %v8368 = vunpack.c.l.b16 %v7736
    %v8369 = vunpack.c.h.b16 %v7736
    %v8370 = vunpack.c.l.b16 %v7737
    %v8371 = vunpack.c.h.b16 %v7737
    %v8372 = vunpack.c.l.b16 %v7738
    %v8373 = vunpack.c.h.b16 %v7738
    %v8374 = vunpack.c.l.b16 %v7739
    %v8375 = vunpack.c.h.b16 %v7739
    %v8376 = vunpack.c.l.b16 %v7740
    %v8377 = vunpack.c.h.b16 %v7740
    %v8378 = vunpack.c.l.b16 %v7741
    %v8379 = vunpack.c.h.b16 %v7741
    %v8380 = vunpack.c.l.b16 %v7742
    %v8381 = vunpack.c.h.b16 %v7742
    %v8382 = vunpack.c.l.b16 %v7743
    %v8383 = vunpack.c.h.b16 %v7743
    %v8384 = vunpack.c.l.b16 %v7744
    %v8385 = vunpack.c.h.b16 %v7744
    %v8386 = vunpack.c.l.b16 %v7745
    %v8387 = vunpack.c.h.b16 %v7745
    %v8388 = vunpack.c.l.b16 %v7746
    %v8389 = vunpack.c.h.b16 %v7746
    %v8390 = vunpack.c.l.b16 %v7747
    %v8391 = vunpack.c.h.b16 %v7747
    %v8392 = vunpack.c.l.b16 %v7748
    %v8393 = vunpack.c.h.b16 %v7748
    %v8394 = vunpack.c.l.b16 %v7749
    %v8395 = vunpack.c.h.b16 %v7749
    %v8396 = vunpack.c.l.b16 %v7750
    %v8397 = vunpack.c.h.b16 %v7750
    %v8398 = vunpack.c.l.b16 %v7751
    %v8399 = vunpack.c.h.b16 %v7751
    %v8400 = vunpack.c.l.b16 %v7752
    %v8401 = vunpack.c.h.b16 %v7752
    %v8402 = vunpack.c.l.b16 %v7753
    %v8403 = vunpack.c.h.b16 %v7753
    %v8404 = vunpack.c.l.b16 %v7754
    %v8405 = vunpack.c.h.b16 %v7754
    %v8406 = vunpack.c.l.b16 %v7755
    %v8407 = vunpack.c.h.b16 %v7755
    %v8408 = vunpack.c.l.b16 %v7756
    %v8409 = vunpack.c.h.b16 %v7756
    %v8410 = vunpack.c.l.b16 %v7757
    %v8411 = vunpack.c.h.b16 %v7757
    %v8412 = vunpack.c.l.b16 %v7758
    %v8413 = vunpack.c.h.b16 %v7758
    %v8414 = vunpack.c.l.b16 %v7759
    %v8415 = vunpack.c.h.b16 %v7759
    %v8416 = vunpack.c.l.b16 %v7760
    %v8417 = vunpack.c.h.b16 %v7760
    %v8418 = vunpack.c.l.b16 %v7761
    %v8419 = vunpack.c.h.b16 %v7761
    %v8420 = vunpack.c.l.b16 %v7762
    %v8421 = vunpack.c.h.b16 %v7762
    %v8422 = vunpack.c.l.b16 %v7763
    %v8423 = vunpack.c.h.b16 %v7763
    %v8424 = vunpack.c.l.b16 %v7764
    %v8425 = vunpack.c.h.b16 %v7764
    %v8426 = vunpack.c.l.b16 %v7765
    %v8427 = vunpack.c.h.b16 %v7765
    %v8428 = vunpack.c.l.b16 %v7766
    %v8429 = vunpack.c.h.b16 %v7766
    %v8430 = vunpack.c.l.b16 %v7767
    %v8431 = vunpack.c.h.b16 %v7767
    %v8432 = vunpack.c.l.b16 %v7768
    %v8433 = vunpack.c.h.b16 %v7768
    %v8434 = vunpack.c.l.b16 %v7769
    %v8435 = vunpack.c.h.b16 %v7769
    %v8436 = vunpack.c.l.b16 %v7770
    %v8437 = vunpack.c.h.b16 %v7770
    %v8438 = vunpack.c.l.b16 %v7771
    %v8439 = vunpack.c.h.b16 %v7771
    %v8440 = vunpack.c.l.b16 %v7772
    %v8441 = vunpack.c.h.b16 %v7772
    %v8442 = vunpack.c.l.b16 %v7773
    %v8443 = vunpack.c.h.b16 %v7773
    %v8444 = vunpack.c.l.b16 %v7774
    %v8445 = vunpack.c.h.b16 %v7774
    %v8446 = vunpack.c.l.b16 %v7775
    %v8447 = vunpack.c.h.b16 %v7775
    %v8448 = vunpack.c.l.b16 %v7776
    %v8449 = vunpack.c.h.b16 %v7776
    %v8450 = vunpack.c.l.b16 %v7777
    %v8451 = vunpack.c.h.b16 %v7777
    %v8452 = vunpack.c.l.b16 %v7778
    %v8453 = vunpack.c.h.b16 %v7778
    %v8454 = vunpack.c.l.b16 %v7779
    %v8455 = vunpack.c.h.b16 %v7779
    %v8456 = vunpack.c.l.b16 %v7780
    %v8457 = vunpack.c.h.b16 %v7780
    %v8458 = vunpack.c.l.b16 %v7781
    %v8459 = vunpack.c.h.b16 %v7781
    %v8460 = vunpack.c.l.b16 %v7782
    %v8461 = vunpack.c.h.b16 %v7782
    %v8462 = vunpack.c.l.b16 %v7783
    %v8463 = vunpack.c.h.b16 %v7783
    %v8464 = vunpack.c.l.b16 %v7784
    %v8465 = vunpack.c.h.b16 %v7784
    %v8466 = vunpack.c.l.b16 %v7785
    %v8467 = vunpack.c.h.b16 %v7785
    %v8468 = vunpack.c.l.b16 %v7786
    %v8469 = vunpack.c.h.b16 %v7786
    %v8470 = vunpack.c.l.b16 %v7787
    %v8471 = vunpack.c.h.b16 %v7787
    %v8472 = vunpack.c.l.b16 %v7788
    %v8473 = vunpack.c.h.b16 %v7788
    %v8474 = vunpack.c.l.b16 %v7789
    %v8475 = vunpack.c.h.b16 %v7789
    %v8476 = vunpack.c.l.b16 %v7790
    %v8477 = vunpack.c.h.b16 %v7790
    %v8478 = vunpack.c.l.b16 %v7791
    %v8479 = vunpack.c.h.b16 %v7791
    %v8480 = vunpack.c.l.b16 %v7792
    %v8481 = vunpack.c.h.b16 %v7792
    %v8482 = vunpack.c.l.b16 %v7793
    %v8483 = vunpack.c.h.b16 %v7793
    %v8484 = vunpack.c.l.b16 %v7794
    %v8485 = vunpack.c.h.b16 %v7794
    %v8486 = vunpack.c.l.b16 %v7795
    %v8487 = vunpack.c.h.b16 %v7795
    %v8488 = vunpack.c.l.b16 %v7796
    %v8489 = vunpack.c.h.b16 %v7796
    %v8490 = vunpack.c.l.b16 %v7797
    %v8491 = vunpack.c.h.b16 %v7797
    %v8492 = vunpack.c.l.b16 %v7798
    %v8493 = vunpack.c.h.b16 %v7798
    %v8494 = vunpack.c.l.b16 %v7799
    %v8495 = vunpack.c.h.b16 %v7799
    %v8496 = vunpack.c.l.b16 %v7800
    %v8497 = vunpack.c.h.b16 %v7800
    %v8498 = vunpack.c.l.b16 %v7801
    %v8499 = vunpack.c.h.b16 %v7801
    %v8500 = vunpack.c.l.b16 %v7802
    %v8501 = vunpack.c.h.b16 %v7802
    %v8502 = vunpack.c.l.b16 %v7803
    %v8503 = vunpack.c.h.b16 %v7803
    %v8504 = vunpack.c.l.b16 %v7804
    %v8505 = vunpack.c.h.b16 %v7804
    %v8506 = vunpack.c.l.b16 %v7805
    %v8507 = vunpack.c.h.b16 %v7805
    %v8508 = vunpack.c.l.b16 %v7806
    %v8509 = vunpack.c.h.b16 %v7806
    %v8510 = vunpack.c.l.b16 %v7807
    %v8511 = vunpack.c.h.b16 %v7807
    %v8512 = vunpack.c.l.b16 %v7808
    %v8513 = vunpack.c.h.b16 %v7808
    %v8514 = vunpack.c.l.b16 %v7809
    %v8515 = vunpack.c.h.b16 %v7809
    %v8516 = vunpack.c.l.b16 %v7810
    %v8517 = vunpack.c.h.b16 %v7810
    %v8518 = vunpack.c.l.b16 %v7811
    %v8519 = vunpack.c.h.b16 %v7811
    %v8520 = vunpack.c.l.b16 %v7812
    %v8521 = vunpack.c.h.b16 %v7812
    %v8522 = vunpack.c.l.b16 %v7813
    %v8523 = vunpack.c.h.b16 %v7813
    %v8524 = vunpack.c.l.b16 %v7814
    %v8525 = vunpack.c.h.b16 %v7814
    %v8526 = vunpack.c.l.b16 %v7815
    %v8527 = vunpack.c.h.b16 %v7815
    %v8528 = vunpack.c.l.b16 %v7816
    %v8529 = vunpack.c.h.b16 %v7816
    %v8530 = vunpack.c.l.b16 %v7817
    %v8531 = vunpack.c.h.b16 %v7817
    %v8532 = vunpack.c.l.b16 %v7818
    %v8533 = vunpack.c.h.b16 %v7818
    %v8534 = vunpack.c.l.b16 %v7819
    %v8535 = vunpack.c.h.b16 %v7819
    %v8536 = vunpack.c.l.b16 %v7820
    %v8537 = vunpack.c.h.b16 %v7820
    %v8538 = vunpack.c.l.b16 %v7821
    %v8539 = vunpack.c.h.b16 %v7821
    %v8540 = vunpack.c.l.b16 %v7822
    %v8541 = vunpack.c.h.b16 %v7822
    %v8542 = vunpack.c.l.b16 %v7823
    %v8543 = vunpack.c.h.b16 %v7823
    %v8544 = vunpack.c.l.b16 %v7824
    %v8545 = vunpack.c.h.b16 %v7824
    %v8546 = vunpack.c.l.b16 %v7825
    %v8547 = vunpack.c.h.b16 %v7825
    %v8548 = vunpack.c.l.b16 %v7826
    %v8549 = vunpack.c.h.b16 %v7826
    %v8550 = vunpack.c.l.b16 %v7827
    %v8551 = vunpack.c.h.b16 %v7827
    %v8552 = vunpack.c.l.b16 %v7828
    %v8553 = vunpack.c.h.b16 %v7828
    %v8554 = vunpack.c.l.b16 %v7829
    %v8555 = vunpack.c.h.b16 %v7829
    %v8556 = vunpack.c.l.b16 %v7830
    %v8557 = vunpack.c.h.b16 %v7830
    %v8558 = vunpack.c.l.b16 %v7831
    %v8559 = vunpack.c.h.b16 %v7831
    %v8560 = vunpack.c.l.b16 %v7832
    %v8561 = vunpack.c.h.b16 %v7832
    %v8562 = vunpack.c.l.b16 %v7833
    %v8563 = vunpack.c.h.b16 %v7833
    %v8564 = vunpack.c.l.b16 %v7834
    %v8565 = vunpack.c.h.b16 %v7834
    %v8566 = vunpack.c.l.b16 %v7835
    %v8567 = vunpack.c.h.b16 %v7835
    %v8568 = vunpack.c.l.b16 %v7836
    %v8569 = vunpack.c.h.b16 %v7836
    %v8570 = vunpack.c.l.b16 %v7837
    %v8571 = vunpack.c.h.b16 %v7837
    %v8572 = vunpack.c.l.b16 %v7838
    %v8573 = vunpack.c.h.b16 %v7838
    %v8574 = vunpack.c.l.b16 %v7839
    %v8575 = vunpack.c.h.b16 %v7839
    %v8576 = vunpack.c.l.b16 %v7840
    %v8577 = vunpack.c.h.b16 %v7840
    %v8578 = vunpack.c.l.b16 %v7841
    %v8579 = vunpack.c.h.b16 %v7841
    %v8580 = vunpack.c.l.b16 %v7842
    %v8581 = vunpack.c.h.b16 %v7842
    %v8582 = vunpack.c.l.b16 %v7843
    %v8583 = vunpack.c.h.b16 %v7843
    %v8584 = vunpack.c.l.b16 %v7844
    %v8585 = vunpack.c.h.b16 %v7844
    %v8586 = vunpack.c.l.b16 %v7845
    %v8587 = vunpack.c.h.b16 %v7845
    %v8588 = vunpack.c.l.b16 %v7846
    %v8589 = vunpack.c.h.b16 %v7846
    %v8590 = vunpack.c.l.b16 %v7847
    %v8591 = vunpack.c.h.b16 %v7847
    %v8592 = vunpack.c.l.b16 %v7848
    %v8593 = vunpack.c.h.b16 %v7848
    %v8594 = vunpack.c.l.b16 %v7849
    %v8595 = vunpack.c.h.b16 %v7849
    %v8596 = vunpack.c.l.b16 %v7850
    %v8597 = vunpack.c.h.b16 %v7850
    %v8598 = vunpack.c.l.b16 %v7851
    %v8599 = vunpack.c.h.b16 %v7851
    %v8600 = vunpack.c.l.b16 %v7852
    %v8601 = vunpack.c.h.b16 %v7852
    %v8602 = vunpack.c.l.b16 %v7853
    %v8603 = vunpack.c.h.b16 %v7853
    %v8604 = vunpack.c.l.b16 %v7854
    %v8605 = vunpack.c.h.b16 %v7854
    %v8606 = vunpack.c.l.b16 %v7855
    %v8607 = vunpack.c.h.b16 %v7855
    %v8608 = vunpack.c.l.b16 %v7856
    %v8609 = vunpack.c.h.b16 %v7856
    %v8610 = vunpack.c.l.b16 %v7857
    %v8611 = vunpack.c.h.b16 %v7857
    %v8612 = vunpack.c.l.b16 %v7858
    %v8613 = vunpack.c.h.b16 %v7858
    %v8614 = vunpack.c.l.b16 %v7859
    %v8615 = vunpack.c.h.b16 %v7859
    %v8616 = vunpack.c.l.b16 %v7860
    %v8617 = vunpack.c.h.b16 %v7860
    %v8618 = vunpack.c.l.b16 %v7861
    %v8619 = vunpack.c.h.b16 %v7861
    %v8620 = vunpack.c.l.b16 %v7862
    %v8621 = vunpack.c.h.b16 %v7862
    %v8622 = vunpack.c.l.b16 %v7863
    %v8623 = vunpack.c.h.b16 %v7863
    %v8624 = vunpack.c.l.b16 %v7864
    %v8625 = vunpack.c.h.b16 %v7864
    %v8626 = vunpack.c.l.b16 %v7865
    %v8627 = vunpack.c.h.b16 %v7865
    %v8628 = vunpack.c.l.b16 %v7866
    %v8629 = vunpack.c.h.b16 %v7866
    %v8630 = vunpack.c.l.b16 %v7867
    %v8631 = vunpack.c.h.b16 %v7867
    %v8632 = vunpack.c.l.b16 %v7868
    %v8633 = vunpack.c.h.b16 %v7868
    %v8634 = vunpack.c.l.b16 %v7869
    %v8635 = vunpack.c.h.b16 %v7869
    %v8636 = vunpack.c.l.b16 %v7870
    %v8637 = vunpack.c.h.b16 %v7870
    %v8638 = vunpack.c.l.b16 %v7871
    %v8639 = vunpack.c.h.b16 %v7871
    %v8640 = vunpack.c.l.b16 %v7872
    %v8641 = vunpack.c.h.b16 %v7872
    %v8642 = vunpack.c.l.b16 %v7873
    %v8643 = vunpack.c.h.b16 %v7873
    %v8644 = vunpack.c.l.b16 %v7874
    %v8645 = vunpack.c.h.b16 %v7874
    %v8646 = vunpack.c.l.b16 %v7875
    %v8647 = vunpack.c.h.b16 %v7875
    %v8648 = vunpack.c.l.b16 %v7876
    %v8649 = vunpack.c.h.b16 %v7876
    %v8650 = vunpack.c.l.b16 %v7877
    %v8651 = vunpack.c.h.b16 %v7877
    %v8652 = vunpack.c.l.b16 %v7878
    %v8653 = vunpack.c.h.b16 %v7878
    %v8654 = vunpack.c.l.b16 %v7879
    %v8655 = vunpack.c.h.b16 %v7879
    %v8656 = vunpack.c.l.b16 %v7880
    %v8657 = vunpack.c.h.b16 %v7880
    %v8658 = vunpack.c.l.b16 %v7881
    %v8659 = vunpack.c.h.b16 %v7881
    %v8660 = vunpack.c.l.b16 %v7882
    %v8661 = vunpack.c.h.b16 %v7882
    %v8662 = vunpack.c.l.b16 %v7883
    %v8663 = vunpack.c.h.b16 %v7883
    %v8664 = vunpack.c.l.b16 %v7884
    %v8665 = vunpack.c.h.b16 %v7884
    %v8666 = vunpack.c.l.b16 %v7885
    %v8667 = vunpack.c.h.b16 %v7885
    %v8668 = vunpack.c.l.b16 %v7886
    %v8669 = vunpack.c.h.b16 %v7886
    %v8670 = vunpack.c.l.b16 %v7887
    %v8671 = vunpack.c.h.b16 %v7887
    %v8672 = vunpack.c.l.b16 %v7888
    %v8673 = vunpack.c.h.b16 %v7888
    %v8674 = vunpack.c.l.b16 %v7889
    %v8675 = vunpack.c.h.b16 %v7889
    %v8676 = vunpack.c.l.b16 %v7890
    %v8677 = vunpack.c.h.b16 %v7890
    %v8678 = vunpack.c.l.b16 %v7891
    %v8679 = vunpack.c.h.b16 %v7891
    %v8680 = vunpack.c.l.b16 %v7892
    %v8681 = vunpack.c.h.b16 %v7892
    %v8682 = vunpack.c.l.b16 %v7893
    %v8683 = vunpack.c.h.b16 %v7893
    %v8684 = vpack.c.b16 %v8176, %v8172
    %v8685 = vpack.c.b16 %v8177, %v8173
    %v8686 = vpack.c.b16 %v8178, %v8174
    %v8687 = vpack.c.b16 %v8179, %v8175
    %v8688 = vpack.c.b16 %v8184, %v8180
    %v8689 = vpack.c.b16 %v8185, %v8181
    %v8690 = vpack.c.b16 %v8186, %v8182
    %v8691 = vpack.c.b16 %v8187, %v8183
    %v8692 = vpack.c.b16 %v8192, %v8188
    %v8693 = vpack.c.b16 %v8193, %v8189
    %v8694 = vpack.c.b16 %v8194, %v8190
    %v8695 = vpack.c.b16 %v8195, %v8191
    %v8696 = vpack.c.b16 %v8200, %v8196
    %v8697 = vpack.c.b16 %v8201, %v8197
    %v8698 = vpack.c.b16 %v8202, %v8198
    %v8699 = vpack.c.b16 %v8203, %v8199
    %v8700 = vpack.c.b16 %v8208, %v8204
    %v8701 = vpack.c.b16 %v8209, %v8205
    %v8702 = vpack.c.b16 %v8210, %v8206
    %v8703 = vpack.c.b16 %v8211, %v8207
    %v8704 = vpack.c.b16 %v8216, %v8212
    %v8705 = vpack.c.b16 %v8217, %v8213
    %v8706 = vpack.c.b16 %v8218, %v8214
    %v8707 = vpack.c.b16 %v8219, %v8215
    %v8708 = vpack.c.b16 %v8224, %v8220
    %v8709 = vpack.c.b16 %v8225, %v8221
    %v8710 = vpack.c.b16 %v8226, %v8222
    %v8711 = vpack.c.b16 %v8227, %v8223
    %v8712 = vpack.c.b16 %v8232, %v8228
    %v8713 = vpack.c.b16 %v8233, %v8229
    %v8714 = vpack.c.b16 %v8234, %v8230
    %v8715 = vpack.c.b16 %v8235, %v8231
    %v8716 = vpack.c.b16 %v8240, %v8236
    %v8717 = vpack.c.b16 %v8241, %v8237
    %v8718 = vpack.c.b16 %v8242, %v8238
    %v8719 = vpack.c.b16 %v8243, %v8239
    %v8720 = vpack.c.b16 %v8248, %v8244
    %v8721 = vpack.c.b16 %v8249, %v8245
    %v8722 = vpack.c.b16 %v8250, %v8246
    %v8723 = vpack.c.b16 %v8251, %v8247
    %v8724 = vpack.c.b16 %v8256, %v8252
    %v8725 = vpack.c.b16 %v8257, %v8253
    %v8726 = vpack.c.b16 %v8258, %v8254
    %v8727 = vpack.c.b16 %v8259, %v8255
    %v8728 = vpack.c.b16 %v8264, %v8260
    %v8729 = vpack.c.b16 %v8265, %v8261
    %v8730 = vpack.c.b16 %v8266, %v8262
    %v8731 = vpack.c.b16 %v8267, %v8263
    %v8732 = vpack.c.b16 %v8272, %v8268
    %v8733 = vpack.c.b16 %v8273, %v8269
    %v8734 = vpack.c.b16 %v8274, %v8270
    %v8735 = vpack.c.b16 %v8275, %v8271
    %v8736 = vpack.c.b16 %v8280, %v8276
    %v8737 = vpack.c.b16 %v8281, %v8277
    %v8738 = vpack.c.b16 %v8282, %v8278
    %v8739 = vpack.c.b16 %v8283, %v8279
    %v8740 = vpack.c.b16 %v8288, %v8284
    %v8741 = vpack.c.b16 %v8289, %v8285
    %v8742 = vpack.c.b16 %v8290, %v8286
    %v8743 = vpack.c.b16 %v8291, %v8287
    %v8744 = vpack.c.b16 %v8296, %v8292
    %v8745 = vpack.c.b16 %v8297, %v8293
    %v8746 = vpack.c.b16 %v8298, %v8294
    %v8747 = vpack.c.b16 %v8299, %v8295
    %v8748 = vpack.c.b16 %v8304, %v8300
    %v8749 = vpack.c.b16 %v8305, %v8301
    %v8750 = vpack.c.b16 %v8306, %v8302
    %v8751 = vpack.c.b16 %v8307, %v8303
    %v8752 = vpack.c.b16 %v8312, %v8308
    %v8753 = vpack.c.b16 %v8313, %v8309
    %v8754 = vpack.c.b16 %v8314, %v8310
    %v8755 = vpack.c.b16 %v8315, %v8311
    %v8756 = vpack.c.b16 %v8320, %v8316
    %v8757 = vpack.c.b16 %v8321, %v8317
    %v8758 = vpack.c.b16 %v8322, %v8318
    %v8759 = vpack.c.b16 %v8323, %v8319
    %v8760 = vpack.c.b16 %v8328, %v8324
    %v8761 = vpack.c.b16 %v8329, %v8325
    %v8762 = vpack.c.b16 %v8330, %v8326
    %v8763 = vpack.c.b16 %v8331, %v8327
    %v8764 = vpack.c.b16 %v8336, %v8332
    %v8765 = vpack.c.b16 %v8337, %v8333
    %v8766 = vpack.c.b16 %v8338, %v8334
    %v8767 = vpack.c.b16 %v8339, %v8335
    %v8768 = vpack.c.b16 %v8344, %v8340
    %v8769 = vpack.c.b16 %v8345, %v8341
    %v8770 = vpack.c.b16 %v8346, %v8342
    %v8771 = vpack.c.b16 %v8347, %v8343
    %v8772 = vpack.c.b16 %v8352, %v8348
    %v8773 = vpack.c.b16 %v8353, %v8349
    %v8774 = vpack.c.b16 %v8354, %v8350
    %v8775 = vpack.c.b16 %v8355, %v8351
    %v8776 = vpack.c.b16 %v8360, %v8356
    %v8777 = vpack.c.b16 %v8361, %v8357
    %v8778 = vpack.c.b16 %v8362, %v8358
    %v8779 = vpack.c.b16 %v8363, %v8359
    %v8780 = vpack.c.b16 %v8368, %v8364
    %v8781 = vpack.c.b16 %v8369, %v8365
    %v8782 = vpack.c.b16 %v8370, %v8366
    %v8783 = vpack.c.b16 %v8371, %v8367
    %v8784 = vpack.c.b16 %v8376, %v8372
    %v8785 = vpack.c.b16 %v8377, %v8373
    %v8786 = vpack.c.b16 %v8378, %v8374
    %v8787 = vpack.c.b16 %v8379, %v8375
    %v8788 = vpack.c.b16 %v8384, %v8380
    %v8789 = vpack.c.b16 %v8385, %v8381
    %v8790 = vpack.c.b16 %v8386, %v8382
    %v8791 = vpack.c.b16 %v8387, %v8383
    %v8792 = vpack.c.b16 %v8392, %v8388
    %v8793 = vpack.c.b16 %v8393, %v8389
    %v8794 = vpack.c.b16 %v8394, %v8390
    %v8795 = vpack.c.b16 %v8395, %v8391
    %v8796 = vpack.c.b16 %v8400, %v8396
    %v8797 = vpack.c.b16 %v8401, %v8397
    %v8798 = vpack.c.b16 %v8402, %v8398
    %v8799 = vpack.c.b16 %v8403, %v8399
    %v8800 = vpack.c.b16 %v8408, %v8404
    %v8801 = vpack.c.b16 %v8409, %v8405
    %v8802 = vpack.c.b16 %v8410, %v8406
    %v8803 = vpack.c.b16 %v8411, %v8407
    %v8804 = vpack.c.b16 %v8416, %v8412
    %v8805 = vpack.c.b16 %v8417, %v8413
    %v8806 = vpack.c.b16 %v8418, %v8414
    %v8807 = vpack.c.b16 %v8419, %v8415
    %v8808 = vpack.c.b16 %v8424, %v8420
    %v8809 = vpack.c.b16 %v8425, %v8421
    %v8810 = vpack.c.b16 %v8426, %v8422
    %v8811 = vpack.c.b16 %v8427, %v8423
    %v8812 = vpack.c.b16 %v8432, %v8428
    %v8813 = vpack.c.b16 %v8433, %v8429
    %v8814 = vpack.c.b16 %v8434, %v8430
    %v8815 = vpack.c.b16 %v8435, %v8431
    %v8816 = vpack.c.b16 %v8440, %v8436
    %v8817 = vpack.c.b16 %v8441, %v8437
    %v8818 = vpack.c.b16 %v8442, %v8438
    %v8819 = vpack.c.b16 %v8443, %v8439
    %v8820 = vpack.c.b16 %v8448, %v8444
    %v8821 = vpack.c.b16 %v8449, %v8445
    %v8822 = vpack.c.b16 %v8450, %v8446
    %v8823 = vpack.c.b16 %v8451, %v8447
    %v8824 = vpack.c.b16 %v8456, %v8452
    %v8825 = vpack.c.b16 %v8457, %v8453
    %v8826 = vpack.c.b16 %v8458, %v8454
    %v8827 = vpack.c.b16 %v8459, %v8455
    %v8828 = vpack.c.b16 %v8464, %v8460
    %v8829 = vpack.c.b16 %v8465, %v8461
    %v8830 = vpack.c.b16 %v8466, %v8462
    %v8831 = vpack.c.b16 %v8467, %v8463
    %v8832 = vpack.c.b16 %v8472, %v8468
    %v8833 = vpack.c.b16 %v8473, %v8469
    %v8834 = vpack.c.b16 %v8474, %v8470
    %v8835 = vpack.c.b16 %v8475, %v8471
    %v8836 = vpack.c.b16 %v8480, %v8476
    %v8837 = vpack.c.b16 %v8481, %v8477
    %v8838 = vpack.c.b16 %v8482, %v8478
    %v8839 = vpack.c.b16 %v8483, %v8479
    %v8840 = vpack.c.b16 %v8488, %v8484
    %v8841 = vpack.c.b16 %v8489, %v8485
    %v8842 = vpack.c.b16 %v8490, %v8486
    %v8843 = vpack.c.b16 %v8491, %v8487
    %v8844 = vpack.c.b16 %v8496, %v8492
    %v8845 = vpack.c.b16 %v8497, %v8493
    %v8846 = vpack.c.b16 %v8498, %v8494
    %v8847 = vpack.c.b16 %v8499, %v8495
    %v8848 = vpack.c.b16 %v8504, %v8500
    %v8849 = vpack.c.b16 %v8505, %v8501
    %v8850 = vpack.c.b16 %v8506, %v8502
    %v8851 = vpack.c.b16 %v8507, %v8503
    %v8852 = vpack.c.b16 %v8512, %v8508
    %v8853 = vpack.c.b16 %v8513, %v8509
    %v8854 = vpack.c.b16 %v8514, %v8510
    %v8855 = vpack.c.b16 %v8515, %v8511
    %v8856 = vpack.c.b16 %v8520, %v8516
    %v8857 = vpack.c.b16 %v8521, %v8517
    %v8858 = vpack.c.b16 %v8522, %v8518
    %v8859 = vpack.c.b16 %v8523, %v8519
    %v8860 = vpack.c.b16 %v8528, %v8524
    %v8861 = vpack.c.b16 %v8529, %v8525
    %v8862 = vpack.c.b16 %v8530, %v8526
    %v8863 = vpack.c.b16 %v8531, %v8527
    %v8864 = vpack.c.b16 %v8536, %v8532
    %v8865 = vpack.c.b16 %v8537, %v8533
    %v8866 = vpack.c.b16 %v8538, %v8534
    %v8867 = vpack.c.b16 %v8539, %v8535
    %v8868 = vpack.c.b16 %v8544, %v8540
    %v8869 = vpack.c.b16 %v8545, %v8541
    %v8870 = vpack.c.b16 %v8546, %v8542
    %v8871 = vpack.c.b16 %v8547, %v8543
    %v8872 = vpack.c.b16 %v8552, %v8548
    %v8873 = vpack.c.b16 %v8553, %v8549
    %v8874 = vpack.c.b16 %v8554, %v8550
    %v8875 = vpack.c.b16 %v8555, %v8551
    %v8876 = vpack.c.b16 %v8560, %v8556
    %v8877 = vpack.c.b16 %v8561, %v8557
    %v8878 = vpack.c.b16 %v8562, %v8558
    %v8879 = vpack.c.b16 %v8563, %v8559
    %v8880 = vpack.c.b16 %v8568, %v8564
    %v8881 = vpack.c.b16 %v8569, %v8565
    %v8882 = vpack.c.b16 %v8570, %v8566
    %v8883 = vpack.c.b16 %v8571, %v8567
    %v8884 = vpack.c.b16 %v8576, %v8572
    %v8885 = vpack.c.b16 %v8577, %v8573
    %v8886 = vpack.c.b16 %v8578, %v8574
    %v8887 = vpack.c.b16 %v8579, %v8575
    %v8888 = vpack.c.b16 %v8584, %v8580
    %v8889 = vpack.c.b16 %v8585, %v8581
    %v8890 = vpack.c.b16 %v8586, %v8582
    %v8891 = vpack.c.b16 %v8587, %v8583
    %v8892 = vpack.c.b16 %v8592, %v8588
    %v8893 = vpack.c.b16 %v8593, %v8589
    %v8894 = vpack.c.b16 %v8594, %v8590
    %v8895 = vpack.c.b16 %v8595, %v8591
    %v8896 = vpack.c.b16 %v8600, %v8596
    %v8897 = vpack.c.b16 %v8601, %v8597
    %v8898 = vpack.c.b16 %v8602, %v8598
    %v8899 = vpack.c.b16 %v8603, %v8599
    %v8900 = vpack.c.b16 %v8608, %v8604
    %v8901 = vpack.c.b16 %v8609, %v8605
    %v8902 = vpack.c.b16 %v8610, %v8606
    %v8903 = vpack.c.b16 %v8611, %v8607
    %v8904 = vpack.c.b16 %v8616, %v8612
    %v8905 = vpack.c.b16 %v8617, %v8613
    %v8906 = vpack.c.b16 %v8618, %v8614
    %v8907 = vpack.c.b16 %v8619, %v8615
    %v8908 = vpack.c.b16 %v8624, %v8620
    %v8909 = vpack.c.b16 %v8625, %v8621
    %v8910 = vpack.c.b16 %v8626, %v8622
    %v8911 = vpack.c.b16 %v8627, %v8623
    %v8912 = vpack.c.b16 %v8632, %v8628
    %v8913 = vpack.c.b16 %v8633, %v8629
    %v8914 = vpack.c.b16 %v8634, %v8630
    %v8915 = vpack.c.b16 %v8635, %v8631
    %v8916 = vpack.c.b16 %v8640, %v8636
    %v8917 = vpack.c.b16 %v8641, %v8637
    %v8918 = vpack.c.b16 %v8642, %v8638
    %v8919 = vpack.c.b16 %v8643, %v8639
    %v8920 = vpack.c.b16 %v8648, %v8644
    %v8921 = vpack.c.b16 %v8649, %v8645
    %v8922 = vpack.c.b16 %v8650, %v8646
    %v8923 = vpack.c.b16 %v8651, %v8647
    %v8924 = vpack.c.b16 %v8656, %v8652
    %v8925 = vpack.c.b16 %v8657, %v8653
    %v8926 = vpack.c.b16 %v8658, %v8654
    %v8927 = vpack.c.b16 %v8659, %v8655
    %v8928 = vpack.c.b16 %v8664, %v8660
    %v8929 = vpack.c.b16 %v8665, %v8661
    %v8930 = vpack.c.b16 %v8666, %v8662
    %v8931 = vpack.c.b16 %v8667, %v8663
    %v8932 = vpack.c.b16 %v8672, %v8668
    %v8933 = vpack.c.b16 %v8673, %v8669
    %v8934 = vpack.c.b16 %v8674, %v8670
    %v8935 = vpack.c.b16 %v8675, %v8671
    %v8936 = vpack.c.b16 %v8680, %v8676
    %v8937 = vpack.c.b16 %v8681, %v8677
    %v8938 = vpack.c.b16 %v8682, %v8678
    %v8939 = vpack.c.b16 %v8683, %v8679
    %9196 = vmatprep.subr.bf16.mxu0 %v8685
    %9197 = vmatpush1.bf16.msra.mxu0 %v8684
    %9198 = vmatprep.subr.bf16.mxu0 %v8689
    %9199 = vmatpush1.bf16.msra.mxu0 %v8688
    %9200 = vmatprep.subr.bf16.mxu0 %v8693
    %9201 = vmatpush1.bf16.msra.mxu0 %v8692
    %9202 = vmatprep.subr.bf16.mxu0 %v8697
    %9203 = vmatpush1.bf16.msra.mxu0 %v8696
    %9204 = vmatprep.subr.bf16.mxu0 %v8701
    %9205 = vmatpush1.bf16.msra.mxu0 %v8700
    %9206 = vmatprep.subr.bf16.mxu0 %v8705
    %9207 = vmatpush1.bf16.msra.mxu0 %v8704
    %9208 = vmatprep.subr.bf16.mxu0 %v8709
    %9209 = vmatpush1.bf16.msra.mxu0 %v8708
    %9210 = vmatprep.subr.bf16.mxu0 %v8713
    %9211 = vmatpush1.bf16.msra.mxu0 %v8712
    %9212 = vmatprep.subr.bf16.mxu0 %v8717
    %9213 = vmatpush1.bf16.msra.mxu0 %v8716
    %9214 = vmatprep.subr.bf16.mxu0 %v8721
    %9215 = vmatpush1.bf16.msra.mxu0 %v8720
    %9216 = vmatprep.subr.bf16.mxu0 %v8725
    %9217 = vmatpush1.bf16.msra.mxu0 %v8724
    %9218 = vmatprep.subr.bf16.mxu0 %v8729
    %9219 = vmatpush1.bf16.msra.mxu0 %v8728
    %9220 = vmatprep.subr.bf16.mxu0 %v8733
    %9221 = vmatpush1.bf16.msra.mxu0 %v8732
    %9222 = vmatprep.subr.bf16.mxu0 %v8737
    %9223 = vmatpush1.bf16.msra.mxu0 %v8736
    %9224 = vmatprep.subr.bf16.mxu0 %v8741
    %9225 = vmatpush1.bf16.msra.mxu0 %v8740
    %9226 = vmatprep.subr.bf16.mxu0 %v8745
    %9227 = vmatpush1.bf16.msra.mxu0 %v8744
    %9228 = vmatprep.mubr.bf16.mxu0 %v7631
    %9229 = vmatmul.mubr.bf16.gmra.mrb[0].mxu0 %v7630
    %v9230 = vpop.f32.mrb[0].mxu0
    %v9231 = vadd.f32 %v7899, %v9230
    %v9232 = vpop.f32.mrb[0].mxu0
    %v9233 = vadd.f32 %v7903, %v9232
    %v9234 = vpop.f32.mrb[0].mxu0
    %v9235 = vpop.f32.mrb[0].mxu0
    %9236 = vdwg.mxu0
    %9237 = vmatprep.subr.bf16.mxu0 %v8749
    %9238 = vmatpush1.bf16.msra.mxu0 %v8748
    %9239 = vmatprep.subr.bf16.mxu0 %v8753
    %9240 = vmatpush1.bf16.msra.mxu0 %v8752
    %9241 = vmatprep.subr.bf16.mxu0 %v8757
    %9242 = vmatpush1.bf16.msra.mxu0 %v8756
    %9243 = vmatprep.subr.bf16.mxu0 %v8761
    %9244 = vmatpush1.bf16.msra.mxu0 %v8760
    %9245 = vmatprep.subr.bf16.mxu0 %v8765
    %9246 = vmatpush1.bf16.msra.mxu0 %v8764
    %9247 = vmatprep.subr.bf16.mxu0 %v8769
    %9248 = vmatpush1.bf16.msra.mxu0 %v8768
    %9249 = vmatprep.subr.bf16.mxu0 %v8773
    %9250 = vmatpush1.bf16.msra.mxu0 %v8772
    %9251 = vmatprep.subr.bf16.mxu0 %v8777
    %9252 = vmatpush1.bf16.msra.mxu0 %v8776
    %9253 = vmatprep.subr.bf16.mxu0 %v8781
    %9254 = vmatpush1.bf16.msra.mxu0 %v8780
    %9255 = vmatprep.subr.bf16.mxu0 %v8785
    %9256 = vmatpush1.bf16.msra.mxu0 %v8784
    %9257 = vmatprep.subr.bf16.mxu0 %v8789
    %9258 = vmatpush1.bf16.msra.mxu0 %v8788
    %9259 = vmatprep.subr.bf16.mxu0 %v8793
    %9260 = vmatpush1.bf16.msra.mxu0 %v8792
    %9261 = vmatprep.subr.bf16.mxu0 %v8797
    %9262 = vmatpush1.bf16.msra.mxu0 %v8796
    %9263 = vmatprep.subr.bf16.mxu0 %v8801
    %9264 = vmatpush1.bf16.msra.mxu0 %v8800
    %9265 = vmatprep.subr.bf16.mxu0 %v8805
    %9266 = vmatpush1.bf16.msra.mxu0 %v8804
    %9267 = vmatprep.subr.bf16.mxu0 %v8809
    %9268 = vmatpush1.bf16.msra.mxu0 %v8808
    %9269 = vmatprep.mubr.bf16.mxu0 %v7633
    %9270 = vmatmul.mubr.bf16.gmra.mrb[0].mxu0 %v7632
    %v9271 = vpop.f32.mrb[0].mxu0
    %v9272 = vadd.f32 %v9231, %v9271
    %v9273 = vpop.f32.mrb[0].mxu0
    %v9274 = vadd.f32 %v9233, %v9273
    %v9275 = vpop.f32.mrb[0].mxu0
    %v9276 = vpop.f32.mrb[0].mxu0
    %9277 = vdwg.mxu0
    %9278 = vmatprep.subr.bf16.mxu0 %v8813
    %9279 = vmatpush1.bf16.msra.mxu0 %v8812
    %9280 = vmatprep.subr.bf16.mxu0 %v8817
    %9281 = vmatpush1.bf16.msra.mxu0 %v8816
    %9282 = vmatprep.subr.bf16.mxu0 %v8821
    %9283 = vmatpush1.bf16.msra.mxu0 %v8820
    %9284 = vmatprep.subr.bf16.mxu0 %v8825
    %9285 = vmatpush1.bf16.msra.mxu0 %v8824
    %9286 = vmatprep.subr.bf16.mxu0 %v8829
    %9287 = vmatpush1.bf16.msra.mxu0 %v8828
    %9288 = vmatprep.subr.bf16.mxu0 %v8833
    %9289 = vmatpush1.bf16.msra.mxu0 %v8832
    %9290 = vmatprep.subr.bf16.mxu0 %v8837
    %9291 = vmatpush1.bf16.msra.mxu0 %v8836
    %9292 = vmatprep.subr.bf16.mxu0 %v8841
    %9293 = vmatpush1.bf16.msra.mxu0 %v8840
    %9294 = vmatprep.subr.bf16.mxu0 %v8845
    %9295 = vmatpush1.bf16.msra.mxu0 %v8844
    %9296 = vmatprep.subr.bf16.mxu0 %v8849
    %9297 = vmatpush1.bf16.msra.mxu0 %v8848
    %9298 = vmatprep.subr.bf16.mxu0 %v8853
    %9299 = vmatpush1.bf16.msra.mxu0 %v8852
    %9300 = vmatprep.subr.bf16.mxu0 %v8857
    %9301 = vmatpush1.bf16.msra.mxu0 %v8856
    %9302 = vmatprep.subr.bf16.mxu0 %v8861
    %9303 = vmatpush1.bf16.msra.mxu0 %v8860
    %9304 = vmatprep.subr.bf16.mxu0 %v8865
    %9305 = vmatpush1.bf16.msra.mxu0 %v8864
    %9306 = vmatprep.subr.bf16.mxu0 %v8869
    %9307 = vmatpush1.bf16.msra.mxu0 %v8868
    %9308 = vmatprep.subr.bf16.mxu0 %v8873
    %9309 = vmatpush1.bf16.msra.mxu0 %v8872
    %9310 = vmatprep.mubr.bf16.mxu0 %v7635
    %9311 = vmatmul.mubr.bf16.gmra.mrb[0].mxu0 %v7634
    %v9312 = vpop.f32.mrb[0].mxu0
    %v9313 = vadd.f32 %v9272, %v9312
    %v9314 = vpop.f32.mrb[0].mxu0
    %v9315 = vadd.f32 %v9274, %v9314
    %v9316 = vpop.f32.mrb[0].mxu0
    %v9317 = vpop.f32.mrb[0].mxu0
    %9318 = vdwg.mxu0
    %9319 = vmatprep.subr.bf16.mxu0 %v8877
    %9320 = vmatpush1.bf16.msra.mxu0 %v8876
    %9321 = vmatprep.subr.bf16.mxu0 %v8881
    %9322 = vmatpush1.bf16.msra.mxu0 %v8880
    %9323 = vmatprep.subr.bf16.mxu0 %v8885
    %9324 = vmatpush1.bf16.msra.mxu0 %v8884
    %9325 = vmatprep.subr.bf16.mxu0 %v8889
    %9326 = vmatpush1.bf16.msra.mxu0 %v8888
    %9327 = vmatprep.subr.bf16.mxu0 %v8893
    %9328 = vmatpush1.bf16.msra.mxu0 %v8892
    %9329 = vmatprep.subr.bf16.mxu0 %v8897
    %9330 = vmatpush1.bf16.msra.mxu0 %v8896
    %9331 = vmatprep.subr.bf16.mxu0 %v8901
    %9332 = vmatpush1.bf16.msra.mxu0 %v8900
    %9333 = vmatprep.subr.bf16.mxu0 %v8905
    %9334 = vmatpush1.bf16.msra.mxu0 %v8904
    %9335 = vmatprep.subr.bf16.mxu0 %v8909
    %9336 = vmatpush1.bf16.msra.mxu0 %v8908
    %9337 = vmatprep.subr.bf16.mxu0 %v8913
    %9338 = vmatpush1.bf16.msra.mxu0 %v8912
    %9339 = vmatprep.subr.bf16.mxu0 %v8917
    %9340 = vmatpush1.bf16.msra.mxu0 %v8916
    %9341 = vmatprep.subr.bf16.mxu0 %v8921
    %9342 = vmatpush1.bf16.msra.mxu0 %v8920
    %9343 = vmatprep.subr.bf16.mxu0 %v8925
    %9344 = vmatpush1.bf16.msra.mxu0 %v8924
    %9345 = vmatprep.subr.bf16.mxu0 %v8929
    %9346 = vmatpush1.bf16.msra.mxu0 %v8928
    %9347 = vmatprep.subr.bf16.mxu0 %v8933
    %9348 = vmatpush1.bf16.msra.mxu0 %v8932
    %9349 = vmatprep.subr.bf16.mxu0 %v8937
    %9350 = vmatpush1.bf16.msra.mxu0 %v8936
    %9351 = vmatprep.mubr.bf16.mxu0 %v7637
    %9352 = vmatmul.mubr.bf16.gmra.mrb[0].mxu0 %v7636
    %v9353 = vpop.f32.mrb[0].mxu0
    %v9354 = vadd.f32 %v9313, %v9353
    %v9355 = vpop.f32.mrb[0].mxu0
    %v9356 = vadd.f32 %v9315, %v9355
    %v9357 = vpop.f32.mrb[0].mxu0
    %v9358 = vpop.f32.mrb[0].mxu0
    %9359 = vdwg.mxu0
    %9360 = vmatprep.subr.bf16.mxu0 %v8687
    %9361 = vmatpush1.bf16.msra.mxu0 %v8686
    %9362 = vmatprep.subr.bf16.mxu0 %v8691
    %9363 = vmatpush1.bf16.msra.mxu0 %v8690
    %9364 = vmatprep.subr.bf16.mxu0 %v8695
    %9365 = vmatpush1.bf16.msra.mxu0 %v8694
    %9366 = vmatprep.subr.bf16.mxu0 %v8699
    %9367 = vmatpush1.bf16.msra.mxu0 %v8698
    %9368 = vmatprep.subr.bf16.mxu0 %v8703
    %9369 = vmatpush1.bf16.msra.mxu0 %v8702
    %9370 = vmatprep.subr.bf16.mxu0 %v8707
    %9371 = vmatpush1.bf16.msra.mxu0 %v8706
    %9372 = vmatprep.subr.bf16.mxu0 %v8711
    %9373 = vmatpush1.bf16.msra.mxu0 %v8710
    %9374 = vmatprep.subr.bf16.mxu0 %v8715
    %9375 = vmatpush1.bf16.msra.mxu0 %v8714
    %9376 = vmatprep.subr.bf16.mxu0 %v8719
    %9377 = vmatpush1.bf16.msra.mxu0 %v8718
    %9378 = vmatprep.subr.bf16.mxu0 %v8723
    %9379 = vmatpush1.bf16.msra.mxu0 %v8722
    %9380 = vmatprep.subr.bf16.mxu0 %v8727
    %9381 = vmatpush1.bf16.msra.mxu0 %v8726
    %9382 = vmatprep.subr.bf16.mxu0 %v8731
    %9383 = vmatpush1.bf16.msra.mxu0 %v8730
    %9384 = vmatprep.subr.bf16.mxu0 %v8735
    %9385 = vmatpush1.bf16.msra.mxu0 %v8734
    %9386 = vmatprep.subr.bf16.mxu0 %v8739
    %9387 = vmatpush1.bf16.msra.mxu0 %v8738
    %9388 = vmatprep.subr.bf16.mxu0 %v8743
    %9389 = vmatpush1.bf16.msra.mxu0 %v8742
    %9390 = vmatprep.subr.bf16.mxu0 %v8747
    %9391 = vmatpush1.bf16.msra.mxu0 %v8746
    %9392 = vmatprep.mubr.bf16.mxu0 %v7631
    %9393 = vmatmul.mubr.bf16.gmra.mrb[0].mxu0 %v7630
    %v9394 = vpop.f32.mrb[0].mxu0
    %v9395 = vadd.f32 %v7907, %v9394
    %v9396 = vpop.f32.mrb[0].mxu0
    %v9397 = vadd.f32 %v7911, %v9396
    %v9398 = vpop.f32.mrb[0].mxu0
    %v9399 = vpop.f32.mrb[0].mxu0
    %9400 = vdwg.mxu0
    %9401 = vmatprep.subr.bf16.mxu0 %v8751
    %9402 = vmatpush1.bf16.msra.mxu0 %v8750
    %9403 = vmatprep.subr.bf16.mxu0 %v8755
    %9404 = vmatpush1.bf16.msra.mxu0 %v8754
    %9405 = vmatprep.subr.bf16.mxu0 %v8759
    %9406 = vmatpush1.bf16.msra.mxu0 %v8758
    %9407 = vmatprep.subr.bf16.mxu0 %v8763
    %9408 = vmatpush1.bf16.msra.mxu0 %v8762
    %9409 = vmatprep.subr.bf16.mxu0 %v8767
    %9410 = vmatpush1.bf16.msra.mxu0 %v8766
    %9411 = vmatprep.subr.bf16.mxu0 %v8771
    %9412 = vmatpush1.bf16.msra.mxu0 %v8770
    %9413 = vmatprep.subr.bf16.mxu0 %v8775
    %9414 = vmatpush1.bf16.msra.mxu0 %v8774
    %9415 = vmatprep.subr.bf16.mxu0 %v8779
    %9416 = vmatpush1.bf16.msra.mxu0 %v8778
    %9417 = vmatprep.subr.bf16.mxu0 %v8783
    %9418 = vmatpush1.bf16.msra.mxu0 %v8782
    %9419 = vmatprep.subr.bf16.mxu0 %v8787
    %9420 = vmatpush1.bf16.msra.mxu0 %v8786
    %9421 = vmatprep.subr.bf16.mxu0 %v8791
    %9422 = vmatpush1.bf16.msra.mxu0 %v8790
    %9423 = vmatprep.subr.bf16.mxu0 %v8795
    %9424 = vmatpush1.bf16.msra.mxu0 %v8794
    %9425 = vmatprep.subr.bf16.mxu0 %v8799
    %9426 = vmatpush1.bf16.msra.mxu0 %v8798
    %9427 = vmatprep.subr.bf16.mxu0 %v8803
    %9428 = vmatpush1.bf16.msra.mxu0 %v8802
    %9429 = vmatprep.subr.bf16.mxu0 %v8807
    %9430 = vmatpush1.bf16.msra.mxu0 %v8806
    %9431 = vmatprep.subr.bf16.mxu0 %v8811
    %9432 = vmatpush1.bf16.msra.mxu0 %v8810
    %9433 = vmatprep.mubr.bf16.mxu0 %v7633
    %9434 = vmatmul.mubr.bf16.gmra.mrb[0].mxu0 %v7632
    %v9435 = vpop.f32.mrb[0].mxu0
    %v9436 = vadd.f32 %v9395, %v9435
    %v9437 = vpop.f32.mrb[0].mxu0
    %v9438 = vadd.f32 %v9397, %v9437
    %v9439 = vpop.f32.mrb[0].mxu0
    %v9440 = vpop.f32.mrb[0].mxu0
    %9441 = vdwg.mxu0
    %9442 = vmatprep.subr.bf16.mxu0 %v8815
    %9443 = vmatpush1.bf16.msra.mxu0 %v8814
    %9444 = vmatprep.subr.bf16.mxu0 %v8819
    %9445 = vmatpush1.bf16.msra.mxu0 %v8818
    %9446 = vmatprep.subr.bf16.mxu0 %v8823
    %9447 = vmatpush1.bf16.msra.mxu0 %v8822
    %9448 = vmatprep.subr.bf16.mxu0 %v8827
    %9449 = vmatpush1.bf16.msra.mxu0 %v8826
    %9450 = vmatprep.subr.bf16.mxu0 %v8831
    %9451 = vmatpush1.bf16.msra.mxu0 %v8830
    %9452 = vmatprep.subr.bf16.mxu0 %v8835
    %9453 = vmatpush1.bf16.msra.mxu0 %v8834
    %9454 = vmatprep.subr.bf16.mxu0 %v8839
    %9455 = vmatpush1.bf16.msra.mxu0 %v8838
    %9456 = vmatprep.subr.bf16.mxu0 %v8843
    %9457 = vmatpush1.bf16.msra.mxu0 %v8842
    %9458 = vmatprep.subr.bf16.mxu0 %v8847
    %9459 = vmatpush1.bf16.msra.mxu0 %v8846
    %9460 = vmatprep.subr.bf16.mxu0 %v8851
    %9461 = vmatpush1.bf16.msra.mxu0 %v8850
    %9462 = vmatprep.subr.bf16.mxu0 %v8855
    %9463 = vmatpush1.bf16.msra.mxu0 %v8854
    %9464 = vmatprep.subr.bf16.mxu0 %v8859
    %9465 = vmatpush1.bf16.msra.mxu0 %v8858
    %9466 = vmatprep.subr.bf16.mxu0 %v8863
    %9467 = vmatpush1.bf16.msra.mxu0 %v8862
    %9468 = vmatprep.subr.bf16.mxu0 %v8867
    %9469 = vmatpush1.bf16.msra.mxu0 %v8866
    %9470 = vmatprep.subr.bf16.mxu0 %v8871
    %9471 = vmatpush1.bf16.msra.mxu0 %v8870
    %9472 = vmatprep.subr.bf16.mxu0 %v8875
    %9473 = vmatpush1.bf16.msra.mxu0 %v8874
    %9474 = vmatprep.mubr.bf16.mxu0 %v7635
    %9475 = vmatmul.mubr.bf16.gmra.mrb[0].mxu0 %v7634
    %v9476 = vpop.f32.mrb[0].mxu0
    %v9477 = vadd.f32 %v9436, %v9476
    %v9478 = vpop.f32.mrb[0].mxu0
    %v9479 = vadd.f32 %v9438, %v9478
    %v9480 = vpop.f32.mrb[0].mxu0
    %v9481 = vpop.f32.mrb[0].mxu0
    %9482 = vdwg.mxu0
    %9483 = vmatprep.subr.bf16.mxu0 %v8879
    %9484 = vmatpush1.bf16.msra.mxu0 %v8878
    %9485 = vmatprep.subr.bf16.mxu0 %v8883
    %9486 = vmatpush1.bf16.msra.mxu0 %v8882
    %9487 = vmatprep.subr.bf16.mxu0 %v8887
    %9488 = vmatpush1.bf16.msra.mxu0 %v8886
    %9489 = vmatprep.subr.bf16.mxu0 %v8891
    %9490 = vmatpush1.bf16.msra.mxu0 %v8890
    %9491 = vmatprep.subr.bf16.mxu0 %v8895
    %9492 = vmatpush1.bf16.msra.mxu0 %v8894
    %9493 = vmatprep.subr.bf16.mxu0 %v8899
    %9494 = vmatpush1.bf16.msra.mxu0 %v8898
    %9495 = vmatprep.subr.bf16.mxu0 %v8903
    %9496 = vmatpush1.bf16.msra.mxu0 %v8902
    %9497 = vmatprep.subr.bf16.mxu0 %v8907
    %9498 = vmatpush1.bf16.msra.mxu0 %v8906
    %9499 = vmatprep.subr.bf16.mxu0 %v8911
    %9500 = vmatpush1.bf16.msra.mxu0 %v8910
    %9501 = vmatprep.subr.bf16.mxu0 %v8915
    %9502 = vmatpush1.bf16.msra.mxu0 %v8914
    %9503 = vmatprep.subr.bf16.mxu0 %v8919
    %9504 = vmatpush1.bf16.msra.mxu0 %v8918
    %9505 = vmatprep.subr.bf16.mxu0 %v8923
    %9506 = vmatpush1.bf16.msra.mxu0 %v8922
    %9507 = vmatprep.subr.bf16.mxu0 %v8927
    %9508 = vmatpush1.bf16.msra.mxu0 %v8926
    %9509 = vmatprep.subr.bf16.mxu0 %v8931
    %9510 = vmatpush1.bf16.msra.mxu0 %v8930
    %9511 = vmatprep.subr.bf16.mxu0 %v8935
    %9512 = vmatpush1.bf16.msra.mxu0 %v8934
    %9513 = vmatprep.subr.bf16.mxu0 %v8939
    %9514 = vmatpush1.bf16.msra.mxu0 %v8938
    %9515 = vmatprep.mubr.bf16.mxu0 %v7637
    %9516 = vmatmul.mubr.bf16.gmra.mrb[0].mxu0 %v7636
    %v9517 = vpop.f32.mrb[0].mxu0
    %v9518 = vadd.f32 %v9477, %v9517
    %v9519 = vpop.f32.mrb[0].mxu0
    %v9520 = vadd.f32 %v9479, %v9519
    %v9521 = vpop.f32.mrb[0].mxu0
    %v9522 = vpop.f32.mrb[0].mxu0
    %9523 = vdwg.mxu0
    %v9524 = vmax.f32 %v9354, 0.0
    %v9525 = vmax.f32 %v9356, 0.0
    %v9526 = vmax.f32 %v9518, 0.0
    %v9527 = vmax.f32 %v9520, 0.0
    %v9528 = vpack.c.bf16 %v9524, %v9524
    %v9529 = vpack.c.bf16 %v9525, %v9525
    %v9530 = vpack.c.bf16 %v9526, %v9526
    %v9531 = vpack.c.bf16 %v9527, %v9527
    %v9532 = vld [vmem:[#allocation5] sm:$0xff]
    %v9533 = vld [vmem:[#allocation5 + $0x8] sm:$0xff]
    %v9534 = vld [vmem:[#allocation5 + $0x10] sm:$0xff]
    %v9535 = vld [vmem:[#allocation5 + $0x18] sm:$0xff]
    %v9536 = vld [vmem:[#allocation5 + $0x20] sm:$0xff]
    %v9537 = vld [vmem:[#allocation5 + $0x28] sm:$0xff]
    %v9538 = vld [vmem:[#allocation5 + $0x30] sm:$0xff]
    %v9539 = vld [vmem:[#allocation5 + $0x38] sm:$0xff]
    %v9540 = vld [vmem:[#allocation5 + $0x40] sm:$0xff]
    %v9541 = vld [vmem:[#allocation5 + $0x48] sm:$0xff]
    %v9542 = vld [vmem:[#allocation5 + $0x50] sm:$0xff]
    %v9543 = vld [vmem:[#allocation5 + $0x58] sm:$0xff]
    %v9544 = vld [vmem:[#allocation5 + $0x60] sm:$0xff]
    %v9545 = vld [vmem:[#allocation5 + $0x68] sm:$0xff]
    %v9546 = vld [vmem:[#allocation5 + $0x70] sm:$0xff]
    %v9547 = vld [vmem:[#allocation5 + $0x78] sm:$0xff]
    %v9548 = vld [vmem:[#allocation5 + $0x80] sm:$0xff]
    %v9549 = vld [vmem:[#allocation5 + $0x88] sm:$0xff]
    %v9550 = vld [vmem:[#allocation5 + $0x90] sm:$0xff]
    %v9551 = vld [vmem:[#allocation5 + $0x98] sm:$0xff]
    %v9552 = vld [vmem:[#allocation5 + $0xa0] sm:$0xff]
    %v9553 = vld [vmem:[#allocation5 + $0xa8] sm:$0xff]
    %v9554 = vld [vmem:[#allocation5 + $0xb0] sm:$0xff]
    %v9555 = vld [vmem:[#allocation5 + $0xb8] sm:$0xff]
    %v9556 = vld [vmem:[#allocation5 + $0xc0] sm:$0xff]
    %v9557 = vld [vmem:[#allocation5 + $0xc8] sm:$0xff]
    %v9558 = vld [vmem:[#allocation5 + $0xd0] sm:$0xff]
    %v9559 = vld [vmem:[#allocation5 + $0xd8] sm:$0xff]
    %v9560 = vld [vmem:[#allocation5 + $0xe0] sm:$0xff]
    %v9561 = vld [vmem:[#allocation5 + $0xe8] sm:$0xff]
    %v9562 = vld [vmem:[#allocation5 + $0xf0] sm:$0xff]
    %v9563 = vld [vmem:[#allocation5 + $0xf8] sm:$0xff]
    %v9564 = vld [vmem:[#allocation5 + $0x100] sm:$0xff]
    %v9565 = vld [vmem:[#allocation5 + $0x108] sm:$0xff]
    %v9566 = vld [vmem:[#allocation5 + $0x110] sm:$0xff]
    %v9567 = vld [vmem:[#allocation5 + $0x118] sm:$0xff]
    %v9568 = vld [vmem:[#allocation5 + $0x120] sm:$0xff]
    %v9569 = vld [vmem:[#allocation5 + $0x128] sm:$0xff]
    %v9570 = vld [vmem:[#allocation5 + $0x130] sm:$0xff]
    %v9571 = vld [vmem:[#allocation5 + $0x138] sm:$0xff]
    %v9572 = vld [vmem:[#allocation5 + $0x140] sm:$0xff]
    %v9573 = vld [vmem:[#allocation5 + $0x148] sm:$0xff]
    %v9574 = vld [vmem:[#allocation5 + $0x150] sm:$0xff]
    %v9575 = vld [vmem:[#allocation5 + $0x158] sm:$0xff]
    %v9576 = vld [vmem:[#allocation5 + $0x160] sm:$0xff]
    %v9577 = vld [vmem:[#allocation5 + $0x168] sm:$0xff]
    %v9578 = vld [vmem:[#allocation5 + $0x170] sm:$0xff]
    %v9579 = vld [vmem:[#allocation5 + $0x178] sm:$0xff]
    %v9580 = vld [vmem:[#allocation5 + $0x180] sm:$0xff]
    %v9581 = vld [vmem:[#allocation5 + $0x188] sm:$0xff]
    %v9582 = vld [vmem:[#allocation5 + $0x190] sm:$0xff]
    %v9583 = vld [vmem:[#allocation5 + $0x198] sm:$0xff]
    %v9584 = vld [vmem:[#allocation5 + $0x1a0] sm:$0xff]
    %v9585 = vld [vmem:[#allocation5 + $0x1a8] sm:$0xff]
    %v9586 = vld [vmem:[#allocation5 + $0x1b0] sm:$0xff]
    %v9587 = vld [vmem:[#allocation5 + $0x1b8] sm:$0xff]
    %v9588 = vld [vmem:[#allocation5 + $0x1c0] sm:$0xff]
    %v9589 = vld [vmem:[#allocation5 + $0x1c8] sm:$0xff]
    %v9590 = vld [vmem:[#allocation5 + $0x1d0] sm:$0xff]
    %v9591 = vld [vmem:[#allocation5 + $0x1d8] sm:$0xff]
    %v9592 = vld [vmem:[#allocation5 + $0x1e0] sm:$0xff]
    %v9593 = vld [vmem:[#allocation5 + $0x1e8] sm:$0xff]
    %v9594 = vld [vmem:[#allocation5 + $0x1f0] sm:$0xff]
    %v9595 = vld [vmem:[#allocation5 + $0x1f8] sm:$0xff]
    %v9596 = vld [vmem:[#allocation5 + $0x200] sm:$0xff]
    %v9597 = vld [vmem:[#allocation5 + $0x208] sm:$0xff]
    %v9598 = vld [vmem:[#allocation5 + $0x210] sm:$0xff]
    %v9599 = vld [vmem:[#allocation5 + $0x218] sm:$0xff]
    %v9600 = vld [vmem:[#allocation5 + $0x220] sm:$0xff]
    %v9601 = vld [vmem:[#allocation5 + $0x228] sm:$0xff]
    %v9602 = vld [vmem:[#allocation5 + $0x230] sm:$0xff]
    %v9603 = vld [vmem:[#allocation5 + $0x238] sm:$0xff]
    %v9604 = vld [vmem:[#allocation5 + $0x240] sm:$0xff]
    %v9605 = vld [vmem:[#allocation5 + $0x248] sm:$0xff]
    %v9606 = vld [vmem:[#allocation5 + $0x250] sm:$0xff]
    %v9607 = vld [vmem:[#allocation5 + $0x258] sm:$0xff]
    %v9608 = vld [vmem:[#allocation5 + $0x260] sm:$0xff]
    %v9609 = vld [vmem:[#allocation5 + $0x268] sm:$0xff]
    %v9610 = vld [vmem:[#allocation5 + $0x270] sm:$0xff]
    %v9611 = vld [vmem:[#allocation5 + $0x278] sm:$0xff]
    %v9612 = vld [vmem:[#allocation5 + $0x280] sm:$0xff]
    %v9613 = vld [vmem:[#allocation5 + $0x288] sm:$0xff]
    %v9614 = vld [vmem:[#allocation5 + $0x290] sm:$0xff]
    %v9615 = vld [vmem:[#allocation5 + $0x298] sm:$0xff]
    %v9616 = vld [vmem:[#allocation5 + $0x2a0] sm:$0xff]
    %v9617 = vld [vmem:[#allocation5 + $0x2a8] sm:$0xff]
    %v9618 = vld [vmem:[#allocation5 + $0x2b0] sm:$0xff]
    %v9619 = vld [vmem:[#allocation5 + $0x2b8] sm:$0xff]
    %v9620 = vld [vmem:[#allocation5 + $0x2c0] sm:$0xff]
    %v9621 = vld [vmem:[#allocation5 + $0x2c8] sm:$0xff]
    %v9622 = vld [vmem:[#allocation5 + $0x2d0] sm:$0xff]
    %v9623 = vld [vmem:[#allocation5 + $0x2d8] sm:$0xff]
    %v9624 = vld [vmem:[#allocation5 + $0x2e0] sm:$0xff]
    %v9625 = vld [vmem:[#allocation5 + $0x2e8] sm:$0xff]
    %v9626 = vld [vmem:[#allocation5 + $0x2f0] sm:$0xff]
    %v9627 = vld [vmem:[#allocation5 + $0x2f8] sm:$0xff]
    %v9628 = vld [vmem:[#allocation5 + $0x300] sm:$0xff]
    %v9629 = vld [vmem:[#allocation5 + $0x308] sm:$0xff]
    %v9630 = vld [vmem:[#allocation5 + $0x310] sm:$0xff]
    %v9631 = vld [vmem:[#allocation5 + $0x318] sm:$0xff]
    %v9632 = vld [vmem:[#allocation5 + $0x320] sm:$0xff]
    %v9633 = vld [vmem:[#allocation5 + $0x328] sm:$0xff]
    %v9634 = vld [vmem:[#allocation5 + $0x330] sm:$0xff]
    %v9635 = vld [vmem:[#allocation5 + $0x338] sm:$0xff]
    %v9636 = vld [vmem:[#allocation5 + $0x340] sm:$0xff]
    %v9637 = vld [vmem:[#allocation5 + $0x348] sm:$0xff]
    %v9638 = vld [vmem:[#allocation5 + $0x350] sm:$0xff]
    %v9639 = vld [vmem:[#allocation5 + $0x358] sm:$0xff]
    %v9640 = vld [vmem:[#allocation5 + $0x360] sm:$0xff]
    %v9641 = vld [vmem:[#allocation5 + $0x368] sm:$0xff]
    %v9642 = vld [vmem:[#allocation5 + $0x370] sm:$0xff]
    %v9643 = vld [vmem:[#allocation5 + $0x378] sm:$0xff]
    %v9644 = vld [vmem:[#allocation5 + $0x380] sm:$0xff]
    %v9645 = vld [vmem:[#allocation5 + $0x388] sm:$0xff]
    %v9646 = vld [vmem:[#allocation5 + $0x390] sm:$0xff]
    %v9647 = vld [vmem:[#allocation5 + $0x398] sm:$0xff]
    %v9648 = vld [vmem:[#allocation5 + $0x3a0] sm:$0xff]
    %v9649 = vld [vmem:[#allocation5 + $0x3a8] sm:$0xff]
    %v9650 = vld [vmem:[#allocation5 + $0x3b0] sm:$0xff]
    %v9651 = vld [vmem:[#allocation5 + $0x3b8] sm:$0xff]
    %v9652 = vld [vmem:[#allocation5 + $0x3c0] sm:$0xff]
    %v9653 = vld [vmem:[#allocation5 + $0x3c8] sm:$0xff]
    %v9654 = vld [vmem:[#allocation5 + $0x3d0] sm:$0xff]
    %v9655 = vld [vmem:[#allocation5 + $0x3d8] sm:$0xff]
    %v9656 = vld [vmem:[#allocation5 + $0x3e0] sm:$0xff]
    %v9657 = vld [vmem:[#allocation5 + $0x3e8] sm:$0xff]
    %v9658 = vld [vmem:[#allocation5 + $0x3f0] sm:$0xff]
    %v9659 = vld [vmem:[#allocation5 + $0x3f8] sm:$0xff]
    %v9660 = vld [vmem:[%s6] sm:$0xf]
    %v9662 = vlaneseq
    %v9663 = vshrl.u32 %v9662, 7
    %v9664 = vsub.s32 0, %v9663
    %v9665 = vrot.slane %v9660, %v9664
    %v9666 = vlaneseq
    %v9667 = vshrl.u32 %v9666, 7
    %v9668 = vsub.s32 1, %v9667
    %v9669 = vrot.slane %v9660, %v9668
    %v9670 = vlaneseq
    %v9671 = vshrl.u32 %v9670, 7
    %v9672 = vsub.s32 2, %v9671
    %v9673 = vrot.slane %v9660, %v9672
    %v9674 = vlaneseq
    %v9675 = vshrl.u32 %v9674, 7
    %v9676 = vsub.s32 3, %v9675
    %v9677 = vrot.slane %v9660, %v9676
    %v9810 = vunpack.c.l.b16 %v9532
    %v9811 = vunpack.c.h.b16 %v9532
    %v9812 = vunpack.c.l.b16 %v9533
    %v9813 = vunpack.c.h.b16 %v9533
    %v9814 = vunpack.c.l.b16 %v9534
    %v9815 = vunpack.c.h.b16 %v9534
    %v9816 = vunpack.c.l.b16 %v9535
    %v9817 = vunpack.c.h.b16 %v9535
    %v9818 = vunpack.c.l.b16 %v9536
    %v9819 = vunpack.c.h.b16 %v9536
    %v9820 = vunpack.c.l.b16 %v9537
    %v9821 = vunpack.c.h.b16 %v9537
    %v9822 = vunpack.c.l.b16 %v9538
    %v9823 = vunpack.c.h.b16 %v9538
    %v9824 = vunpack.c.l.b16 %v9539
    %v9825 = vunpack.c.h.b16 %v9539
    %v9826 = vunpack.c.l.b16 %v9540
    %v9827 = vunpack.c.h.b16 %v9540
    %v9828 = vunpack.c.l.b16 %v9541
    %v9829 = vunpack.c.h.b16 %v9541
    %v9830 = vunpack.c.l.b16 %v9542
    %v9831 = vunpack.c.h.b16 %v9542
    %v9832 = vunpack.c.l.b16 %v9543
    %v9833 = vunpack.c.h.b16 %v9543
    %v9834 = vunpack.c.l.b16 %v9544
    %v9835 = vunpack.c.h.b16 %v9544
    %v9836 = vunpack.c.l.b16 %v9545
    %v9837 = vunpack.c.h.b16 %v9545
    %v9838 = vunpack.c.l.b16 %v9546
    %v9839 = vunpack.c.h.b16 %v9546
    %v9840 = vunpack.c.l.b16 %v9547
    %v9841 = vunpack.c.h.b16 %v9547
    %v9842 = vunpack.c.l.b16 %v9548
    %v9843 = vunpack.c.h.b16 %v9548
    %v9844 = vunpack.c.l.b16 %v9549
    %v9845 = vunpack.c.h.b16 %v9549
    %v9846 = vunpack.c.l.b16 %v9550
    %v9847 = vunpack.c.h.b16 %v9550
    %v9848 = vunpack.c.l.b16 %v9551
    %v9849 = vunpack.c.h.b16 %v9551
    %v9850 = vunpack.c.l.b16 %v9552
    %v9851 = vunpack.c.h.b16 %v9552
    %v9852 = vunpack.c.l.b16 %v9553
    %v9853 = vunpack.c.h.b16 %v9553
    %v9854 = vunpack.c.l.b16 %v9554
    %v9855 = vunpack.c.h.b16 %v9554
    %v9856 = vunpack.c.l.b16 %v9555
    %v9857 = vunpack.c.h.b16 %v9555
    %v9858 = vunpack.c.l.b16 %v9556
    %v9859 = vunpack.c.h.b16 %v9556
    %v9860 = vunpack.c.l.b16 %v9557
    %v9861 = vunpack.c.h.b16 %v9557
    %v9862 = vunpack.c.l.b16 %v9558
    %v9863 = vunpack.c.h.b16 %v9558
    %v9864 = vunpack.c.l.b16 %v9559
    %v9865 = vunpack.c.h.b16 %v9559
    %v9866 = vunpack.c.l.b16 %v9560
    %v9867 = vunpack.c.h.b16 %v9560
    %v9868 = vunpack.c.l.b16 %v9561
    %v9869 = vunpack.c.h.b16 %v9561
    %v9870 = vunpack.c.l.b16 %v9562
    %v9871 = vunpack.c.h.b16 %v9562
    %v9872 = vunpack.c.l.b16 %v9563
    %v9873 = vunpack.c.h.b16 %v9563
    %v9874 = vunpack.c.l.b16 %v9564
    %v9875 = vunpack.c.h.b16 %v9564
    %v9876 = vunpack.c.l.b16 %v9565
    %v9877 = vunpack.c.h.b16 %v9565
    %v9878 = vunpack.c.l.b16 %v9566
    %v9879 = vunpack.c.h.b16 %v9566
    %v9880 = vunpack.c.l.b16 %v9567
    %v9881 = vunpack.c.h.b16 %v9567
    %v9882 = vunpack.c.l.b16 %v9568
    %v9883 = vunpack.c.h.b16 %v9568
    %v9884 = vunpack.c.l.b16 %v9569
    %v9885 = vunpack.c.h.b16 %v9569
    %v9886 = vunpack.c.l.b16 %v9570
    %v9887 = vunpack.c.h.b16 %v9570
    %v9888 = vunpack.c.l.b16 %v9571
    %v9889 = vunpack.c.h.b16 %v9571
    %v9890 = vunpack.c.l.b16 %v9572
    %v9891 = vunpack.c.h.b16 %v9572
    %v9892 = vunpack.c.l.b16 %v9573
    %v9893 = vunpack.c.h.b16 %v9573
    %v9894 = vunpack.c.l.b16 %v9574
    %v9895 = vunpack.c.h.b16 %v9574
    %v9896 = vunpack.c.l.b16 %v9575
    %v9897 = vunpack.c.h.b16 %v9575
    %v9898 = vunpack.c.l.b16 %v9576
    %v9899 = vunpack.c.h.b16 %v9576
    %v9900 = vunpack.c.l.b16 %v9577
    %v9901 = vunpack.c.h.b16 %v9577
    %v9902 = vunpack.c.l.b16 %v9578
    %v9903 = vunpack.c.h.b16 %v9578
    %v9904 = vunpack.c.l.b16 %v9579
    %v9905 = vunpack.c.h.b16 %v9579
    %v9906 = vunpack.c.l.b16 %v9580
    %v9907 = vunpack.c.h.b16 %v9580
    %v9908 = vunpack.c.l.b16 %v9581
    %v9909 = vunpack.c.h.b16 %v9581
    %v9910 = vunpack.c.l.b16 %v9582
    %v9911 = vunpack.c.h.b16 %v9582
    %v9912 = vunpack.c.l.b16 %v9583
    %v9913 = vunpack.c.h.b16 %v9583
    %v9914 = vunpack.c.l.b16 %v9584
    %v9915 = vunpack.c.h.b16 %v9584
    %v9916 = vunpack.c.l.b16 %v9585
    %v9917 = vunpack.c.h.b16 %v9585
    %v9918 = vunpack.c.l.b16 %v9586
    %v9919 = vunpack.c.h.b16 %v9586
    %v9920 = vunpack.c.l.b16 %v9587
    %v9921 = vunpack.c.h.b16 %v9587
    %v9922 = vunpack.c.l.b16 %v9588
    %v9923 = vunpack.c.h.b16 %v9588
    %v9924 = vunpack.c.l.b16 %v9589
    %v9925 = vunpack.c.h.b16 %v9589
    %v9926 = vunpack.c.l.b16 %v9590
    %v9927 = vunpack.c.h.b16 %v9590
    %v9928 = vunpack.c.l.b16 %v9591
    %v9929 = vunpack.c.h.b16 %v9591
    %v9930 = vunpack.c.l.b16 %v9592
    %v9931 = vunpack.c.h.b16 %v9592
    %v9932 = vunpack.c.l.b16 %v9593
    %v9933 = vunpack.c.h.b16 %v9593
    %v9934 = vunpack.c.l.b16 %v9594
    %v9935 = vunpack.c.h.b16 %v9594
    %v9936 = vunpack.c.l.b16 %v9595
    %v9937 = vunpack.c.h.b16 %v9595
    %v9938 = vunpack.c.l.b16 %v9596
    %v9939 = vunpack.c.h.b16 %v9596
    %v9940 = vunpack.c.l.b16 %v9597
    %v9941 = vunpack.c.h.b16 %v9597
    %v9942 = vunpack.c.l.b16 %v9598
    %v9943 = vunpack.c.h.b16 %v9598
    %v9944 = vunpack.c.l.b16 %v9599
    %v9945 = vunpack.c.h.b16 %v9599
    %v9946 = vunpack.c.l.b16 %v9600
    %v9947 = vunpack.c.h.b16 %v9600
    %v9948 = vunpack.c.l.b16 %v9601
    %v9949 = vunpack.c.h.b16 %v9601
    %v9950 = vunpack.c.l.b16 %v9602
    %v9951 = vunpack.c.h.b16 %v9602
    %v9952 = vunpack.c.l.b16 %v9603
    %v9953 = vunpack.c.h.b16 %v9603
    %v9954 = vunpack.c.l.b16 %v9604
    %v9955 = vunpack.c.h.b16 %v9604
    %v9956 = vunpack.c.l.b16 %v9605
    %v9957 = vunpack.c.h.b16 %v9605
    %v9958 = vunpack.c.l.b16 %v9606
    %v9959 = vunpack.c.h.b16 %v9606
    %v9960 = vunpack.c.l.b16 %v9607
    %v9961 = vunpack.c.h.b16 %v9607
    %v9962 = vunpack.c.l.b16 %v9608
    %v9963 = vunpack.c.h.b16 %v9608
    %v9964 = vunpack.c.l.b16 %v9609
    %v9965 = vunpack.c.h.b16 %v9609
    %v9966 = vunpack.c.l.b16 %v9610
    %v9967 = vunpack.c.h.b16 %v9610
    %v9968 = vunpack.c.l.b16 %v9611
    %v9969 = vunpack.c.h.b16 %v9611
    %v9970 = vunpack.c.l.b16 %v9612
    %v9971 = vunpack.c.h.b16 %v9612
    %v9972 = vunpack.c.l.b16 %v9613
    %v9973 = vunpack.c.h.b16 %v9613
    %v9974 = vunpack.c.l.b16 %v9614
    %v9975 = vunpack.c.h.b16 %v9614
    %v9976 = vunpack.c.l.b16 %v9615
    %v9977 = vunpack.c.h.b16 %v9615
    %v9978 = vunpack.c.l.b16 %v9616
    %v9979 = vunpack.c.h.b16 %v9616
    %v9980 = vunpack.c.l.b16 %v9617
    %v9981 = vunpack.c.h.b16 %v9617
    %v9982 = vunpack.c.l.b16 %v9618
    %v9983 = vunpack.c.h.b16 %v9618
    %v9984 = vunpack.c.l.b16 %v9619
    %v9985 = vunpack.c.h.b16 %v9619
    %v9986 = vunpack.c.l.b16 %v9620
    %v9987 = vunpack.c.h.b16 %v9620
    %v9988 = vunpack.c.l.b16 %v9621
    %v9989 = vunpack.c.h.b16 %v9621
    %v9990 = vunpack.c.l.b16 %v9622
    %v9991 = vunpack.c.h.b16 %v9622
    %v9992 = vunpack.c.l.b16 %v9623
    %v9993 = vunpack.c.h.b16 %v9623
    %v9994 = vunpack.c.l.b16 %v9624
    %v9995 = vunpack.c.h.b16 %v9624
    %v9996 = vunpack.c.l.b16 %v9625
    %v9997 = vunpack.c.h.b16 %v9625
    %v9998 = vunpack.c.l.b16 %v9626
    %v9999 = vunpack.c.h.b16 %v9626
    %v10000 = vunpack.c.l.b16 %v9627
    %v10001 = vunpack.c.h.b16 %v9627
    %v10002 = vunpack.c.l.b16 %v9628
    %v10003 = vunpack.c.h.b16 %v9628
    %v10004 = vunpack.c.l.b16 %v9629
    %v10005 = vunpack.c.h.b16 %v9629
    %v10006 = vunpack.c.l.b16 %v9630
    %v10007 = vunpack.c.h.b16 %v9630
    %v10008 = vunpack.c.l.b16 %v9631
    %v10009 = vunpack.c.h.b16 %v9631
    %v10010 = vunpack.c.l.b16 %v9632
    %v10011 = vunpack.c.h.b16 %v9632
    %v10012 = vunpack.c.l.b16 %v9633
    %v10013 = vunpack.c.h.b16 %v9633
    %v10014 = vunpack.c.l.b16 %v9634
    %v10015 = vunpack.c.h.b16 %v9634
    %v10016 = vunpack.c.l.b16 %v9635
    %v10017 = vunpack.c.h.b16 %v9635
    %v10018 = vunpack.c.l.b16 %v9636
    %v10019 = vunpack.c.h.b16 %v9636
    %v10020 = vunpack.c.l.b16 %v9637
    %v10021 = vunpack.c.h.b16 %v9637
    %v10022 = vunpack.c.l.b16 %v9638
    %v10023 = vunpack.c.h.b16 %v9638
    %v10024 = vunpack.c.l.b16 %v9639
    %v10025 = vunpack.c.h.b16 %v9639
    %v10026 = vunpack.c.l.b16 %v9640
    %v10027 = vunpack.c.h.b16 %v9640
    %v10028 = vunpack.c.l.b16 %v9641
    %v10029 = vunpack.c.h.b16 %v9641
    %v10030 = vunpack.c.l.b16 %v9642
    %v10031 = vunpack.c.h.b16 %v9642
    %v10032 = vunpack.c.l.b16 %v9643
    %v10033 = vunpack.c.h.b16 %v9643
    %v10034 = vunpack.c.l.b16 %v9644
    %v10035 = vunpack.c.h.b16 %v9644
    %v10036 = vunpack.c.l.b16 %v9645
    %v10037 = vunpack.c.h.b16 %v9645
    %v10038 = vunpack.c.l.b16 %v9646
    %v10039 = vunpack.c.h.b16 %v9646
    %v10040 = vunpack.c.l.b16 %v9647
    %v10041 = vunpack.c.h.b16 %v9647
    %v10042 = vunpack.c.l.b16 %v9648
    %v10043 = vunpack.c.h.b16 %v9648
    %v10044 = vunpack.c.l.b16 %v9649
    %v10045 = vunpack.c.h.b16 %v9649
    %v10046 = vunpack.c.l.b16 %v9650
    %v10047 = vunpack.c.h.b16 %v9650
    %v10048 = vunpack.c.l.b16 %v9651
    %v10049 = vunpack.c.h.b16 %v9651
    %v10050 = vunpack.c.l.b16 %v9652
    %v10051 = vunpack.c.h.b16 %v9652
    %v10052 = vunpack.c.l.b16 %v9653
    %v10053 = vunpack.c.h.b16 %v9653
    %v10054 = vunpack.c.l.b16 %v9654
    %v10055 = vunpack.c.h.b16 %v9654
    %v10056 = vunpack.c.l.b16 %v9655
    %v10057 = vunpack.c.h.b16 %v9655
    %v10058 = vunpack.c.l.b16 %v9656
    %v10059 = vunpack.c.h.b16 %v9656
    %v10060 = vunpack.c.l.b16 %v9657
    %v10061 = vunpack.c.h.b16 %v9657
    %v10062 = vunpack.c.l.b16 %v9658
    %v10063 = vunpack.c.h.b16 %v9658
    %v10064 = vunpack.c.l.b16 %v9659
    %v10065 = vunpack.c.h.b16 %v9659
    %v10066 = vpack.c.b16 %v9814, %v9810
    %v10067 = vpack.c.b16 %v9815, %v9811
    %v10068 = vpack.c.b16 %v9816, %v9812
    %v10069 = vpack.c.b16 %v9817, %v9813
    %v10070 = vpack.c.b16 %v9822, %v9818
    %v10071 = vpack.c.b16 %v9823, %v9819
    %v10072 = vpack.c.b16 %v9824, %v9820
    %v10073 = vpack.c.b16 %v9825, %v9821
    %v10074 = vpack.c.b16 %v9830, %v9826
    %v10075 = vpack.c.b16 %v9831, %v9827
    %v10076 = vpack.c.b16 %v9832, %v9828
    %v10077 = vpack.c.b16 %v9833, %v9829
    %v10078 = vpack.c.b16 %v9838, %v9834
    %v10079 = vpack.c.b16 %v9839, %v9835
    %v10080 = vpack.c.b16 %v9840, %v9836
    %v10081 = vpack.c.b16 %v9841, %v9837
    %v10082 = vpack.c.b16 %v9846, %v9842
    %v10083 = vpack.c.b16 %v9847, %v9843
    %v10084 = vpack.c.b16 %v9848, %v9844
    %v10085 = vpack.c.b16 %v9849, %v9845
    %v10086 = vpack.c.b16 %v9854, %v9850
    %v10087 = vpack.c.b16 %v9855, %v9851
    %v10088 = vpack.c.b16 %v9856, %v9852
    %v10089 = vpack.c.b16 %v9857, %v9853
    %v10090 = vpack.c.b16 %v9862, %v9858
    %v10091 = vpack.c.b16 %v9863, %v9859
    %v10092 = vpack.c.b16 %v9864, %v9860
    %v10093 = vpack.c.b16 %v9865, %v9861
    %v10094 = vpack.c.b16 %v9870, %v9866
    %v10095 = vpack.c.b16 %v9871, %v9867
    %v10096 = vpack.c.b16 %v9872, %v9868
    %v10097 = vpack.c.b16 %v9873, %v9869
    %v10098 = vpack.c.b16 %v9878, %v9874
    %v10099 = vpack.c.b16 %v9879, %v9875
    %v10100 = vpack.c.b16 %v9880, %v9876
    %v10101 = vpack.c.b16 %v9881, %v9877
    %v10102 = vpack.c.b16 %v9886, %v9882
    %v10103 = vpack.c.b16 %v9887, %v9883
    %v10104 = vpack.c.b16 %v9888, %v9884
    %v10105 = vpack.c.b16 %v9889, %v9885
    %v10106 = vpack.c.b16 %v9894, %v9890
    %v10107 = vpack.c.b16 %v9895, %v9891
    %v10108 = vpack.c.b16 %v9896, %v9892
    %v10109 = vpack.c.b16 %v9897, %v9893
    %v10110 = vpack.c.b16 %v9902, %v9898
    %v10111 = vpack.c.b16 %v9903, %v9899
    %v10112 = vpack.c.b16 %v9904, %v9900
    %v10113 = vpack.c.b16 %v9905, %v9901
    %v10114 = vpack.c.b16 %v9910, %v9906
    %v10115 = vpack.c.b16 %v9911, %v9907
    %v10116 = vpack.c.b16 %v9912, %v9908
    %v10117 = vpack.c.b16 %v9913, %v9909
    %v10118 = vpack.c.b16 %v9918, %v9914
    %v10119 = vpack.c.b16 %v9919, %v9915
    %v10120 = vpack.c.b16 %v9920, %v9916
    %v10121 = vpack.c.b16 %v9921, %v9917
    %v10122 = vpack.c.b16 %v9926, %v9922
    %v10123 = vpack.c.b16 %v9927, %v9923
    %v10124 = vpack.c.b16 %v9928, %v9924
    %v10125 = vpack.c.b16 %v9929, %v9925
    %v10126 = vpack.c.b16 %v9934, %v9930
    %v10127 = vpack.c.b16 %v9935, %v9931
    %v10128 = vpack.c.b16 %v9936, %v9932
    %v10129 = vpack.c.b16 %v9937, %v9933
    %v10130 = vpack.c.b16 %v9942, %v9938
    %v10131 = vpack.c.b16 %v9943, %v9939
    %v10132 = vpack.c.b16 %v9944, %v9940
    %v10133 = vpack.c.b16 %v9945, %v9941
    %v10134 = vpack.c.b16 %v9950, %v9946
    %v10135 = vpack.c.b16 %v9951, %v9947
    %v10136 = vpack.c.b16 %v9952, %v9948
    %v10137 = vpack.c.b16 %v9953, %v9949
    %v10138 = vpack.c.b16 %v9958, %v9954
    %v10139 = vpack.c.b16 %v9959, %v9955
    %v10140 = vpack.c.b16 %v9960, %v9956
    %v10141 = vpack.c.b16 %v9961, %v9957
    %v10142 = vpack.c.b16 %v9966, %v9962
    %v10143 = vpack.c.b16 %v9967, %v9963
    %v10144 = vpack.c.b16 %v9968, %v9964
    %v10145 = vpack.c.b16 %v9969, %v9965
    %v10146 = vpack.c.b16 %v9974, %v9970
    %v10147 = vpack.c.b16 %v9975, %v9971
    %v10148 = vpack.c.b16 %v9976, %v9972
    %v10149 = vpack.c.b16 %v9977, %v9973
    %v10150 = vpack.c.b16 %v9982, %v9978
    %v10151 = vpack.c.b16 %v9983, %v9979
    %v10152 = vpack.c.b16 %v9984, %v9980
    %v10153 = vpack.c.b16 %v9985, %v9981
    %v10154 = vpack.c.b16 %v9990, %v9986
    %v10155 = vpack.c.b16 %v9991, %v9987
    %v10156 = vpack.c.b16 %v9992, %v9988
    %v10157 = vpack.c.b16 %v9993, %v9989
    %v10158 = vpack.c.b16 %v9998, %v9994
    %v10159 = vpack.c.b16 %v9999, %v9995
    %v10160 = vpack.c.b16 %v10000, %v9996
    %v10161 = vpack.c.b16 %v10001, %v9997
    %v10162 = vpack.c.b16 %v10006, %v10002
    %v10163 = vpack.c.b16 %v10007, %v10003
    %v10164 = vpack.c.b16 %v10008, %v10004
    %v10165 = vpack.c.b16 %v10009, %v10005
    %v10166 = vpack.c.b16 %v10014, %v10010
    %v10167 = vpack.c.b16 %v10015, %v10011
    %v10168 = vpack.c.b16 %v10016, %v10012
    %v10169 = vpack.c.b16 %v10017, %v10013
    %v10170 = vpack.c.b16 %v10022, %v10018
    %v10171 = vpack.c.b16 %v10023, %v10019
    %v10172 = vpack.c.b16 %v10024, %v10020
    %v10173 = vpack.c.b16 %v10025, %v10021
    %v10174 = vpack.c.b16 %v10030, %v10026
    %v10175 = vpack.c.b16 %v10031, %v10027
    %v10176 = vpack.c.b16 %v10032, %v10028
    %v10177 = vpack.c.b16 %v10033, %v10029
    %v10178 = vpack.c.b16 %v10038, %v10034
    %v10179 = vpack.c.b16 %v10039, %v10035
    %v10180 = vpack.c.b16 %v10040, %v10036
    %v10181 = vpack.c.b16 %v10041, %v10037
    %v10182 = vpack.c.b16 %v10046, %v10042
    %v10183 = vpack.c.b16 %v10047, %v10043
    %v10184 = vpack.c.b16 %v10048, %v10044
    %v10185 = vpack.c.b16 %v10049, %v10045
    %v10186 = vpack.c.b16 %v10054, %v10050
    %v10187 = vpack.c.b16 %v10055, %v10051
    %v10188 = vpack.c.b16 %v10056, %v10052
    %v10189 = vpack.c.b16 %v10057, %v10053
    %v10190 = vpack.c.b16 %v10062, %v10058
    %v10191 = vpack.c.b16 %v10063, %v10059
    %v10192 = vpack.c.b16 %v10064, %v10060
    %v10193 = vpack.c.b16 %v10065, %v10061
    %10322 = vmatprep.subr.bf16.mxu0 %v10067
    %10323 = vmatpush1.bf16.msra.mxu0 %v10066
    %10324 = vmatprep.subr.bf16.mxu0 %v10071
    %10325 = vmatpush1.bf16.msra.mxu0 %v10070
    %10326 = vmatprep.subr.bf16.mxu0 %v10075
    %10327 = vmatpush1.bf16.msra.mxu0 %v10074
    %10328 = vmatprep.subr.bf16.mxu0 %v10079
    %10329 = vmatpush1.bf16.msra.mxu0 %v10078
    %10330 = vmatprep.subr.bf16.mxu0 %v10083
    %10331 = vmatpush1.bf16.msra.mxu0 %v10082
    %10332 = vmatprep.subr.bf16.mxu0 %v10087
    %10333 = vmatpush1.bf16.msra.mxu0 %v10086
    %10334 = vmatprep.subr.bf16.mxu0 %v10091
    %10335 = vmatpush1.bf16.msra.mxu0 %v10090
    %10336 = vmatprep.subr.bf16.mxu0 %v10095
    %10337 = vmatpush1.bf16.msra.mxu0 %v10094
    %10338 = vmatprep.subr.bf16.mxu0 %v10099
    %10339 = vmatpush1.bf16.msra.mxu0 %v10098
    %10340 = vmatprep.subr.bf16.mxu0 %v10103
    %10341 = vmatpush1.bf16.msra.mxu0 %v10102
    %10342 = vmatprep.subr.bf16.mxu0 %v10107
    %10343 = vmatpush1.bf16.msra.mxu0 %v10106
    %10344 = vmatprep.subr.bf16.mxu0 %v10111
    %10345 = vmatpush1.bf16.msra.mxu0 %v10110
    %10346 = vmatprep.subr.bf16.mxu0 %v10115
    %10347 = vmatpush1.bf16.msra.mxu0 %v10114
    %10348 = vmatprep.subr.bf16.mxu0 %v10119
    %10349 = vmatpush1.bf16.msra.mxu0 %v10118
    %10350 = vmatprep.subr.bf16.mxu0 %v10123
    %10351 = vmatpush1.bf16.msra.mxu0 %v10122
    %10352 = vmatprep.subr.bf16.mxu0 %v10127
    %10353 = vmatpush1.bf16.msra.mxu0 %v10126
    %10354 = vmatprep.mubr.bf16.mxu0 %v9529
    %10355 = vmatmul.mubr.bf16.gmra.mrb[0].mxu0 %v9528
    %v10356 = vpop.f32.mrb[0].mxu0
    %v10357 = vadd.f32 %v9665, %v10356
    %v10358 = vpop.f32.mrb[0].mxu0
    %v10359 = vadd.f32 %v9669, %v10358
    %v10360 = vpop.f32.mrb[0].mxu0
    %v10361 = vpop.f32.mrb[0].mxu0
    %10362 = vdwg.mxu0
    %10363 = vmatprep.subr.bf16.mxu0 %v10131
    %10364 = vmatpush1.bf16.msra.mxu0 %v10130
    %10365 = vmatprep.subr.bf16.mxu0 %v10135
    %10366 = vmatpush1.bf16.msra.mxu0 %v10134
    %10367 = vmatprep.subr.bf16.mxu0 %v10139
    %10368 = vmatpush1.bf16.msra.mxu0 %v10138
    %10369 = vmatprep.subr.bf16.mxu0 %v10143
    %10370 = vmatpush1.bf16.msra.mxu0 %v10142
    %10371 = vmatprep.subr.bf16.mxu0 %v10147
    %10372 = vmatpush1.bf16.msra.mxu0 %v10146
    %10373 = vmatprep.subr.bf16.mxu0 %v10151
    %10374 = vmatpush1.bf16.msra.mxu0 %v10150
    %10375 = vmatprep.subr.bf16.mxu0 %v10155
    %10376 = vmatpush1.bf16.msra.mxu0 %v10154
    %10377 = vmatprep.subr.bf16.mxu0 %v10159
    %10378 = vmatpush1.bf16.msra.mxu0 %v10158
    %10379 = vmatprep.subr.bf16.mxu0 %v10163
    %10380 = vmatpush1.bf16.msra.mxu0 %v10162
    %10381 = vmatprep.subr.bf16.mxu0 %v10167
    %10382 = vmatpush1.bf16.msra.mxu0 %v10166
    %10383 = vmatprep.subr.bf16.mxu0 %v10171
    %10384 = vmatpush1.bf16.msra.mxu0 %v10170
    %10385 = vmatprep.subr.bf16.mxu0 %v10175
    %10386 = vmatpush1.bf16.msra.mxu0 %v10174
    %10387 = vmatprep.subr.bf16.mxu0 %v10179
    %10388 = vmatpush1.bf16.msra.mxu0 %v10178
    %10389 = vmatprep.subr.bf16.mxu0 %v10183
    %10390 = vmatpush1.bf16.msra.mxu0 %v10182
    %10391 = vmatprep.subr.bf16.mxu0 %v10187
    %10392 = vmatpush1.bf16.msra.mxu0 %v10186
    %10393 = vmatprep.subr.bf16.mxu0 %v10191
    %10394 = vmatpush1.bf16.msra.mxu0 %v10190
    %10395 = vmatprep.mubr.bf16.mxu0 %v9531
    %10396 = vmatmul.mubr.bf16.gmra.mrb[0].mxu0 %v9530
    %v10397 = vpop.f32.mrb[0].mxu0
    %v10398 = vadd.f32 %v10357, %v10397
    %v10399 = vpop.f32.mrb[0].mxu0
    %v10400 = vadd.f32 %v10359, %v10399
    %v10401 = vpop.f32.mrb[0].mxu0
    %v10402 = vpop.f32.mrb[0].mxu0
    %10403 = vdwg.mxu0
    %10404 = vmatprep.subr.bf16.mxu0 %v10069
    %10405 = vmatpush1.bf16.msra.mxu0 %v10068
    %10406 = vmatprep.subr.bf16.mxu0 %v10073
    %10407 = vmatpush1.bf16.msra.mxu0 %v10072
    %10408 = vmatprep.subr.bf16.mxu0 %v10077
    %10409 = vmatpush1.bf16.msra.mxu0 %v10076
    %10410 = vmatprep.subr.bf16.mxu0 %v10081
    %10411 = vmatpush1.bf16.msra.mxu0 %v10080
    %10412 = vmatprep.subr.bf16.mxu0 %v10085
    %10413 = vmatpush1.bf16.msra.mxu0 %v10084
    %10414 = vmatprep.subr.bf16.mxu0 %v10089
    %10415 = vmatpush1.bf16.msra.mxu0 %v10088
    %10416 = vmatprep.subr.bf16.mxu0 %v10093
    %10417 = vmatpush1.bf16.msra.mxu0 %v10092
    %10418 = vmatprep.subr.bf16.mxu0 %v10097
    %10419 = vmatpush1.bf16.msra.mxu0 %v10096
    %10420 = vmatprep.subr.bf16.mxu0 %v10101
    %10421 = vmatpush1.bf16.msra.mxu0 %v10100
    %10422 = vmatprep.subr.bf16.mxu0 %v10105
    %10423 = vmatpush1.bf16.msra.mxu0 %v10104
    %10424 = vmatprep.subr.bf16.mxu0 %v10109
    %10425 = vmatpush1.bf16.msra.mxu0 %v10108
    %10426 = vmatprep.subr.bf16.mxu0 %v10113
    %10427 = vmatpush1.bf16.msra.mxu0 %v10112
    %10428 = vmatprep.subr.bf16.mxu0 %v10117
    %10429 = vmatpush1.bf16.msra.mxu0 %v10116
    %10430 = vmatprep.subr.bf16.mxu0 %v10121
    %10431 = vmatpush1.bf16.msra.mxu0 %v10120
    %10432 = vmatprep.subr.bf16.mxu0 %v10125
    %10433 = vmatpush1.bf16.msra.mxu0 %v10124
    %10434 = vmatprep.subr.bf16.mxu0 %v10129
    %10435 = vmatpush1.bf16.msra.mxu0 %v10128
    %10436 = vmatprep.mubr.bf16.mxu0 %v9529
    %10437 = vmatmul.mubr.bf16.gmra.mrb[0].mxu0 %v9528
    %v10438 = vpop.f32.mrb[0].mxu0
    %v10439 = vadd.f32 %v9673, %v10438
    %v10440 = vpop.f32.mrb[0].mxu0
    %v10441 = vadd.f32 %v9677, %v10440
    %v10442 = vpop.f32.mrb[0].mxu0
    %v10443 = vpop.f32.mrb[0].mxu0
    %10444 = vdwg.mxu0
    %10445 = vmatprep.subr.bf16.mxu0 %v10133
    %10446 = vmatpush1.bf16.msra.mxu0 %v10132
    %10447 = vmatprep.subr.bf16.mxu0 %v10137
    %10448 = vmatpush1.bf16.msra.mxu0 %v10136
    %10449 = vmatprep.subr.bf16.mxu0 %v10141
    %10450 = vmatpush1.bf16.msra.mxu0 %v10140
    %10451 = vmatprep.subr.bf16.mxu0 %v10145
    %10452 = vmatpush1.bf16.msra.mxu0 %v10144
    %10453 = vmatprep.subr.bf16.mxu0 %v10149
    %10454 = vmatpush1.bf16.msra.mxu0 %v10148
    %10455 = vmatprep.subr.bf16.mxu0 %v10153
    %10456 = vmatpush1.bf16.msra.mxu0 %v10152
    %10457 = vmatprep.subr.bf16.mxu0 %v10157
    %10458 = vmatpush1.bf16.msra.mxu0 %v10156
    %10459 = vmatprep.subr.bf16.mxu0 %v10161
    %10460 = vmatpush1.bf16.msra.mxu0 %v10160
    %10461 = vmatprep.subr.bf16.mxu0 %v10165
    %10462 = vmatpush1.bf16.msra.mxu0 %v10164
    %10463 = vmatprep.subr.bf16.mxu0 %v10169
    %10464 = vmatpush1.bf16.msra.mxu0 %v10168
    %10465 = vmatprep.subr.bf16.mxu0 %v10173
    %10466 = vmatpush1.bf16.msra.mxu0 %v10172
    %10467 = vmatprep.subr.bf16.mxu0 %v10177
    %10468 = vmatpush1.bf16.msra.mxu0 %v10176
    %10469 = vmatprep.subr.bf16.mxu0 %v10181
    %10470 = vmatpush1.bf16.msra.mxu0 %v10180
    %10471 = vmatprep.subr.bf16.mxu0 %v10185
    %10472 = vmatpush1.bf16.msra.mxu0 %v10184
    %10473 = vmatprep.subr.bf16.mxu0 %v10189
    %10474 = vmatpush1.bf16.msra.mxu0 %v10188
    %10475 = vmatprep.subr.bf16.mxu0 %v10193
    %10476 = vmatpush1.bf16.msra.mxu0 %v10192
    %10477 = vmatprep.mubr.bf16.mxu0 %v9531
    %10478 = vmatmul.mubr.bf16.gmra.mrb[0].mxu0 %v9530
    %v10479 = vpop.f32.mrb[0].mxu0
    %v10480 = vadd.f32 %v10439, %v10479
    %v10481 = vpop.f32.mrb[0].mxu0
    %v10482 = vadd.f32 %v10441, %v10481
    %v10483 = vpop.f32.mrb[0].mxu0
    %v10484 = vpop.f32.mrb[0].mxu0
    %10485 = vdwg.mxu0
    %v10486 = vmul.f32 %v10480, 1.442695
    %v10487 = vpow.pop %v10486
    %v10488 = vmul.f32 %v10482, 1.442695
    %v10489 = vpow.pop %v10488
    %v10490 = vld [vmem:[%s7] sm:$0xff]
    %v10491 = vld [vmem:[%s7 + $0x8] sm:$0xff]
    %v10492 = vmul.f32 %v10487, %v10490
    %v10493 = vmul.f32 %v10489, %v10491
    %v10494 = vadd.f32 %v10398, %v10492
    %v10495 = vadd.f32 %v10400, %v10493
    %10496 = vst [vmem:[%s8] sm:$0xff] %v10494
    %10497 = vst [vmem:[%s8 + $0x8] sm:$0xff] %v10495
    %v10498 = vlaneseq
    %v10499 = vshrl.u32 %v10498, 7
    %vm10500 = vcmp.lt.s32.totalorder %v10499, 2
    %v10501 = vmul.f32 %v10487, %v10487
    %v10502 = vmul.f32 %v10489, %v10489
    %v10503 = vmul.f32 %v10398, %v10398
    %v10504 = vmul.f32 %v10400, %v10400
    %v10505 = vadd.f32 %v10501, %v10503
    %v10506 = vadd.f32 %v10502, %v10504
    %v10507 = vsub.f32 %v10505, %v10480
    %v10508 = vsub.f32 %v10506, %v10482
    %v10509 = vsub.f32 %v10507, 0.5
    %v10510 = vsub.f32 %v10508, 0.5
    %v10511 = vsel %vm10500, %v10509, 0.0
    %v10512 = vsel %vm10500, %v10510, 0.0
    %v10513 = vadd.f32 %v10511, %v10512
    %10514 = vadd.xlane.f32.xlu0 %v10513
    %v10515 = vpop.xlane.xlu0 %10514
    %v10516 = vrot.slane %v10515, 4
    %v10517 = vadd.f32 %v10515, %v10516
    %v10518 = vrot.slane %v10517, 2
    %v10519 = vadd.f32 %v10517, %v10518
    %v10520 = vrot.slane %v10519, 1
    %v10521 = vadd.f32 %v10519, %v10520
    %s10522 = vtos %v10521
    %v10523 = vstv %s10522
    %vm10524 = vcmask 0
    %10525 = vst.msk [vmem:[#allocation7] sm:$0x1] %vm10524, %v10523
    // Predicated region
    $region42: #{variational_encoder_forward.3} parent=1 // pred_check
      _
    $region43: #{variational_encoder_forward.3} parent=1 // pred_check_branch
      %10527 = sbr.rel (0) target = $region45
    $region44: #{variational_encoder_forward.3} parent=1 // pred_region
      _
    $region45: #{variational_encoder_forward.3} parent=1 // pred_fallthru
      _
    // Predicated region
    $region46: #{variational_encoder_forward.3} parent=1 // pred_check
      _
    $region47: #{variational_encoder_forward.3} parent=1 // pred_check_branch
      %10529 = sbr.rel (0) target = $region49
    $region48: #{variational_encoder_forward.3} parent=1 // pred_region
      %s10531 = ssub.s32 16, 16
      %10532 = vsyncadd [#allocation4], %s10531
      %s10534 = sshll.u32 [#allocation7], 4
      %s10535 = int_to_ptr.vmem [resolvable:$true] %s10534
      %10537 = dma.vmem_to_hbm [thread:$0]  %s10535, 16, %s9, [#allocation4]
    $region49: #{variational_encoder_forward.3} parent=1 // pred_fallthru
      _
    // Predicated region
    $region50: #{variational_encoder_forward.3} parent=1 // pred_check
      _
    $region51: #{variational_encoder_forward.3} parent=1 // pred_check_branch
      %10539 = sbr.rel (0) target = $region53
    $region52: #{variational_encoder_forward.3} parent=1 // pred_region
      _
    $region53: #{variational_encoder_forward.3} parent=1 // pred_fallthru
      _
    // Predicated region
    $region54: #{variational_encoder_forward.3} parent=1 // pred_check
      _
    $region55: #{variational_encoder_forward.3} parent=1 // pred_check_branch
      %10541 = sbr.rel (0) target = $region57
    $region56: #{variational_encoder_forward.3} parent=1 // pred_region
      %10542 = dma.done [#allocation4], 16
    $region57: #{variational_encoder_forward.3} parent=1 // pred_fallthru
      _
    %10543 = vsyncpa [#allocation3], 1
    %10544 = vsyncpa [#allocation6], 1
    %10545 = vsyncpa [#allocation4], 1

</llo_original>
